<compile_context>
chip_gen: v7x
topology: tpu7x:2x2x1
jax: 0.10.0
libtpu: 0.0.40
codegen_flags: <defaults>
</compile_context>

<pallas_src>
import jax
import jax.numpy as jnp
from jax.experimental import pallas as pl
from jax.experimental.pallas import tpu as pltpu

# ---------------- model configuration (small, synthetic) ----------------
HIDDEN = 32
NUM_HEADS = 4
HEAD_DIM = HIDDEN // NUM_HEADS
FFN_DIM = 64
LN_EPS = 1e-5                       # torch.nn.LayerNorm default
NEG_INF = -1e9
SCALE = 1.0 / (HEAD_DIM ** 0.5)

B = 2
S_CHAR = 8
S_LAT = 12

# order of the stacked weight arrays passed to the kernel
STACKED_NAMES = ("w_q", "b_q", "w_k", "b_k", "w_v", "b_v", "w_o", "b_o",
                 "w_f1", "b_f1", "w_f2", "b_f2",
                 "ln1_g", "ln1_b", "ln2_g", "ln2_b")


# ============================= fused kernel ==============================

def _fused_block_kernel(char_ref, lat_ref, cmask_ref, lmask_ref, pos_ref,
                        wq, bq, wk, bk, wv, bv, wo, bo,
                        wf1, bf1, wf2, bf2, ln1g, ln1b, ln2g, ln2b,
                        out_ref):
    f32 = jnp.float32

    x = char_ref[0].astype(f32)                    # (S_CHAR, H)
    lat = lat_ref[0].astype(f32)                   # (S_LAT, H)
    char_bias = (1.0 - cmask_ref[0]) * NEG_INF     # (1, S_CHAR) additive bias
    lat_bias = (1.0 - lmask_ref[0]) * NEG_INF      # (1, S_LAT) additive bias

    def layer_norm(v, g, b):
        mu = jnp.mean(v, axis=-1, keepdims=True)
        var = jnp.mean(jnp.square(v - mu), axis=-1, keepdims=True)
        return (v - mu) * jax.lax.rsqrt(var + LN_EPS) * g + b

    def mha(blk, q_src, kv_src, bias2d, use_pos):
        """Multi-head attention + output projection, per-head accumulation.

        All weight accesses are static leading-dim indexing of the stacked
        (3, NH, ...) refs -> no lane slicing anywhere.
        """
        acc = None
        for h in range(NUM_HEADS):
            qh = jnp.dot(q_src, wq[blk, h], preferred_element_type=f32) + bq[blk, h]
            kh = jnp.dot(kv_src, wk[blk, h], preferred_element_type=f32) + bk[blk, h]
            vh = jnp.dot(kv_src, wv[blk, h], preferred_element_type=f32) + bv[blk, h]
            # scores = qh @ kh^T (contract head_dim on both, no transpose op)
            s = jax.lax.dot_general(qh, kh, (((1,), (1,)), ((), ())),
                                    preferred_element_type=f32)
            s = s * SCALE + bias2d
            if use_pos:
                s = s + pos_ref[0, h]              # (Sq, Sk) per-head bias
            m = jnp.max(s, axis=-1, keepdims=True)
            p = jnp.exp(s - m)
            p = p * pl.reciprocal(jnp.sum(p, axis=-1, keepdims=True), approx=True)
            ctx = jnp.dot(p, vh, preferred_element_type=f32)             # (Sq, dh)
            contrib = jnp.dot(ctx, wo[blk, h], preferred_element_type=f32)  # (Sq, H)
            acc = contrib if acc is None else acc + contrib
        return acc + bo[blk]

    def residual_ffn(blk, v, attn):
        """Residual + LN, then FFN (ReLU) + residual + LN (post-norm)."""
        v = layer_norm(v + attn, ln1g[blk], ln1b[blk])
        hid = jnp.maximum(
            jnp.dot(v, wf1[blk], preferred_element_type=f32) + bf1[blk], 0.0)
        f = jnp.dot(hid, wf2[blk], preferred_element_type=f32) + bf2[blk]
        return layer_norm(v + f, ln2g[blk], ln2b[blk])

    # block 0: char self-attention
    x = residual_ffn(0, x, mha(0, x, x, char_bias, False))
    # block 1: char -> lattice cross-attention with positional score bias
    x = residual_ffn(1, x, mha(1, x, lat, lat_bias, True))
    # block 2: char self-attention
    x = residual_ffn(2, x, mha(2, x, x, char_bias, False))

    out_ref[0] = x.astype(out_ref.dtype)


# ======================= host-side weight packing ========================

def _pack_params(params):
    """Stack per-block params and pre-split heads onto leading axes."""
    blocks = [params["char_block"], params["char_lattice"], params["char_block1"]]

    def stack(fn):
        return jnp.stack([fn(p) for p in blocks], axis=0)

    def split_in(w):          # (H, H) -> (NH, H, dh)
        return jnp.transpose(w.reshape(HIDDEN, NUM_HEADS, HEAD_DIM), (1, 0, 2))

    def split_bias(b):        # (H,) -> (NH, 1, dh)
        return b.reshape(NUM_HEADS, 1, HEAD_DIM)

    def split_out(w):         # (H, H) -> (NH, dh, H)
        return w.reshape(NUM_HEADS, HEAD_DIM, HIDDEN)

    packed = dict(
        w_q=stack(lambda p: split_in(p["w_q"])),
        b_q=stack(lambda p: split_bias(p["b_q"])),
        w_k=stack(lambda p: split_in(p["w_k"])),
        b_k=stack(lambda p: split_bias(p["b_k"])),
        w_v=stack(lambda p: split_in(p["w_v"])),
        b_v=stack(lambda p: split_bias(p["b_v"])),
        w_o=stack(lambda p: split_out(p["w_o"])),
        b_o=stack(lambda p: p["b_o"].reshape(1, HIDDEN)),
        w_f1=stack(lambda p: p["w_f1"]),
        b_f1=stack(lambda p: p["b_f1"].reshape(1, FFN_DIM)),
        w_f2=stack(lambda p: p["w_f2"]),
        b_f2=stack(lambda p: p["b_f2"].reshape(1, HIDDEN)),
        ln1_g=stack(lambda p: p["ln1_g"].reshape(1, HIDDEN)),
        ln1_b=stack(lambda p: p["ln1_b"].reshape(1, HIDDEN)),
        ln2_g=stack(lambda p: p["ln2_g"].reshape(1, HIDDEN)),
        ln2_b=stack(lambda p: p["ln2_b"].reshape(1, HIDDEN)),
    )
    return [packed[n] for n in STACKED_NAMES]


# =========================== host-side wrapper ===========================

def block_forward(params, char, lattice, char_mask, lattice_mask,
                  lattice_pos_emb, char_lattice_pos_emb, lattice_char_pos_emb):
    # Mirrors Block.forward: lattice_pos_emb / lattice_char_pos_emb are
    # accepted but unused (as in the reference); Block.norm is unused.
    Bb, Sq, H = char.shape
    Sk = lattice.shape[1]

    cmask = char_mask.astype(jnp.float32).reshape(Bb, 1, Sq)
    lmask = lattice_mask.astype(jnp.float32).reshape(Bb, 1, Sk)
    stacked = _pack_params(params)

    def resident_spec(arr):
        # Same block at every grid step -> weight stays VMEM-resident.
        nd = arr.ndim
        return pl.BlockSpec(arr.shape, lambda b, _n=nd: (0,) * _n)

    in_specs = [
        pl.BlockSpec((1, Sq, H), lambda b: (b, 0, 0)),                  # char
        pl.BlockSpec((1, Sk, H), lambda b: (b, 0, 0)),                  # lattice
        pl.BlockSpec((1, 1, Sq), lambda b: (b, 0, 0)),                  # char mask
        pl.BlockSpec((1, 1, Sk), lambda b: (b, 0, 0)),                  # lattice mask
        pl.BlockSpec((1, NUM_HEADS, Sq, Sk), lambda b: (b, 0, 0, 0)),   # pos bias
    ] + [resident_spec(p) for p in stacked]

    out_specs = pl.BlockSpec((1, Sq, H), lambda b: (b, 0, 0))

    return pl.pallas_call(
        _fused_block_kernel,
        out_shape=jax.ShapeDtypeStruct((Bb, Sq, H), char.dtype),
        grid=(Bb,),
        in_specs=in_specs,
        out_specs=out_specs,
        compiler_params=pltpu.CompilerParams(
            dimension_semantics=("parallel",)),     # v7x: one batch per TC
    )(char, lattice, cmask, lmask, char_lattice_pos_emb, *stacked)


# =========================== parameter init ==============================

def _init_transformer_block(key):
    ks = jax.random.split(key, 6)

    def w(k, din, dout):
        return jax.random.normal(k, (din, dout), jnp.float32) * 0.02

    return dict(
        w_q=w(ks[0], HIDDEN, HIDDEN), b_q=jnp.zeros((HIDDEN,), jnp.float32),
        w_k=w(ks[1], HIDDEN, HIDDEN), b_k=jnp.zeros((HIDDEN,), jnp.float32),
        w_v=w(ks[2], HIDDEN, HIDDEN), b_v=jnp.zeros((HIDDEN,), jnp.float32),
        w_o=w(ks[3], HIDDEN, HIDDEN), b_o=jnp.zeros((HIDDEN,), jnp.float32),
        w_f1=w(ks[4], HIDDEN, FFN_DIM), b_f1=jnp.zeros((FFN_DIM,), jnp.float32),
        w_f2=w(ks[5], FFN_DIM, HIDDEN), b_f2=jnp.zeros((HIDDEN,), jnp.float32),
        ln1_g=jnp.ones((HIDDEN,), jnp.float32),
        ln1_b=jnp.zeros((HIDDEN,), jnp.float32),
        ln2_g=jnp.ones((HIDDEN,), jnp.float32),
        ln2_b=jnp.zeros((HIDDEN,), jnp.float32),
    )


def init_block_params(key):
    k1, k2, k3 = jax.random.split(key, 3)
    return {
        "char_block": _init_transformer_block(k1),
        "char_lattice": _init_transformer_block(k2),
        "char_block1": _init_transformer_block(k3),
        # Block.norm params (unused in forward, kept for shape parity)
        "norm_g": jnp.ones((HIDDEN,), jnp.float32),
        "norm_b": jnp.zeros((HIDDEN,), jnp.float32),
    }


# ================================ main ===================================

if __name__ == "__main__":
    key = jax.random.PRNGKey(0)
    k_char, k_lat, k_p1, k_p2, k_p3, k_params = jax.random.split(key, 6)

    char = jax.random.normal(k_char, (B, S_CHAR, HIDDEN), jnp.float32)
    lattice = jax.random.normal(k_lat, (B, S_LAT, HIDDEN), jnp.float32)

    # validity masks (1 = keep, 0 = pad)
    char_mask = (jnp.arange(S_CHAR)[None, :]
                 < jnp.array([S_CHAR, 6])[:, None]).astype(jnp.float32)
    lattice_mask = (jnp.arange(S_LAT)[None, :]
                    < jnp.array([S_LAT, 9])[:, None]).astype(jnp.float32)

    # positional embeddings (only char_lattice_pos_emb is consumed by forward)
    lattice_pos_emb = jax.random.normal(k_p1, (B, NUM_HEADS, S_LAT, S_LAT),
                                        jnp.float32) * 0.1
    char_lattice_pos_emb = jax.random.normal(k_p2, (B, NUM_HEADS, S_CHAR, S_LAT),
                                             jnp.float32) * 0.1
    lattice_char_pos_emb = jax.random.normal(k_p3, (B, NUM_HEADS, S_LAT, S_CHAR),
                                             jnp.float32) * 0.1

    params = init_block_params(k_params)

    fwd = jax.jit(block_forward)
    out = fwd(params, char, lattice, char_mask, lattice_mask,
              lattice_pos_emb, char_lattice_pos_emb, lattice_char_pos_emb)
    out = jax.block_until_ready(out)

    assert out.shape == (B, S_CHAR, HIDDEN)
    assert bool(jnp.all(jnp.isfinite(out)))
    print("KERNEL_OK")
</pallas_src>

<mosaic_0001>
module attributes {stable_mosaic.version = 11 : i64} {
  func.func @_fused_block_kernel(%arg0: i32, %arg1: memref<1x8x32xf32, #tpu.memory_space<vmem>>, %arg2: memref<1x12x32xf32, #tpu.memory_space<vmem>>, %arg3: memref<1x1x8xf32, #tpu.memory_space<vmem>>, %arg4: memref<1x1x12xf32, #tpu.memory_space<vmem>>, %arg5: memref<1x4x8x12xf32, #tpu.memory_space<vmem>>, %arg6: memref<3x4x32x8xf32, #tpu.memory_space<vmem>>, %arg7: memref<3x4x1x8xf32, #tpu.memory_space<vmem>>, %arg8: memref<3x4x32x8xf32, #tpu.memory_space<vmem>>, %arg9: memref<3x4x1x8xf32, #tpu.memory_space<vmem>>, %arg10: memref<3x4x32x8xf32, #tpu.memory_space<vmem>>, %arg11: memref<3x4x1x8xf32, #tpu.memory_space<vmem>>, %arg12: memref<3x4x8x32xf32, #tpu.memory_space<vmem>>, %arg13: memref<3x1x32xf32, #tpu.memory_space<vmem>>, %arg14: memref<3x32x64xf32, #tpu.memory_space<vmem>>, %arg15: memref<3x1x64xf32, #tpu.memory_space<vmem>>, %arg16: memref<3x64x32xf32, #tpu.memory_space<vmem>>, %arg17: memref<3x1x32xf32, #tpu.memory_space<vmem>>, %arg18: memref<3x1x32xf32, #tpu.memory_space<vmem>>, %arg19: memref<3x1x32xf32, #tpu.memory_space<vmem>>, %arg20: memref<3x1x32xf32, #tpu.memory_space<vmem>>, %arg21: memref<3x1x32xf32, #tpu.memory_space<vmem>>, %arg22: memref<1x8x32xf32, #tpu.memory_space<vmem>>) attributes {dimension_semantics = [#tpu.dimension_semantics<parallel>], iteration_bounds = array<i64: 2>, scalar_prefetch = 0 : i64, scratch_operands = 0 : i64, tpu.core_type = #tpu.core_type<tc>, window_params = [{transform_indices = @transform_0, window_bounds = array<i64: 1, 8, 32>}, {transform_indices = @transform_1, window_bounds = array<i64: 1, 12, 32>}, {transform_indices = @transform_2, window_bounds = array<i64: 1, 1, 8>}, {transform_indices = @transform_3, window_bounds = array<i64: 1, 1, 12>}, {transform_indices = @transform_4, window_bounds = array<i64: 1, 4, 8, 12>}, {pipeline_mode = #tpu.pipeline_mode<synchronous>, transform_indices = @transform_5, window_bounds = array<i64: 3, 4, 32, 8>}, {pipeline_mode = #tpu.pipeline_mode<synchronous>, transform_indices = @transform_6, window_bounds = array<i64: 3, 4, 1, 8>}, {pipeline_mode = #tpu.pipeline_mode<synchronous>, transform_indices = @transform_7, window_bounds = array<i64: 3, 4, 32, 8>}, {pipeline_mode = #tpu.pipeline_mode<synchronous>, transform_indices = @transform_8, window_bounds = array<i64: 3, 4, 1, 8>}, {pipeline_mode = #tpu.pipeline_mode<synchronous>, transform_indices = @transform_9, window_bounds = array<i64: 3, 4, 32, 8>}, {pipeline_mode = #tpu.pipeline_mode<synchronous>, transform_indices = @transform_10, window_bounds = array<i64: 3, 4, 1, 8>}, {pipeline_mode = #tpu.pipeline_mode<synchronous>, transform_indices = @transform_11, window_bounds = array<i64: 3, 4, 8, 32>}, {pipeline_mode = #tpu.pipeline_mode<synchronous>, transform_indices = @transform_12, window_bounds = array<i64: 3, 1, 32>}, {pipeline_mode = #tpu.pipeline_mode<synchronous>, transform_indices = @transform_13, window_bounds = array<i64: 3, 32, 64>}, {pipeline_mode = #tpu.pipeline_mode<synchronous>, transform_indices = @transform_14, window_bounds = array<i64: 3, 1, 64>}, {pipeline_mode = #tpu.pipeline_mode<synchronous>, transform_indices = @transform_15, window_bounds = array<i64: 3, 64, 32>}, {pipeline_mode = #tpu.pipeline_mode<synchronous>, transform_indices = @transform_16, window_bounds = array<i64: 3, 1, 32>}, {pipeline_mode = #tpu.pipeline_mode<synchronous>, transform_indices = @transform_17, window_bounds = array<i64: 3, 1, 32>}, {pipeline_mode = #tpu.pipeline_mode<synchronous>, transform_indices = @transform_18, window_bounds = array<i64: 3, 1, 32>}, {pipeline_mode = #tpu.pipeline_mode<synchronous>, transform_indices = @transform_19, window_bounds = array<i64: 3, 1, 32>}, {pipeline_mode = #tpu.pipeline_mode<synchronous>, transform_indices = @transform_20, window_bounds = array<i64: 3, 1, 32>}, {transform_indices = @transform_21, window_bounds = array<i64: 1, 8, 32>}]} {
    %c0 = arith.constant 0 : index
    %c0_0 = arith.constant 0 : index
    %c0_1 = arith.constant 0 : index
    %0 = vector.load %arg1[%c0, %c0_0, %c0_1] : memref<1x8x32xf32, #tpu.memory_space<vmem>>, vector<1x8x32xf32>
    %1 = vector.shape_cast %0 : vector<1x8x32xf32> to vector<8x32xf32>
    %c0_2 = arith.constant 0 : index
    %c0_3 = arith.constant 0 : index
    %c0_4 = arith.constant 0 : index
    %2 = vector.load %arg2[%c0_2, %c0_3, %c0_4] : memref<1x12x32xf32, #tpu.memory_space<vmem>>, vector<1x12x32xf32>
    %3 = vector.shape_cast %2 : vector<1x12x32xf32> to vector<12x32xf32>
    %c0_5 = arith.constant 0 : index
    %c0_6 = arith.constant 0 : index
    %c0_7 = arith.constant 0 : index
    %4 = vector.load %arg3[%c0_5, %c0_6, %c0_7] : memref<1x1x8xf32, #tpu.memory_space<vmem>>, vector<1x1x8xf32>
    %5 = vector.shape_cast %4 : vector<1x1x8xf32> to vector<1x8xf32>
    %cst = arith.constant 1.000000e+00 : f32
    %6 = vector.broadcast %cst : f32 to vector<1x8xf32>
    %7 = arith.subf %6, %5 : vector<1x8xf32>
    %cst_8 = arith.constant -1.000000e+09 : f32
    %8 = vector.broadcast %cst_8 : f32 to vector<1x8xf32>
    %9 = arith.mulf %7, %8 : vector<1x8xf32>
    %c0_9 = arith.constant 0 : index
    %c0_10 = arith.constant 0 : index
    %c0_11 = arith.constant 0 : index
    %10 = vector.load %arg4[%c0_9, %c0_10, %c0_11] : memref<1x1x12xf32, #tpu.memory_space<vmem>>, vector<1x1x12xf32>
    %11 = vector.shape_cast %10 : vector<1x1x12xf32> to vector<1x12xf32>
    %cst_12 = arith.constant 1.000000e+00 : f32
    %12 = vector.broadcast %cst_12 : f32 to vector<1x12xf32>
    %13 = arith.subf %12, %11 : vector<1x12xf32>
    %cst_13 = arith.constant -1.000000e+09 : f32
    %14 = vector.broadcast %cst_13 : f32 to vector<1x12xf32>
    %15 = arith.mulf %13, %14 : vector<1x12xf32>
    %c0_14 = arith.constant 0 : index
    %c0_15 = arith.constant 0 : index
    %c0_16 = arith.constant 0 : index
    %c0_17 = arith.constant 0 : index
    %16 = vector.load %arg6[%c0_14, %c0_15, %c0_16, %c0_17] : memref<3x4x32x8xf32, #tpu.memory_space<vmem>>, vector<1x1x32x8xf32>
    %17 = vector.shape_cast %16 : vector<1x1x32x8xf32> to vector<32x8xf32>
    %cst_18 = arith.constant dense<0.000000e+00> : vector<8x8xf32>
    %18 = tpu.matmul %1, %17, %cst_18 {dimension_numbers = #tpu.dot_dimension_numbers<[1], [0], [0], [1], [0, 0, 1, 1], [], []>} : vector<8x32xf32>, vector<32x8xf32>, vector<8x8xf32> -> vector<8x8xf32>
    %c0_19 = arith.constant 0 : index
    %c0_20 = arith.constant 0 : index
    %c0_21 = arith.constant 0 : index
    %c0_22 = arith.constant 0 : index
    %19 = vector.load %arg7[%c0_19, %c0_20, %c0_21, %c0_22] : memref<3x4x1x8xf32, #tpu.memory_space<vmem>>, vector<1x1x1x8xf32>
    %20 = vector.shape_cast %19 : vector<1x1x1x8xf32> to vector<1x8xf32>
    %21 = vector.broadcast %20 : vector<1x8xf32> to vector<8x8xf32>
    %22 = arith.addf %18, %21 : vector<8x8xf32>
    %c0_23 = arith.constant 0 : index
    %c0_24 = arith.constant 0 : index
    %c0_25 = arith.constant 0 : index
    %c0_26 = arith.constant 0 : index
    %23 = vector.load %arg8[%c0_23, %c0_24, %c0_25, %c0_26] : memref<3x4x32x8xf32, #tpu.memory_space<vmem>>, vector<1x1x32x8xf32>
    %24 = vector.shape_cast %23 : vector<1x1x32x8xf32> to vector<32x8xf32>
    %cst_27 = arith.constant dense<0.000000e+00> : vector<8x8xf32>
    %25 = tpu.matmul %1, %24, %cst_27 {dimension_numbers = #tpu.dot_dimension_numbers<[1], [0], [0], [1], [0, 0, 1, 1], [], []>} : vector<8x32xf32>, vector<32x8xf32>, vector<8x8xf32> -> vector<8x8xf32>
    %c0_28 = arith.constant 0 : index
    %c0_29 = arith.constant 0 : index
    %c0_30 = arith.constant 0 : index
    %c0_31 = arith.constant 0 : index
    %26 = vector.load %arg9[%c0_28, %c0_29, %c0_30, %c0_31] : memref<3x4x1x8xf32, #tpu.memory_space<vmem>>, vector<1x1x1x8xf32>
    %27 = vector.shape_cast %26 : vector<1x1x1x8xf32> to vector<1x8xf32>
    %28 = vector.broadcast %27 : vector<1x8xf32> to vector<8x8xf32>
    %29 = arith.addf %25, %28 : vector<8x8xf32>
    %c0_32 = arith.constant 0 : index
    %c0_33 = arith.constant 0 : index
    %c0_34 = arith.constant 0 : index
    %c0_35 = arith.constant 0 : index
    %30 = vector.load %arg10[%c0_32, %c0_33, %c0_34, %c0_35] : memref<3x4x32x8xf32, #tpu.memory_space<vmem>>, vector<1x1x32x8xf32>
    %31 = vector.shape_cast %30 : vector<1x1x32x8xf32> to vector<32x8xf32>
    %cst_36 = arith.constant dense<0.000000e+00> : vector<8x8xf32>
    %32 = tpu.matmul %1, %31, %cst_36 {dimension_numbers = #tpu.dot_dimension_numbers<[1], [0], [0], [1], [0, 0, 1, 1], [], []>} : vector<8x32xf32>, vector<32x8xf32>, vector<8x8xf32> -> vector<8x8xf32>
    %c0_37 = arith.constant 0 : index
    %c0_38 = arith.constant 0 : index
    %c0_39 = arith.constant 0 : index
    %c0_40 = arith.constant 0 : index
    %33 = vector.load %arg11[%c0_37, %c0_38, %c0_39, %c0_40] : memref<3x4x1x8xf32, #tpu.memory_space<vmem>>, vector<1x1x1x8xf32>
    %34 = vector.shape_cast %33 : vector<1x1x1x8xf32> to vector<1x8xf32>
    %35 = vector.broadcast %34 : vector<1x8xf32> to vector<8x8xf32>
    %36 = arith.addf %32, %35 : vector<8x8xf32>
    %cst_41 = arith.constant dense<0.000000e+00> : vector<8x8xf32>
    %37 = tpu.matmul %22, %29, %cst_41 {dimension_numbers = #tpu.dot_dimension_numbers<[1], [1], [0], [0], [0, 0, 1, 0], [], []>} : vector<8x8xf32>, vector<8x8xf32>, vector<8x8xf32> -> vector<8x8xf32>
    %cst_42 = arith.constant 0.353553385 : f32
    %38 = vector.broadcast %cst_42 : f32 to vector<8x8xf32>
    %39 = arith.mulf %37, %38 : vector<8x8xf32>
    %40 = vector.broadcast %9 : vector<1x8xf32> to vector<8x8xf32>
    %41 = arith.addf %39, %40 : vector<8x8xf32>
    %cst_43 = arith.constant dense<0xFF800000> : vector<8xf32>
    %42 = vector.multi_reduction <maximumf>, %41, %cst_43 [1] : vector<8x8xf32> to vector<8xf32>
    %43 = vector.shape_cast %42 : vector<8xf32> to vector<8x1xf32>
    %44 = vector.broadcast %43 : vector<8x1xf32> to vector<8x8xf32>
    %45 = arith.subf %41, %44 : vector<8x8xf32>
    %46 = math.exp %45 : vector<8x8xf32>
    %cst_44 = arith.constant dense<0.000000e+00> : vector<8xf32>
    %47 = vector.multi_reduction <add>, %46, %cst_44 [1] : vector<8x8xf32> to vector<8xf32>
    %48 = vector.shape_cast %47 : vector<8xf32> to vector<8x1xf32>
    %49 = tpu.reciprocal %48 {approx = true} : vector<8x1xf32> -> vector<8x1xf32>
    %50 = vector.broadcast %49 : vector<8x1xf32> to vector<8x8xf32>
    %51 = arith.mulf %46, %50 : vector<8x8xf32>
    %cst_45 = arith.constant dense<0.000000e+00> : vector<8x8xf32>
    %52 = tpu.matmul %51, %36, %cst_45 {dimension_numbers = #tpu.dot_dimension_numbers<[1], [0], [0], [1], [0, 0, 1, 1], [], []>} : vector<8x8xf32>, vector<8x8xf32>, vector<8x8xf32> -> vector<8x8xf32>
    %c0_46 = arith.constant 0 : index
    %c0_47 = arith.constant 0 : index
    %c0_48 = arith.constant 0 : index
    %c0_49 = arith.constant 0 : index
    %53 = vector.load %arg12[%c0_46, %c0_47, %c0_48, %c0_49] : memref<3x4x8x32xf32, #tpu.memory_space<vmem>>, vector<1x1x8x32xf32>
    %54 = vector.shape_cast %53 : vector<1x1x8x32xf32> to vector<8x32xf32>
    %cst_50 = arith.constant dense<0.000000e+00> : vector<8x32xf32>
    %55 = tpu.matmul %52, %54, %cst_50 {dimension_numbers = #tpu.dot_dimension_numbers<[1], [0], [0], [1], [0, 0, 1, 1], [], []>} : vector<8x8xf32>, vector<8x32xf32>, vector<8x32xf32> -> vector<8x32xf32>
    %c0_51 = arith.constant 0 : index
    %c1 = arith.constant 1 : index
    %c0_52 = arith.constant 0 : index
    %c0_53 = arith.constant 0 : index
    %56 = vector.load %arg6[%c0_51, %c1, %c0_52, %c0_53] : memref<3x4x32x8xf32, #tpu.memory_space<vmem>>, vector<1x1x32x8xf32>
    %57 = vector.shape_cast %56 : vector<1x1x32x8xf32> to vector<32x8xf32>
    %cst_54 = arith.constant dense<0.000000e+00> : vector<8x8xf32>
    %58 = tpu.matmul %1, %57, %cst_54 {dimension_numbers = #tpu.dot_dimension_numbers<[1], [0], [0], [1], [0, 0, 1, 1], [], []>} : vector<8x32xf32>, vector<32x8xf32>, vector<8x8xf32> -> vector<8x8xf32>
    %c0_55 = arith.constant 0 : index
    %c1_56 = arith.constant 1 : index
    %c0_57 = arith.constant 0 : index
    %c0_58 = arith.constant 0 : index
    %59 = vector.load %arg7[%c0_55, %c1_56, %c0_57, %c0_58] : memref<3x4x1x8xf32, #tpu.memory_space<vmem>>, vector<1x1x1x8xf32>
    %60 = vector.shape_cast %59 : vector<1x1x1x8xf32> to vector<1x8xf32>
    %61 = vector.broadcast %60 : vector<1x8xf32> to vector<8x8xf32>
    %62 = arith.addf %58, %61 : vector<8x8xf32>
    %c0_59 = arith.constant 0 : index
    %c1_60 = arith.constant 1 : index
    %c0_61 = arith.constant 0 : index
    %c0_62 = arith.constant 0 : index
    %63 = vector.load %arg8[%c0_59, %c1_60, %c0_61, %c0_62] : memref<3x4x32x8xf32, #tpu.memory_space<vmem>>, vector<1x1x32x8xf32>
    %64 = vector.shape_cast %63 : vector<1x1x32x8xf32> to vector<32x8xf32>
    %cst_63 = arith.constant dense<0.000000e+00> : vector<8x8xf32>
    %65 = tpu.matmul %1, %64, %cst_63 {dimension_numbers = #tpu.dot_dimension_numbers<[1], [0], [0], [1], [0, 0, 1, 1], [], []>} : vector<8x32xf32>, vector<32x8xf32>, vector<8x8xf32> -> vector<8x8xf32>
    %c0_64 = arith.constant 0 : index
    %c1_65 = arith.constant 1 : index
    %c0_66 = arith.constant 0 : index
    %c0_67 = arith.constant 0 : index
    %66 = vector.load %arg9[%c0_64, %c1_65, %c0_66, %c0_67] : memref<3x4x1x8xf32, #tpu.memory_space<vmem>>, vector<1x1x1x8xf32>
    %67 = vector.shape_cast %66 : vector<1x1x1x8xf32> to vector<1x8xf32>
    %68 = vector.broadcast %67 : vector<1x8xf32> to vector<8x8xf32>
    %69 = arith.addf %65, %68 : vector<8x8xf32>
    %c0_68 = arith.constant 0 : index
    %c1_69 = arith.constant 1 : index
    %c0_70 = arith.constant 0 : index
    %c0_71 = arith.constant 0 : index
    %70 = vector.load %arg10[%c0_68, %c1_69, %c0_70, %c0_71] : memref<3x4x32x8xf32, #tpu.memory_space<vmem>>, vector<1x1x32x8xf32>
    %71 = vector.shape_cast %70 : vector<1x1x32x8xf32> to vector<32x8xf32>
    %cst_72 = arith.constant dense<0.000000e+00> : vector<8x8xf32>
    %72 = tpu.matmul %1, %71, %cst_72 {dimension_numbers = #tpu.dot_dimension_numbers<[1], [0], [0], [1], [0, 0, 1, 1], [], []>} : vector<8x32xf32>, vector<32x8xf32>, vector<8x8xf32> -> vector<8x8xf32>
    %c0_73 = arith.constant 0 : index
    %c1_74 = arith.constant 1 : index
    %c0_75 = arith.constant 0 : index
    %c0_76 = arith.constant 0 : index
    %73 = vector.load %arg11[%c0_73, %c1_74, %c0_75, %c0_76] : memref<3x4x1x8xf32, #tpu.memory_space<vmem>>, vector<1x1x1x8xf32>
    %74 = vector.shape_cast %73 : vector<1x1x1x8xf32> to vector<1x8xf32>
    %75 = vector.broadcast %74 : vector<1x8xf32> to vector<8x8xf32>
    %76 = arith.addf %72, %75 : vector<8x8xf32>
    %cst_77 = arith.constant dense<0.000000e+00> : vector<8x8xf32>
    %77 = tpu.matmul %62, %69, %cst_77 {dimension_numbers = #tpu.dot_dimension_numbers<[1], [1], [0], [0], [0, 0, 1, 0], [], []>} : vector<8x8xf32>, vector<8x8xf32>, vector<8x8xf32> -> vector<8x8xf32>
    %cst_78 = arith.constant 0.353553385 : f32
    %78 = vector.broadcast %cst_78 : f32 to vector<8x8xf32>
    %79 = arith.mulf %77, %78 : vector<8x8xf32>
    %80 = vector.broadcast %9 : vector<1x8xf32> to vector<8x8xf32>
    %81 = arith.addf %79, %80 : vector<8x8xf32>
    %cst_79 = arith.constant dense<0xFF800000> : vector<8xf32>
    %82 = vector.multi_reduction <maximumf>, %81, %cst_79 [1] : vector<8x8xf32> to vector<8xf32>
    %83 = vector.shape_cast %82 : vector<8xf32> to vector<8x1xf32>
    %84 = vector.broadcast %83 : vector<8x1xf32> to vector<8x8xf32>
    %85 = arith.subf %81, %84 : vector<8x8xf32>
    %86 = math.exp %85 : vector<8x8xf32>
    %cst_80 = arith.constant dense<0.000000e+00> : vector<8xf32>
    %87 = vector.multi_reduction <add>, %86, %cst_80 [1] : vector<8x8xf32> to vector<8xf32>
    %88 = vector.shape_cast %87 : vector<8xf32> to vector<8x1xf32>
    %89 = tpu.reciprocal %88 {approx = true} : vector<8x1xf32> -> vector<8x1xf32>
    %90 = vector.broadcast %89 : vector<8x1xf32> to vector<8x8xf32>
    %91 = arith.mulf %86, %90 : vector<8x8xf32>
    %cst_81 = arith.constant dense<0.000000e+00> : vector<8x8xf32>
    %92 = tpu.matmul %91, %76, %cst_81 {dimension_numbers = #tpu.dot_dimension_numbers<[1], [0], [0], [1], [0, 0, 1, 1], [], []>} : vector<8x8xf32>, vector<8x8xf32>, vector<8x8xf32> -> vector<8x8xf32>
    %c0_82 = arith.constant 0 : index
    %c1_83 = arith.constant 1 : index
    %c0_84 = arith.constant 0 : index
    %c0_85 = arith.constant 0 : index
    %93 = vector.load %arg12[%c0_82, %c1_83, %c0_84, %c0_85] : memref<3x4x8x32xf32, #tpu.memory_space<vmem>>, vector<1x1x8x32xf32>
    %94 = vector.shape_cast %93 : vector<1x1x8x32xf32> to vector<8x32xf32>
    %cst_86 = arith.constant dense<0.000000e+00> : vector<8x32xf32>
    %95 = tpu.matmul %92, %94, %cst_86 {dimension_numbers = #tpu.dot_dimension_numbers<[1], [0], [0], [1], [0, 0, 1, 1], [], []>} : vector<8x8xf32>, vector<8x32xf32>, vector<8x32xf32> -> vector<8x32xf32>
    %96 = arith.addf %55, %95 : vector<8x32xf32>
    %c0_87 = arith.constant 0 : index
    %c2 = arith.constant 2 : index
    %c0_88 = arith.constant 0 : index
    %c0_89 = arith.constant 0 : index
    %97 = vector.load %arg6[%c0_87, %c2, %c0_88, %c0_89] : memref<3x4x32x8xf32, #tpu.memory_space<vmem>>, vector<1x1x32x8xf32>
    %98 = vector.shape_cast %97 : vector<1x1x32x8xf32> to vector<32x8xf32>
    %cst_90 = arith.constant dense<0.000000e+00> : vector<8x8xf32>
    %99 = tpu.matmul %1, %98, %cst_90 {dimension_numbers = #tpu.dot_dimension_numbers<[1], [0], [0], [1], [0, 0, 1, 1], [], []>} : vector<8x32xf32>, vector<32x8xf32>, vector<8x8xf32> -> vector<8x8xf32>
    %c0_91 = arith.constant 0 : index
    %c2_92 = arith.constant 2 : index
    %c0_93 = arith.constant 0 : index
    %c0_94 = arith.constant 0 : index
    %100 = vector.load %arg7[%c0_91, %c2_92, %c0_93, %c0_94] : memref<3x4x1x8xf32, #tpu.memory_space<vmem>>, vector<1x1x1x8xf32>
    %101 = vector.shape_cast %100 : vector<1x1x1x8xf32> to vector<1x8xf32>
    %102 = vector.broadcast %101 : vector<1x8xf32> to vector<8x8xf32>
    %103 = arith.addf %99, %102 : vector<8x8xf32>
    %c0_95 = arith.constant 0 : index
    %c2_96 = arith.constant 2 : index
    %c0_97 = arith.constant 0 : index
    %c0_98 = arith.constant 0 : index
    %104 = vector.load %arg8[%c0_95, %c2_96, %c0_97, %c0_98] : memref<3x4x32x8xf32, #tpu.memory_space<vmem>>, vector<1x1x32x8xf32>
    %105 = vector.shape_cast %104 : vector<1x1x32x8xf32> to vector<32x8xf32>
    %cst_99 = arith.constant dense<0.000000e+00> : vector<8x8xf32>
    %106 = tpu.matmul %1, %105, %cst_99 {dimension_numbers = #tpu.dot_dimension_numbers<[1], [0], [0], [1], [0, 0, 1, 1], [], []>} : vector<8x32xf32>, vector<32x8xf32>, vector<8x8xf32> -> vector<8x8xf32>
    %c0_100 = arith.constant 0 : index
    %c2_101 = arith.constant 2 : index
    %c0_102 = arith.constant 0 : index
    %c0_103 = arith.constant 0 : index
    %107 = vector.load %arg9[%c0_100, %c2_101, %c0_102, %c0_103] : memref<3x4x1x8xf32, #tpu.memory_space<vmem>>, vector<1x1x1x8xf32>
    %108 = vector.shape_cast %107 : vector<1x1x1x8xf32> to vector<1x8xf32>
    %109 = vector.broadcast %108 : vector<1x8xf32> to vector<8x8xf32>
    %110 = arith.addf %106, %109 : vector<8x8xf32>
    %c0_104 = arith.constant 0 : index
    %c2_105 = arith.constant 2 : index
    %c0_106 = arith.constant 0 : index
    %c0_107 = arith.constant 0 : index
    %111 = vector.load %arg10[%c0_104, %c2_105, %c0_106, %c0_107] : memref<3x4x32x8xf32, #tpu.memory_space<vmem>>, vector<1x1x32x8xf32>
    %112 = vector.shape_cast %111 : vector<1x1x32x8xf32> to vector<32x8xf32>
    %cst_108 = arith.constant dense<0.000000e+00> : vector<8x8xf32>
    %113 = tpu.matmul %1, %112, %cst_108 {dimension_numbers = #tpu.dot_dimension_numbers<[1], [0], [0], [1], [0, 0, 1, 1], [], []>} : vector<8x32xf32>, vector<32x8xf32>, vector<8x8xf32> -> vector<8x8xf32>
    %c0_109 = arith.constant 0 : index
    %c2_110 = arith.constant 2 : index
    %c0_111 = arith.constant 0 : index
    %c0_112 = arith.constant 0 : index
    %114 = vector.load %arg11[%c0_109, %c2_110, %c0_111, %c0_112] : memref<3x4x1x8xf32, #tpu.memory_space<vmem>>, vector<1x1x1x8xf32>
    %115 = vector.shape_cast %114 : vector<1x1x1x8xf32> to vector<1x8xf32>
    %116 = vector.broadcast %115 : vector<1x8xf32> to vector<8x8xf32>
    %117 = arith.addf %113, %116 : vector<8x8xf32>
    %cst_113 = arith.constant dense<0.000000e+00> : vector<8x8xf32>
    %118 = tpu.matmul %103, %110, %cst_113 {dimension_numbers = #tpu.dot_dimension_numbers<[1], [1], [0], [0], [0, 0, 1, 0], [], []>} : vector<8x8xf32>, vector<8x8xf32>, vector<8x8xf32> -> vector<8x8xf32>
    %cst_114 = arith.constant 0.353553385 : f32
    %119 = vector.broadcast %cst_114 : f32 to vector<8x8xf32>
    %120 = arith.mulf %118, %119 : vector<8x8xf32>
    %121 = vector.broadcast %9 : vector<1x8xf32> to vector<8x8xf32>
    %122 = arith.addf %120, %121 : vector<8x8xf32>
    %cst_115 = arith.constant dense<0xFF800000> : vector<8xf32>
    %123 = vector.multi_reduction <maximumf>, %122, %cst_115 [1] : vector<8x8xf32> to vector<8xf32>
    %124 = vector.shape_cast %123 : vector<8xf32> to vector<8x1xf32>
    %125 = vector.broadcast %124 : vector<8x1xf32> to vector<8x8xf32>
    %126 = arith.subf %122, %125 : vector<8x8xf32>
    %127 = math.exp %126 : vector<8x8xf32>
    %cst_116 = arith.constant dense<0.000000e+00> : vector<8xf32>
    %128 = vector.multi_reduction <add>, %127, %cst_116 [1] : vector<8x8xf32> to vector<8xf32>
    %129 = vector.shape_cast %128 : vector<8xf32> to vector<8x1xf32>
    %130 = tpu.reciprocal %129 {approx = true} : vector<8x1xf32> -> vector<8x1xf32>
    %131 = vector.broadcast %130 : vector<8x1xf32> to vector<8x8xf32>
    %132 = arith.mulf %127, %131 : vector<8x8xf32>
    %cst_117 = arith.constant dense<0.000000e+00> : vector<8x8xf32>
    %133 = tpu.matmul %132, %117, %cst_117 {dimension_numbers = #tpu.dot_dimension_numbers<[1], [0], [0], [1], [0, 0, 1, 1], [], []>} : vector<8x8xf32>, vector<8x8xf32>, vector<8x8xf32> -> vector<8x8xf32>
    %c0_118 = arith.constant 0 : index
    %c2_119 = arith.constant 2 : index
    %c0_120 = arith.constant 0 : index
    %c0_121 = arith.constant 0 : index
    %134 = vector.load %arg12[%c0_118, %c2_119, %c0_120, %c0_121] : memref<3x4x8x32xf32, #tpu.memory_space<vmem>>, vector<1x1x8x32xf32>
    %135 = vector.shape_cast %134 : vector<1x1x8x32xf32> to vector<8x32xf32>
    %cst_122 = arith.constant dense<0.000000e+00> : vector<8x32xf32>
    %136 = tpu.matmul %133, %135, %cst_122 {dimension_numbers = #tpu.dot_dimension_numbers<[1], [0], [0], [1], [0, 0, 1, 1], [], []>} : vector<8x8xf32>, vector<8x32xf32>, vector<8x32xf32> -> vector<8x32xf32>
    %137 = arith.addf %96, %136 : vector<8x32xf32>
    %c0_123 = arith.constant 0 : index
    %c3 = arith.constant 3 : index
    %c0_124 = arith.constant 0 : index
    %c0_125 = arith.constant 0 : index
    %138 = vector.load %arg6[%c0_123, %c3, %c0_124, %c0_125] : memref<3x4x32x8xf32, #tpu.memory_space<vmem>>, vector<1x1x32x8xf32>
    %139 = vector.shape_cast %138 : vector<1x1x32x8xf32> to vector<32x8xf32>
    %cst_126 = arith.constant dense<0.000000e+00> : vector<8x8xf32>
    %140 = tpu.matmul %1, %139, %cst_126 {dimension_numbers = #tpu.dot_dimension_numbers<[1], [0], [0], [1], [0, 0, 1, 1], [], []>} : vector<8x32xf32>, vector<32x8xf32>, vector<8x8xf32> -> vector<8x8xf32>
    %c0_127 = arith.constant 0 : index
    %c3_128 = arith.constant 3 : index
    %c0_129 = arith.constant 0 : index
    %c0_130 = arith.constant 0 : index
    %141 = vector.load %arg7[%c0_127, %c3_128, %c0_129, %c0_130] : memref<3x4x1x8xf32, #tpu.memory_space<vmem>>, vector<1x1x1x8xf32>
    %142 = vector.shape_cast %141 : vector<1x1x1x8xf32> to vector<1x8xf32>
    %143 = vector.broadcast %142 : vector<1x8xf32> to vector<8x8xf32>
    %144 = arith.addf %140, %143 : vector<8x8xf32>
    %c0_131 = arith.constant 0 : index
    %c3_132 = arith.constant 3 : index
    %c0_133 = arith.constant 0 : index
    %c0_134 = arith.constant 0 : index
    %145 = vector.load %arg8[%c0_131, %c3_132, %c0_133, %c0_134] : memref<3x4x32x8xf32, #tpu.memory_space<vmem>>, vector<1x1x32x8xf32>
    %146 = vector.shape_cast %145 : vector<1x1x32x8xf32> to vector<32x8xf32>
    %cst_135 = arith.constant dense<0.000000e+00> : vector<8x8xf32>
    %147 = tpu.matmul %1, %146, %cst_135 {dimension_numbers = #tpu.dot_dimension_numbers<[1], [0], [0], [1], [0, 0, 1, 1], [], []>} : vector<8x32xf32>, vector<32x8xf32>, vector<8x8xf32> -> vector<8x8xf32>
    %c0_136 = arith.constant 0 : index
    %c3_137 = arith.constant 3 : index
    %c0_138 = arith.constant 0 : index
    %c0_139 = arith.constant 0 : index
    %148 = vector.load %arg9[%c0_136, %c3_137, %c0_138, %c0_139] : memref<3x4x1x8xf32, #tpu.memory_space<vmem>>, vector<1x1x1x8xf32>
    %149 = vector.shape_cast %148 : vector<1x1x1x8xf32> to vector<1x8xf32>
    %150 = vector.broadcast %149 : vector<1x8xf32> to vector<8x8xf32>
    %151 = arith.addf %147, %150 : vector<8x8xf32>
    %c0_140 = arith.constant 0 : index
    %c3_141 = arith.constant 3 : index
    %c0_142 = arith.constant 0 : index
    %c0_143 = arith.constant 0 : index
    %152 = vector.load %arg10[%c0_140, %c3_141, %c0_142, %c0_143] : memref<3x4x32x8xf32, #tpu.memory_space<vmem>>, vector<1x1x32x8xf32>
    %153 = vector.shape_cast %152 : vector<1x1x32x8xf32> to vector<32x8xf32>
    %cst_144 = arith.constant dense<0.000000e+00> : vector<8x8xf32>
    %154 = tpu.matmul %1, %153, %cst_144 {dimension_numbers = #tpu.dot_dimension_numbers<[1], [0], [0], [1], [0, 0, 1, 1], [], []>} : vector<8x32xf32>, vector<32x8xf32>, vector<8x8xf32> -> vector<8x8xf32>
    %c0_145 = arith.constant 0 : index
    %c3_146 = arith.constant 3 : index
    %c0_147 = arith.constant 0 : index
    %c0_148 = arith.constant 0 : index
    %155 = vector.load %arg11[%c0_145, %c3_146, %c0_147, %c0_148] : memref<3x4x1x8xf32, #tpu.memory_space<vmem>>, vector<1x1x1x8xf32>
    %156 = vector.shape_cast %155 : vector<1x1x1x8xf32> to vector<1x8xf32>
    %157 = vector.broadcast %156 : vector<1x8xf32> to vector<8x8xf32>
    %158 = arith.addf %154, %157 : vector<8x8xf32>
    %cst_149 = arith.constant dense<0.000000e+00> : vector<8x8xf32>
    %159 = tpu.matmul %144, %151, %cst_149 {dimension_numbers = #tpu.dot_dimension_numbers<[1], [1], [0], [0], [0, 0, 1, 0], [], []>} : vector<8x8xf32>, vector<8x8xf32>, vector<8x8xf32> -> vector<8x8xf32>
    %cst_150 = arith.constant 0.353553385 : f32
    %160 = vector.broadcast %cst_150 : f32 to vector<8x8xf32>
    %161 = arith.mulf %159, %160 : vector<8x8xf32>
    %162 = vector.broadcast %9 : vector<1x8xf32> to vector<8x8xf32>
    %163 = arith.addf %161, %162 : vector<8x8xf32>
    %cst_151 = arith.constant dense<0xFF800000> : vector<8xf32>
    %164 = vector.multi_reduction <maximumf>, %163, %cst_151 [1] : vector<8x8xf32> to vector<8xf32>
    %165 = vector.shape_cast %164 : vector<8xf32> to vector<8x1xf32>
    %166 = vector.broadcast %165 : vector<8x1xf32> to vector<8x8xf32>
    %167 = arith.subf %163, %166 : vector<8x8xf32>
    %168 = math.exp %167 : vector<8x8xf32>
    %cst_152 = arith.constant dense<0.000000e+00> : vector<8xf32>
    %169 = vector.multi_reduction <add>, %168, %cst_152 [1] : vector<8x8xf32> to vector<8xf32>
    %170 = vector.shape_cast %169 : vector<8xf32> to vector<8x1xf32>
    %171 = tpu.reciprocal %170 {approx = true} : vector<8x1xf32> -> vector<8x1xf32>
    %172 = vector.broadcast %171 : vector<8x1xf32> to vector<8x8xf32>
    %173 = arith.mulf %168, %172 : vector<8x8xf32>
    %cst_153 = arith.constant dense<0.000000e+00> : vector<8x8xf32>
    %174 = tpu.matmul %173, %158, %cst_153 {dimension_numbers = #tpu.dot_dimension_numbers<[1], [0], [0], [1], [0, 0, 1, 1], [], []>} : vector<8x8xf32>, vector<8x8xf32>, vector<8x8xf32> -> vector<8x8xf32>
    %c0_154 = arith.constant 0 : index
    %c3_155 = arith.constant 3 : index
    %c0_156 = arith.constant 0 : index
    %c0_157 = arith.constant 0 : index
    %175 = vector.load %arg12[%c0_154, %c3_155, %c0_156, %c0_157] : memref<3x4x8x32xf32, #tpu.memory_space<vmem>>, vector<1x1x8x32xf32>
    %176 = vector.shape_cast %175 : vector<1x1x8x32xf32> to vector<8x32xf32>
    %cst_158 = arith.constant dense<0.000000e+00> : vector<8x32xf32>
    %177 = tpu.matmul %174, %176, %cst_158 {dimension_numbers = #tpu.dot_dimension_numbers<[1], [0], [0], [1], [0, 0, 1, 1], [], []>} : vector<8x8xf32>, vector<8x32xf32>, vector<8x32xf32> -> vector<8x32xf32>
    %178 = arith.addf %137, %177 : vector<8x32xf32>
    %c0_159 = arith.constant 0 : index
    %c0_160 = arith.constant 0 : index
    %c0_161 = arith.constant 0 : index
    %179 = vector.load %arg13[%c0_159, %c0_160, %c0_161] : memref<3x1x32xf32, #tpu.memory_space<vmem>>, vector<1x1x32xf32>
    %180 = vector.shape_cast %179 : vector<1x1x32xf32> to vector<1x32xf32>
    %181 = vector.broadcast %180 : vector<1x32xf32> to vector<8x32xf32>
    %182 = arith.addf %178, %181 : vector<8x32xf32>
    %183 = arith.addf %1, %182 : vector<8x32xf32>
    %c0_162 = arith.constant 0 : index
    %c0_163 = arith.constant 0 : index
    %c0_164 = arith.constant 0 : index
    %184 = vector.load %arg18[%c0_162, %c0_163, %c0_164] : memref<3x1x32xf32, #tpu.memory_space<vmem>>, vector<1x1x32xf32>
    %185 = vector.shape_cast %184 : vector<1x1x32xf32> to vector<1x32xf32>
    %c0_165 = arith.constant 0 : index
    %c0_166 = arith.constant 0 : index
    %c0_167 = arith.constant 0 : index
    %186 = vector.load %arg19[%c0_165, %c0_166, %c0_167] : memref<3x1x32xf32, #tpu.memory_space<vmem>>, vector<1x1x32xf32>
    %187 = vector.shape_cast %186 : vector<1x1x32xf32> to vector<1x32xf32>
    %cst_168 = arith.constant dense<0.000000e+00> : vector<8xf32>
    %188 = vector.multi_reduction <add>, %183, %cst_168 [1] : vector<8x32xf32> to vector<8xf32>
    %189 = vector.shape_cast %188 : vector<8xf32> to vector<8x1xf32>
    %cst_169 = arith.constant 3.200000e+01 : f32
    %190 = vector.broadcast %cst_169 : f32 to vector<8x1xf32>
    %191 = arith.divf %189, %190 : vector<8x1xf32>
    %192 = vector.broadcast %191 : vector<8x1xf32> to vector<8x32xf32>
    %193 = arith.subf %183, %192 : vector<8x32xf32>
    %194 = arith.mulf %193, %193 : vector<8x32xf32>
    %cst_170 = arith.constant dense<0.000000e+00> : vector<8xf32>
    %195 = vector.multi_reduction <add>, %194, %cst_170 [1] : vector<8x32xf32> to vector<8xf32>
    %196 = vector.shape_cast %195 : vector<8xf32> to vector<8x1xf32>
    %cst_171 = arith.constant 3.200000e+01 : f32
    %197 = vector.broadcast %cst_171 : f32 to vector<8x1xf32>
    %198 = arith.divf %196, %197 : vector<8x1xf32>
    %199 = vector.broadcast %191 : vector<8x1xf32> to vector<8x32xf32>
    %200 = arith.subf %183, %199 : vector<8x32xf32>
    %cst_172 = arith.constant 9.99999974E-6 : f32
    %201 = vector.broadcast %cst_172 : f32 to vector<8x1xf32>
    %202 = arith.addf %198, %201 : vector<8x1xf32>
    %203 = math.rsqrt %202 : vector<8x1xf32>
    %204 = vector.broadcast %203 : vector<8x1xf32> to vector<8x32xf32>
    %205 = arith.mulf %200, %204 : vector<8x32xf32>
    %206 = vector.broadcast %185 : vector<1x32xf32> to vector<8x32xf32>
    %207 = arith.mulf %205, %206 : vector<8x32xf32>
    %208 = vector.broadcast %187 : vector<1x32xf32> to vector<8x32xf32>
    %209 = arith.addf %207, %208 : vector<8x32xf32>
    %c0_173 = arith.constant 0 : index
    %c0_174 = arith.constant 0 : index
    %c0_175 = arith.constant 0 : index
    %210 = vector.load %arg14[%c0_173, %c0_174, %c0_175] : memref<3x32x64xf32, #tpu.memory_space<vmem>>, vector<1x32x64xf32>
    %211 = vector.shape_cast %210 : vector<1x32x64xf32> to vector<32x64xf32>
    %cst_176 = arith.constant dense<0.000000e+00> : vector<8x64xf32>
    %212 = tpu.matmul %209, %211, %cst_176 {dimension_numbers = #tpu.dot_dimension_numbers<[1], [0], [0], [1], [0, 0, 1, 1], [], []>} : vector<8x32xf32>, vector<32x64xf32>, vector<8x64xf32> -> vector<8x64xf32>
    %c0_177 = arith.constant 0 : index
    %c0_178 = arith.constant 0 : index
    %c0_179 = arith.constant 0 : index
    %213 = vector.load %arg15[%c0_177, %c0_178, %c0_179] : memref<3x1x64xf32, #tpu.memory_space<vmem>>, vector<1x1x64xf32>
    %214 = vector.shape_cast %213 : vector<1x1x64xf32> to vector<1x64xf32>
    %215 = vector.broadcast %214 : vector<1x64xf32> to vector<8x64xf32>
    %216 = arith.addf %212, %215 : vector<8x64xf32>
    %cst_180 = arith.constant 0.000000e+00 : f32
    %217 = vector.broadcast %cst_180 : f32 to vector<8x64xf32>
    %218 = arith.maximumf %216, %217 : vector<8x64xf32>
    %c0_181 = arith.constant 0 : index
    %c0_182 = arith.constant 0 : index
    %c0_183 = arith.constant 0 : index
    %219 = vector.load %arg16[%c0_181, %c0_182, %c0_183] : memref<3x64x32xf32, #tpu.memory_space<vmem>>, vector<1x64x32xf32>
    %220 = vector.shape_cast %219 : vector<1x64x32xf32> to vector<64x32xf32>
    %cst_184 = arith.constant dense<0.000000e+00> : vector<8x32xf32>
    %221 = tpu.matmul %218, %220, %cst_184 {dimension_numbers = #tpu.dot_dimension_numbers<[1], [0], [0], [1], [0, 0, 1, 1], [], []>} : vector<8x64xf32>, vector<64x32xf32>, vector<8x32xf32> -> vector<8x32xf32>
    %c0_185 = arith.constant 0 : index
    %c0_186 = arith.constant 0 : index
    %c0_187 = arith.constant 0 : index
    %222 = vector.load %arg17[%c0_185, %c0_186, %c0_187] : memref<3x1x32xf32, #tpu.memory_space<vmem>>, vector<1x1x32xf32>
    %223 = vector.shape_cast %222 : vector<1x1x32xf32> to vector<1x32xf32>
    %224 = vector.broadcast %223 : vector<1x32xf32> to vector<8x32xf32>
    %225 = arith.addf %221, %224 : vector<8x32xf32>
    %226 = arith.addf %209, %225 : vector<8x32xf32>
    %c0_188 = arith.constant 0 : index
    %c0_189 = arith.constant 0 : index
    %c0_190 = arith.constant 0 : index
    %227 = vector.load %arg20[%c0_188, %c0_189, %c0_190] : memref<3x1x32xf32, #tpu.memory_space<vmem>>, vector<1x1x32xf32>
    %228 = vector.shape_cast %227 : vector<1x1x32xf32> to vector<1x32xf32>
    %c0_191 = arith.constant 0 : index
    %c0_192 = arith.constant 0 : index
    %c0_193 = arith.constant 0 : index
    %229 = vector.load %arg21[%c0_191, %c0_192, %c0_193] : memref<3x1x32xf32, #tpu.memory_space<vmem>>, vector<1x1x32xf32>
    %230 = vector.shape_cast %229 : vector<1x1x32xf32> to vector<1x32xf32>
    %cst_194 = arith.constant dense<0.000000e+00> : vector<8xf32>
    %231 = vector.multi_reduction <add>, %226, %cst_194 [1] : vector<8x32xf32> to vector<8xf32>
    %232 = vector.shape_cast %231 : vector<8xf32> to vector<8x1xf32>
    %cst_195 = arith.constant 3.200000e+01 : f32
    %233 = vector.broadcast %cst_195 : f32 to vector<8x1xf32>
    %234 = arith.divf %232, %233 : vector<8x1xf32>
    %235 = vector.broadcast %234 : vector<8x1xf32> to vector<8x32xf32>
    %236 = arith.subf %226, %235 : vector<8x32xf32>
    %237 = arith.mulf %236, %236 : vector<8x32xf32>
    %cst_196 = arith.constant dense<0.000000e+00> : vector<8xf32>
    %238 = vector.multi_reduction <add>, %237, %cst_196 [1] : vector<8x32xf32> to vector<8xf32>
    %239 = vector.shape_cast %238 : vector<8xf32> to vector<8x1xf32>
    %cst_197 = arith.constant 3.200000e+01 : f32
    %240 = vector.broadcast %cst_197 : f32 to vector<8x1xf32>
    %241 = arith.divf %239, %240 : vector<8x1xf32>
    %242 = vector.broadcast %234 : vector<8x1xf32> to vector<8x32xf32>
    %243 = arith.subf %226, %242 : vector<8x32xf32>
    %cst_198 = arith.constant 9.99999974E-6 : f32
    %244 = vector.broadcast %cst_198 : f32 to vector<8x1xf32>
    %245 = arith.addf %241, %244 : vector<8x1xf32>
    %246 = math.rsqrt %245 : vector<8x1xf32>
    %247 = vector.broadcast %246 : vector<8x1xf32> to vector<8x32xf32>
    %248 = arith.mulf %243, %247 : vector<8x32xf32>
    %249 = vector.broadcast %228 : vector<1x32xf32> to vector<8x32xf32>
    %250 = arith.mulf %248, %249 : vector<8x32xf32>
    %251 = vector.broadcast %230 : vector<1x32xf32> to vector<8x32xf32>
    %252 = arith.addf %250, %251 : vector<8x32xf32>
    %c1_199 = arith.constant 1 : index
    %c0_200 = arith.constant 0 : index
    %c0_201 = arith.constant 0 : index
    %c0_202 = arith.constant 0 : index
    %253 = vector.load %arg6[%c1_199, %c0_200, %c0_201, %c0_202] : memref<3x4x32x8xf32, #tpu.memory_space<vmem>>, vector<1x1x32x8xf32>
    %254 = vector.shape_cast %253 : vector<1x1x32x8xf32> to vector<32x8xf32>
    %cst_203 = arith.constant dense<0.000000e+00> : vector<8x8xf32>
    %255 = tpu.matmul %252, %254, %cst_203 {dimension_numbers = #tpu.dot_dimension_numbers<[1], [0], [0], [1], [0, 0, 1, 1], [], []>} : vector<8x32xf32>, vector<32x8xf32>, vector<8x8xf32> -> vector<8x8xf32>
    %c1_204 = arith.constant 1 : index
    %c0_205 = arith.constant 0 : index
    %c0_206 = arith.constant 0 : index
    %c0_207 = arith.constant 0 : index
    %256 = vector.load %arg7[%c1_204, %c0_205, %c0_206, %c0_207] : memref<3x4x1x8xf32, #tpu.memory_space<vmem>>, vector<1x1x1x8xf32>
    %257 = vector.shape_cast %256 : vector<1x1x1x8xf32> to vector<1x8xf32>
    %258 = vector.broadcast %257 : vector<1x8xf32> to vector<8x8xf32>
    %259 = arith.addf %255, %258 : vector<8x8xf32>
    %c1_208 = arith.constant 1 : index
    %c0_209 = arith.constant 0 : index
    %c0_210 = arith.constant 0 : index
    %c0_211 = arith.constant 0 : index
    %260 = vector.load %arg8[%c1_208, %c0_209, %c0_210, %c0_211] : memref<3x4x32x8xf32, #tpu.memory_space<vmem>>, vector<1x1x32x8xf32>
    %261 = vector.shape_cast %260 : vector<1x1x32x8xf32> to vector<32x8xf32>
    %cst_212 = arith.constant dense<0.000000e+00> : vector<12x8xf32>
    %262 = tpu.matmul %3, %261, %cst_212 {dimension_numbers = #tpu.dot_dimension_numbers<[1], [0], [0], [1], [0, 0, 1, 1], [], []>} : vector<12x32xf32>, vector<32x8xf32>, vector<12x8xf32> -> vector<12x8xf32>
    %c1_213 = arith.constant 1 : index
    %c0_214 = arith.constant 0 : index
    %c0_215 = arith.constant 0 : index
    %c0_216 = arith.constant 0 : index
    %263 = vector.load %arg9[%c1_213, %c0_214, %c0_215, %c0_216] : memref<3x4x1x8xf32, #tpu.memory_space<vmem>>, vector<1x1x1x8xf32>
    %264 = vector.shape_cast %263 : vector<1x1x1x8xf32> to vector<1x8xf32>
    %265 = vector.broadcast %264 : vector<1x8xf32> to vector<12x8xf32>
    %266 = arith.addf %262, %265 : vector<12x8xf32>
    %c1_217 = arith.constant 1 : index
    %c0_218 = arith.constant 0 : index
    %c0_219 = arith.constant 0 : index
    %c0_220 = arith.constant 0 : index
    %267 = vector.load %arg10[%c1_217, %c0_218, %c0_219, %c0_220] : memref<3x4x32x8xf32, #tpu.memory_space<vmem>>, vector<1x1x32x8xf32>
    %268 = vector.shape_cast %267 : vector<1x1x32x8xf32> to vector<32x8xf32>
    %cst_221 = arith.constant dense<0.000000e+00> : vector<12x8xf32>
    %269 = tpu.matmul %3, %268, %cst_221 {dimension_numbers = #tpu.dot_dimension_numbers<[1], [0], [0], [1], [0, 0, 1, 1], [], []>} : vector<12x32xf32>, vector<32x8xf32>, vector<12x8xf32> -> vector<12x8xf32>
    %c1_222 = arith.constant 1 : index
    %c0_223 = arith.constant 0 : index
    %c0_224 = arith.constant 0 : index
    %c0_225 = arith.constant 0 : index
    %270 = vector.load %arg11[%c1_222, %c0_223, %c0_224, %c0_225] : memref<3x4x1x8xf32, #tpu.memory_space<vmem>>, vector<1x1x1x8xf32>
    %271 = vector.shape_cast %270 : vector<1x1x1x8xf32> to vector<1x8xf32>
    %272 = vector.broadcast %271 : vector<1x8xf32> to vector<12x8xf32>
    %273 = arith.addf %269, %272 : vector<12x8xf32>
    %cst_226 = arith.constant dense<0.000000e+00> : vector<8x12xf32>
    %274 = tpu.matmul %259, %266, %cst_226 {dimension_numbers = #tpu.dot_dimension_numbers<[1], [1], [0], [0], [0, 0, 1, 0], [], []>} : vector<8x8xf32>, vector<12x8xf32>, vector<8x12xf32> -> vector<8x12xf32>
    %cst_227 = arith.constant 0.353553385 : f32
    %275 = vector.broadcast %cst_227 : f32 to vector<8x12xf32>
    %276 = arith.mulf %274, %275 : vector<8x12xf32>
    %277 = vector.broadcast %15 : vector<1x12xf32> to vector<8x12xf32>
    %278 = arith.addf %276, %277 : vector<8x12xf32>
    %c0_228 = arith.constant 0 : index
    %c0_229 = arith.constant 0 : index
    %c0_230 = arith.constant 0 : index
    %c0_231 = arith.constant 0 : index
    %279 = vector.load %arg5[%c0_228, %c0_229, %c0_230, %c0_231] : memref<1x4x8x12xf32, #tpu.memory_space<vmem>>, vector<1x1x8x12xf32>
    %280 = vector.shape_cast %279 : vector<1x1x8x12xf32> to vector<8x12xf32>
    %281 = arith.addf %278, %280 : vector<8x12xf32>
    %cst_232 = arith.constant dense<0xFF800000> : vector<8xf32>
    %282 = vector.multi_reduction <maximumf>, %281, %cst_232 [1] : vector<8x12xf32> to vector<8xf32>
    %283 = vector.shape_cast %282 : vector<8xf32> to vector<8x1xf32>
    %284 = vector.broadcast %283 : vector<8x1xf32> to vector<8x12xf32>
    %285 = arith.subf %281, %284 : vector<8x12xf32>
    %286 = math.exp %285 : vector<8x12xf32>
    %cst_233 = arith.constant dense<0.000000e+00> : vector<8xf32>
    %287 = vector.multi_reduction <add>, %286, %cst_233 [1] : vector<8x12xf32> to vector<8xf32>
    %288 = vector.shape_cast %287 : vector<8xf32> to vector<8x1xf32>
    %289 = tpu.reciprocal %288 {approx = true} : vector<8x1xf32> -> vector<8x1xf32>
    %290 = vector.broadcast %289 : vector<8x1xf32> to vector<8x12xf32>
    %291 = arith.mulf %286, %290 : vector<8x12xf32>
    %cst_234 = arith.constant dense<0.000000e+00> : vector<8x8xf32>
    %292 = tpu.matmul %291, %273, %cst_234 {dimension_numbers = #tpu.dot_dimension_numbers<[1], [0], [0], [1], [0, 0, 1, 1], [], []>} : vector<8x12xf32>, vector<12x8xf32>, vector<8x8xf32> -> vector<8x8xf32>
    %c1_235 = arith.constant 1 : index
    %c0_236 = arith.constant 0 : index
    %c0_237 = arith.constant 0 : index
    %c0_238 = arith.constant 0 : index
    %293 = vector.load %arg12[%c1_235, %c0_236, %c0_237, %c0_238] : memref<3x4x8x32xf32, #tpu.memory_space<vmem>>, vector<1x1x8x32xf32>
    %294 = vector.shape_cast %293 : vector<1x1x8x32xf32> to vector<8x32xf32>
    %cst_239 = arith.constant dense<0.000000e+00> : vector<8x32xf32>
    %295 = tpu.matmul %292, %294, %cst_239 {dimension_numbers = #tpu.dot_dimension_numbers<[1], [0], [0], [1], [0, 0, 1, 1], [], []>} : vector<8x8xf32>, vector<8x32xf32>, vector<8x32xf32> -> vector<8x32xf32>
    %c1_240 = arith.constant 1 : index
    %c1_241 = arith.constant 1 : index
    %c0_242 = arith.constant 0 : index
    %c0_243 = arith.constant 0 : index
    %296 = vector.load %arg6[%c1_240, %c1_241, %c0_242, %c0_243] : memref<3x4x32x8xf32, #tpu.memory_space<vmem>>, vector<1x1x32x8xf32>
    %297 = vector.shape_cast %296 : vector<1x1x32x8xf32> to vector<32x8xf32>
    %cst_244 = arith.constant dense<0.000000e+00> : vector<8x8xf32>
    %298 = tpu.matmul %252, %297, %cst_244 {dimension_numbers = #tpu.dot_dimension_numbers<[1], [0], [0], [1], [0, 0, 1, 1], [], []>} : vector<8x32xf32>, vector<32x8xf32>, vector<8x8xf32> -> vector<8x8xf32>
    %c1_245 = arith.constant 1 : index
    %c1_246 = arith.constant 1 : index
    %c0_247 = arith.constant 0 : index
    %c0_248 = arith.constant 0 : index
    %299 = vector.load %arg7[%c1_245, %c1_246, %c0_247, %c0_248] : memref<3x4x1x8xf32, #tpu.memory_space<vmem>>, vector<1x1x1x8xf32>
    %300 = vector.shape_cast %299 : vector<1x1x1x8xf32> to vector<1x8xf32>
    %301 = vector.broadcast %300 : vector<1x8xf32> to vector<8x8xf32>
    %302 = arith.addf %298, %301 : vector<8x8xf32>
    %c1_249 = arith.constant 1 : index
    %c1_250 = arith.constant 1 : index
    %c0_251 = arith.constant 0 : index
    %c0_252 = arith.constant 0 : index
    %303 = vector.load %arg8[%c1_249, %c1_250, %c0_251, %c0_252] : memref<3x4x32x8xf32, #tpu.memory_space<vmem>>, vector<1x1x32x8xf32>
    %304 = vector.shape_cast %303 : vector<1x1x32x8xf32> to vector<32x8xf32>
    %cst_253 = arith.constant dense<0.000000e+00> : vector<12x8xf32>
    %305 = tpu.matmul %3, %304, %cst_253 {dimension_numbers = #tpu.dot_dimension_numbers<[1], [0], [0], [1], [0, 0, 1, 1], [], []>} : vector<12x32xf32>, vector<32x8xf32>, vector<12x8xf32> -> vector<12x8xf32>
    %c1_254 = arith.constant 1 : index
    %c1_255 = arith.constant 1 : index
    %c0_256 = arith.constant 0 : index
    %c0_257 = arith.constant 0 : index
    %306 = vector.load %arg9[%c1_254, %c1_255, %c0_256, %c0_257] : memref<3x4x1x8xf32, #tpu.memory_space<vmem>>, vector<1x1x1x8xf32>
    %307 = vector.shape_cast %306 : vector<1x1x1x8xf32> to vector<1x8xf32>
    %308 = vector.broadcast %307 : vector<1x8xf32> to vector<12x8xf32>
    %309 = arith.addf %305, %308 : vector<12x8xf32>
    %c1_258 = arith.constant 1 : index
    %c1_259 = arith.constant 1 : index
    %c0_260 = arith.constant 0 : index
    %c0_261 = arith.constant 0 : index
    %310 = vector.load %arg10[%c1_258, %c1_259, %c0_260, %c0_261] : memref<3x4x32x8xf32, #tpu.memory_space<vmem>>, vector<1x1x32x8xf32>
    %311 = vector.shape_cast %310 : vector<1x1x32x8xf32> to vector<32x8xf32>
    %cst_262 = arith.constant dense<0.000000e+00> : vector<12x8xf32>
    %312 = tpu.matmul %3, %311, %cst_262 {dimension_numbers = #tpu.dot_dimension_numbers<[1], [0], [0], [1], [0, 0, 1, 1], [], []>} : vector<12x32xf32>, vector<32x8xf32>, vector<12x8xf32> -> vector<12x8xf32>
    %c1_263 = arith.constant 1 : index
    %c1_264 = arith.constant 1 : index
    %c0_265 = arith.constant 0 : index
    %c0_266 = arith.constant 0 : index
    %313 = vector.load %arg11[%c1_263, %c1_264, %c0_265, %c0_266] : memref<3x4x1x8xf32, #tpu.memory_space<vmem>>, vector<1x1x1x8xf32>
    %314 = vector.shape_cast %313 : vector<1x1x1x8xf32> to vector<1x8xf32>
    %315 = vector.broadcast %314 : vector<1x8xf32> to vector<12x8xf32>
    %316 = arith.addf %312, %315 : vector<12x8xf32>
    %cst_267 = arith.constant dense<0.000000e+00> : vector<8x12xf32>
    %317 = tpu.matmul %302, %309, %cst_267 {dimension_numbers = #tpu.dot_dimension_numbers<[1], [1], [0], [0], [0, 0, 1, 0], [], []>} : vector<8x8xf32>, vector<12x8xf32>, vector<8x12xf32> -> vector<8x12xf32>
    %cst_268 = arith.constant 0.353553385 : f32
    %318 = vector.broadcast %cst_268 : f32 to vector<8x12xf32>
    %319 = arith.mulf %317, %318 : vector<8x12xf32>
    %320 = vector.broadcast %15 : vector<1x12xf32> to vector<8x12xf32>
    %321 = arith.addf %319, %320 : vector<8x12xf32>
    %c0_269 = arith.constant 0 : index
    %c1_270 = arith.constant 1 : index
    %c0_271 = arith.constant 0 : index
    %c0_272 = arith.constant 0 : index
    %322 = vector.load %arg5[%c0_269, %c1_270, %c0_271, %c0_272] : memref<1x4x8x12xf32, #tpu.memory_space<vmem>>, vector<1x1x8x12xf32>
    %323 = vector.shape_cast %322 : vector<1x1x8x12xf32> to vector<8x12xf32>
    %324 = arith.addf %321, %323 : vector<8x12xf32>
    %cst_273 = arith.constant dense<0xFF800000> : vector<8xf32>
    %325 = vector.multi_reduction <maximumf>, %324, %cst_273 [1] : vector<8x12xf32> to vector<8xf32>
    %326 = vector.shape_cast %325 : vector<8xf32> to vector<8x1xf32>
    %327 = vector.broadcast %326 : vector<8x1xf32> to vector<8x12xf32>
    %328 = arith.subf %324, %327 : vector<8x12xf32>
    %329 = math.exp %328 : vector<8x12xf32>
    %cst_274 = arith.constant dense<0.000000e+00> : vector<8xf32>
    %330 = vector.multi_reduction <add>, %329, %cst_274 [1] : vector<8x12xf32> to vector<8xf32>
    %331 = vector.shape_cast %330 : vector<8xf32> to vector<8x1xf32>
    %332 = tpu.reciprocal %331 {approx = true} : vector<8x1xf32> -> vector<8x1xf32>
    %333 = vector.broadcast %332 : vector<8x1xf32> to vector<8x12xf32>
    %334 = arith.mulf %329, %333 : vector<8x12xf32>
    %cst_275 = arith.constant dense<0.000000e+00> : vector<8x8xf32>
    %335 = tpu.matmul %334, %316, %cst_275 {dimension_numbers = #tpu.dot_dimension_numbers<[1], [0], [0], [1], [0, 0, 1, 1], [], []>} : vector<8x12xf32>, vector<12x8xf32>, vector<8x8xf32> -> vector<8x8xf32>
    %c1_276 = arith.constant 1 : index
    %c1_277 = arith.constant 1 : index
    %c0_278 = arith.constant 0 : index
    %c0_279 = arith.constant 0 : index
    %336 = vector.load %arg12[%c1_276, %c1_277, %c0_278, %c0_279] : memref<3x4x8x32xf32, #tpu.memory_space<vmem>>, vector<1x1x8x32xf32>
    %337 = vector.shape_cast %336 : vector<1x1x8x32xf32> to vector<8x32xf32>
    %cst_280 = arith.constant dense<0.000000e+00> : vector<8x32xf32>
    %338 = tpu.matmul %335, %337, %cst_280 {dimension_numbers = #tpu.dot_dimension_numbers<[1], [0], [0], [1], [0, 0, 1, 1], [], []>} : vector<8x8xf32>, vector<8x32xf32>, vector<8x32xf32> -> vector<8x32xf32>
    %339 = arith.addf %295, %338 : vector<8x32xf32>
    %c1_281 = arith.constant 1 : index
    %c2_282 = arith.constant 2 : index
    %c0_283 = arith.constant 0 : index
    %c0_284 = arith.constant 0 : index
    %340 = vector.load %arg6[%c1_281, %c2_282, %c0_283, %c0_284] : memref<3x4x32x8xf32, #tpu.memory_space<vmem>>, vector<1x1x32x8xf32>
    %341 = vector.shape_cast %340 : vector<1x1x32x8xf32> to vector<32x8xf32>
    %cst_285 = arith.constant dense<0.000000e+00> : vector<8x8xf32>
    %342 = tpu.matmul %252, %341, %cst_285 {dimension_numbers = #tpu.dot_dimension_numbers<[1], [0], [0], [1], [0, 0, 1, 1], [], []>} : vector<8x32xf32>, vector<32x8xf32>, vector<8x8xf32> -> vector<8x8xf32>
    %c1_286 = arith.constant 1 : index
    %c2_287 = arith.constant 2 : index
    %c0_288 = arith.constant 0 : index
    %c0_289 = arith.constant 0 : index
    %343 = vector.load %arg7[%c1_286, %c2_287, %c0_288, %c0_289] : memref<3x4x1x8xf32, #tpu.memory_space<vmem>>, vector<1x1x1x8xf32>
    %344 = vector.shape_cast %343 : vector<1x1x1x8xf32> to vector<1x8xf32>
    %345 = vector.broadcast %344 : vector<1x8xf32> to vector<8x8xf32>
    %346 = arith.addf %342, %345 : vector<8x8xf32>
    %c1_290 = arith.constant 1 : index
    %c2_291 = arith.constant 2 : index
    %c0_292 = arith.constant 0 : index
    %c0_293 = arith.constant 0 : index
    %347 = vector.load %arg8[%c1_290, %c2_291, %c0_292, %c0_293] : memref<3x4x32x8xf32, #tpu.memory_space<vmem>>, vector<1x1x32x8xf32>
    %348 = vector.shape_cast %347 : vector<1x1x32x8xf32> to vector<32x8xf32>
    %cst_294 = arith.constant dense<0.000000e+00> : vector<12x8xf32>
    %349 = tpu.matmul %3, %348, %cst_294 {dimension_numbers = #tpu.dot_dimension_numbers<[1], [0], [0], [1], [0, 0, 1, 1], [], []>} : vector<12x32xf32>, vector<32x8xf32>, vector<12x8xf32> -> vector<12x8xf32>
    %c1_295 = arith.constant 1 : index
    %c2_296 = arith.constant 2 : index
    %c0_297 = arith.constant 0 : index
    %c0_298 = arith.constant 0 : index
    %350 = vector.load %arg9[%c1_295, %c2_296, %c0_297, %c0_298] : memref<3x4x1x8xf32, #tpu.memory_space<vmem>>, vector<1x1x1x8xf32>
    %351 = vector.shape_cast %350 : vector<1x1x1x8xf32> to vector<1x8xf32>
    %352 = vector.broadcast %351 : vector<1x8xf32> to vector<12x8xf32>
    %353 = arith.addf %349, %352 : vector<12x8xf32>
    %c1_299 = arith.constant 1 : index
    %c2_300 = arith.constant 2 : index
    %c0_301 = arith.constant 0 : index
    %c0_302 = arith.constant 0 : index
    %354 = vector.load %arg10[%c1_299, %c2_300, %c0_301, %c0_302] : memref<3x4x32x8xf32, #tpu.memory_space<vmem>>, vector<1x1x32x8xf32>
    %355 = vector.shape_cast %354 : vector<1x1x32x8xf32> to vector<32x8xf32>
    %cst_303 = arith.constant dense<0.000000e+00> : vector<12x8xf32>
    %356 = tpu.matmul %3, %355, %cst_303 {dimension_numbers = #tpu.dot_dimension_numbers<[1], [0], [0], [1], [0, 0, 1, 1], [], []>} : vector<12x32xf32>, vector<32x8xf32>, vector<12x8xf32> -> vector<12x8xf32>
    %c1_304 = arith.constant 1 : index
    %c2_305 = arith.constant 2 : index
    %c0_306 = arith.constant 0 : index
    %c0_307 = arith.constant 0 : index
    %357 = vector.load %arg11[%c1_304, %c2_305, %c0_306, %c0_307] : memref<3x4x1x8xf32, #tpu.memory_space<vmem>>, vector<1x1x1x8xf32>
    %358 = vector.shape_cast %357 : vector<1x1x1x8xf32> to vector<1x8xf32>
    %359 = vector.broadcast %358 : vector<1x8xf32> to vector<12x8xf32>
    %360 = arith.addf %356, %359 : vector<12x8xf32>
    %cst_308 = arith.constant dense<0.000000e+00> : vector<8x12xf32>
    %361 = tpu.matmul %346, %353, %cst_308 {dimension_numbers = #tpu.dot_dimension_numbers<[1], [1], [0], [0], [0, 0, 1, 0], [], []>} : vector<8x8xf32>, vector<12x8xf32>, vector<8x12xf32> -> vector<8x12xf32>
    %cst_309 = arith.constant 0.353553385 : f32
    %362 = vector.broadcast %cst_309 : f32 to vector<8x12xf32>
    %363 = arith.mulf %361, %362 : vector<8x12xf32>
    %364 = vector.broadcast %15 : vector<1x12xf32> to vector<8x12xf32>
    %365 = arith.addf %363, %364 : vector<8x12xf32>
    %c0_310 = arith.constant 0 : index
    %c2_311 = arith.constant 2 : index
    %c0_312 = arith.constant 0 : index
    %c0_313 = arith.constant 0 : index
    %366 = vector.load %arg5[%c0_310, %c2_311, %c0_312, %c0_313] : memref<1x4x8x12xf32, #tpu.memory_space<vmem>>, vector<1x1x8x12xf32>
    %367 = vector.shape_cast %366 : vector<1x1x8x12xf32> to vector<8x12xf32>
    %368 = arith.addf %365, %367 : vector<8x12xf32>
    %cst_314 = arith.constant dense<0xFF800000> : vector<8xf32>
    %369 = vector.multi_reduction <maximumf>, %368, %cst_314 [1] : vector<8x12xf32> to vector<8xf32>
    %370 = vector.shape_cast %369 : vector<8xf32> to vector<8x1xf32>
    %371 = vector.broadcast %370 : vector<8x1xf32> to vector<8x12xf32>
    %372 = arith.subf %368, %371 : vector<8x12xf32>
    %373 = math.exp %372 : vector<8x12xf32>
    %cst_315 = arith.constant dense<0.000000e+00> : vector<8xf32>
    %374 = vector.multi_reduction <add>, %373, %cst_315 [1] : vector<8x12xf32> to vector<8xf32>
    %375 = vector.shape_cast %374 : vector<8xf32> to vector<8x1xf32>
    %376 = tpu.reciprocal %375 {approx = true} : vector<8x1xf32> -> vector<8x1xf32>
    %377 = vector.broadcast %376 : vector<8x1xf32> to vector<8x12xf32>
    %378 = arith.mulf %373, %377 : vector<8x12xf32>
    %cst_316 = arith.constant dense<0.000000e+00> : vector<8x8xf32>
    %379 = tpu.matmul %378, %360, %cst_316 {dimension_numbers = #tpu.dot_dimension_numbers<[1], [0], [0], [1], [0, 0, 1, 1], [], []>} : vector<8x12xf32>, vector<12x8xf32>, vector<8x8xf32> -> vector<8x8xf32>
    %c1_317 = arith.constant 1 : index
    %c2_318 = arith.constant 2 : index
    %c0_319 = arith.constant 0 : index
    %c0_320 = arith.constant 0 : index
    %380 = vector.load %arg12[%c1_317, %c2_318, %c0_319, %c0_320] : memref<3x4x8x32xf32, #tpu.memory_space<vmem>>, vector<1x1x8x32xf32>
    %381 = vector.shape_cast %380 : vector<1x1x8x32xf32> to vector<8x32xf32>
    %cst_321 = arith.constant dense<0.000000e+00> : vector<8x32xf32>
    %382 = tpu.matmul %379, %381, %cst_321 {dimension_numbers = #tpu.dot_dimension_numbers<[1], [0], [0], [1], [0, 0, 1, 1], [], []>} : vector<8x8xf32>, vector<8x32xf32>, vector<8x32xf32> -> vector<8x32xf32>
    %383 = arith.addf %339, %382 : vector<8x32xf32>
    %c1_322 = arith.constant 1 : index
    %c3_323 = arith.constant 3 : index
    %c0_324 = arith.constant 0 : index
    %c0_325 = arith.constant 0 : index
    %384 = vector.load %arg6[%c1_322, %c3_323, %c0_324, %c0_325] : memref<3x4x32x8xf32, #tpu.memory_space<vmem>>, vector<1x1x32x8xf32>
    %385 = vector.shape_cast %384 : vector<1x1x32x8xf32> to vector<32x8xf32>
    %cst_326 = arith.constant dense<0.000000e+00> : vector<8x8xf32>
    %386 = tpu.matmul %252, %385, %cst_326 {dimension_numbers = #tpu.dot_dimension_numbers<[1], [0], [0], [1], [0, 0, 1, 1], [], []>} : vector<8x32xf32>, vector<32x8xf32>, vector<8x8xf32> -> vector<8x8xf32>
    %c1_327 = arith.constant 1 : index
    %c3_328 = arith.constant 3 : index
    %c0_329 = arith.constant 0 : index
    %c0_330 = arith.constant 0 : index
    %387 = vector.load %arg7[%c1_327, %c3_328, %c0_329, %c0_330] : memref<3x4x1x8xf32, #tpu.memory_space<vmem>>, vector<1x1x1x8xf32>
    %388 = vector.shape_cast %387 : vector<1x1x1x8xf32> to vector<1x8xf32>
    %389 = vector.broadcast %388 : vector<1x8xf32> to vector<8x8xf32>
    %390 = arith.addf %386, %389 : vector<8x8xf32>
    %c1_331 = arith.constant 1 : index
    %c3_332 = arith.constant 3 : index
    %c0_333 = arith.constant 0 : index
    %c0_334 = arith.constant 0 : index
    %391 = vector.load %arg8[%c1_331, %c3_332, %c0_333, %c0_334] : memref<3x4x32x8xf32, #tpu.memory_space<vmem>>, vector<1x1x32x8xf32>
    %392 = vector.shape_cast %391 : vector<1x1x32x8xf32> to vector<32x8xf32>
    %cst_335 = arith.constant dense<0.000000e+00> : vector<12x8xf32>
    %393 = tpu.matmul %3, %392, %cst_335 {dimension_numbers = #tpu.dot_dimension_numbers<[1], [0], [0], [1], [0, 0, 1, 1], [], []>} : vector<12x32xf32>, vector<32x8xf32>, vector<12x8xf32> -> vector<12x8xf32>
    %c1_336 = arith.constant 1 : index
    %c3_337 = arith.constant 3 : index
    %c0_338 = arith.constant 0 : index
    %c0_339 = arith.constant 0 : index
    %394 = vector.load %arg9[%c1_336, %c3_337, %c0_338, %c0_339] : memref<3x4x1x8xf32, #tpu.memory_space<vmem>>, vector<1x1x1x8xf32>
    %395 = vector.shape_cast %394 : vector<1x1x1x8xf32> to vector<1x8xf32>
    %396 = vector.broadcast %395 : vector<1x8xf32> to vector<12x8xf32>
    %397 = arith.addf %393, %396 : vector<12x8xf32>
    %c1_340 = arith.constant 1 : index
    %c3_341 = arith.constant 3 : index
    %c0_342 = arith.constant 0 : index
    %c0_343 = arith.constant 0 : index
    %398 = vector.load %arg10[%c1_340, %c3_341, %c0_342, %c0_343] : memref<3x4x32x8xf32, #tpu.memory_space<vmem>>, vector<1x1x32x8xf32>
    %399 = vector.shape_cast %398 : vector<1x1x32x8xf32> to vector<32x8xf32>
    %cst_344 = arith.constant dense<0.000000e+00> : vector<12x8xf32>
    %400 = tpu.matmul %3, %399, %cst_344 {dimension_numbers = #tpu.dot_dimension_numbers<[1], [0], [0], [1], [0, 0, 1, 1], [], []>} : vector<12x32xf32>, vector<32x8xf32>, vector<12x8xf32> -> vector<12x8xf32>
    %c1_345 = arith.constant 1 : index
    %c3_346 = arith.constant 3 : index
    %c0_347 = arith.constant 0 : index
    %c0_348 = arith.constant 0 : index
    %401 = vector.load %arg11[%c1_345, %c3_346, %c0_347, %c0_348] : memref<3x4x1x8xf32, #tpu.memory_space<vmem>>, vector<1x1x1x8xf32>
    %402 = vector.shape_cast %401 : vector<1x1x1x8xf32> to vector<1x8xf32>
    %403 = vector.broadcast %402 : vector<1x8xf32> to vector<12x8xf32>
    %404 = arith.addf %400, %403 : vector<12x8xf32>
    %cst_349 = arith.constant dense<0.000000e+00> : vector<8x12xf32>
    %405 = tpu.matmul %390, %397, %cst_349 {dimension_numbers = #tpu.dot_dimension_numbers<[1], [1], [0], [0], [0, 0, 1, 0], [], []>} : vector<8x8xf32>, vector<12x8xf32>, vector<8x12xf32> -> vector<8x12xf32>
    %cst_350 = arith.constant 0.353553385 : f32
    %406 = vector.broadcast %cst_350 : f32 to vector<8x12xf32>
    %407 = arith.mulf %405, %406 : vector<8x12xf32>
    %408 = vector.broadcast %15 : vector<1x12xf32> to vector<8x12xf32>
    %409 = arith.addf %407, %408 : vector<8x12xf32>
    %c0_351 = arith.constant 0 : index
    %c3_352 = arith.constant 3 : index
    %c0_353 = arith.constant 0 : index
    %c0_354 = arith.constant 0 : index
    %410 = vector.load %arg5[%c0_351, %c3_352, %c0_353, %c0_354] : memref<1x4x8x12xf32, #tpu.memory_space<vmem>>, vector<1x1x8x12xf32>
    %411 = vector.shape_cast %410 : vector<1x1x8x12xf32> to vector<8x12xf32>
    %412 = arith.addf %409, %411 : vector<8x12xf32>
    %cst_355 = arith.constant dense<0xFF800000> : vector<8xf32>
    %413 = vector.multi_reduction <maximumf>, %412, %cst_355 [1] : vector<8x12xf32> to vector<8xf32>
    %414 = vector.shape_cast %413 : vector<8xf32> to vector<8x1xf32>
    %415 = vector.broadcast %414 : vector<8x1xf32> to vector<8x12xf32>
    %416 = arith.subf %412, %415 : vector<8x12xf32>
    %417 = math.exp %416 : vector<8x12xf32>
    %cst_356 = arith.constant dense<0.000000e+00> : vector<8xf32>
    %418 = vector.multi_reduction <add>, %417, %cst_356 [1] : vector<8x12xf32> to vector<8xf32>
    %419 = vector.shape_cast %418 : vector<8xf32> to vector<8x1xf32>
    %420 = tpu.reciprocal %419 {approx = true} : vector<8x1xf32> -> vector<8x1xf32>
    %421 = vector.broadcast %420 : vector<8x1xf32> to vector<8x12xf32>
    %422 = arith.mulf %417, %421 : vector<8x12xf32>
    %cst_357 = arith.constant dense<0.000000e+00> : vector<8x8xf32>
    %423 = tpu.matmul %422, %404, %cst_357 {dimension_numbers = #tpu.dot_dimension_numbers<[1], [0], [0], [1], [0, 0, 1, 1], [], []>} : vector<8x12xf32>, vector<12x8xf32>, vector<8x8xf32> -> vector<8x8xf32>
    %c1_358 = arith.constant 1 : index
    %c3_359 = arith.constant 3 : index
    %c0_360 = arith.constant 0 : index
    %c0_361 = arith.constant 0 : index
    %424 = vector.load %arg12[%c1_358, %c3_359, %c0_360, %c0_361] : memref<3x4x8x32xf32, #tpu.memory_space<vmem>>, vector<1x1x8x32xf32>
    %425 = vector.shape_cast %424 : vector<1x1x8x32xf32> to vector<8x32xf32>
    %cst_362 = arith.constant dense<0.000000e+00> : vector<8x32xf32>
    %426 = tpu.matmul %423, %425, %cst_362 {dimension_numbers = #tpu.dot_dimension_numbers<[1], [0], [0], [1], [0, 0, 1, 1], [], []>} : vector<8x8xf32>, vector<8x32xf32>, vector<8x32xf32> -> vector<8x32xf32>
    %427 = arith.addf %383, %426 : vector<8x32xf32>
    %c1_363 = arith.constant 1 : index
    %c0_364 = arith.constant 0 : index
    %c0_365 = arith.constant 0 : index
    %428 = vector.load %arg13[%c1_363, %c0_364, %c0_365] : memref<3x1x32xf32, #tpu.memory_space<vmem>>, vector<1x1x32xf32>
    %429 = vector.shape_cast %428 : vector<1x1x32xf32> to vector<1x32xf32>
    %430 = vector.broadcast %429 : vector<1x32xf32> to vector<8x32xf32>
    %431 = arith.addf %427, %430 : vector<8x32xf32>
    %432 = arith.addf %252, %431 : vector<8x32xf32>
    %c1_366 = arith.constant 1 : index
    %c0_367 = arith.constant 0 : index
    %c0_368 = arith.constant 0 : index
    %433 = vector.load %arg18[%c1_366, %c0_367, %c0_368] : memref<3x1x32xf32, #tpu.memory_space<vmem>>, vector<1x1x32xf32>
    %434 = vector.shape_cast %433 : vector<1x1x32xf32> to vector<1x32xf32>
    %c1_369 = arith.constant 1 : index
    %c0_370 = arith.constant 0 : index
    %c0_371 = arith.constant 0 : index
    %435 = vector.load %arg19[%c1_369, %c0_370, %c0_371] : memref<3x1x32xf32, #tpu.memory_space<vmem>>, vector<1x1x32xf32>
    %436 = vector.shape_cast %435 : vector<1x1x32xf32> to vector<1x32xf32>
    %cst_372 = arith.constant dense<0.000000e+00> : vector<8xf32>
    %437 = vector.multi_reduction <add>, %432, %cst_372 [1] : vector<8x32xf32> to vector<8xf32>
    %438 = vector.shape_cast %437 : vector<8xf32> to vector<8x1xf32>
    %cst_373 = arith.constant 3.200000e+01 : f32
    %439 = vector.broadcast %cst_373 : f32 to vector<8x1xf32>
    %440 = arith.divf %438, %439 : vector<8x1xf32>
    %441 = vector.broadcast %440 : vector<8x1xf32> to vector<8x32xf32>
    %442 = arith.subf %432, %441 : vector<8x32xf32>
    %443 = arith.mulf %442, %442 : vector<8x32xf32>
    %cst_374 = arith.constant dense<0.000000e+00> : vector<8xf32>
    %444 = vector.multi_reduction <add>, %443, %cst_374 [1] : vector<8x32xf32> to vector<8xf32>
    %445 = vector.shape_cast %444 : vector<8xf32> to vector<8x1xf32>
    %cst_375 = arith.constant 3.200000e+01 : f32
    %446 = vector.broadcast %cst_375 : f32 to vector<8x1xf32>
    %447 = arith.divf %445, %446 : vector<8x1xf32>
    %448 = vector.broadcast %440 : vector<8x1xf32> to vector<8x32xf32>
    %449 = arith.subf %432, %448 : vector<8x32xf32>
    %cst_376 = arith.constant 9.99999974E-6 : f32
    %450 = vector.broadcast %cst_376 : f32 to vector<8x1xf32>
    %451 = arith.addf %447, %450 : vector<8x1xf32>
    %452 = math.rsqrt %451 : vector<8x1xf32>
    %453 = vector.broadcast %452 : vector<8x1xf32> to vector<8x32xf32>
    %454 = arith.mulf %449, %453 : vector<8x32xf32>
    %455 = vector.broadcast %434 : vector<1x32xf32> to vector<8x32xf32>
    %456 = arith.mulf %454, %455 : vector<8x32xf32>
    %457 = vector.broadcast %436 : vector<1x32xf32> to vector<8x32xf32>
    %458 = arith.addf %456, %457 : vector<8x32xf32>
    %c1_377 = arith.constant 1 : index
    %c0_378 = arith.constant 0 : index
    %c0_379 = arith.constant 0 : index
    %459 = vector.load %arg14[%c1_377, %c0_378, %c0_379] : memref<3x32x64xf32, #tpu.memory_space<vmem>>, vector<1x32x64xf32>
    %460 = vector.shape_cast %459 : vector<1x32x64xf32> to vector<32x64xf32>
    %cst_380 = arith.constant dense<0.000000e+00> : vector<8x64xf32>
    %461 = tpu.matmul %458, %460, %cst_380 {dimension_numbers = #tpu.dot_dimension_numbers<[1], [0], [0], [1], [0, 0, 1, 1], [], []>} : vector<8x32xf32>, vector<32x64xf32>, vector<8x64xf32> -> vector<8x64xf32>
    %c1_381 = arith.constant 1 : index
    %c0_382 = arith.constant 0 : index
    %c0_383 = arith.constant 0 : index
    %462 = vector.load %arg15[%c1_381, %c0_382, %c0_383] : memref<3x1x64xf32, #tpu.memory_space<vmem>>, vector<1x1x64xf32>
    %463 = vector.shape_cast %462 : vector<1x1x64xf32> to vector<1x64xf32>
    %464 = vector.broadcast %463 : vector<1x64xf32> to vector<8x64xf32>
    %465 = arith.addf %461, %464 : vector<8x64xf32>
    %cst_384 = arith.constant 0.000000e+00 : f32
    %466 = vector.broadcast %cst_384 : f32 to vector<8x64xf32>
    %467 = arith.maximumf %465, %466 : vector<8x64xf32>
    %c1_385 = arith.constant 1 : index
    %c0_386 = arith.constant 0 : index
    %c0_387 = arith.constant 0 : index
    %468 = vector.load %arg16[%c1_385, %c0_386, %c0_387] : memref<3x64x32xf32, #tpu.memory_space<vmem>>, vector<1x64x32xf32>
    %469 = vector.shape_cast %468 : vector<1x64x32xf32> to vector<64x32xf32>
    %cst_388 = arith.constant dense<0.000000e+00> : vector<8x32xf32>
    %470 = tpu.matmul %467, %469, %cst_388 {dimension_numbers = #tpu.dot_dimension_numbers<[1], [0], [0], [1], [0, 0, 1, 1], [], []>} : vector<8x64xf32>, vector<64x32xf32>, vector<8x32xf32> -> vector<8x32xf32>
    %c1_389 = arith.constant 1 : index
    %c0_390 = arith.constant 0 : index
    %c0_391 = arith.constant 0 : index
    %471 = vector.load %arg17[%c1_389, %c0_390, %c0_391] : memref<3x1x32xf32, #tpu.memory_space<vmem>>, vector<1x1x32xf32>
    %472 = vector.shape_cast %471 : vector<1x1x32xf32> to vector<1x32xf32>
    %473 = vector.broadcast %472 : vector<1x32xf32> to vector<8x32xf32>
    %474 = arith.addf %470, %473 : vector<8x32xf32>
    %475 = arith.addf %458, %474 : vector<8x32xf32>
    %c1_392 = arith.constant 1 : index
    %c0_393 = arith.constant 0 : index
    %c0_394 = arith.constant 0 : index
    %476 = vector.load %arg20[%c1_392, %c0_393, %c0_394] : memref<3x1x32xf32, #tpu.memory_space<vmem>>, vector<1x1x32xf32>
    %477 = vector.shape_cast %476 : vector<1x1x32xf32> to vector<1x32xf32>
    %c1_395 = arith.constant 1 : index
    %c0_396 = arith.constant 0 : index
    %c0_397 = arith.constant 0 : index
    %478 = vector.load %arg21[%c1_395, %c0_396, %c0_397] : memref<3x1x32xf32, #tpu.memory_space<vmem>>, vector<1x1x32xf32>
    %479 = vector.shape_cast %478 : vector<1x1x32xf32> to vector<1x32xf32>
    %cst_398 = arith.constant dense<0.000000e+00> : vector<8xf32>
    %480 = vector.multi_reduction <add>, %475, %cst_398 [1] : vector<8x32xf32> to vector<8xf32>
    %481 = vector.shape_cast %480 : vector<8xf32> to vector<8x1xf32>
    %cst_399 = arith.constant 3.200000e+01 : f32
    %482 = vector.broadcast %cst_399 : f32 to vector<8x1xf32>
    %483 = arith.divf %481, %482 : vector<8x1xf32>
    %484 = vector.broadcast %483 : vector<8x1xf32> to vector<8x32xf32>
    %485 = arith.subf %475, %484 : vector<8x32xf32>
    %486 = arith.mulf %485, %485 : vector<8x32xf32>
    %cst_400 = arith.constant dense<0.000000e+00> : vector<8xf32>
    %487 = vector.multi_reduction <add>, %486, %cst_400 [1] : vector<8x32xf32> to vector<8xf32>
    %488 = vector.shape_cast %487 : vector<8xf32> to vector<8x1xf32>
    %cst_401 = arith.constant 3.200000e+01 : f32
    %489 = vector.broadcast %cst_401 : f32 to vector<8x1xf32>
    %490 = arith.divf %488, %489 : vector<8x1xf32>
    %491 = vector.broadcast %483 : vector<8x1xf32> to vector<8x32xf32>
    %492 = arith.subf %475, %491 : vector<8x32xf32>
    %cst_402 = arith.constant 9.99999974E-6 : f32
    %493 = vector.broadcast %cst_402 : f32 to vector<8x1xf32>
    %494 = arith.addf %490, %493 : vector<8x1xf32>
    %495 = math.rsqrt %494 : vector<8x1xf32>
    %496 = vector.broadcast %495 : vector<8x1xf32> to vector<8x32xf32>
    %497 = arith.mulf %492, %496 : vector<8x32xf32>
    %498 = vector.broadcast %477 : vector<1x32xf32> to vector<8x32xf32>
    %499 = arith.mulf %497, %498 : vector<8x32xf32>
    %500 = vector.broadcast %479 : vector<1x32xf32> to vector<8x32xf32>
    %501 = arith.addf %499, %500 : vector<8x32xf32>
    %c2_403 = arith.constant 2 : index
    %c0_404 = arith.constant 0 : index
    %c0_405 = arith.constant 0 : index
    %c0_406 = arith.constant 0 : index
    %502 = vector.load %arg6[%c2_403, %c0_404, %c0_405, %c0_406] : memref<3x4x32x8xf32, #tpu.memory_space<vmem>>, vector<1x1x32x8xf32>
    %503 = vector.shape_cast %502 : vector<1x1x32x8xf32> to vector<32x8xf32>
    %cst_407 = arith.constant dense<0.000000e+00> : vector<8x8xf32>
    %504 = tpu.matmul %501, %503, %cst_407 {dimension_numbers = #tpu.dot_dimension_numbers<[1], [0], [0], [1], [0, 0, 1, 1], [], []>} : vector<8x32xf32>, vector<32x8xf32>, vector<8x8xf32> -> vector<8x8xf32>
    %c2_408 = arith.constant 2 : index
    %c0_409 = arith.constant 0 : index
    %c0_410 = arith.constant 0 : index
    %c0_411 = arith.constant 0 : index
    %505 = vector.load %arg7[%c2_408, %c0_409, %c0_410, %c0_411] : memref<3x4x1x8xf32, #tpu.memory_space<vmem>>, vector<1x1x1x8xf32>
    %506 = vector.shape_cast %505 : vector<1x1x1x8xf32> to vector<1x8xf32>
    %507 = vector.broadcast %506 : vector<1x8xf32> to vector<8x8xf32>
    %508 = arith.addf %504, %507 : vector<8x8xf32>
    %c2_412 = arith.constant 2 : index
    %c0_413 = arith.constant 0 : index
    %c0_414 = arith.constant 0 : index
    %c0_415 = arith.constant 0 : index
    %509 = vector.load %arg8[%c2_412, %c0_413, %c0_414, %c0_415] : memref<3x4x32x8xf32, #tpu.memory_space<vmem>>, vector<1x1x32x8xf32>
    %510 = vector.shape_cast %509 : vector<1x1x32x8xf32> to vector<32x8xf32>
    %cst_416 = arith.constant dense<0.000000e+00> : vector<8x8xf32>
    %511 = tpu.matmul %501, %510, %cst_416 {dimension_numbers = #tpu.dot_dimension_numbers<[1], [0], [0], [1], [0, 0, 1, 1], [], []>} : vector<8x32xf32>, vector<32x8xf32>, vector<8x8xf32> -> vector<8x8xf32>
    %c2_417 = arith.constant 2 : index
    %c0_418 = arith.constant 0 : index
    %c0_419 = arith.constant 0 : index
    %c0_420 = arith.constant 0 : index
    %512 = vector.load %arg9[%c2_417, %c0_418, %c0_419, %c0_420] : memref<3x4x1x8xf32, #tpu.memory_space<vmem>>, vector<1x1x1x8xf32>
    %513 = vector.shape_cast %512 : vector<1x1x1x8xf32> to vector<1x8xf32>
    %514 = vector.broadcast %513 : vector<1x8xf32> to vector<8x8xf32>
    %515 = arith.addf %511, %514 : vector<8x8xf32>
    %c2_421 = arith.constant 2 : index
    %c0_422 = arith.constant 0 : index
    %c0_423 = arith.constant 0 : index
    %c0_424 = arith.constant 0 : index
    %516 = vector.load %arg10[%c2_421, %c0_422, %c0_423, %c0_424] : memref<3x4x32x8xf32, #tpu.memory_space<vmem>>, vector<1x1x32x8xf32>
    %517 = vector.shape_cast %516 : vector<1x1x32x8xf32> to vector<32x8xf32>
    %cst_425 = arith.constant dense<0.000000e+00> : vector<8x8xf32>
    %518 = tpu.matmul %501, %517, %cst_425 {dimension_numbers = #tpu.dot_dimension_numbers<[1], [0], [0], [1], [0, 0, 1, 1], [], []>} : vector<8x32xf32>, vector<32x8xf32>, vector<8x8xf32> -> vector<8x8xf32>
    %c2_426 = arith.constant 2 : index
    %c0_427 = arith.constant 0 : index
    %c0_428 = arith.constant 0 : index
    %c0_429 = arith.constant 0 : index
    %519 = vector.load %arg11[%c2_426, %c0_427, %c0_428, %c0_429] : memref<3x4x1x8xf32, #tpu.memory_space<vmem>>, vector<1x1x1x8xf32>
    %520 = vector.shape_cast %519 : vector<1x1x1x8xf32> to vector<1x8xf32>
    %521 = vector.broadcast %520 : vector<1x8xf32> to vector<8x8xf32>
    %522 = arith.addf %518, %521 : vector<8x8xf32>
    %cst_430 = arith.constant dense<0.000000e+00> : vector<8x8xf32>
    %523 = tpu.matmul %508, %515, %cst_430 {dimension_numbers = #tpu.dot_dimension_numbers<[1], [1], [0], [0], [0, 0, 1, 0], [], []>} : vector<8x8xf32>, vector<8x8xf32>, vector<8x8xf32> -> vector<8x8xf32>
    %cst_431 = arith.constant 0.353553385 : f32
    %524 = vector.broadcast %cst_431 : f32 to vector<8x8xf32>
    %525 = arith.mulf %523, %524 : vector<8x8xf32>
    %526 = vector.broadcast %9 : vector<1x8xf32> to vector<8x8xf32>
    %527 = arith.addf %525, %526 : vector<8x8xf32>
    %cst_432 = arith.constant dense<0xFF800000> : vector<8xf32>
    %528 = vector.multi_reduction <maximumf>, %527, %cst_432 [1] : vector<8x8xf32> to vector<8xf32>
    %529 = vector.shape_cast %528 : vector<8xf32> to vector<8x1xf32>
    %530 = vector.broadcast %529 : vector<8x1xf32> to vector<8x8xf32>
    %531 = arith.subf %527, %530 : vector<8x8xf32>
    %532 = math.exp %531 : vector<8x8xf32>
    %cst_433 = arith.constant dense<0.000000e+00> : vector<8xf32>
    %533 = vector.multi_reduction <add>, %532, %cst_433 [1] : vector<8x8xf32> to vector<8xf32>
    %534 = vector.shape_cast %533 : vector<8xf32> to vector<8x1xf32>
    %535 = tpu.reciprocal %534 {approx = true} : vector<8x1xf32> -> vector<8x1xf32>
    %536 = vector.broadcast %535 : vector<8x1xf32> to vector<8x8xf32>
    %537 = arith.mulf %532, %536 : vector<8x8xf32>
    %cst_434 = arith.constant dense<0.000000e+00> : vector<8x8xf32>
    %538 = tpu.matmul %537, %522, %cst_434 {dimension_numbers = #tpu.dot_dimension_numbers<[1], [0], [0], [1], [0, 0, 1, 1], [], []>} : vector<8x8xf32>, vector<8x8xf32>, vector<8x8xf32> -> vector<8x8xf32>
    %c2_435 = arith.constant 2 : index
    %c0_436 = arith.constant 0 : index
    %c0_437 = arith.constant 0 : index
    %c0_438 = arith.constant 0 : index
    %539 = vector.load %arg12[%c2_435, %c0_436, %c0_437, %c0_438] : memref<3x4x8x32xf32, #tpu.memory_space<vmem>>, vector<1x1x8x32xf32>
    %540 = vector.shape_cast %539 : vector<1x1x8x32xf32> to vector<8x32xf32>
    %cst_439 = arith.constant dense<0.000000e+00> : vector<8x32xf32>
    %541 = tpu.matmul %538, %540, %cst_439 {dimension_numbers = #tpu.dot_dimension_numbers<[1], [0], [0], [1], [0, 0, 1, 1], [], []>} : vector<8x8xf32>, vector<8x32xf32>, vector<8x32xf32> -> vector<8x32xf32>
    %c2_440 = arith.constant 2 : index
    %c1_441 = arith.constant 1 : index
    %c0_442 = arith.constant 0 : index
    %c0_443 = arith.constant 0 : index
    %542 = vector.load %arg6[%c2_440, %c1_441, %c0_442, %c0_443] : memref<3x4x32x8xf32, #tpu.memory_space<vmem>>, vector<1x1x32x8xf32>
    %543 = vector.shape_cast %542 : vector<1x1x32x8xf32> to vector<32x8xf32>
    %cst_444 = arith.constant dense<0.000000e+00> : vector<8x8xf32>
    %544 = tpu.matmul %501, %543, %cst_444 {dimension_numbers = #tpu.dot_dimension_numbers<[1], [0], [0], [1], [0, 0, 1, 1], [], []>} : vector<8x32xf32>, vector<32x8xf32>, vector<8x8xf32> -> vector<8x8xf32>
    %c2_445 = arith.constant 2 : index
    %c1_446 = arith.constant 1 : index
    %c0_447 = arith.constant 0 : index
    %c0_448 = arith.constant 0 : index
    %545 = vector.load %arg7[%c2_445, %c1_446, %c0_447, %c0_448] : memref<3x4x1x8xf32, #tpu.memory_space<vmem>>, vector<1x1x1x8xf32>
    %546 = vector.shape_cast %545 : vector<1x1x1x8xf32> to vector<1x8xf32>
    %547 = vector.broadcast %546 : vector<1x8xf32> to vector<8x8xf32>
    %548 = arith.addf %544, %547 : vector<8x8xf32>
    %c2_449 = arith.constant 2 : index
    %c1_450 = arith.constant 1 : index
    %c0_451 = arith.constant 0 : index
    %c0_452 = arith.constant 0 : index
    %549 = vector.load %arg8[%c2_449, %c1_450, %c0_451, %c0_452] : memref<3x4x32x8xf32, #tpu.memory_space<vmem>>, vector<1x1x32x8xf32>
    %550 = vector.shape_cast %549 : vector<1x1x32x8xf32> to vector<32x8xf32>
    %cst_453 = arith.constant dense<0.000000e+00> : vector<8x8xf32>
    %551 = tpu.matmul %501, %550, %cst_453 {dimension_numbers = #tpu.dot_dimension_numbers<[1], [0], [0], [1], [0, 0, 1, 1], [], []>} : vector<8x32xf32>, vector<32x8xf32>, vector<8x8xf32> -> vector<8x8xf32>
    %c2_454 = arith.constant 2 : index
    %c1_455 = arith.constant 1 : index
    %c0_456 = arith.constant 0 : index
    %c0_457 = arith.constant 0 : index
    %552 = vector.load %arg9[%c2_454, %c1_455, %c0_456, %c0_457] : memref<3x4x1x8xf32, #tpu.memory_space<vmem>>, vector<1x1x1x8xf32>
    %553 = vector.shape_cast %552 : vector<1x1x1x8xf32> to vector<1x8xf32>
    %554 = vector.broadcast %553 : vector<1x8xf32> to vector<8x8xf32>
    %555 = arith.addf %551, %554 : vector<8x8xf32>
    %c2_458 = arith.constant 2 : index
    %c1_459 = arith.constant 1 : index
    %c0_460 = arith.constant 0 : index
    %c0_461 = arith.constant 0 : index
    %556 = vector.load %arg10[%c2_458, %c1_459, %c0_460, %c0_461] : memref<3x4x32x8xf32, #tpu.memory_space<vmem>>, vector<1x1x32x8xf32>
    %557 = vector.shape_cast %556 : vector<1x1x32x8xf32> to vector<32x8xf32>
    %cst_462 = arith.constant dense<0.000000e+00> : vector<8x8xf32>
    %558 = tpu.matmul %501, %557, %cst_462 {dimension_numbers = #tpu.dot_dimension_numbers<[1], [0], [0], [1], [0, 0, 1, 1], [], []>} : vector<8x32xf32>, vector<32x8xf32>, vector<8x8xf32> -> vector<8x8xf32>
    %c2_463 = arith.constant 2 : index
    %c1_464 = arith.constant 1 : index
    %c0_465 = arith.constant 0 : index
    %c0_466 = arith.constant 0 : index
    %559 = vector.load %arg11[%c2_463, %c1_464, %c0_465, %c0_466] : memref<3x4x1x8xf32, #tpu.memory_space<vmem>>, vector<1x1x1x8xf32>
    %560 = vector.shape_cast %559 : vector<1x1x1x8xf32> to vector<1x8xf32>
    %561 = vector.broadcast %560 : vector<1x8xf32> to vector<8x8xf32>
    %562 = arith.addf %558, %561 : vector<8x8xf32>
    %cst_467 = arith.constant dense<0.000000e+00> : vector<8x8xf32>
    %563 = tpu.matmul %548, %555, %cst_467 {dimension_numbers = #tpu.dot_dimension_numbers<[1], [1], [0], [0], [0, 0, 1, 0], [], []>} : vector<8x8xf32>, vector<8x8xf32>, vector<8x8xf32> -> vector<8x8xf32>
    %cst_468 = arith.constant 0.353553385 : f32
    %564 = vector.broadcast %cst_468 : f32 to vector<8x8xf32>
    %565 = arith.mulf %563, %564 : vector<8x8xf32>
    %566 = vector.broadcast %9 : vector<1x8xf32> to vector<8x8xf32>
    %567 = arith.addf %565, %566 : vector<8x8xf32>
    %cst_469 = arith.constant dense<0xFF800000> : vector<8xf32>
    %568 = vector.multi_reduction <maximumf>, %567, %cst_469 [1] : vector<8x8xf32> to vector<8xf32>
    %569 = vector.shape_cast %568 : vector<8xf32> to vector<8x1xf32>
    %570 = vector.broadcast %569 : vector<8x1xf32> to vector<8x8xf32>
    %571 = arith.subf %567, %570 : vector<8x8xf32>
    %572 = math.exp %571 : vector<8x8xf32>
    %cst_470 = arith.constant dense<0.000000e+00> : vector<8xf32>
    %573 = vector.multi_reduction <add>, %572, %cst_470 [1] : vector<8x8xf32> to vector<8xf32>
    %574 = vector.shape_cast %573 : vector<8xf32> to vector<8x1xf32>
    %575 = tpu.reciprocal %574 {approx = true} : vector<8x1xf32> -> vector<8x1xf32>
    %576 = vector.broadcast %575 : vector<8x1xf32> to vector<8x8xf32>
    %577 = arith.mulf %572, %576 : vector<8x8xf32>
    %cst_471 = arith.constant dense<0.000000e+00> : vector<8x8xf32>
    %578 = tpu.matmul %577, %562, %cst_471 {dimension_numbers = #tpu.dot_dimension_numbers<[1], [0], [0], [1], [0, 0, 1, 1], [], []>} : vector<8x8xf32>, vector<8x8xf32>, vector<8x8xf32> -> vector<8x8xf32>
    %c2_472 = arith.constant 2 : index
    %c1_473 = arith.constant 1 : index
    %c0_474 = arith.constant 0 : index
    %c0_475 = arith.constant 0 : index
    %579 = vector.load %arg12[%c2_472, %c1_473, %c0_474, %c0_475] : memref<3x4x8x32xf32, #tpu.memory_space<vmem>>, vector<1x1x8x32xf32>
    %580 = vector.shape_cast %579 : vector<1x1x8x32xf32> to vector<8x32xf32>
    %cst_476 = arith.constant dense<0.000000e+00> : vector<8x32xf32>
    %581 = tpu.matmul %578, %580, %cst_476 {dimension_numbers = #tpu.dot_dimension_numbers<[1], [0], [0], [1], [0, 0, 1, 1], [], []>} : vector<8x8xf32>, vector<8x32xf32>, vector<8x32xf32> -> vector<8x32xf32>
    %582 = arith.addf %541, %581 : vector<8x32xf32>
    %c2_477 = arith.constant 2 : index
    %c2_478 = arith.constant 2 : index
    %c0_479 = arith.constant 0 : index
    %c0_480 = arith.constant 0 : index
    %583 = vector.load %arg6[%c2_477, %c2_478, %c0_479, %c0_480] : memref<3x4x32x8xf32, #tpu.memory_space<vmem>>, vector<1x1x32x8xf32>
    %584 = vector.shape_cast %583 : vector<1x1x32x8xf32> to vector<32x8xf32>
    %cst_481 = arith.constant dense<0.000000e+00> : vector<8x8xf32>
    %585 = tpu.matmul %501, %584, %cst_481 {dimension_numbers = #tpu.dot_dimension_numbers<[1], [0], [0], [1], [0, 0, 1, 1], [], []>} : vector<8x32xf32>, vector<32x8xf32>, vector<8x8xf32> -> vector<8x8xf32>
    %c2_482 = arith.constant 2 : index
    %c2_483 = arith.constant 2 : index
    %c0_484 = arith.constant 0 : index
    %c0_485 = arith.constant 0 : index
    %586 = vector.load %arg7[%c2_482, %c2_483, %c0_484, %c0_485] : memref<3x4x1x8xf32, #tpu.memory_space<vmem>>, vector<1x1x1x8xf32>
    %587 = vector.shape_cast %586 : vector<1x1x1x8xf32> to vector<1x8xf32>
    %588 = vector.broadcast %587 : vector<1x8xf32> to vector<8x8xf32>
    %589 = arith.addf %585, %588 : vector<8x8xf32>
    %c2_486 = arith.constant 2 : index
    %c2_487 = arith.constant 2 : index
    %c0_488 = arith.constant 0 : index
    %c0_489 = arith.constant 0 : index
    %590 = vector.load %arg8[%c2_486, %c2_487, %c0_488, %c0_489] : memref<3x4x32x8xf32, #tpu.memory_space<vmem>>, vector<1x1x32x8xf32>
    %591 = vector.shape_cast %590 : vector<1x1x32x8xf32> to vector<32x8xf32>
    %cst_490 = arith.constant dense<0.000000e+00> : vector<8x8xf32>
    %592 = tpu.matmul %501, %591, %cst_490 {dimension_numbers = #tpu.dot_dimension_numbers<[1], [0], [0], [1], [0, 0, 1, 1], [], []>} : vector<8x32xf32>, vector<32x8xf32>, vector<8x8xf32> -> vector<8x8xf32>
    %c2_491 = arith.constant 2 : index
    %c2_492 = arith.constant 2 : index
    %c0_493 = arith.constant 0 : index
    %c0_494 = arith.constant 0 : index
    %593 = vector.load %arg9[%c2_491, %c2_492, %c0_493, %c0_494] : memref<3x4x1x8xf32, #tpu.memory_space<vmem>>, vector<1x1x1x8xf32>
    %594 = vector.shape_cast %593 : vector<1x1x1x8xf32> to vector<1x8xf32>
    %595 = vector.broadcast %594 : vector<1x8xf32> to vector<8x8xf32>
    %596 = arith.addf %592, %595 : vector<8x8xf32>
    %c2_495 = arith.constant 2 : index
    %c2_496 = arith.constant 2 : index
    %c0_497 = arith.constant 0 : index
    %c0_498 = arith.constant 0 : index
    %597 = vector.load %arg10[%c2_495, %c2_496, %c0_497, %c0_498] : memref<3x4x32x8xf32, #tpu.memory_space<vmem>>, vector<1x1x32x8xf32>
    %598 = vector.shape_cast %597 : vector<1x1x32x8xf32> to vector<32x8xf32>
    %cst_499 = arith.constant dense<0.000000e+00> : vector<8x8xf32>
    %599 = tpu.matmul %501, %598, %cst_499 {dimension_numbers = #tpu.dot_dimension_numbers<[1], [0], [0], [1], [0, 0, 1, 1], [], []>} : vector<8x32xf32>, vector<32x8xf32>, vector<8x8xf32> -> vector<8x8xf32>
    %c2_500 = arith.constant 2 : index
    %c2_501 = arith.constant 2 : index
    %c0_502 = arith.constant 0 : index
    %c0_503 = arith.constant 0 : index
    %600 = vector.load %arg11[%c2_500, %c2_501, %c0_502, %c0_503] : memref<3x4x1x8xf32, #tpu.memory_space<vmem>>, vector<1x1x1x8xf32>
    %601 = vector.shape_cast %600 : vector<1x1x1x8xf32> to vector<1x8xf32>
    %602 = vector.broadcast %601 : vector<1x8xf32> to vector<8x8xf32>
    %603 = arith.addf %599, %602 : vector<8x8xf32>
    %cst_504 = arith.constant dense<0.000000e+00> : vector<8x8xf32>
    %604 = tpu.matmul %589, %596, %cst_504 {dimension_numbers = #tpu.dot_dimension_numbers<[1], [1], [0], [0], [0, 0, 1, 0], [], []>} : vector<8x8xf32>, vector<8x8xf32>, vector<8x8xf32> -> vector<8x8xf32>
    %cst_505 = arith.constant 0.353553385 : f32
    %605 = vector.broadcast %cst_505 : f32 to vector<8x8xf32>
    %606 = arith.mulf %604, %605 : vector<8x8xf32>
    %607 = vector.broadcast %9 : vector<1x8xf32> to vector<8x8xf32>
    %608 = arith.addf %606, %607 : vector<8x8xf32>
    %cst_506 = arith.constant dense<0xFF800000> : vector<8xf32>
    %609 = vector.multi_reduction <maximumf>, %608, %cst_506 [1] : vector<8x8xf32> to vector<8xf32>
    %610 = vector.shape_cast %609 : vector<8xf32> to vector<8x1xf32>
    %611 = vector.broadcast %610 : vector<8x1xf32> to vector<8x8xf32>
    %612 = arith.subf %608, %611 : vector<8x8xf32>
    %613 = math.exp %612 : vector<8x8xf32>
    %cst_507 = arith.constant dense<0.000000e+00> : vector<8xf32>
    %614 = vector.multi_reduction <add>, %613, %cst_507 [1] : vector<8x8xf32> to vector<8xf32>
    %615 = vector.shape_cast %614 : vector<8xf32> to vector<8x1xf32>
    %616 = tpu.reciprocal %615 {approx = true} : vector<8x1xf32> -> vector<8x1xf32>
    %617 = vector.broadcast %616 : vector<8x1xf32> to vector<8x8xf32>
    %618 = arith.mulf %613, %617 : vector<8x8xf32>
    %cst_508 = arith.constant dense<0.000000e+00> : vector<8x8xf32>
    %619 = tpu.matmul %618, %603, %cst_508 {dimension_numbers = #tpu.dot_dimension_numbers<[1], [0], [0], [1], [0, 0, 1, 1], [], []>} : vector<8x8xf32>, vector<8x8xf32>, vector<8x8xf32> -> vector<8x8xf32>
    %c2_509 = arith.constant 2 : index
    %c2_510 = arith.constant 2 : index
    %c0_511 = arith.constant 0 : index
    %c0_512 = arith.constant 0 : index
    %620 = vector.load %arg12[%c2_509, %c2_510, %c0_511, %c0_512] : memref<3x4x8x32xf32, #tpu.memory_space<vmem>>, vector<1x1x8x32xf32>
    %621 = vector.shape_cast %620 : vector<1x1x8x32xf32> to vector<8x32xf32>
    %cst_513 = arith.constant dense<0.000000e+00> : vector<8x32xf32>
    %622 = tpu.matmul %619, %621, %cst_513 {dimension_numbers = #tpu.dot_dimension_numbers<[1], [0], [0], [1], [0, 0, 1, 1], [], []>} : vector<8x8xf32>, vector<8x32xf32>, vector<8x32xf32> -> vector<8x32xf32>
    %623 = arith.addf %582, %622 : vector<8x32xf32>
    %c2_514 = arith.constant 2 : index
    %c3_515 = arith.constant 3 : index
    %c0_516 = arith.constant 0 : index
    %c0_517 = arith.constant 0 : index
    %624 = vector.load %arg6[%c2_514, %c3_515, %c0_516, %c0_517] : memref<3x4x32x8xf32, #tpu.memory_space<vmem>>, vector<1x1x32x8xf32>
    %625 = vector.shape_cast %624 : vector<1x1x32x8xf32> to vector<32x8xf32>
    %cst_518 = arith.constant dense<0.000000e+00> : vector<8x8xf32>
    %626 = tpu.matmul %501, %625, %cst_518 {dimension_numbers = #tpu.dot_dimension_numbers<[1], [0], [0], [1], [0, 0, 1, 1], [], []>} : vector<8x32xf32>, vector<32x8xf32>, vector<8x8xf32> -> vector<8x8xf32>
    %c2_519 = arith.constant 2 : index
    %c3_520 = arith.constant 3 : index
    %c0_521 = arith.constant 0 : index
    %c0_522 = arith.constant 0 : index
    %627 = vector.load %arg7[%c2_519, %c3_520, %c0_521, %c0_522] : memref<3x4x1x8xf32, #tpu.memory_space<vmem>>, vector<1x1x1x8xf32>
    %628 = vector.shape_cast %627 : vector<1x1x1x8xf32> to vector<1x8xf32>
    %629 = vector.broadcast %628 : vector<1x8xf32> to vector<8x8xf32>
    %630 = arith.addf %626, %629 : vector<8x8xf32>
    %c2_523 = arith.constant 2 : index
    %c3_524 = arith.constant 3 : index
    %c0_525 = arith.constant 0 : index
    %c0_526 = arith.constant 0 : index
    %631 = vector.load %arg8[%c2_523, %c3_524, %c0_525, %c0_526] : memref<3x4x32x8xf32, #tpu.memory_space<vmem>>, vector<1x1x32x8xf32>
    %632 = vector.shape_cast %631 : vector<1x1x32x8xf32> to vector<32x8xf32>
    %cst_527 = arith.constant dense<0.000000e+00> : vector<8x8xf32>
    %633 = tpu.matmul %501, %632, %cst_527 {dimension_numbers = #tpu.dot_dimension_numbers<[1], [0], [0], [1], [0, 0, 1, 1], [], []>} : vector<8x32xf32>, vector<32x8xf32>, vector<8x8xf32> -> vector<8x8xf32>
    %c2_528 = arith.constant 2 : index
    %c3_529 = arith.constant 3 : index
    %c0_530 = arith.constant 0 : index
    %c0_531 = arith.constant 0 : index
    %634 = vector.load %arg9[%c2_528, %c3_529, %c0_530, %c0_531] : memref<3x4x1x8xf32, #tpu.memory_space<vmem>>, vector<1x1x1x8xf32>
    %635 = vector.shape_cast %634 : vector<1x1x1x8xf32> to vector<1x8xf32>
    %636 = vector.broadcast %635 : vector<1x8xf32> to vector<8x8xf32>
    %637 = arith.addf %633, %636 : vector<8x8xf32>
    %c2_532 = arith.constant 2 : index
    %c3_533 = arith.constant 3 : index
    %c0_534 = arith.constant 0 : index
    %c0_535 = arith.constant 0 : index
    %638 = vector.load %arg10[%c2_532, %c3_533, %c0_534, %c0_535] : memref<3x4x32x8xf32, #tpu.memory_space<vmem>>, vector<1x1x32x8xf32>
    %639 = vector.shape_cast %638 : vector<1x1x32x8xf32> to vector<32x8xf32>
    %cst_536 = arith.constant dense<0.000000e+00> : vector<8x8xf32>
    %640 = tpu.matmul %501, %639, %cst_536 {dimension_numbers = #tpu.dot_dimension_numbers<[1], [0], [0], [1], [0, 0, 1, 1], [], []>} : vector<8x32xf32>, vector<32x8xf32>, vector<8x8xf32> -> vector<8x8xf32>
    %c2_537 = arith.constant 2 : index
    %c3_538 = arith.constant 3 : index
    %c0_539 = arith.constant 0 : index
    %c0_540 = arith.constant 0 : index
    %641 = vector.load %arg11[%c2_537, %c3_538, %c0_539, %c0_540] : memref<3x4x1x8xf32, #tpu.memory_space<vmem>>, vector<1x1x1x8xf32>
    %642 = vector.shape_cast %641 : vector<1x1x1x8xf32> to vector<1x8xf32>
    %643 = vector.broadcast %642 : vector<1x8xf32> to vector<8x8xf32>
    %644 = arith.addf %640, %643 : vector<8x8xf32>
    %cst_541 = arith.constant dense<0.000000e+00> : vector<8x8xf32>
    %645 = tpu.matmul %630, %637, %cst_541 {dimension_numbers = #tpu.dot_dimension_numbers<[1], [1], [0], [0], [0, 0, 1, 0], [], []>} : vector<8x8xf32>, vector<8x8xf32>, vector<8x8xf32> -> vector<8x8xf32>
    %cst_542 = arith.constant 0.353553385 : f32
    %646 = vector.broadcast %cst_542 : f32 to vector<8x8xf32>
    %647 = arith.mulf %645, %646 : vector<8x8xf32>
    %648 = vector.broadcast %9 : vector<1x8xf32> to vector<8x8xf32>
    %649 = arith.addf %647, %648 : vector<8x8xf32>
    %cst_543 = arith.constant dense<0xFF800000> : vector<8xf32>
    %650 = vector.multi_reduction <maximumf>, %649, %cst_543 [1] : vector<8x8xf32> to vector<8xf32>
    %651 = vector.shape_cast %650 : vector<8xf32> to vector<8x1xf32>
    %652 = vector.broadcast %651 : vector<8x1xf32> to vector<8x8xf32>
    %653 = arith.subf %649, %652 : vector<8x8xf32>
    %654 = math.exp %653 : vector<8x8xf32>
    %cst_544 = arith.constant dense<0.000000e+00> : vector<8xf32>
    %655 = vector.multi_reduction <add>, %654, %cst_544 [1] : vector<8x8xf32> to vector<8xf32>
    %656 = vector.shape_cast %655 : vector<8xf32> to vector<8x1xf32>
    %657 = tpu.reciprocal %656 {approx = true} : vector<8x1xf32> -> vector<8x1xf32>
    %658 = vector.broadcast %657 : vector<8x1xf32> to vector<8x8xf32>
    %659 = arith.mulf %654, %658 : vector<8x8xf32>
    %cst_545 = arith.constant dense<0.000000e+00> : vector<8x8xf32>
    %660 = tpu.matmul %659, %644, %cst_545 {dimension_numbers = #tpu.dot_dimension_numbers<[1], [0], [0], [1], [0, 0, 1, 1], [], []>} : vector<8x8xf32>, vector<8x8xf32>, vector<8x8xf32> -> vector<8x8xf32>
    %c2_546 = arith.constant 2 : index
    %c3_547 = arith.constant 3 : index
    %c0_548 = arith.constant 0 : index
    %c0_549 = arith.constant 0 : index
    %661 = vector.load %arg12[%c2_546, %c3_547, %c0_548, %c0_549] : memref<3x4x8x32xf32, #tpu.memory_space<vmem>>, vector<1x1x8x32xf32>
    %662 = vector.shape_cast %661 : vector<1x1x8x32xf32> to vector<8x32xf32>
    %cst_550 = arith.constant dense<0.000000e+00> : vector<8x32xf32>
    %663 = tpu.matmul %660, %662, %cst_550 {dimension_numbers = #tpu.dot_dimension_numbers<[1], [0], [0], [1], [0, 0, 1, 1], [], []>} : vector<8x8xf32>, vector<8x32xf32>, vector<8x32xf32> -> vector<8x32xf32>
    %664 = arith.addf %623, %663 : vector<8x32xf32>
    %c2_551 = arith.constant 2 : index
    %c0_552 = arith.constant 0 : index
    %c0_553 = arith.constant 0 : index
    %665 = vector.load %arg13[%c2_551, %c0_552, %c0_553] : memref<3x1x32xf32, #tpu.memory_space<vmem>>, vector<1x1x32xf32>
    %666 = vector.shape_cast %665 : vector<1x1x32xf32> to vector<1x32xf32>
    %667 = vector.broadcast %666 : vector<1x32xf32> to vector<8x32xf32>
    %668 = arith.addf %664, %667 : vector<8x32xf32>
    %669 = arith.addf %501, %668 : vector<8x32xf32>
    %c2_554 = arith.constant 2 : index
    %c0_555 = arith.constant 0 : index
    %c0_556 = arith.constant 0 : index
    %670 = vector.load %arg18[%c2_554, %c0_555, %c0_556] : memref<3x1x32xf32, #tpu.memory_space<vmem>>, vector<1x1x32xf32>
    %671 = vector.shape_cast %670 : vector<1x1x32xf32> to vector<1x32xf32>
    %c2_557 = arith.constant 2 : index
    %c0_558 = arith.constant 0 : index
    %c0_559 = arith.constant 0 : index
    %672 = vector.load %arg19[%c2_557, %c0_558, %c0_559] : memref<3x1x32xf32, #tpu.memory_space<vmem>>, vector<1x1x32xf32>
    %673 = vector.shape_cast %672 : vector<1x1x32xf32> to vector<1x32xf32>
    %cst_560 = arith.constant dense<0.000000e+00> : vector<8xf32>
    %674 = vector.multi_reduction <add>, %669, %cst_560 [1] : vector<8x32xf32> to vector<8xf32>
    %675 = vector.shape_cast %674 : vector<8xf32> to vector<8x1xf32>
    %cst_561 = arith.constant 3.200000e+01 : f32
    %676 = vector.broadcast %cst_561 : f32 to vector<8x1xf32>
    %677 = arith.divf %675, %676 : vector<8x1xf32>
    %678 = vector.broadcast %677 : vector<8x1xf32> to vector<8x32xf32>
    %679 = arith.subf %669, %678 : vector<8x32xf32>
    %680 = arith.mulf %679, %679 : vector<8x32xf32>
    %cst_562 = arith.constant dense<0.000000e+00> : vector<8xf32>
    %681 = vector.multi_reduction <add>, %680, %cst_562 [1] : vector<8x32xf32> to vector<8xf32>
    %682 = vector.shape_cast %681 : vector<8xf32> to vector<8x1xf32>
    %cst_563 = arith.constant 3.200000e+01 : f32
    %683 = vector.broadcast %cst_563 : f32 to vector<8x1xf32>
    %684 = arith.divf %682, %683 : vector<8x1xf32>
    %685 = vector.broadcast %677 : vector<8x1xf32> to vector<8x32xf32>
    %686 = arith.subf %669, %685 : vector<8x32xf32>
    %cst_564 = arith.constant 9.99999974E-6 : f32
    %687 = vector.broadcast %cst_564 : f32 to vector<8x1xf32>
    %688 = arith.addf %684, %687 : vector<8x1xf32>
    %689 = math.rsqrt %688 : vector<8x1xf32>
    %690 = vector.broadcast %689 : vector<8x1xf32> to vector<8x32xf32>
    %691 = arith.mulf %686, %690 : vector<8x32xf32>
    %692 = vector.broadcast %671 : vector<1x32xf32> to vector<8x32xf32>
    %693 = arith.mulf %691, %692 : vector<8x32xf32>
    %694 = vector.broadcast %673 : vector<1x32xf32> to vector<8x32xf32>
    %695 = arith.addf %693, %694 : vector<8x32xf32>
    %c2_565 = arith.constant 2 : index
    %c0_566 = arith.constant 0 : index
    %c0_567 = arith.constant 0 : index
    %696 = vector.load %arg14[%c2_565, %c0_566, %c0_567] : memref<3x32x64xf32, #tpu.memory_space<vmem>>, vector<1x32x64xf32>
    %697 = vector.shape_cast %696 : vector<1x32x64xf32> to vector<32x64xf32>
    %cst_568 = arith.constant dense<0.000000e+00> : vector<8x64xf32>
    %698 = tpu.matmul %695, %697, %cst_568 {dimension_numbers = #tpu.dot_dimension_numbers<[1], [0], [0], [1], [0, 0, 1, 1], [], []>} : vector<8x32xf32>, vector<32x64xf32>, vector<8x64xf32> -> vector<8x64xf32>
    %c2_569 = arith.constant 2 : index
    %c0_570 = arith.constant 0 : index
    %c0_571 = arith.constant 0 : index
    %699 = vector.load %arg15[%c2_569, %c0_570, %c0_571] : memref<3x1x64xf32, #tpu.memory_space<vmem>>, vector<1x1x64xf32>
    %700 = vector.shape_cast %699 : vector<1x1x64xf32> to vector<1x64xf32>
    %701 = vector.broadcast %700 : vector<1x64xf32> to vector<8x64xf32>
    %702 = arith.addf %698, %701 : vector<8x64xf32>
    %cst_572 = arith.constant 0.000000e+00 : f32
    %703 = vector.broadcast %cst_572 : f32 to vector<8x64xf32>
    %704 = arith.maximumf %702, %703 : vector<8x64xf32>
    %c2_573 = arith.constant 2 : index
    %c0_574 = arith.constant 0 : index
    %c0_575 = arith.constant 0 : index
    %705 = vector.load %arg16[%c2_573, %c0_574, %c0_575] : memref<3x64x32xf32, #tpu.memory_space<vmem>>, vector<1x64x32xf32>
    %706 = vector.shape_cast %705 : vector<1x64x32xf32> to vector<64x32xf32>
    %cst_576 = arith.constant dense<0.000000e+00> : vector<8x32xf32>
    %707 = tpu.matmul %704, %706, %cst_576 {dimension_numbers = #tpu.dot_dimension_numbers<[1], [0], [0], [1], [0, 0, 1, 1], [], []>} : vector<8x64xf32>, vector<64x32xf32>, vector<8x32xf32> -> vector<8x32xf32>
    %c2_577 = arith.constant 2 : index
    %c0_578 = arith.constant 0 : index
    %c0_579 = arith.constant 0 : index
    %708 = vector.load %arg17[%c2_577, %c0_578, %c0_579] : memref<3x1x32xf32, #tpu.memory_space<vmem>>, vector<1x1x32xf32>
    %709 = vector.shape_cast %708 : vector<1x1x32xf32> to vector<1x32xf32>
    %710 = vector.broadcast %709 : vector<1x32xf32> to vector<8x32xf32>
    %711 = arith.addf %707, %710 : vector<8x32xf32>
    %712 = arith.addf %695, %711 : vector<8x32xf32>
    %c2_580 = arith.constant 2 : index
    %c0_581 = arith.constant 0 : index
    %c0_582 = arith.constant 0 : index
    %713 = vector.load %arg20[%c2_580, %c0_581, %c0_582] : memref<3x1x32xf32, #tpu.memory_space<vmem>>, vector<1x1x32xf32>
    %714 = vector.shape_cast %713 : vector<1x1x32xf32> to vector<1x32xf32>
    %c2_583 = arith.constant 2 : index
    %c0_584 = arith.constant 0 : index
    %c0_585 = arith.constant 0 : index
    %715 = vector.load %arg21[%c2_583, %c0_584, %c0_585] : memref<3x1x32xf32, #tpu.memory_space<vmem>>, vector<1x1x32xf32>
    %716 = vector.shape_cast %715 : vector<1x1x32xf32> to vector<1x32xf32>
    %cst_586 = arith.constant dense<0.000000e+00> : vector<8xf32>
    %717 = vector.multi_reduction <add>, %712, %cst_586 [1] : vector<8x32xf32> to vector<8xf32>
    %718 = vector.shape_cast %717 : vector<8xf32> to vector<8x1xf32>
    %cst_587 = arith.constant 3.200000e+01 : f32
    %719 = vector.broadcast %cst_587 : f32 to vector<8x1xf32>
    %720 = arith.divf %718, %719 : vector<8x1xf32>
    %721 = vector.broadcast %720 : vector<8x1xf32> to vector<8x32xf32>
    %722 = arith.subf %712, %721 : vector<8x32xf32>
    %723 = arith.mulf %722, %722 : vector<8x32xf32>
    %cst_588 = arith.constant dense<0.000000e+00> : vector<8xf32>
    %724 = vector.multi_reduction <add>, %723, %cst_588 [1] : vector<8x32xf32> to vector<8xf32>
    %725 = vector.shape_cast %724 : vector<8xf32> to vector<8x1xf32>
    %cst_589 = arith.constant 3.200000e+01 : f32
    %726 = vector.broadcast %cst_589 : f32 to vector<8x1xf32>
    %727 = arith.divf %725, %726 : vector<8x1xf32>
    %728 = vector.broadcast %720 : vector<8x1xf32> to vector<8x32xf32>
    %729 = arith.subf %712, %728 : vector<8x32xf32>
    %cst_590 = arith.constant 9.99999974E-6 : f32
    %730 = vector.broadcast %cst_590 : f32 to vector<8x1xf32>
    %731 = arith.addf %727, %730 : vector<8x1xf32>
    %732 = math.rsqrt %731 : vector<8x1xf32>
    %733 = vector.broadcast %732 : vector<8x1xf32> to vector<8x32xf32>
    %734 = arith.mulf %729, %733 : vector<8x32xf32>
    %735 = vector.broadcast %714 : vector<1x32xf32> to vector<8x32xf32>
    %736 = arith.mulf %734, %735 : vector<8x32xf32>
    %737 = vector.broadcast %716 : vector<1x32xf32> to vector<8x32xf32>
    %738 = arith.addf %736, %737 : vector<8x32xf32>
    %c0_591 = arith.constant 0 : index
    %c0_592 = arith.constant 0 : index
    %c0_593 = arith.constant 0 : index
    %739 = vector.load %arg22[%c0_591, %c0_592, %c0_593] : memref<1x8x32xf32, #tpu.memory_space<vmem>>, vector<1x8x32xf32>
    %740 = vector.shape_cast %739 : vector<1x8x32xf32> to vector<8x32xf32>
    %741 = vector.shape_cast %738 : vector<8x32xf32> to vector<1x8x32xf32>
    tpu.vector_store %arg22[%c0_591, %c0_592, %c0_593], %741 {strides = array<i32>} : memref<1x8x32xf32, #tpu.memory_space<vmem>>, vector<1x8x32xf32>,
    return
  }
  func.func @transform_0(%arg0: i32) -> (i32, i32, i32) {
    %c0_i32 = arith.constant 0 : i32
    %c0_i32_0 = arith.constant 0 : i32
    %c0_i32_1 = arith.constant 0 : i32
    return %arg0, %c0_i32, %c0_i32_0 : i32, i32, i32
  }
  func.func @transform_1(%arg0: i32) -> (i32, i32, i32) {
    %c0_i32 = arith.constant 0 : i32
    %c0_i32_0 = arith.constant 0 : i32
    %c0_i32_1 = arith.constant 0 : i32
    return %arg0, %c0_i32, %c0_i32_0 : i32, i32, i32
  }
  func.func @transform_2(%arg0: i32) -> (i32, i32, i32) {
    %c0_i32 = arith.constant 0 : i32
    %c0_i32_0 = arith.constant 0 : i32
    %c0_i32_1 = arith.constant 0 : i32
    return %arg0, %c0_i32, %c0_i32_0 : i32, i32, i32
  }
  func.func @transform_3(%arg0: i32) -> (i32, i32, i32) {
    %c0_i32 = arith.constant 0 : i32
    %c0_i32_0 = arith.constant 0 : i32
    %c0_i32_1 = arith.constant 0 : i32
    return %arg0, %c0_i32, %c0_i32_0 : i32, i32, i32
  }
  func.func @transform_4(%arg0: i32) -> (i32, i32, i32, i32) {
    %c0_i32 = arith.constant 0 : i32
    %c0_i32_0 = arith.constant 0 : i32
    %c0_i32_1 = arith.constant 0 : i32
    %c0_i32_2 = arith.constant 0 : i32
    return %arg0, %c0_i32, %c0_i32_0, %c0_i32_1 : i32, i32, i32, i32
  }
  func.func @transform_5(%arg0: i32) -> (i32, i32, i32, i32) {
    %c0_i32 = arith.constant 0 : i32
    %c0_i32_0 = arith.constant 0 : i32
    %c0_i32_1 = arith.constant 0 : i32
    %c0_i32_2 = arith.constant 0 : i32
    %c0_i32_3 = arith.constant 0 : i32
    return %c0_i32, %c0_i32_0, %c0_i32_1, %c0_i32_2 : i32, i32, i32, i32
  }
  func.func @transform_6(%arg0: i32) -> (i32, i32, i32, i32) {
    %c0_i32 = arith.constant 0 : i32
    %c0_i32_0 = arith.constant 0 : i32
    %c0_i32_1 = arith.constant 0 : i32
    %c0_i32_2 = arith.constant 0 : i32
    %c0_i32_3 = arith.constant 0 : i32
    return %c0_i32, %c0_i32_0, %c0_i32_1, %c0_i32_2 : i32, i32, i32, i32
  }
  func.func @transform_7(%arg0: i32) -> (i32, i32, i32, i32) {
    %c0_i32 = arith.constant 0 : i32
    %c0_i32_0 = arith.constant 0 : i32
    %c0_i32_1 = arith.constant 0 : i32
    %c0_i32_2 = arith.constant 0 : i32
    %c0_i32_3 = arith.constant 0 : i32
    return %c0_i32, %c0_i32_0, %c0_i32_1, %c0_i32_2 : i32, i32, i32, i32
  }
  func.func @transform_8(%arg0: i32) -> (i32, i32, i32, i32) {
    %c0_i32 = arith.constant 0 : i32
    %c0_i32_0 = arith.constant 0 : i32
    %c0_i32_1 = arith.constant 0 : i32
    %c0_i32_2 = arith.constant 0 : i32
    %c0_i32_3 = arith.constant 0 : i32
    return %c0_i32, %c0_i32_0, %c0_i32_1, %c0_i32_2 : i32, i32, i32, i32
  }
  func.func @transform_9(%arg0: i32) -> (i32, i32, i32, i32) {
    %c0_i32 = arith.constant 0 : i32
    %c0_i32_0 = arith.constant 0 : i32
    %c0_i32_1 = arith.constant 0 : i32
    %c0_i32_2 = arith.constant 0 : i32
    %c0_i32_3 = arith.constant 0 : i32
    return %c0_i32, %c0_i32_0, %c0_i32_1, %c0_i32_2 : i32, i32, i32, i32
  }
  func.func @transform_10(%arg0: i32) -> (i32, i32, i32, i32) {
    %c0_i32 = arith.constant 0 : i32
    %c0_i32_0 = arith.constant 0 : i32
    %c0_i32_1 = arith.constant 0 : i32
    %c0_i32_2 = arith.constant 0 : i32
    %c0_i32_3 = arith.constant 0 : i32
    return %c0_i32, %c0_i32_0, %c0_i32_1, %c0_i32_2 : i32, i32, i32, i32
  }
  func.func @transform_11(%arg0: i32) -> (i32, i32, i32, i32) {
    %c0_i32 = arith.constant 0 : i32
    %c0_i32_0 = arith.constant 0 : i32
    %c0_i32_1 = arith.constant 0 : i32
    %c0_i32_2 = arith.constant 0 : i32
    %c0_i32_3 = arith.constant 0 : i32
    return %c0_i32, %c0_i32_0, %c0_i32_1, %c0_i32_2 : i32, i32, i32, i32
  }
  func.func @transform_12(%arg0: i32) -> (i32, i32, i32) {
    %c0_i32 = arith.constant 0 : i32
    %c0_i32_0 = arith.constant 0 : i32
    %c0_i32_1 = arith.constant 0 : i32
    %c0_i32_2 = arith.constant 0 : i32
    return %c0_i32, %c0_i32_0, %c0_i32_1 : i32, i32, i32
  }
  func.func @transform_13(%arg0: i32) -> (i32, i32, i32) {
    %c0_i32 = arith.constant 0 : i32
    %c0_i32_0 = arith.constant 0 : i32
    %c0_i32_1 = arith.constant 0 : i32
    %c0_i32_2 = arith.constant 0 : i32
    return %c0_i32, %c0_i32_0, %c0_i32_1 : i32, i32, i32
  }
  func.func @transform_14(%arg0: i32) -> (i32, i32, i32) {
    %c0_i32 = arith.constant 0 : i32
    %c0_i32_0 = arith.constant 0 : i32
    %c0_i32_1 = arith.constant 0 : i32
    %c0_i32_2 = arith.constant 0 : i32
    return %c0_i32, %c0_i32_0, %c0_i32_1 : i32, i32, i32
  }
  func.func @transform_15(%arg0: i32) -> (i32, i32, i32) {
    %c0_i32 = arith.constant 0 : i32
    %c0_i32_0 = arith.constant 0 : i32
    %c0_i32_1 = arith.constant 0 : i32
    %c0_i32_2 = arith.constant 0 : i32
    return %c0_i32, %c0_i32_0, %c0_i32_1 : i32, i32, i32
  }
  func.func @transform_16(%arg0: i32) -> (i32, i32, i32) {
    %c0_i32 = arith.constant 0 : i32
    %c0_i32_0 = arith.constant 0 : i32
    %c0_i32_1 = arith.constant 0 : i32
    %c0_i32_2 = arith.constant 0 : i32
    return %c0_i32, %c0_i32_0, %c0_i32_1 : i32, i32, i32
  }
  func.func @transform_17(%arg0: i32) -> (i32, i32, i32) {
    %c0_i32 = arith.constant 0 : i32
    %c0_i32_0 = arith.constant 0 : i32
    %c0_i32_1 = arith.constant 0 : i32
    %c0_i32_2 = arith.constant 0 : i32
    return %c0_i32, %c0_i32_0, %c0_i32_1 : i32, i32, i32
  }
  func.func @transform_18(%arg0: i32) -> (i32, i32, i32) {
    %c0_i32 = arith.constant 0 : i32
    %c0_i32_0 = arith.constant 0 : i32
    %c0_i32_1 = arith.constant 0 : i32
    %c0_i32_2 = arith.constant 0 : i32
    return %c0_i32, %c0_i32_0, %c0_i32_1 : i32, i32, i32
  }
  func.func @transform_19(%arg0: i32) -> (i32, i32, i32) {
    %c0_i32 = arith.constant 0 : i32
    %c0_i32_0 = arith.constant 0 : i32
    %c0_i32_1 = arith.constant 0 : i32
    %c0_i32_2 = arith.constant 0 : i32
    return %c0_i32, %c0_i32_0, %c0_i32_1 : i32, i32, i32
  }
  func.func @transform_20(%arg0: i32) -> (i32, i32, i32) {
    %c0_i32 = arith.constant 0 : i32
    %c0_i32_0 = arith.constant 0 : i32
    %c0_i32_1 = arith.constant 0 : i32
    %c0_i32_2 = arith.constant 0 : i32
    return %c0_i32, %c0_i32_0, %c0_i32_1 : i32, i32, i32
  }
  func.func @transform_21(%arg0: i32) -> (i32, i32, i32) {
    %c0_i32 = arith.constant 0 : i32
    %c0_i32_0 = arith.constant 0 : i32
    %c0_i32_1 = arith.constant 0 : i32
    return %arg0, %c0_i32, %c0_i32_0 : i32, i32, i32
  }
}

</mosaic_0001>

<llo_original>
// kernel: block_forward.1
$region0: #{block_forward.1}
  #allocation0 [shape = 'u32[]', space=smem, size = 0x4, offset = 0x4, fixed_abs, tag = 'smem constant byte address 0x4 - core index']
  #allocation1 [shape = 'u32[144,128]{1,0:T(1,128)}', space=vmem, size = 0x12000, scoped, tag = 'internal scratch']
  %s0 = inlined_call_operand.vmem [shape: f32[2,8,32], index: 0, kind: input, shape index: {}]
  %s1 = inlined_call_operand.vmem [shape: f32[2,12,32], index: 1, kind: input, shape index: {}]
  %s2 = inlined_call_operand.vmem [shape: f32[2,1,8], index: 2, kind: input, shape index: {}]
  %s3 = inlined_call_operand.vmem [shape: f32[2,1,12], index: 3, kind: input, shape index: {}]
  %s4 = inlined_call_operand.vmem [shape: f32[2,4,8,12], index: 4, kind: input, shape index: {}]
  %s5 = inlined_call_operand.vmem [shape: f32[3,4,32,8], index: 5, kind: input, shape index: {}]
  %s6 = inlined_call_operand.vmem [shape: f32[3,4,1,8], index: 6, kind: input, shape index: {}]
  %s7 = inlined_call_operand.vmem [shape: f32[3,4,32,8], index: 7, kind: input, shape index: {}]
  %s8 = inlined_call_operand.vmem [shape: f32[3,4,1,8], index: 8, kind: input, shape index: {}]
  %s9 = inlined_call_operand.vmem [shape: f32[3,4,32,8], index: 9, kind: input, shape index: {}]
  %s10 = inlined_call_operand.vmem [shape: f32[3,4,1,8], index: 10, kind: input, shape index: {}]
  %s11 = inlined_call_operand.vmem [shape: f32[3,4,8,32], index: 11, kind: input, shape index: {}]
  %s12 = inlined_call_operand.vmem [shape: f32[3,1,32], index: 12, kind: input, shape index: {}]
  %s13 = inlined_call_operand.vmem [shape: f32[3,32,64], index: 13, kind: input, shape index: {}]
  %s14 = inlined_call_operand.vmem [shape: f32[3,1,64], index: 14, kind: input, shape index: {}]
  %s15 = inlined_call_operand.vmem [shape: f32[3,64,32], index: 15, kind: input, shape index: {}]
  %s16 = inlined_call_operand.vmem [shape: f32[3,1,32], index: 16, kind: input, shape index: {}]
  %s17 = inlined_call_operand.vmem [shape: f32[3,1,32], index: 17, kind: input, shape index: {}]
  %s18 = inlined_call_operand.vmem [shape: f32[3,1,32], index: 18, kind: input, shape index: {}]
  %s19 = inlined_call_operand.vmem [shape: f32[3,1,32], index: 19, kind: input, shape index: {}]
  %s20 = inlined_call_operand.vmem [shape: f32[3,1,32], index: 20, kind: input, shape index: {}]
  %s21 = inlined_call_operand.hbm [shape: f32[2,8,32], index: 21, kind: output, shape index: {}]
  %s22 = sld [smem:[#allocation0]]
  $region117: #{block_forward.1} parent=0
    _
  %s24 = ssub.s32 1, %s22
  %s25 = scalar_select 0, %s24, %s22
  $region1: #{block_forward.1} parent=0
    #allocation2 [shape = 'u8[8192]{0}', space=vmem, size = 0x2000, scoped, tag = 'output window, operand 0']
    #allocation3 [shape = 's32[2]{0}', space=sflag, size = 0x8, scoped, tag = 'scoped memory for block_forward.1']
    %26 = vsyncpa [#allocation3], 0
    %s27 = scalar_lea.sflag [#allocation3], 1
    %28 = vsyncpa %s27, 0
    loop: start=0, step=1, limit=4
    $region2: #{block_forward.1} parent=1 // loop_pre_header
      _
    $region3: #{block_forward.1} parent=1 // loop_header
      %s30 = sphi 0, %s34
      %p31 = scmp.ge.s32.totalorder %s30, 4
      %s40 = sphi 0, %s42
      %s43 = sphi 0, %s40
      %s44 = sphi 0, %s43
      %s60 = sphi 0, %s44
      %s66 = sphi 0, %s68
      %s69 = sphi 0, %s66
      %s70 = sphi 0, %s69
      %s86 = sphi 0, %s70
      %s92 = sphi 0, %s94
      %s95 = sphi 0, %s92
      %s96 = sphi 0, %s95
      %s112 = sphi 0, %s96
      %s118 = sphi 0, %s120
      %s121 = sphi 0, %s118
      %s122 = sphi 0, %s121
      %s138 = sphi 0, %s122
      %s144 = sphi 0, %s146
      %s147 = sphi 0, %s144
      %s148 = sphi 0, %s147
      %s164 = sphi 0, %s148
      %s168 = sphi 0, %s168
      %s170 = sphi 0, %s168
      %s171 = sphi 0, %s170
      %s185 = sphi 0, %s171
      %s189 = sphi 0, %s189
      %s191 = sphi 0, %s189
      %s192 = sphi 0, %s191
      %s206 = sphi 0, %s192
      %s210 = sphi 0, %s210
      %s212 = sphi 0, %s210
      %s213 = sphi 0, %s212
      %s227 = sphi 0, %s213
      %s231 = sphi 0, %s231
      %s233 = sphi 0, %s231
      %s234 = sphi 0, %s233
      %s248 = sphi 0, %s234
      %s252 = sphi 0, %s252
      %s254 = sphi 0, %s252
      %s255 = sphi 0, %s254
      %s269 = sphi 0, %s255
      %s273 = sphi 0, %s273
      %s275 = sphi 0, %s273
      %s276 = sphi 0, %s275
      %s290 = sphi 0, %s276
      %s294 = sphi 0, %s294
      %s296 = sphi 0, %s294
      %s297 = sphi 0, %s296
      %s311 = sphi 0, %s297
      %s315 = sphi 0, %s315
      %s317 = sphi 0, %s315
      %s318 = sphi 0, %s317
      %s332 = sphi 0, %s318
      %s336 = sphi 0, %s336
      %s338 = sphi 0, %s336
      %s339 = sphi 0, %s338
      %s353 = sphi 0, %s339
      %s357 = sphi 0, %s357
      %s359 = sphi 0, %s357
      %s360 = sphi 0, %s359
      %s374 = sphi 0, %s360
      %s378 = sphi 0, %s378
      %s380 = sphi 0, %s378
      %s381 = sphi 0, %s380
      %s395 = sphi 0, %s381
      %s399 = sphi 0, %s399
      %s401 = sphi 0, %s399
      %s402 = sphi 0, %s401
      %s416 = sphi 0, %s402
      %s420 = sphi 0, %s420
      %s422 = sphi 0, %s420
      %s423 = sphi 0, %s422
      %s437 = sphi 0, %s423
      %s441 = sphi 0, %s441
      %s443 = sphi 0, %s441
      %s444 = sphi 0, %s443
      %s458 = sphi 0, %s444
      %s462 = sphi 0, %s462
      %s464 = sphi 0, %s462
      %s465 = sphi 0, %s464
      %s479 = sphi 0, %s465
      %s483 = sphi 0, %s483
      %s485 = sphi 0, %s483
      %s486 = sphi 0, %s485
      %s500 = sphi 0, %s486
      %s506 = sphi 0, %s508
      %s509 = sphi 0, %s506
      %s510 = sphi 0, %s509
      %s526 = sphi 0, %s510
    $region4: #{block_forward.1} parent=1 // loop_header_branch
      %33 = sbr.rel (%p31) target = $region8
    $region5: #{block_forward.1} parent=1 // loop_body
      %s35 = ssub.s32 %s30, 1
      %s36 = ssub.s32 %s30, 2
      %s37 = sadd.s32 %s30, 1
      %s38 = ssub.s32 %s30, %s37
      %p39 = scmp.eq.s32.totalorder %s38, 0
      %s41 = sadd.s32 %s40, 1
      %s42 = scalar_select %p39, %s40, %s41
      %p45 = pneg %p39
      %p46 = scmp.eq.s32.totalorder %s30, 1
      %p47 = por %p45, %p46
      %p48 = scmp.ne.s32.totalorder %s40, %s43
      %p49 = scmp.eq.s32.totalorder %s30, 0
      %p50 = por %p48, %p49
      %p51 = scmp.ne.s32.totalorder %s40, %s43
      %p52 = scmp.eq.s32.totalorder %s35, 1
      %p53 = por %p51, %p52
      %p54 = scmp.ne.s32.totalorder %s43, %s44
      %p55 = scmp.eq.s32.totalorder %s35, 0
      %p56 = por %p54, %p55
      %p57 = scmp.ne.s32.totalorder %s43, %s44
      %p58 = scmp.eq.s32.totalorder %s36, 1
      %p59 = por %p57, %p58
      %p61 = scmp.ne.s32.totalorder %s44, %s60
      %p62 = scmp.eq.s32.totalorder %s36, 0
      %p63 = por %p61, %p62
      %s64 = ssub.s32 %s30, %s37
      %p65 = scmp.eq.s32.totalorder %s64, 0
      %s67 = sadd.s32 %s66, 1
      %s68 = scalar_select %p65, %s66, %s67
      %p71 = pneg %p65
      %p72 = scmp.eq.s32.totalorder %s30, 1
      %p73 = por %p71, %p72
      %p74 = scmp.ne.s32.totalorder %s66, %s69
      %p75 = scmp.eq.s32.totalorder %s30, 0
      %p76 = por %p74, %p75
      %p77 = scmp.ne.s32.totalorder %s66, %s69
      %p78 = scmp.eq.s32.totalorder %s35, 1
      %p79 = por %p77, %p78
      %p80 = scmp.ne.s32.totalorder %s69, %s70
      %p81 = scmp.eq.s32.totalorder %s35, 0
      %p82 = por %p80, %p81
      %p83 = scmp.ne.s32.totalorder %s69, %s70
      %p84 = scmp.eq.s32.totalorder %s36, 1
      %p85 = por %p83, %p84
      %p87 = scmp.ne.s32.totalorder %s70, %s86
      %p88 = scmp.eq.s32.totalorder %s36, 0
      %p89 = por %p87, %p88
      %s90 = ssub.s32 %s30, %s37
      %p91 = scmp.eq.s32.totalorder %s90, 0
      %s93 = sadd.s32 %s92, 1
      %s94 = scalar_select %p91, %s92, %s93
      %p97 = pneg %p91
      %p98 = scmp.eq.s32.totalorder %s30, 1
      %p99 = por %p97, %p98
      %p100 = scmp.ne.s32.totalorder %s92, %s95
      %p101 = scmp.eq.s32.totalorder %s30, 0
      %p102 = por %p100, %p101
      %p103 = scmp.ne.s32.totalorder %s92, %s95
      %p104 = scmp.eq.s32.totalorder %s35, 1
      %p105 = por %p103, %p104
      %p106 = scmp.ne.s32.totalorder %s95, %s96
      %p107 = scmp.eq.s32.totalorder %s35, 0
      %p108 = por %p106, %p107
      %p109 = scmp.ne.s32.totalorder %s95, %s96
      %p110 = scmp.eq.s32.totalorder %s36, 1
      %p111 = por %p109, %p110
      %p113 = scmp.ne.s32.totalorder %s96, %s112
      %p114 = scmp.eq.s32.totalorder %s36, 0
      %p115 = por %p113, %p114
      %s116 = ssub.s32 %s30, %s37
      %p117 = scmp.eq.s32.totalorder %s116, 0
      %s119 = sadd.s32 %s118, 1
      %s120 = scalar_select %p117, %s118, %s119
      %p123 = pneg %p117
      %p124 = scmp.eq.s32.totalorder %s30, 1
      %p125 = por %p123, %p124
      %p126 = scmp.ne.s32.totalorder %s118, %s121
      %p127 = scmp.eq.s32.totalorder %s30, 0
      %p128 = por %p126, %p127
      %p129 = scmp.ne.s32.totalorder %s118, %s121
      %p130 = scmp.eq.s32.totalorder %s35, 1
      %p131 = por %p129, %p130
      %p132 = scmp.ne.s32.totalorder %s121, %s122
      %p133 = scmp.eq.s32.totalorder %s35, 0
      %p134 = por %p132, %p133
      %p135 = scmp.ne.s32.totalorder %s121, %s122
      %p136 = scmp.eq.s32.totalorder %s36, 1
      %p137 = por %p135, %p136
      %p139 = scmp.ne.s32.totalorder %s122, %s138
      %p140 = scmp.eq.s32.totalorder %s36, 0
      %p141 = por %p139, %p140
      %s142 = ssub.s32 %s30, %s37
      %p143 = scmp.eq.s32.totalorder %s142, 0
      %s145 = sadd.s32 %s144, 1
      %s146 = scalar_select %p143, %s144, %s145
      %p149 = pneg %p143
      %p150 = scmp.eq.s32.totalorder %s30, 1
      %p151 = por %p149, %p150
      %p152 = scmp.ne.s32.totalorder %s144, %s147
      %p153 = scmp.eq.s32.totalorder %s30, 0
      %p154 = por %p152, %p153
      %p155 = scmp.ne.s32.totalorder %s144, %s147
      %p156 = scmp.eq.s32.totalorder %s35, 1
      %p157 = por %p155, %p156
      %p158 = scmp.ne.s32.totalorder %s147, %s148
      %p159 = scmp.eq.s32.totalorder %s35, 0
      %p160 = por %p158, %p159
      %p161 = scmp.ne.s32.totalorder %s147, %s148
      %p162 = scmp.eq.s32.totalorder %s36, 1
      %p163 = por %p161, %p162
      %p165 = scmp.ne.s32.totalorder %s148, %s164
      %p166 = scmp.eq.s32.totalorder %s36, 0
      %p167 = por %p165, %p166
      %s169 = sadd.s32 %s168, 1
      %p172 = scmp.eq.s32.totalorder %s30, 1
      %p173 = scmp.ne.s32.totalorder %s168, %s170
      %p174 = scmp.eq.s32.totalorder %s30, 0
      %p175 = por %p173, %p174
      %p176 = scmp.ne.s32.totalorder %s168, %s170
      %p177 = scmp.eq.s32.totalorder %s35, 1
      %p178 = por %p176, %p177
      %p179 = scmp.ne.s32.totalorder %s170, %s171
      %p180 = scmp.eq.s32.totalorder %s35, 0
      %p181 = por %p179, %p180
      %p182 = scmp.ne.s32.totalorder %s170, %s171
      %p183 = scmp.eq.s32.totalorder %s36, 1
      %p184 = por %p182, %p183
      %p186 = scmp.ne.s32.totalorder %s171, %s185
      %p187 = scmp.eq.s32.totalorder %s36, 0
      %p188 = por %p186, %p187
      %s190 = sadd.s32 %s189, 1
      %p193 = scmp.eq.s32.totalorder %s30, 1
      %p194 = scmp.ne.s32.totalorder %s189, %s191
      %p195 = scmp.eq.s32.totalorder %s30, 0
      %p196 = por %p194, %p195
      %p197 = scmp.ne.s32.totalorder %s189, %s191
      %p198 = scmp.eq.s32.totalorder %s35, 1
      %p199 = por %p197, %p198
      %p200 = scmp.ne.s32.totalorder %s191, %s192
      %p201 = scmp.eq.s32.totalorder %s35, 0
      %p202 = por %p200, %p201
      %p203 = scmp.ne.s32.totalorder %s191, %s192
      %p204 = scmp.eq.s32.totalorder %s36, 1
      %p205 = por %p203, %p204
      %p207 = scmp.ne.s32.totalorder %s192, %s206
      %p208 = scmp.eq.s32.totalorder %s36, 0
      %p209 = por %p207, %p208
      %s211 = sadd.s32 %s210, 1
      %p214 = scmp.eq.s32.totalorder %s30, 1
      %p215 = scmp.ne.s32.totalorder %s210, %s212
      %p216 = scmp.eq.s32.totalorder %s30, 0
      %p217 = por %p215, %p216
      %p218 = scmp.ne.s32.totalorder %s210, %s212
      %p219 = scmp.eq.s32.totalorder %s35, 1
      %p220 = por %p218, %p219
      %p221 = scmp.ne.s32.totalorder %s212, %s213
      %p222 = scmp.eq.s32.totalorder %s35, 0
      %p223 = por %p221, %p222
      %p224 = scmp.ne.s32.totalorder %s212, %s213
      %p225 = scmp.eq.s32.totalorder %s36, 1
      %p226 = por %p224, %p225
      %p228 = scmp.ne.s32.totalorder %s213, %s227
      %p229 = scmp.eq.s32.totalorder %s36, 0
      %p230 = por %p228, %p229
      %s232 = sadd.s32 %s231, 1
      %p235 = scmp.eq.s32.totalorder %s30, 1
      %p236 = scmp.ne.s32.totalorder %s231, %s233
      %p237 = scmp.eq.s32.totalorder %s30, 0
      %p238 = por %p236, %p237
      %p239 = scmp.ne.s32.totalorder %s231, %s233
      %p240 = scmp.eq.s32.totalorder %s35, 1
      %p241 = por %p239, %p240
      %p242 = scmp.ne.s32.totalorder %s233, %s234
      %p243 = scmp.eq.s32.totalorder %s35, 0
      %p244 = por %p242, %p243
      %p245 = scmp.ne.s32.totalorder %s233, %s234
      %p246 = scmp.eq.s32.totalorder %s36, 1
      %p247 = por %p245, %p246
      %p249 = scmp.ne.s32.totalorder %s234, %s248
      %p250 = scmp.eq.s32.totalorder %s36, 0
      %p251 = por %p249, %p250
      %s253 = sadd.s32 %s252, 1
      %p256 = scmp.eq.s32.totalorder %s30, 1
      %p257 = scmp.ne.s32.totalorder %s252, %s254
      %p258 = scmp.eq.s32.totalorder %s30, 0
      %p259 = por %p257, %p258
      %p260 = scmp.ne.s32.totalorder %s252, %s254
      %p261 = scmp.eq.s32.totalorder %s35, 1
      %p262 = por %p260, %p261
      %p263 = scmp.ne.s32.totalorder %s254, %s255
      %p264 = scmp.eq.s32.totalorder %s35, 0
      %p265 = por %p263, %p264
      %p266 = scmp.ne.s32.totalorder %s254, %s255
      %p267 = scmp.eq.s32.totalorder %s36, 1
      %p268 = por %p266, %p267
      %p270 = scmp.ne.s32.totalorder %s255, %s269
      %p271 = scmp.eq.s32.totalorder %s36, 0
      %p272 = por %p270, %p271
      %s274 = sadd.s32 %s273, 1
      %p277 = scmp.eq.s32.totalorder %s30, 1
      %p278 = scmp.ne.s32.totalorder %s273, %s275
      %p279 = scmp.eq.s32.totalorder %s30, 0
      %p280 = por %p278, %p279
      %p281 = scmp.ne.s32.totalorder %s273, %s275
      %p282 = scmp.eq.s32.totalorder %s35, 1
      %p283 = por %p281, %p282
      %p284 = scmp.ne.s32.totalorder %s275, %s276
      %p285 = scmp.eq.s32.totalorder %s35, 0
      %p286 = por %p284, %p285
      %p287 = scmp.ne.s32.totalorder %s275, %s276
      %p288 = scmp.eq.s32.totalorder %s36, 1
      %p289 = por %p287, %p288
      %p291 = scmp.ne.s32.totalorder %s276, %s290
      %p292 = scmp.eq.s32.totalorder %s36, 0
      %p293 = por %p291, %p292
      %s295 = sadd.s32 %s294, 1
      %p298 = scmp.eq.s32.totalorder %s30, 1
      %p299 = scmp.ne.s32.totalorder %s294, %s296
      %p300 = scmp.eq.s32.totalorder %s30, 0
      %p301 = por %p299, %p300
      %p302 = scmp.ne.s32.totalorder %s294, %s296
      %p303 = scmp.eq.s32.totalorder %s35, 1
      %p304 = por %p302, %p303
      %p305 = scmp.ne.s32.totalorder %s296, %s297
      %p306 = scmp.eq.s32.totalorder %s35, 0
      %p307 = por %p305, %p306
      %p308 = scmp.ne.s32.totalorder %s296, %s297
      %p309 = scmp.eq.s32.totalorder %s36, 1
      %p310 = por %p308, %p309
      %p312 = scmp.ne.s32.totalorder %s297, %s311
      %p313 = scmp.eq.s32.totalorder %s36, 0
      %p314 = por %p312, %p313
      %s316 = sadd.s32 %s315, 1
      %p319 = scmp.eq.s32.totalorder %s30, 1
      %p320 = scmp.ne.s32.totalorder %s315, %s317
      %p321 = scmp.eq.s32.totalorder %s30, 0
      %p322 = por %p320, %p321
      %p323 = scmp.ne.s32.totalorder %s315, %s317
      %p324 = scmp.eq.s32.totalorder %s35, 1
      %p325 = por %p323, %p324
      %p326 = scmp.ne.s32.totalorder %s317, %s318
      %p327 = scmp.eq.s32.totalorder %s35, 0
      %p328 = por %p326, %p327
      %p329 = scmp.ne.s32.totalorder %s317, %s318
      %p330 = scmp.eq.s32.totalorder %s36, 1
      %p331 = por %p329, %p330
      %p333 = scmp.ne.s32.totalorder %s318, %s332
      %p334 = scmp.eq.s32.totalorder %s36, 0
      %p335 = por %p333, %p334
      %s337 = sadd.s32 %s336, 1
      %p340 = scmp.eq.s32.totalorder %s30, 1
      %p341 = scmp.ne.s32.totalorder %s336, %s338
      %p342 = scmp.eq.s32.totalorder %s30, 0
      %p343 = por %p341, %p342
      %p344 = scmp.ne.s32.totalorder %s336, %s338
      %p345 = scmp.eq.s32.totalorder %s35, 1
      %p346 = por %p344, %p345
      %p347 = scmp.ne.s32.totalorder %s338, %s339
      %p348 = scmp.eq.s32.totalorder %s35, 0
      %p349 = por %p347, %p348
      %p350 = scmp.ne.s32.totalorder %s338, %s339
      %p351 = scmp.eq.s32.totalorder %s36, 1
      %p352 = por %p350, %p351
      %p354 = scmp.ne.s32.totalorder %s339, %s353
      %p355 = scmp.eq.s32.totalorder %s36, 0
      %p356 = por %p354, %p355
      %s358 = sadd.s32 %s357, 1
      %p361 = scmp.eq.s32.totalorder %s30, 1
      %p362 = scmp.ne.s32.totalorder %s357, %s359
      %p363 = scmp.eq.s32.totalorder %s30, 0
      %p364 = por %p362, %p363
      %p365 = scmp.ne.s32.totalorder %s357, %s359
      %p366 = scmp.eq.s32.totalorder %s35, 1
      %p367 = por %p365, %p366
      %p368 = scmp.ne.s32.totalorder %s359, %s360
      %p369 = scmp.eq.s32.totalorder %s35, 0
      %p370 = por %p368, %p369
      %p371 = scmp.ne.s32.totalorder %s359, %s360
      %p372 = scmp.eq.s32.totalorder %s36, 1
      %p373 = por %p371, %p372
      %p375 = scmp.ne.s32.totalorder %s360, %s374
      %p376 = scmp.eq.s32.totalorder %s36, 0
      %p377 = por %p375, %p376
      %s379 = sadd.s32 %s378, 1
      %p382 = scmp.eq.s32.totalorder %s30, 1
      %p383 = scmp.ne.s32.totalorder %s378, %s380
      %p384 = scmp.eq.s32.totalorder %s30, 0
      %p385 = por %p383, %p384
      %p386 = scmp.ne.s32.totalorder %s378, %s380
      %p387 = scmp.eq.s32.totalorder %s35, 1
      %p388 = por %p386, %p387
      %p389 = scmp.ne.s32.totalorder %s380, %s381
      %p390 = scmp.eq.s32.totalorder %s35, 0
      %p391 = por %p389, %p390
      %p392 = scmp.ne.s32.totalorder %s380, %s381
      %p393 = scmp.eq.s32.totalorder %s36, 1
      %p394 = por %p392, %p393
      %p396 = scmp.ne.s32.totalorder %s381, %s395
      %p397 = scmp.eq.s32.totalorder %s36, 0
      %p398 = por %p396, %p397
      %s400 = sadd.s32 %s399, 1
      %p403 = scmp.eq.s32.totalorder %s30, 1
      %p404 = scmp.ne.s32.totalorder %s399, %s401
      %p405 = scmp.eq.s32.totalorder %s30, 0
      %p406 = por %p404, %p405
      %p407 = scmp.ne.s32.totalorder %s399, %s401
      %p408 = scmp.eq.s32.totalorder %s35, 1
      %p409 = por %p407, %p408
      %p410 = scmp.ne.s32.totalorder %s401, %s402
      %p411 = scmp.eq.s32.totalorder %s35, 0
      %p412 = por %p410, %p411
      %p413 = scmp.ne.s32.totalorder %s401, %s402
      %p414 = scmp.eq.s32.totalorder %s36, 1
      %p415 = por %p413, %p414
      %p417 = scmp.ne.s32.totalorder %s402, %s416
      %p418 = scmp.eq.s32.totalorder %s36, 0
      %p419 = por %p417, %p418
      %s421 = sadd.s32 %s420, 1
      %p424 = scmp.eq.s32.totalorder %s30, 1
      %p425 = scmp.ne.s32.totalorder %s420, %s422
      %p426 = scmp.eq.s32.totalorder %s30, 0
      %p427 = por %p425, %p426
      %p428 = scmp.ne.s32.totalorder %s420, %s422
      %p429 = scmp.eq.s32.totalorder %s35, 1
      %p430 = por %p428, %p429
      %p431 = scmp.ne.s32.totalorder %s422, %s423
      %p432 = scmp.eq.s32.totalorder %s35, 0
      %p433 = por %p431, %p432
      %p434 = scmp.ne.s32.totalorder %s422, %s423
      %p435 = scmp.eq.s32.totalorder %s36, 1
      %p436 = por %p434, %p435
      %p438 = scmp.ne.s32.totalorder %s423, %s437
      %p439 = scmp.eq.s32.totalorder %s36, 0
      %p440 = por %p438, %p439
      %s442 = sadd.s32 %s441, 1
      %p445 = scmp.eq.s32.totalorder %s30, 1
      %p446 = scmp.ne.s32.totalorder %s441, %s443
      %p447 = scmp.eq.s32.totalorder %s30, 0
      %p448 = por %p446, %p447
      %p449 = scmp.ne.s32.totalorder %s441, %s443
      %p450 = scmp.eq.s32.totalorder %s35, 1
      %p451 = por %p449, %p450
      %p452 = scmp.ne.s32.totalorder %s443, %s444
      %p453 = scmp.eq.s32.totalorder %s35, 0
      %p454 = por %p452, %p453
      %p455 = scmp.ne.s32.totalorder %s443, %s444
      %p456 = scmp.eq.s32.totalorder %s36, 1
      %p457 = por %p455, %p456
      %p459 = scmp.ne.s32.totalorder %s444, %s458
      %p460 = scmp.eq.s32.totalorder %s36, 0
      %p461 = por %p459, %p460
      %s463 = sadd.s32 %s462, 1
      %p466 = scmp.eq.s32.totalorder %s30, 1
      %p467 = scmp.ne.s32.totalorder %s462, %s464
      %p468 = scmp.eq.s32.totalorder %s30, 0
      %p469 = por %p467, %p468
      %p470 = scmp.ne.s32.totalorder %s462, %s464
      %p471 = scmp.eq.s32.totalorder %s35, 1
      %p472 = por %p470, %p471
      %p473 = scmp.ne.s32.totalorder %s464, %s465
      %p474 = scmp.eq.s32.totalorder %s35, 0
      %p475 = por %p473, %p474
      %p476 = scmp.ne.s32.totalorder %s464, %s465
      %p477 = scmp.eq.s32.totalorder %s36, 1
      %p478 = por %p476, %p477
      %p480 = scmp.ne.s32.totalorder %s465, %s479
      %p481 = scmp.eq.s32.totalorder %s36, 0
      %p482 = por %p480, %p481
      %s484 = sadd.s32 %s483, 1
      %p487 = scmp.eq.s32.totalorder %s30, 1
      %p488 = scmp.ne.s32.totalorder %s483, %s485
      %p489 = scmp.eq.s32.totalorder %s30, 0
      %p490 = por %p488, %p489
      %p491 = scmp.ne.s32.totalorder %s483, %s485
      %p492 = scmp.eq.s32.totalorder %s35, 1
      %p493 = por %p491, %p492
      %p494 = scmp.ne.s32.totalorder %s485, %s486
      %p495 = scmp.eq.s32.totalorder %s35, 0
      %p496 = por %p494, %p495
      %p497 = scmp.ne.s32.totalorder %s485, %s486
      %p498 = scmp.eq.s32.totalorder %s36, 1
      %p499 = por %p497, %p498
      %p501 = scmp.ne.s32.totalorder %s486, %s500
      %p502 = scmp.eq.s32.totalorder %s36, 0
      %p503 = por %p501, %p502
      %s504 = ssub.s32 %s30, %s37
      %p505 = scmp.eq.s32.totalorder %s504, 0
      %s507 = sadd.s32 %s506, 1
      %s508 = scalar_select %p505, %s506, %s507
      %p511 = pneg %p505
      %p512 = scmp.eq.s32.totalorder %s30, 1
      %p513 = por %p511, %p512
      %p514 = scmp.ne.s32.totalorder %s506, %s509
      %p515 = scmp.eq.s32.totalorder %s30, 0
      %p516 = por %p514, %p515
      %p517 = scmp.ne.s32.totalorder %s506, %s509
      %p518 = scmp.eq.s32.totalorder %s35, 1
      %p519 = por %p517, %p518
      %p520 = scmp.ne.s32.totalorder %s509, %s510
      %p521 = scmp.eq.s32.totalorder %s35, 0
      %p522 = por %p520, %p521
      %p523 = scmp.ne.s32.totalorder %s509, %s510
      %p524 = scmp.eq.s32.totalorder %s36, 1
      %p525 = por %p523, %p524
      %p527 = scmp.ne.s32.totalorder %s510, %s526
      %p528 = scmp.eq.s32.totalorder %s36, 0
      %p529 = por %p527, %p528
      %p530 = scmp.le.s32.totalorder 1, %s30
      %p531 = scmp.lt.s32.totalorder %s30, 3
      %p532 = pnand %p530, %p531
      %p533 = pneg %p532
      // Predicated region
      $region9: #{block_forward.1} parent=5 // pred_check
        _
      $region10: #{block_forward.1} parent=5 // pred_check_branch
        %535 = sbr.rel (%p532) target = $region12
      $region11: #{block_forward.1} parent=5 // pred_region
        %s536 = ssub.s32 %s30, 1
        // Predicated region
        $region13: #{block_forward.1} parent=11 // pred_check
          %p537 = pneg %p181
        $region14: #{block_forward.1} parent=11 // pred_check_branch
          %539 = sbr.rel (%p537) target = $region16
        $region15: #{block_forward.1} parent=11 // pred_region
          _
        $region16: #{block_forward.1} parent=11 // pred_fallthru
          _
        // Predicated region
        $region17: #{block_forward.1} parent=11 // pred_check
          %p540 = pneg %p202
        $region18: #{block_forward.1} parent=11 // pred_check_branch
          %542 = sbr.rel (%p540) target = $region20
        $region19: #{block_forward.1} parent=11 // pred_region
          _
        $region20: #{block_forward.1} parent=11 // pred_fallthru
          _
        // Predicated region
        $region21: #{block_forward.1} parent=11 // pred_check
          %p543 = pneg %p223
        $region22: #{block_forward.1} parent=11 // pred_check_branch
          %545 = sbr.rel (%p543) target = $region24
        $region23: #{block_forward.1} parent=11 // pred_region
          _
        $region24: #{block_forward.1} parent=11 // pred_fallthru
          _
        // Predicated region
        $region25: #{block_forward.1} parent=11 // pred_check
          %p546 = pneg %p244
        $region26: #{block_forward.1} parent=11 // pred_check_branch
          %548 = sbr.rel (%p546) target = $region28
        $region27: #{block_forward.1} parent=11 // pred_region
          _
        $region28: #{block_forward.1} parent=11 // pred_fallthru
          _
        // Predicated region
        $region29: #{block_forward.1} parent=11 // pred_check
          %p549 = pneg %p265
        $region30: #{block_forward.1} parent=11 // pred_check_branch
          %551 = sbr.rel (%p549) target = $region32
        $region31: #{block_forward.1} parent=11 // pred_region
          _
        $region32: #{block_forward.1} parent=11 // pred_fallthru
          _
        // Predicated region
        $region33: #{block_forward.1} parent=11 // pred_check
          %p552 = pneg %p286
        $region34: #{block_forward.1} parent=11 // pred_check_branch
          %554 = sbr.rel (%p552) target = $region36
        $region35: #{block_forward.1} parent=11 // pred_region
          _
        $region36: #{block_forward.1} parent=11 // pred_fallthru
          _
        // Predicated region
        $region37: #{block_forward.1} parent=11 // pred_check
          %p555 = pneg %p307
        $region38: #{block_forward.1} parent=11 // pred_check_branch
          %557 = sbr.rel (%p555) target = $region40
        $region39: #{block_forward.1} parent=11 // pred_region
          _
        $region40: #{block_forward.1} parent=11 // pred_fallthru
          _
        // Predicated region
        $region41: #{block_forward.1} parent=11 // pred_check
          %p558 = pneg %p328
        $region42: #{block_forward.1} parent=11 // pred_check_branch
          %560 = sbr.rel (%p558) target = $region44
        $region43: #{block_forward.1} parent=11 // pred_region
          _
        $region44: #{block_forward.1} parent=11 // pred_fallthru
          _
        // Predicated region
        $region45: #{block_forward.1} parent=11 // pred_check
          %p561 = pneg %p349
        $region46: #{block_forward.1} parent=11 // pred_check_branch
          %563 = sbr.rel (%p561) target = $region48
        $region47: #{block_forward.1} parent=11 // pred_region
          _
        $region48: #{block_forward.1} parent=11 // pred_fallthru
          _
        // Predicated region
        $region49: #{block_forward.1} parent=11 // pred_check
          %p564 = pneg %p370
        $region50: #{block_forward.1} parent=11 // pred_check_branch
          %566 = sbr.rel (%p564) target = $region52
        $region51: #{block_forward.1} parent=11 // pred_region
          _
        $region52: #{block_forward.1} parent=11 // pred_fallthru
          _
        // Predicated region
        $region53: #{block_forward.1} parent=11 // pred_check
          %p567 = pneg %p391
        $region54: #{block_forward.1} parent=11 // pred_check_branch
          %569 = sbr.rel (%p567) target = $region56
        $region55: #{block_forward.1} parent=11 // pred_region
          _
        $region56: #{block_forward.1} parent=11 // pred_fallthru
          _
        // Predicated region
        $region57: #{block_forward.1} parent=11 // pred_check
          %p570 = pneg %p412
        $region58: #{block_forward.1} parent=11 // pred_check_branch
          %572 = sbr.rel (%p570) target = $region60
        $region59: #{block_forward.1} parent=11 // pred_region
          _
        $region60: #{block_forward.1} parent=11 // pred_fallthru
          _
        // Predicated region
        $region61: #{block_forward.1} parent=11 // pred_check
          %p573 = pneg %p433
        $region62: #{block_forward.1} parent=11 // pred_check_branch
          %575 = sbr.rel (%p573) target = $region64
        $region63: #{block_forward.1} parent=11 // pred_region
          _
        $region64: #{block_forward.1} parent=11 // pred_fallthru
          _
        // Predicated region
        $region65: #{block_forward.1} parent=11 // pred_check
          %p576 = pneg %p454
        $region66: #{block_forward.1} parent=11 // pred_check_branch
          %578 = sbr.rel (%p576) target = $region68
        $region67: #{block_forward.1} parent=11 // pred_region
          _
        $region68: #{block_forward.1} parent=11 // pred_fallthru
          _
        // Predicated region
        $region69: #{block_forward.1} parent=11 // pred_check
          %p579 = pneg %p475
        $region70: #{block_forward.1} parent=11 // pred_check_branch
          %581 = sbr.rel (%p579) target = $region72
        $region71: #{block_forward.1} parent=11 // pred_region
          _
        $region72: #{block_forward.1} parent=11 // pred_fallthru
          _
        // Predicated region
        $region73: #{block_forward.1} parent=11 // pred_check
          %p582 = pneg %p496
        $region74: #{block_forward.1} parent=11 // pred_check_branch
          %584 = sbr.rel (%p582) target = $region76
        $region75: #{block_forward.1} parent=11 // pred_region
          _
        $region76: #{block_forward.1} parent=11 // pred_fallthru
          _
      $region12: #{block_forward.1} parent=5 // pred_fallthru
        _
      %p585 = scmp.lt.s32.totalorder %s30, 2
      // Predicated region
      $region77: #{block_forward.1} parent=5 // pred_check
        %p586 = pneg %p585
      $region78: #{block_forward.1} parent=5 // pred_check_branch
        %588 = sbr.rel (%p586) target = $region80
      $region79: #{block_forward.1} parent=5 // pred_region
        // Predicated region
        $region81: #{block_forward.1} parent=79 // pred_check
          %p589 = pneg %p50
        $region82: #{block_forward.1} parent=79 // pred_check_branch
          %591 = sbr.rel (%p589) target = $region84
        $region83: #{block_forward.1} parent=79 // pred_region
          %p592 = scmp.lt.s32.totalorder %s30, 1
          %s593 = scalar_select %p592, %s30, 1
          %s594 = smul.addr %s593, 8
          %s595 = scalar_lea.vmem %s0, %s594
        $region84: #{block_forward.1} parent=79 // pred_fallthru
          _
        // Predicated region
        $region85: #{block_forward.1} parent=79 // pred_check
          %p596 = pneg %p76
        $region86: #{block_forward.1} parent=79 // pred_check_branch
          %598 = sbr.rel (%p596) target = $region88
        $region87: #{block_forward.1} parent=79 // pred_region
          %p599 = scmp.lt.s32.totalorder %s30, 1
          %s600 = scalar_select %p599, %s30, 1
          %s601 = smul.addr %s600, 2
          %s602 = smul.addr %s601, 8
          %s603 = scalar_lea.vmem %s1, %s602
        $region88: #{block_forward.1} parent=79 // pred_fallthru
          _
        // Predicated region
        $region89: #{block_forward.1} parent=79 // pred_check
          %p604 = pneg %p102
        $region90: #{block_forward.1} parent=79 // pred_check_branch
          %606 = sbr.rel (%p604) target = $region92
        $region91: #{block_forward.1} parent=79 // pred_region
          %p607 = scmp.lt.s32.totalorder %s30, 1
          %s608 = scalar_select %p607, %s30, 1
          %s609 = scalar_lea.vmem %s2, %s608
        $region92: #{block_forward.1} parent=79 // pred_fallthru
          _
        // Predicated region
        $region93: #{block_forward.1} parent=79 // pred_check
          %p610 = pneg %p128
        $region94: #{block_forward.1} parent=79 // pred_check_branch
          %612 = sbr.rel (%p610) target = $region96
        $region95: #{block_forward.1} parent=79 // pred_region
          %p613 = scmp.lt.s32.totalorder %s30, 1
          %s614 = scalar_select %p613, %s30, 1
          %s615 = scalar_lea.vmem %s3, %s614
        $region96: #{block_forward.1} parent=79 // pred_fallthru
          _
        // Predicated region
        $region97: #{block_forward.1} parent=79 // pred_check
          %p616 = pneg %p154
        $region98: #{block_forward.1} parent=79 // pred_check_branch
          %618 = sbr.rel (%p616) target = $region100
        $region99: #{block_forward.1} parent=79 // pred_region
          %p619 = scmp.lt.s32.totalorder %s30, 1
          %s620 = scalar_select %p619, %s30, 1
          %s621 = smul.addr %s620, 4
          %s622 = smul.addr %s621, 8
          %s623 = scalar_lea.vmem %s4, %s622
        $region100: #{block_forward.1} parent=79 // pred_fallthru
          _
      $region80: #{block_forward.1} parent=5 // pred_fallthru
        _
      %p624 = scmp.le.s32.totalorder 1, %s30
      %p625 = scmp.lt.s32.totalorder %s30, 3
      %p626 = pnand %p624, %p625
      %p627 = pneg %p626
      // Predicated region
      $region101: #{block_forward.1} parent=5 // pred_check
        _
      $region102: #{block_forward.1} parent=5 // pred_check_branch
        %629 = sbr.rel (%p626) target = $region104
      $region103: #{block_forward.1} parent=5 // pred_region
        %s630 = ssub.s32 %s30, 1
        %p631 = scmp.lt.s32.totalorder %s35, 1
        %s632 = scalar_select %p631, %s35, 1
        %s633 = smul.addr %s632, 8
        %s634 = scalar_lea.vmem %s0, %s633
        %p635 = pneg %p56
        %p636 = pneg %p53
        %p637 = scmp.lt.s32.totalorder %s35, 1
        %s638 = scalar_select %p637, %s35, 1
        %s639 = smul.addr %s638, 2
        %s640 = smul.addr %s639, 8
        %s641 = scalar_lea.vmem %s1, %s640
        %p642 = pneg %p82
        %p643 = pneg %p79
        %p644 = scmp.lt.s32.totalorder %s35, 1
        %s645 = scalar_select %p644, %s35, 1
        %s646 = scalar_lea.vmem %s2, %s645
        %p647 = pneg %p108
        %p648 = pneg %p105
        %p649 = scmp.lt.s32.totalorder %s35, 1
        %s650 = scalar_select %p649, %s35, 1
        %s651 = scalar_lea.vmem %s3, %s650
        %p652 = pneg %p134
        %p653 = pneg %p131
        %p654 = scmp.lt.s32.totalorder %s35, 1
        %s655 = scalar_select %p654, %s35, 1
        %s656 = smul.addr %s655, 4
        %s657 = smul.addr %s656, 8
        %s658 = scalar_lea.vmem %s4, %s657
        %p659 = pneg %p160
        %p660 = pneg %p157
        %p661 = pneg %p181
        %p662 = pneg %p178
        %p663 = pneg %p202
        %p664 = pneg %p199
        %p665 = pneg %p223
        %p666 = pneg %p220
        %p667 = pneg %p244
        %p668 = pneg %p241
        %p669 = pneg %p265
        %p670 = pneg %p262
        %p671 = pneg %p286
        %p672 = pneg %p283
        %p673 = pneg %p307
        %p674 = pneg %p304
        %p675 = pneg %p328
        %p676 = pneg %p325
        %p677 = pneg %p349
        %p678 = pneg %p346
        %p679 = pneg %p370
        %p680 = pneg %p367
        %p681 = pneg %p391
        %p682 = pneg %p388
        %p683 = pneg %p412
        %p684 = pneg %p409
        %p685 = pneg %p433
        %p686 = pneg %p430
        %p687 = pneg %p454
        %p688 = pneg %p451
        %p689 = pneg %p475
        %p690 = pneg %p472
        %p691 = pneg %p496
        %p692 = pneg %p493
        %p693 = pneg %p522
        %p694 = pneg %p519
        %s695 = sand.u32 %s509, 1
        %s696 = scalar_lea.sflag [#allocation3], %s695
        %s697 = sand.u32 %s509, 1
        %s698 = smul.addr %s697, 8
        %s699 = scalar_lea.vmem [#allocation2], %s698
        %p700 = scmp.lt.s32.totalorder %s35, 1
        %s701 = scalar_select %p700, %s35, 1
        %s702 = smul.addr %s701, 8
        %s703 = scalar_lea.vmem %s0, %s702
        %p704 = scmp.lt.s32.totalorder %s35, 1
        %s705 = scalar_select %p704, %s35, 1
        %s706 = smul.addr %s705, 2
        %s707 = smul.addr %s706, 8
        %s708 = scalar_lea.vmem %s1, %s707
        %p709 = scmp.lt.s32.totalorder %s35, 1
        %s710 = scalar_select %p709, %s35, 1
        %s711 = scalar_lea.vmem %s2, %s710
        %p712 = scmp.lt.s32.totalorder %s35, 1
        %s713 = scalar_select %p712, %s35, 1
        %s714 = scalar_lea.vmem %s3, %s713
        %p715 = scmp.lt.s32.totalorder %s35, 1
        %s716 = scalar_select %p715, %s35, 1
        %s717 = smul.addr %s716, 4
        %s718 = smul.addr %s717, 8
        %s719 = scalar_lea.vmem %s4, %s718
        %v720 = vld [vmem:[%s703] sm:$0xff]
        %v721 = vld [vmem:[%s708] sm:$0xff]
        %v722 = vld [vmem:[%s708 + $0x8] sm:$0xf]
        %v723 = vld [vmem:[%s711] sm:$0x1]
        %v724 = vsub.f32 1.0, %v723
        %v725 = vmul.f32 %v724, -1e+09
        %v726 = vld [vmem:[%s714] sm:$0x1]
        %v727 = vsub.f32 1.0, %v726
        %v728 = vmul.f32 %v727, -1e+09
        %v729 = vld [vmem:[%s5] sm:$0xff]
        %v730 = vld [vmem:[%s5 + $0x8] sm:$0xff]
        %v731 = vld [vmem:[%s5 + $0x10] sm:$0xff]
        %v732 = vld [vmem:[%s5 + $0x18] sm:$0xff]
        %v733 = vld [vmem:[%s6] sm:$0x1]
        %v735 = vlaneseq
        %v736 = vshrl.u32 %v735, 7
        %v737 = vsub.s32 0, %v736
        %v738 = vrot.slane %v733, %v737
        %vm740 = vcmask 261120
        %v742 = vsel %vm740, %v720, 0
        %744 = vmatprep.subr.mxu0 0.0
        %745 = vmatpush1.msra.mxu0 %v729
        %746 = vmatprep.subr.mxu0 0.0
        %747 = vmatpush1.msra.mxu0 %v730
        %748 = vmatprep.subr.mxu0 0.0
        %749 = vmatpush1.msra.mxu0 %v731
        %750 = vmatprep.subr.mxu0 0.0
        %751 = vmatpush1.msra.mxu0 %v732
        %752 = vmatprep.subr.mxu0 0.0
        %753 = vmatpush1.msra.mxu0 0.0
        %754 = vmatprep.subr.mxu0 0.0
        %755 = vmatpush1.msra.mxu0 0.0
        %756 = vmatprep.subr.mxu0 0.0
        %757 = vmatpush1.msra.mxu0 0.0
        %758 = vmatprep.subr.mxu0 0.0
        %759 = vmatpush1.msra.mxu0 0.0
        %760 = vmatprep.subr.mxu0 0.0
        %761 = vmatpush1.msra.mxu0 0.0
        %762 = vmatprep.subr.mxu0 0.0
        %763 = vmatpush1.msra.mxu0 0.0
        %764 = vmatprep.subr.mxu0 0.0
        %765 = vmatpush1.msra.mxu0 0.0
        %766 = vmatprep.subr.mxu0 0.0
        %767 = vmatpush1.msra.mxu0 0.0
        %768 = vmatprep.subr.mxu0 0.0
        %769 = vmatpush1.msra.mxu0 0.0
        %770 = vmatprep.subr.mxu0 0.0
        %771 = vmatpush1.msra.mxu0 0.0
        %772 = vmatprep.subr.mxu0 0.0
        %773 = vmatpush1.msra.mxu0 0.0
        %774 = vmatprep.subr.mxu0 0.0
        %775 = vmatpush1.msra.mxu0 0.0
        %776 = vmatprep.subr.mxu0 0.0
        %777 = vmatpush1.msra.mxu0 0.0
        %778 = vmatprep.subr.mxu0 0.0
        %779 = vmatpush1.msra.mxu0 0.0
        %780 = vmatprep.subr.mxu0 0.0
        %781 = vmatpush1.msra.mxu0 0.0
        %782 = vmatprep.subr.mxu0 0.0
        %783 = vmatpush1.msra.mxu0 0.0
        %784 = vmatprep.subr.mxu0 0.0
        %785 = vmatpush1.msra.mxu0 0.0
        %786 = vmatprep.subr.mxu0 0.0
        %787 = vmatpush1.msra.mxu0 0.0
        %788 = vmatprep.subr.mxu0 0.0
        %789 = vmatpush1.msra.mxu0 0.0
        %790 = vmatprep.subr.mxu0 0.0
        %791 = vmatpush1.msra.mxu0 0.0
        %792 = vmatprep.subr.mxu0 0.0
        %793 = vmatpush1.msra.mxu0 0.0
        %794 = vmatprep.subr.mxu0 0.0
        %795 = vmatpush1.msra.mxu0 0.0
        %796 = vmatprep.subr.mxu0 0.0
        %797 = vmatpush1.msra.mxu0 0.0
        %798 = vmatprep.subr.mxu0 0.0
        %799 = vmatpush1.msra.mxu0 0.0
        %800 = vmatprep.subr.mxu0 0.0
        %801 = vmatpush1.msra.mxu0 0.0
        %802 = vmatprep.subr.mxu0 0.0
        %803 = vmatpush1.msra.mxu0 0.0
        %804 = vmatprep.subr.mxu0 0.0
        %805 = vmatpush1.msra.mxu0 0.0
        %806 = vmatprep.subr.mxu0 0.0
        %807 = vmatpush1.msra.mxu0 0.0
        %808 = vmatprep.mubr.f32.mxu0 0.0
        %809 = vmatmul.mubr.f32.gmra.mrb[0].mxu0 %v742
        %v810 = vpop.f32.mrb[0].mxu0
        %v811 = vadd.f32 %v738, %v810
        %v812 = vpop.f32.mrb[0].mxu0
        %813 = vdwg.mxu0
        %v814 = vld [vmem:[%s7] sm:$0xff]
        %v815 = vld [vmem:[%s7 + $0x8] sm:$0xff]
        %v816 = vld [vmem:[%s7 + $0x10] sm:$0xff]
        %v817 = vld [vmem:[%s7 + $0x18] sm:$0xff]
        %v818 = vld [vmem:[%s8] sm:$0x1]
        %v820 = vlaneseq
        %v821 = vshrl.u32 %v820, 7
        %v822 = vsub.s32 0, %v821
        %v823 = vrot.slane %v818, %v822
        %825 = vmatprep.subr.mxu0 0.0
        %826 = vmatpush1.msra.mxu0 %v814
        %827 = vmatprep.subr.mxu0 0.0
        %828 = vmatpush1.msra.mxu0 %v815
        %829 = vmatprep.subr.mxu0 0.0
        %830 = vmatpush1.msra.mxu0 %v816
        %831 = vmatprep.subr.mxu0 0.0
        %832 = vmatpush1.msra.mxu0 %v817
        %833 = vmatprep.subr.mxu0 0.0
        %834 = vmatpush1.msra.mxu0 0.0
        %835 = vmatprep.subr.mxu0 0.0
        %836 = vmatpush1.msra.mxu0 0.0
        %837 = vmatprep.subr.mxu0 0.0
        %838 = vmatpush1.msra.mxu0 0.0
        %839 = vmatprep.subr.mxu0 0.0
        %840 = vmatpush1.msra.mxu0 0.0
        %841 = vmatprep.subr.mxu0 0.0
        %842 = vmatpush1.msra.mxu0 0.0
        %843 = vmatprep.subr.mxu0 0.0
        %844 = vmatpush1.msra.mxu0 0.0
        %845 = vmatprep.subr.mxu0 0.0
        %846 = vmatpush1.msra.mxu0 0.0
        %847 = vmatprep.subr.mxu0 0.0
        %848 = vmatpush1.msra.mxu0 0.0
        %849 = vmatprep.subr.mxu0 0.0
        %850 = vmatpush1.msra.mxu0 0.0
        %851 = vmatprep.subr.mxu0 0.0
        %852 = vmatpush1.msra.mxu0 0.0
        %853 = vmatprep.subr.mxu0 0.0
        %854 = vmatpush1.msra.mxu0 0.0
        %855 = vmatprep.subr.mxu0 0.0
        %856 = vmatpush1.msra.mxu0 0.0
        %857 = vmatprep.subr.mxu0 0.0
        %858 = vmatpush1.msra.mxu0 0.0
        %859 = vmatprep.subr.mxu0 0.0
        %860 = vmatpush1.msra.mxu0 0.0
        %861 = vmatprep.subr.mxu0 0.0
        %862 = vmatpush1.msra.mxu0 0.0
        %863 = vmatprep.subr.mxu0 0.0
        %864 = vmatpush1.msra.mxu0 0.0
        %865 = vmatprep.subr.mxu0 0.0
        %866 = vmatpush1.msra.mxu0 0.0
        %867 = vmatprep.subr.mxu0 0.0
        %868 = vmatpush1.msra.mxu0 0.0
        %869 = vmatprep.subr.mxu0 0.0
        %870 = vmatpush1.msra.mxu0 0.0
        %871 = vmatprep.subr.mxu0 0.0
        %872 = vmatpush1.msra.mxu0 0.0
        %873 = vmatprep.subr.mxu0 0.0
        %874 = vmatpush1.msra.mxu0 0.0
        %875 = vmatprep.subr.mxu0 0.0
        %876 = vmatpush1.msra.mxu0 0.0
        %877 = vmatprep.subr.mxu0 0.0
        %878 = vmatpush1.msra.mxu0 0.0
        %879 = vmatprep.subr.mxu0 0.0
        %880 = vmatpush1.msra.mxu0 0.0
        %881 = vmatprep.subr.mxu0 0.0
        %882 = vmatpush1.msra.mxu0 0.0
        %883 = vmatprep.subr.mxu0 0.0
        %884 = vmatpush1.msra.mxu0 0.0
        %885 = vmatprep.subr.mxu0 0.0
        %886 = vmatpush1.msra.mxu0 0.0
        %887 = vmatprep.subr.mxu0 0.0
        %888 = vmatpush1.msra.mxu0 0.0
        %889 = vmatprep.mubr.f32.mxu0 0.0
        %890 = vmatmul.mubr.f32.gmra.mrb[0].mxu0 %v742
        %v891 = vpop.f32.mrb[0].mxu0
        %v892 = vadd.f32 %v823, %v891
        %v893 = vpop.f32.mrb[0].mxu0
        %894 = vdwg.mxu0
        %v895 = vld [vmem:[%s9] sm:$0xff]
        %v896 = vld [vmem:[%s9 + $0x8] sm:$0xff]
        %v897 = vld [vmem:[%s9 + $0x10] sm:$0xff]
        %v898 = vld [vmem:[%s9 + $0x18] sm:$0xff]
        %v899 = vld [vmem:[%s10] sm:$0x1]
        %v901 = vlaneseq
        %v902 = vshrl.u32 %v901, 7
        %v903 = vsub.s32 0, %v902
        %v904 = vrot.slane %v899, %v903
        %906 = vmatprep.subr.mxu0 0.0
        %907 = vmatpush1.msra.mxu0 %v895
        %908 = vmatprep.subr.mxu0 0.0
        %909 = vmatpush1.msra.mxu0 %v896
        %910 = vmatprep.subr.mxu0 0.0
        %911 = vmatpush1.msra.mxu0 %v897
        %912 = vmatprep.subr.mxu0 0.0
        %913 = vmatpush1.msra.mxu0 %v898
        %914 = vmatprep.subr.mxu0 0.0
        %915 = vmatpush1.msra.mxu0 0.0
        %916 = vmatprep.subr.mxu0 0.0
        %917 = vmatpush1.msra.mxu0 0.0
        %918 = vmatprep.subr.mxu0 0.0
        %919 = vmatpush1.msra.mxu0 0.0
        %920 = vmatprep.subr.mxu0 0.0
        %921 = vmatpush1.msra.mxu0 0.0
        %922 = vmatprep.subr.mxu0 0.0
        %923 = vmatpush1.msra.mxu0 0.0
        %924 = vmatprep.subr.mxu0 0.0
        %925 = vmatpush1.msra.mxu0 0.0
        %926 = vmatprep.subr.mxu0 0.0
        %927 = vmatpush1.msra.mxu0 0.0
        %928 = vmatprep.subr.mxu0 0.0
        %929 = vmatpush1.msra.mxu0 0.0
        %930 = vmatprep.subr.mxu0 0.0
        %931 = vmatpush1.msra.mxu0 0.0
        %932 = vmatprep.subr.mxu0 0.0
        %933 = vmatpush1.msra.mxu0 0.0
        %934 = vmatprep.subr.mxu0 0.0
        %935 = vmatpush1.msra.mxu0 0.0
        %936 = vmatprep.subr.mxu0 0.0
        %937 = vmatpush1.msra.mxu0 0.0
        %938 = vmatprep.subr.mxu0 0.0
        %939 = vmatpush1.msra.mxu0 0.0
        %940 = vmatprep.subr.mxu0 0.0
        %941 = vmatpush1.msra.mxu0 0.0
        %942 = vmatprep.subr.mxu0 0.0
        %943 = vmatpush1.msra.mxu0 0.0
        %944 = vmatprep.subr.mxu0 0.0
        %945 = vmatpush1.msra.mxu0 0.0
        %946 = vmatprep.subr.mxu0 0.0
        %947 = vmatpush1.msra.mxu0 0.0
        %948 = vmatprep.subr.mxu0 0.0
        %949 = vmatpush1.msra.mxu0 0.0
        %950 = vmatprep.subr.mxu0 0.0
        %951 = vmatpush1.msra.mxu0 0.0
        %952 = vmatprep.subr.mxu0 0.0
        %953 = vmatpush1.msra.mxu0 0.0
        %954 = vmatprep.subr.mxu0 0.0
        %955 = vmatpush1.msra.mxu0 0.0
        %956 = vmatprep.subr.mxu0 0.0
        %957 = vmatpush1.msra.mxu0 0.0
        %958 = vmatprep.subr.mxu0 0.0
        %959 = vmatpush1.msra.mxu0 0.0
        %960 = vmatprep.subr.mxu0 0.0
        %961 = vmatpush1.msra.mxu0 0.0
        %962 = vmatprep.subr.mxu0 0.0
        %963 = vmatpush1.msra.mxu0 0.0
        %964 = vmatprep.subr.mxu0 0.0
        %965 = vmatpush1.msra.mxu0 0.0
        %966 = vmatprep.subr.mxu0 0.0
        %967 = vmatpush1.msra.mxu0 0.0
        %968 = vmatprep.subr.mxu0 0.0
        %969 = vmatpush1.msra.mxu0 0.0
        %970 = vmatprep.mubr.f32.mxu0 0.0
        %971 = vmatmul.mubr.f32.gmra.mrb[0].mxu0 %v742
        %v972 = vpop.f32.mrb[0].mxu0
        %v973 = vadd.f32 %v904, %v972
        %v974 = vpop.f32.mrb[0].mxu0
        %975 = vdwg.mxu0
        %vm976 = vcmask 64512
        %v978 = vsel %vm976, %v811, 0
        %v981 = vsel %vm976, %v892, 0
        %983 = vmatprep.subr.mxu0 0.0
        %984 = vmatpush1.xpose.msra.mxu0 %v981
        %985 = vmatprep.subr.mxu0 0.0
        %986 = vmatpush1.xpose.msra.mxu0 0.0
        %987 = vmatprep.subr.mxu0 0.0
        %988 = vmatpush1.xpose.msra.mxu0 0.0
        %989 = vmatprep.subr.mxu0 0.0
        %990 = vmatpush1.xpose.msra.mxu0 0.0
        %991 = vmatprep.subr.mxu0 0.0
        %992 = vmatpush1.xpose.msra.mxu0 0.0
        %993 = vmatprep.subr.mxu0 0.0
        %994 = vmatpush1.xpose.msra.mxu0 0.0
        %995 = vmatprep.subr.mxu0 0.0
        %996 = vmatpush1.xpose.msra.mxu0 0.0
        %997 = vmatprep.subr.mxu0 0.0
        %998 = vmatpush1.xpose.msra.mxu0 0.0
        %999 = vmatprep.subr.mxu0 0.0
        %1000 = vmatpush1.xpose.msra.mxu0 0.0
        %1001 = vmatprep.subr.mxu0 0.0
        %1002 = vmatpush1.xpose.msra.mxu0 0.0
        %1003 = vmatprep.subr.mxu0 0.0
        %1004 = vmatpush1.xpose.msra.mxu0 0.0
        %1005 = vmatprep.subr.mxu0 0.0
        %1006 = vmatpush1.xpose.msra.mxu0 0.0
        %1007 = vmatprep.subr.mxu0 0.0
        %1008 = vmatpush1.xpose.msra.mxu0 0.0
        %1009 = vmatprep.subr.mxu0 0.0
        %1010 = vmatpush1.xpose.msra.mxu0 0.0
        %1011 = vmatprep.subr.mxu0 0.0
        %1012 = vmatpush1.xpose.msra.mxu0 0.0
        %1013 = vmatprep.subr.mxu0 0.0
        %1014 = vmatpush1.xpose.msra.mxu0 0.0
        %1015 = vmatprep.subr.mxu0 0.0
        %1016 = vmatpush1.xpose.msra.mxu0 0.0
        %1017 = vmatprep.subr.mxu0 0.0
        %1018 = vmatpush1.xpose.msra.mxu0 0.0
        %1019 = vmatprep.subr.mxu0 0.0
        %1020 = vmatpush1.xpose.msra.mxu0 0.0
        %1021 = vmatprep.subr.mxu0 0.0
        %1022 = vmatpush1.xpose.msra.mxu0 0.0
        %1023 = vmatprep.subr.mxu0 0.0
        %1024 = vmatpush1.xpose.msra.mxu0 0.0
        %1025 = vmatprep.subr.mxu0 0.0
        %1026 = vmatpush1.xpose.msra.mxu0 0.0
        %1027 = vmatprep.subr.mxu0 0.0
        %1028 = vmatpush1.xpose.msra.mxu0 0.0
        %1029 = vmatprep.subr.mxu0 0.0
        %1030 = vmatpush1.xpose.msra.mxu0 0.0
        %1031 = vmatprep.subr.mxu0 0.0
        %1032 = vmatpush1.xpose.msra.mxu0 0.0
        %1033 = vmatprep.subr.mxu0 0.0
        %1034 = vmatpush1.xpose.msra.mxu0 0.0
        %1035 = vmatprep.subr.mxu0 0.0
        %1036 = vmatpush1.xpose.msra.mxu0 0.0
        %1037 = vmatprep.subr.mxu0 0.0
        %1038 = vmatpush1.xpose.msra.mxu0 0.0
        %1039 = vmatprep.subr.mxu0 0.0
        %1040 = vmatpush1.xpose.msra.mxu0 0.0
        %1041 = vmatprep.subr.mxu0 0.0
        %1042 = vmatpush1.xpose.msra.mxu0 0.0
        %1043 = vmatprep.subr.mxu0 0.0
        %1044 = vmatpush1.xpose.msra.mxu0 0.0
        %1045 = vmatprep.subr.mxu0 0.0
        %1046 = vmatpush1.xpose.msra.mxu0 0.0
        %1047 = vmatprep.mubr.f32.mxu0 0.0
        %1048 = vmatmul.mubr.f32.gmra.mrb[0].mxu0 %v978
        %v1049 = vpop.f32.mrb[0].mxu0
        %v1050 = vadd.f32 0.0, %v1049
        %v1051 = vpop.f32.mrb[0].mxu0
        %1052 = vdwg.mxu0
        %v1053 = vmul.f32 %v1050, 0.35355338
        %v1055 = vlaneseq
        %v1056 = vshrl.u32 %v1055, 7
        %v1057 = vsub.s32 0, %v1056
        %v1058 = vrot.slane %v725, %v1057
        %v1060 = vadd.f32 %v1053, %v1058
        %v1061 = vsel %vm976, %v1060, -inf
        %1062 = vmax.xlane.f32.xlu0 %v1061
        %v1063 = vpop.xlane.xlu0 %1062
        %v1064 = vsub.f32 %v1060, %v1063
        %v1065 = vmul.f32 %v1064, 1.442695
        %v1066 = vpow.pop %v1065
        %v1067 = vsel %vm976, %v1066, 0.0
        %1068 = vadd.xlane.f32.xlu0 %v1067
        %v1069 = vpop.xlane.xlu0 %1068
        %v1070 = vrcp.pop %v1069
        %v1071 = vmul.f32 %v1066, %v1070
        %v1073 = vsel %vm976, %v1071, 0
        %1075 = vmatprep.subr.mxu0 0.0
        %1076 = vmatpush1.msra.mxu0 %v973
        %1077 = vmatprep.subr.mxu0 0.0
        %1078 = vmatpush1.msra.mxu0 0.0
        %1079 = vmatprep.subr.mxu0 0.0
        %1080 = vmatpush1.msra.mxu0 0.0
        %1081 = vmatprep.subr.mxu0 0.0
        %1082 = vmatpush1.msra.mxu0 0.0
        %1083 = vmatprep.subr.mxu0 0.0
        %1084 = vmatpush1.msra.mxu0 0.0
        %1085 = vmatprep.subr.mxu0 0.0
        %1086 = vmatpush1.msra.mxu0 0.0
        %1087 = vmatprep.subr.mxu0 0.0
        %1088 = vmatpush1.msra.mxu0 0.0
        %1089 = vmatprep.subr.mxu0 0.0
        %1090 = vmatpush1.msra.mxu0 0.0
        %1091 = vmatprep.subr.mxu0 0.0
        %1092 = vmatpush1.msra.mxu0 0.0
        %1093 = vmatprep.subr.mxu0 0.0
        %1094 = vmatpush1.msra.mxu0 0.0
        %1095 = vmatprep.subr.mxu0 0.0
        %1096 = vmatpush1.msra.mxu0 0.0
        %1097 = vmatprep.subr.mxu0 0.0
        %1098 = vmatpush1.msra.mxu0 0.0
        %1099 = vmatprep.subr.mxu0 0.0
        %1100 = vmatpush1.msra.mxu0 0.0
        %1101 = vmatprep.subr.mxu0 0.0
        %1102 = vmatpush1.msra.mxu0 0.0
        %1103 = vmatprep.subr.mxu0 0.0
        %1104 = vmatpush1.msra.mxu0 0.0
        %1105 = vmatprep.subr.mxu0 0.0
        %1106 = vmatpush1.msra.mxu0 0.0
        %1107 = vmatprep.subr.mxu0 0.0
        %1108 = vmatpush1.msra.mxu0 0.0
        %1109 = vmatprep.subr.mxu0 0.0
        %1110 = vmatpush1.msra.mxu0 0.0
        %1111 = vmatprep.subr.mxu0 0.0
        %1112 = vmatpush1.msra.mxu0 0.0
        %1113 = vmatprep.subr.mxu0 0.0
        %1114 = vmatpush1.msra.mxu0 0.0
        %1115 = vmatprep.subr.mxu0 0.0
        %1116 = vmatpush1.msra.mxu0 0.0
        %1117 = vmatprep.subr.mxu0 0.0
        %1118 = vmatpush1.msra.mxu0 0.0
        %1119 = vmatprep.subr.mxu0 0.0
        %1120 = vmatpush1.msra.mxu0 0.0
        %1121 = vmatprep.subr.mxu0 0.0
        %1122 = vmatpush1.msra.mxu0 0.0
        %1123 = vmatprep.subr.mxu0 0.0
        %1124 = vmatpush1.msra.mxu0 0.0
        %1125 = vmatprep.subr.mxu0 0.0
        %1126 = vmatpush1.msra.mxu0 0.0
        %1127 = vmatprep.subr.mxu0 0.0
        %1128 = vmatpush1.msra.mxu0 0.0
        %1129 = vmatprep.subr.mxu0 0.0
        %1130 = vmatpush1.msra.mxu0 0.0
        %1131 = vmatprep.subr.mxu0 0.0
        %1132 = vmatpush1.msra.mxu0 0.0
        %1133 = vmatprep.subr.mxu0 0.0
        %1134 = vmatpush1.msra.mxu0 0.0
        %1135 = vmatprep.subr.mxu0 0.0
        %1136 = vmatpush1.msra.mxu0 0.0
        %1137 = vmatprep.subr.mxu0 0.0
        %1138 = vmatpush1.msra.mxu0 0.0
        %1139 = vmatprep.mubr.f32.mxu0 0.0
        %1140 = vmatmul.mubr.f32.gmra.mrb[0].mxu0 %v1073
        %v1141 = vpop.f32.mrb[0].mxu0
        %v1142 = vadd.f32 0.0, %v1141
        %v1143 = vpop.f32.mrb[0].mxu0
        %1144 = vdwg.mxu0
        %v1145 = vld [vmem:[%s11] sm:$0xff]
        %s1146 = scalar_lea.vmem %s5, 32
        %v1147 = vld [vmem:[%s1146] sm:$0xff]
        %v1148 = vld [vmem:[%s1146 + $0x8] sm:$0xff]
        %v1149 = vld [vmem:[%s1146 + $0x10] sm:$0xff]
        %v1150 = vld [vmem:[%s1146 + $0x18] sm:$0xff]
        %s1151 = scalar_lea.vmem %s6, 1
        %v1152 = vld [vmem:[%s1151] sm:$0x1]
        %v1154 = vlaneseq
        %v1155 = vshrl.u32 %v1154, 7
        %v1156 = vsub.s32 0, %v1155
        %v1157 = vrot.slane %v1152, %v1156
        %1159 = vmatprep.subr.mxu0 0.0
        %1160 = vmatpush1.msra.mxu0 %v1147
        %1161 = vmatprep.subr.mxu0 0.0
        %1162 = vmatpush1.msra.mxu0 %v1148
        %1163 = vmatprep.subr.mxu0 0.0
        %1164 = vmatpush1.msra.mxu0 %v1149
        %1165 = vmatprep.subr.mxu0 0.0
        %1166 = vmatpush1.msra.mxu0 %v1150
        %1167 = vmatprep.subr.mxu0 0.0
        %1168 = vmatpush1.msra.mxu0 0.0
        %1169 = vmatprep.subr.mxu0 0.0
        %1170 = vmatpush1.msra.mxu0 0.0
        %1171 = vmatprep.subr.mxu0 0.0
        %1172 = vmatpush1.msra.mxu0 0.0
        %1173 = vmatprep.subr.mxu0 0.0
        %1174 = vmatpush1.msra.mxu0 0.0
        %1175 = vmatprep.subr.mxu0 0.0
        %1176 = vmatpush1.msra.mxu0 0.0
        %1177 = vmatprep.subr.mxu0 0.0
        %1178 = vmatpush1.msra.mxu0 0.0
        %1179 = vmatprep.subr.mxu0 0.0
        %1180 = vmatpush1.msra.mxu0 0.0
        %1181 = vmatprep.subr.mxu0 0.0
        %1182 = vmatpush1.msra.mxu0 0.0
        %1183 = vmatprep.subr.mxu0 0.0
        %1184 = vmatpush1.msra.mxu0 0.0
        %1185 = vmatprep.subr.mxu0 0.0
        %1186 = vmatpush1.msra.mxu0 0.0
        %1187 = vmatprep.subr.mxu0 0.0
        %1188 = vmatpush1.msra.mxu0 0.0
        %1189 = vmatprep.subr.mxu0 0.0
        %1190 = vmatpush1.msra.mxu0 0.0
        %1191 = vmatprep.subr.mxu0 0.0
        %1192 = vmatpush1.msra.mxu0 0.0
        %1193 = vmatprep.subr.mxu0 0.0
        %1194 = vmatpush1.msra.mxu0 0.0
        %1195 = vmatprep.subr.mxu0 0.0
        %1196 = vmatpush1.msra.mxu0 0.0
        %1197 = vmatprep.subr.mxu0 0.0
        %1198 = vmatpush1.msra.mxu0 0.0
        %1199 = vmatprep.subr.mxu0 0.0
        %1200 = vmatpush1.msra.mxu0 0.0
        %1201 = vmatprep.subr.mxu0 0.0
        %1202 = vmatpush1.msra.mxu0 0.0
        %1203 = vmatprep.subr.mxu0 0.0
        %1204 = vmatpush1.msra.mxu0 0.0
        %1205 = vmatprep.subr.mxu0 0.0
        %1206 = vmatpush1.msra.mxu0 0.0
        %1207 = vmatprep.subr.mxu0 0.0
        %1208 = vmatpush1.msra.mxu0 0.0
        %1209 = vmatprep.subr.mxu0 0.0
        %1210 = vmatpush1.msra.mxu0 0.0
        %1211 = vmatprep.subr.mxu0 0.0
        %1212 = vmatpush1.msra.mxu0 0.0
        %1213 = vmatprep.subr.mxu0 0.0
        %1214 = vmatpush1.msra.mxu0 0.0
        %1215 = vmatprep.subr.mxu0 0.0
        %1216 = vmatpush1.msra.mxu0 0.0
        %1217 = vmatprep.subr.mxu0 0.0
        %1218 = vmatpush1.msra.mxu0 0.0
        %1219 = vmatprep.subr.mxu0 0.0
        %1220 = vmatpush1.msra.mxu0 0.0
        %1221 = vmatprep.subr.mxu0 0.0
        %1222 = vmatpush1.msra.mxu0 0.0
        %1223 = vmatprep.mubr.f32.mxu0 0.0
        %1224 = vmatmul.mubr.f32.gmra.mrb[0].mxu0 %v742
        %v1225 = vpop.f32.mrb[0].mxu0
        %v1226 = vadd.f32 %v1157, %v1225
        %v1227 = vpop.f32.mrb[0].mxu0
        %1228 = vdwg.mxu0
        %s1229 = scalar_lea.vmem %s7, 32
        %v1230 = vld [vmem:[%s1229] sm:$0xff]
        %v1231 = vld [vmem:[%s1229 + $0x8] sm:$0xff]
        %v1232 = vld [vmem:[%s1229 + $0x10] sm:$0xff]
        %v1233 = vld [vmem:[%s1229 + $0x18] sm:$0xff]
        %s1234 = scalar_lea.vmem %s8, 1
        %v1235 = vld [vmem:[%s1234] sm:$0x1]
        %v1237 = vlaneseq
        %v1238 = vshrl.u32 %v1237, 7
        %v1239 = vsub.s32 0, %v1238
        %v1240 = vrot.slane %v1235, %v1239
        %1242 = vmatprep.subr.mxu0 0.0
        %1243 = vmatpush1.msra.mxu0 %v1230
        %1244 = vmatprep.subr.mxu0 0.0
        %1245 = vmatpush1.msra.mxu0 %v1231
        %1246 = vmatprep.subr.mxu0 0.0
        %1247 = vmatpush1.msra.mxu0 %v1232
        %1248 = vmatprep.subr.mxu0 0.0
        %1249 = vmatpush1.msra.mxu0 %v1233
        %1250 = vmatprep.subr.mxu0 0.0
        %1251 = vmatpush1.msra.mxu0 0.0
        %1252 = vmatprep.subr.mxu0 0.0
        %1253 = vmatpush1.msra.mxu0 0.0
        %1254 = vmatprep.subr.mxu0 0.0
        %1255 = vmatpush1.msra.mxu0 0.0
        %1256 = vmatprep.subr.mxu0 0.0
        %1257 = vmatpush1.msra.mxu0 0.0
        %1258 = vmatprep.subr.mxu0 0.0
        %1259 = vmatpush1.msra.mxu0 0.0
        %1260 = vmatprep.subr.mxu0 0.0
        %1261 = vmatpush1.msra.mxu0 0.0
        %1262 = vmatprep.subr.mxu0 0.0
        %1263 = vmatpush1.msra.mxu0 0.0
        %1264 = vmatprep.subr.mxu0 0.0
        %1265 = vmatpush1.msra.mxu0 0.0
        %1266 = vmatprep.subr.mxu0 0.0
        %1267 = vmatpush1.msra.mxu0 0.0
        %1268 = vmatprep.subr.mxu0 0.0
        %1269 = vmatpush1.msra.mxu0 0.0
        %1270 = vmatprep.subr.mxu0 0.0
        %1271 = vmatpush1.msra.mxu0 0.0
        %1272 = vmatprep.subr.mxu0 0.0
        %1273 = vmatpush1.msra.mxu0 0.0
        %1274 = vmatprep.subr.mxu0 0.0
        %1275 = vmatpush1.msra.mxu0 0.0
        %1276 = vmatprep.subr.mxu0 0.0
        %1277 = vmatpush1.msra.mxu0 0.0
        %1278 = vmatprep.subr.mxu0 0.0
        %1279 = vmatpush1.msra.mxu0 0.0
        %1280 = vmatprep.subr.mxu0 0.0
        %1281 = vmatpush1.msra.mxu0 0.0
        %1282 = vmatprep.subr.mxu0 0.0
        %1283 = vmatpush1.msra.mxu0 0.0
        %1284 = vmatprep.subr.mxu0 0.0
        %1285 = vmatpush1.msra.mxu0 0.0
        %1286 = vmatprep.subr.mxu0 0.0
        %1287 = vmatpush1.msra.mxu0 0.0
        %1288 = vmatprep.subr.mxu0 0.0
        %1289 = vmatpush1.msra.mxu0 0.0
        %1290 = vmatprep.subr.mxu0 0.0
        %1291 = vmatpush1.msra.mxu0 0.0
        %1292 = vmatprep.subr.mxu0 0.0
        %1293 = vmatpush1.msra.mxu0 0.0
        %1294 = vmatprep.subr.mxu0 0.0
        %1295 = vmatpush1.msra.mxu0 0.0
        %1296 = vmatprep.subr.mxu0 0.0
        %1297 = vmatpush1.msra.mxu0 0.0
        %1298 = vmatprep.subr.mxu0 0.0
        %1299 = vmatpush1.msra.mxu0 0.0
        %1300 = vmatprep.subr.mxu0 0.0
        %1301 = vmatpush1.msra.mxu0 0.0
        %1302 = vmatprep.subr.mxu0 0.0
        %1303 = vmatpush1.msra.mxu0 0.0
        %1304 = vmatprep.subr.mxu0 0.0
        %1305 = vmatpush1.msra.mxu0 0.0
        %1306 = vmatprep.mubr.f32.mxu0 0.0
        %1307 = vmatmul.mubr.f32.gmra.mrb[0].mxu0 %v742
        %v1308 = vpop.f32.mrb[0].mxu0
        %v1309 = vadd.f32 %v1240, %v1308
        %v1310 = vpop.f32.mrb[0].mxu0
        %1311 = vdwg.mxu0
        %s1312 = scalar_lea.vmem %s9, 32
        %v1313 = vld [vmem:[%s1312] sm:$0xff]
        %v1314 = vld [vmem:[%s1312 + $0x8] sm:$0xff]
        %v1315 = vld [vmem:[%s1312 + $0x10] sm:$0xff]
        %v1316 = vld [vmem:[%s1312 + $0x18] sm:$0xff]
        %s1317 = scalar_lea.vmem %s10, 1
        %v1318 = vld [vmem:[%s1317] sm:$0x1]
        %v1320 = vlaneseq
        %v1321 = vshrl.u32 %v1320, 7
        %v1322 = vsub.s32 0, %v1321
        %v1323 = vrot.slane %v1318, %v1322
        %1325 = vmatprep.subr.mxu0 0.0
        %1326 = vmatpush1.msra.mxu0 %v1313
        %1327 = vmatprep.subr.mxu0 0.0
        %1328 = vmatpush1.msra.mxu0 %v1314
        %1329 = vmatprep.subr.mxu0 0.0
        %1330 = vmatpush1.msra.mxu0 %v1315
        %1331 = vmatprep.subr.mxu0 0.0
        %1332 = vmatpush1.msra.mxu0 %v1316
        %1333 = vmatprep.subr.mxu0 0.0
        %1334 = vmatpush1.msra.mxu0 0.0
        %1335 = vmatprep.subr.mxu0 0.0
        %1336 = vmatpush1.msra.mxu0 0.0
        %1337 = vmatprep.subr.mxu0 0.0
        %1338 = vmatpush1.msra.mxu0 0.0
        %1339 = vmatprep.subr.mxu0 0.0
        %1340 = vmatpush1.msra.mxu0 0.0
        %1341 = vmatprep.subr.mxu0 0.0
        %1342 = vmatpush1.msra.mxu0 0.0
        %1343 = vmatprep.subr.mxu0 0.0
        %1344 = vmatpush1.msra.mxu0 0.0
        %1345 = vmatprep.subr.mxu0 0.0
        %1346 = vmatpush1.msra.mxu0 0.0
        %1347 = vmatprep.subr.mxu0 0.0
        %1348 = vmatpush1.msra.mxu0 0.0
        %1349 = vmatprep.subr.mxu0 0.0
        %1350 = vmatpush1.msra.mxu0 0.0
        %1351 = vmatprep.subr.mxu0 0.0
        %1352 = vmatpush1.msra.mxu0 0.0
        %1353 = vmatprep.subr.mxu0 0.0
        %1354 = vmatpush1.msra.mxu0 0.0
        %1355 = vmatprep.subr.mxu0 0.0
        %1356 = vmatpush1.msra.mxu0 0.0
        %1357 = vmatprep.subr.mxu0 0.0
        %1358 = vmatpush1.msra.mxu0 0.0
        %1359 = vmatprep.subr.mxu0 0.0
        %1360 = vmatpush1.msra.mxu0 0.0
        %1361 = vmatprep.subr.mxu0 0.0
        %1362 = vmatpush1.msra.mxu0 0.0
        %1363 = vmatprep.subr.mxu0 0.0
        %1364 = vmatpush1.msra.mxu0 0.0
        %1365 = vmatprep.subr.mxu0 0.0
        %1366 = vmatpush1.msra.mxu0 0.0
        %1367 = vmatprep.subr.mxu0 0.0
        %1368 = vmatpush1.msra.mxu0 0.0
        %1369 = vmatprep.subr.mxu0 0.0
        %1370 = vmatpush1.msra.mxu0 0.0
        %1371 = vmatprep.subr.mxu0 0.0
        %1372 = vmatpush1.msra.mxu0 0.0
        %1373 = vmatprep.subr.mxu0 0.0
        %1374 = vmatpush1.msra.mxu0 0.0
        %1375 = vmatprep.subr.mxu0 0.0
        %1376 = vmatpush1.msra.mxu0 0.0
        %1377 = vmatprep.subr.mxu0 0.0
        %1378 = vmatpush1.msra.mxu0 0.0
        %1379 = vmatprep.subr.mxu0 0.0
        %1380 = vmatpush1.msra.mxu0 0.0
        %1381 = vmatprep.subr.mxu0 0.0
        %1382 = vmatpush1.msra.mxu0 0.0
        %1383 = vmatprep.subr.mxu0 0.0
        %1384 = vmatpush1.msra.mxu0 0.0
        %1385 = vmatprep.subr.mxu0 0.0
        %1386 = vmatpush1.msra.mxu0 0.0
        %1387 = vmatprep.subr.mxu0 0.0
        %1388 = vmatpush1.msra.mxu0 0.0
        %1389 = vmatprep.mubr.f32.mxu0 0.0
        %1390 = vmatmul.mubr.f32.gmra.mrb[0].mxu0 %v742
        %v1391 = vpop.f32.mrb[0].mxu0
        %v1392 = vadd.f32 %v1323, %v1391
        %v1393 = vpop.f32.mrb[0].mxu0
        %1394 = vdwg.mxu0
        %v1396 = vsel %vm976, %v1226, 0
        %v1399 = vsel %vm976, %v1309, 0
        %1401 = vmatprep.subr.mxu0 0.0
        %1402 = vmatpush1.xpose.msra.mxu0 %v1399
        %1403 = vmatprep.subr.mxu0 0.0
        %1404 = vmatpush1.xpose.msra.mxu0 0.0
        %1405 = vmatprep.subr.mxu0 0.0
        %1406 = vmatpush1.xpose.msra.mxu0 0.0
        %1407 = vmatprep.subr.mxu0 0.0
        %1408 = vmatpush1.xpose.msra.mxu0 0.0
        %1409 = vmatprep.subr.mxu0 0.0
        %1410 = vmatpush1.xpose.msra.mxu0 0.0
        %1411 = vmatprep.subr.mxu0 0.0
        %1412 = vmatpush1.xpose.msra.mxu0 0.0
        %1413 = vmatprep.subr.mxu0 0.0
        %1414 = vmatpush1.xpose.msra.mxu0 0.0
        %1415 = vmatprep.subr.mxu0 0.0
        %1416 = vmatpush1.xpose.msra.mxu0 0.0
        %1417 = vmatprep.subr.mxu0 0.0
        %1418 = vmatpush1.xpose.msra.mxu0 0.0
        %1419 = vmatprep.subr.mxu0 0.0
        %1420 = vmatpush1.xpose.msra.mxu0 0.0
        %1421 = vmatprep.subr.mxu0 0.0
        %1422 = vmatpush1.xpose.msra.mxu0 0.0
        %1423 = vmatprep.subr.mxu0 0.0
        %1424 = vmatpush1.xpose.msra.mxu0 0.0
        %1425 = vmatprep.subr.mxu0 0.0
        %1426 = vmatpush1.xpose.msra.mxu0 0.0
        %1427 = vmatprep.subr.mxu0 0.0
        %1428 = vmatpush1.xpose.msra.mxu0 0.0
        %1429 = vmatprep.subr.mxu0 0.0
        %1430 = vmatpush1.xpose.msra.mxu0 0.0
        %1431 = vmatprep.subr.mxu0 0.0
        %1432 = vmatpush1.xpose.msra.mxu0 0.0
        %1433 = vmatprep.subr.mxu0 0.0
        %1434 = vmatpush1.xpose.msra.mxu0 0.0
        %1435 = vmatprep.subr.mxu0 0.0
        %1436 = vmatpush1.xpose.msra.mxu0 0.0
        %1437 = vmatprep.subr.mxu0 0.0
        %1438 = vmatpush1.xpose.msra.mxu0 0.0
        %1439 = vmatprep.subr.mxu0 0.0
        %1440 = vmatpush1.xpose.msra.mxu0 0.0
        %1441 = vmatprep.subr.mxu0 0.0
        %1442 = vmatpush1.xpose.msra.mxu0 0.0
        %1443 = vmatprep.subr.mxu0 0.0
        %1444 = vmatpush1.xpose.msra.mxu0 0.0
        %1445 = vmatprep.subr.mxu0 0.0
        %1446 = vmatpush1.xpose.msra.mxu0 0.0
        %1447 = vmatprep.subr.mxu0 0.0
        %1448 = vmatpush1.xpose.msra.mxu0 0.0
        %1449 = vmatprep.subr.mxu0 0.0
        %1450 = vmatpush1.xpose.msra.mxu0 0.0
        %1451 = vmatprep.subr.mxu0 0.0
        %1452 = vmatpush1.xpose.msra.mxu0 0.0
        %1453 = vmatprep.subr.mxu0 0.0
        %1454 = vmatpush1.xpose.msra.mxu0 0.0
        %1455 = vmatprep.subr.mxu0 0.0
        %1456 = vmatpush1.xpose.msra.mxu0 0.0
        %1457 = vmatprep.subr.mxu0 0.0
        %1458 = vmatpush1.xpose.msra.mxu0 0.0
        %1459 = vmatprep.subr.mxu0 0.0
        %1460 = vmatpush1.xpose.msra.mxu0 0.0
        %1461 = vmatprep.subr.mxu0 0.0
        %1462 = vmatpush1.xpose.msra.mxu0 0.0
        %1463 = vmatprep.subr.mxu0 0.0
        %1464 = vmatpush1.xpose.msra.mxu0 0.0
        %1465 = vmatprep.mubr.f32.mxu0 0.0
        %1466 = vmatmul.mubr.f32.gmra.mrb[0].mxu0 %v1396
        %v1467 = vpop.f32.mrb[0].mxu0
        %v1468 = vadd.f32 0.0, %v1467
        %v1469 = vpop.f32.mrb[0].mxu0
        %1470 = vdwg.mxu0
        %v1471 = vmul.f32 %v1468, 0.35355338
        %v1472 = vadd.f32 %v1471, %v1058
        %v1473 = vsel %vm976, %v1472, -inf
        %1474 = vmax.xlane.f32.xlu0 %v1473
        %v1475 = vpop.xlane.xlu0 %1474
        %v1476 = vsub.f32 %v1472, %v1475
        %v1477 = vmul.f32 %v1476, 1.442695
        %v1478 = vpow.pop %v1477
        %v1479 = vsel %vm976, %v1478, 0.0
        %1480 = vadd.xlane.f32.xlu0 %v1479
        %v1481 = vpop.xlane.xlu0 %1480
        %v1482 = vrcp.pop %v1481
        %v1483 = vmul.f32 %v1478, %v1482
        %v1485 = vsel %vm976, %v1483, 0
        %1487 = vmatprep.subr.mxu0 0.0
        %1488 = vmatpush1.msra.mxu0 %v1392
        %1489 = vmatprep.subr.mxu0 0.0
        %1490 = vmatpush1.msra.mxu0 0.0
        %1491 = vmatprep.subr.mxu0 0.0
        %1492 = vmatpush1.msra.mxu0 0.0
        %1493 = vmatprep.subr.mxu0 0.0
        %1494 = vmatpush1.msra.mxu0 0.0
        %1495 = vmatprep.subr.mxu0 0.0
        %1496 = vmatpush1.msra.mxu0 0.0
        %1497 = vmatprep.subr.mxu0 0.0
        %1498 = vmatpush1.msra.mxu0 0.0
        %1499 = vmatprep.subr.mxu0 0.0
        %1500 = vmatpush1.msra.mxu0 0.0
        %1501 = vmatprep.subr.mxu0 0.0
        %1502 = vmatpush1.msra.mxu0 0.0
        %1503 = vmatprep.subr.mxu0 0.0
        %1504 = vmatpush1.msra.mxu0 0.0
        %1505 = vmatprep.subr.mxu0 0.0
        %1506 = vmatpush1.msra.mxu0 0.0
        %1507 = vmatprep.subr.mxu0 0.0
        %1508 = vmatpush1.msra.mxu0 0.0
        %1509 = vmatprep.subr.mxu0 0.0
        %1510 = vmatpush1.msra.mxu0 0.0
        %1511 = vmatprep.subr.mxu0 0.0
        %1512 = vmatpush1.msra.mxu0 0.0
        %1513 = vmatprep.subr.mxu0 0.0
        %1514 = vmatpush1.msra.mxu0 0.0
        %1515 = vmatprep.subr.mxu0 0.0
        %1516 = vmatpush1.msra.mxu0 0.0
        %1517 = vmatprep.subr.mxu0 0.0
        %1518 = vmatpush1.msra.mxu0 0.0
        %1519 = vmatprep.subr.mxu0 0.0
        %1520 = vmatpush1.msra.mxu0 0.0
        %1521 = vmatprep.subr.mxu0 0.0
        %1522 = vmatpush1.msra.mxu0 0.0
        %1523 = vmatprep.subr.mxu0 0.0
        %1524 = vmatpush1.msra.mxu0 0.0
        %1525 = vmatprep.subr.mxu0 0.0
        %1526 = vmatpush1.msra.mxu0 0.0
        %1527 = vmatprep.subr.mxu0 0.0
        %1528 = vmatpush1.msra.mxu0 0.0
        %1529 = vmatprep.subr.mxu0 0.0
        %1530 = vmatpush1.msra.mxu0 0.0
        %1531 = vmatprep.subr.mxu0 0.0
        %1532 = vmatpush1.msra.mxu0 0.0
        %1533 = vmatprep.subr.mxu0 0.0
        %1534 = vmatpush1.msra.mxu0 0.0
        %1535 = vmatprep.subr.mxu0 0.0
        %1536 = vmatpush1.msra.mxu0 0.0
        %1537 = vmatprep.subr.mxu0 0.0
        %1538 = vmatpush1.msra.mxu0 0.0
        %1539 = vmatprep.subr.mxu0 0.0
        %1540 = vmatpush1.msra.mxu0 0.0
        %1541 = vmatprep.subr.mxu0 0.0
        %1542 = vmatpush1.msra.mxu0 0.0
        %1543 = vmatprep.subr.mxu0 0.0
        %1544 = vmatpush1.msra.mxu0 0.0
        %1545 = vmatprep.subr.mxu0 0.0
        %1546 = vmatpush1.msra.mxu0 0.0
        %1547 = vmatprep.subr.mxu0 0.0
        %1548 = vmatpush1.msra.mxu0 0.0
        %1549 = vmatprep.subr.mxu0 0.0
        %1550 = vmatpush1.msra.mxu0 0.0
        %1551 = vmatprep.mubr.f32.mxu0 0.0
        %1552 = vmatmul.mubr.f32.gmra.mrb[0].mxu0 %v1485
        %v1553 = vpop.f32.mrb[0].mxu0
        %v1554 = vadd.f32 0.0, %v1553
        %v1555 = vpop.f32.mrb[0].mxu0
        %1556 = vdwg.mxu0
        %s1557 = scalar_lea.vmem %s11, 8
        %v1558 = vld [vmem:[%s1557] sm:$0xff]
        %v1560 = vsel %vm976, %v1554, 0
        %1562 = vmatprep.subr.mxu0 0.0
        %1563 = vmatpush1.msra.mxu0 %v1558
        %1564 = vmatprep.subr.mxu0 0.0
        %1565 = vmatpush1.msra.mxu0 0.0
        %1566 = vmatprep.subr.mxu0 0.0
        %1567 = vmatpush1.msra.mxu0 0.0
        %1568 = vmatprep.subr.mxu0 0.0
        %1569 = vmatpush1.msra.mxu0 0.0
        %1570 = vmatprep.subr.mxu0 0.0
        %1571 = vmatpush1.msra.mxu0 0.0
        %1572 = vmatprep.subr.mxu0 0.0
        %1573 = vmatpush1.msra.mxu0 0.0
        %1574 = vmatprep.subr.mxu0 0.0
        %1575 = vmatpush1.msra.mxu0 0.0
        %1576 = vmatprep.subr.mxu0 0.0
        %1577 = vmatpush1.msra.mxu0 0.0
        %1578 = vmatprep.subr.mxu0 0.0
        %1579 = vmatpush1.msra.mxu0 0.0
        %1580 = vmatprep.subr.mxu0 0.0
        %1581 = vmatpush1.msra.mxu0 0.0
        %1582 = vmatprep.subr.mxu0 0.0
        %1583 = vmatpush1.msra.mxu0 0.0
        %1584 = vmatprep.subr.mxu0 0.0
        %1585 = vmatpush1.msra.mxu0 0.0
        %1586 = vmatprep.subr.mxu0 0.0
        %1587 = vmatpush1.msra.mxu0 0.0
        %1588 = vmatprep.subr.mxu0 0.0
        %1589 = vmatpush1.msra.mxu0 0.0
        %1590 = vmatprep.subr.mxu0 0.0
        %1591 = vmatpush1.msra.mxu0 0.0
        %1592 = vmatprep.subr.mxu0 0.0
        %1593 = vmatpush1.msra.mxu0 0.0
        %1594 = vmatprep.subr.mxu0 0.0
        %1595 = vmatpush1.msra.mxu0 0.0
        %1596 = vmatprep.subr.mxu0 0.0
        %1597 = vmatpush1.msra.mxu0 0.0
        %1598 = vmatprep.subr.mxu0 0.0
        %1599 = vmatpush1.msra.mxu0 0.0
        %1600 = vmatprep.subr.mxu0 0.0
        %1601 = vmatpush1.msra.mxu0 0.0
        %1602 = vmatprep.subr.mxu0 0.0
        %1603 = vmatpush1.msra.mxu0 0.0
        %1604 = vmatprep.subr.mxu0 0.0
        %1605 = vmatpush1.msra.mxu0 0.0
        %1606 = vmatprep.subr.mxu0 0.0
        %1607 = vmatpush1.msra.mxu0 0.0
        %1608 = vmatprep.subr.mxu0 0.0
        %1609 = vmatpush1.msra.mxu0 0.0
        %1610 = vmatprep.subr.mxu0 0.0
        %1611 = vmatpush1.msra.mxu0 0.0
        %1612 = vmatprep.subr.mxu0 0.0
        %1613 = vmatpush1.msra.mxu0 0.0
        %1614 = vmatprep.subr.mxu0 0.0
        %1615 = vmatpush1.msra.mxu0 0.0
        %1616 = vmatprep.subr.mxu0 0.0
        %1617 = vmatpush1.msra.mxu0 0.0
        %1618 = vmatprep.subr.mxu0 0.0
        %1619 = vmatpush1.msra.mxu0 0.0
        %1620 = vmatprep.subr.mxu0 0.0
        %1621 = vmatpush1.msra.mxu0 0.0
        %1622 = vmatprep.subr.mxu0 0.0
        %1623 = vmatpush1.msra.mxu0 0.0
        %1624 = vmatprep.subr.mxu0 0.0
        %1625 = vmatpush1.msra.mxu0 0.0
        %1626 = vmatprep.mubr.f32.mxu0 0.0
        %1627 = vmatmul.mubr.f32.gmra.mrb[0].mxu0 %v1560
        %v1628 = vpop.f32.mrb[0].mxu0
        %v1629 = vadd.f32 0.0, %v1628
        %v1630 = vpop.f32.mrb[0].mxu0
        %1631 = vdwg.mxu0
        %v1633 = vsel %vm976, %v1142, 0
        %1635 = vmatprep.subr.mxu0 0.0
        %1636 = vmatpush1.msra.mxu0 %v1145
        %1637 = vmatprep.subr.mxu0 0.0
        %1638 = vmatpush1.msra.mxu0 0.0
        %1639 = vmatprep.subr.mxu0 0.0
        %1640 = vmatpush1.msra.mxu0 0.0
        %1641 = vmatprep.subr.mxu0 0.0
        %1642 = vmatpush1.msra.mxu0 0.0
        %1643 = vmatprep.subr.mxu0 0.0
        %1644 = vmatpush1.msra.mxu0 0.0
        %1645 = vmatprep.subr.mxu0 0.0
        %1646 = vmatpush1.msra.mxu0 0.0
        %1647 = vmatprep.subr.mxu0 0.0
        %1648 = vmatpush1.msra.mxu0 0.0
        %1649 = vmatprep.subr.mxu0 0.0
        %1650 = vmatpush1.msra.mxu0 0.0
        %1651 = vmatprep.subr.mxu0 0.0
        %1652 = vmatpush1.msra.mxu0 0.0
        %1653 = vmatprep.subr.mxu0 0.0
        %1654 = vmatpush1.msra.mxu0 0.0
        %1655 = vmatprep.subr.mxu0 0.0
        %1656 = vmatpush1.msra.mxu0 0.0
        %1657 = vmatprep.subr.mxu0 0.0
        %1658 = vmatpush1.msra.mxu0 0.0
        %1659 = vmatprep.subr.mxu0 0.0
        %1660 = vmatpush1.msra.mxu0 0.0
        %1661 = vmatprep.subr.mxu0 0.0
        %1662 = vmatpush1.msra.mxu0 0.0
        %1663 = vmatprep.subr.mxu0 0.0
        %1664 = vmatpush1.msra.mxu0 0.0
        %1665 = vmatprep.subr.mxu0 0.0
        %1666 = vmatpush1.msra.mxu0 0.0
        %1667 = vmatprep.subr.mxu0 0.0
        %1668 = vmatpush1.msra.mxu0 0.0
        %1669 = vmatprep.subr.mxu0 0.0
        %1670 = vmatpush1.msra.mxu0 0.0
        %1671 = vmatprep.subr.mxu0 0.0
        %1672 = vmatpush1.msra.mxu0 0.0
        %1673 = vmatprep.subr.mxu0 0.0
        %1674 = vmatpush1.msra.mxu0 0.0
        %1675 = vmatprep.subr.mxu0 0.0
        %1676 = vmatpush1.msra.mxu0 0.0
        %1677 = vmatprep.subr.mxu0 0.0
        %1678 = vmatpush1.msra.mxu0 0.0
        %1679 = vmatprep.subr.mxu0 0.0
        %1680 = vmatpush1.msra.mxu0 0.0
        %1681 = vmatprep.subr.mxu0 0.0
        %1682 = vmatpush1.msra.mxu0 0.0
        %1683 = vmatprep.subr.mxu0 0.0
        %1684 = vmatpush1.msra.mxu0 0.0
        %1685 = vmatprep.subr.mxu0 0.0
        %1686 = vmatpush1.msra.mxu0 0.0
        %1687 = vmatprep.subr.mxu0 0.0
        %1688 = vmatpush1.msra.mxu0 0.0
        %1689 = vmatprep.subr.mxu0 0.0
        %1690 = vmatpush1.msra.mxu0 0.0
        %1691 = vmatprep.subr.mxu0 0.0
        %1692 = vmatpush1.msra.mxu0 0.0
        %1693 = vmatprep.subr.mxu0 0.0
        %1694 = vmatpush1.msra.mxu0 0.0
        %1695 = vmatprep.subr.mxu0 0.0
        %1696 = vmatpush1.msra.mxu0 0.0
        %1697 = vmatprep.subr.mxu0 0.0
        %1698 = vmatpush1.msra.mxu0 0.0
        %1699 = vmatprep.mubr.f32.mxu0 0.0
        %1700 = vmatmul.mubr.f32.gmra.mrb[0].mxu0 %v1633
        %v1701 = vpop.f32.mrb[0].mxu0
        %v1702 = vadd.f32 %v1629, %v1701
        %v1703 = vpop.f32.mrb[0].mxu0
        %1704 = vdwg.mxu0
        %s1705 = scalar_lea.vmem %s5, 64
        %v1706 = vld [vmem:[%s1705] sm:$0xff]
        %v1707 = vld [vmem:[%s1705 + $0x8] sm:$0xff]
        %v1708 = vld [vmem:[%s1705 + $0x10] sm:$0xff]
        %v1709 = vld [vmem:[%s1705 + $0x18] sm:$0xff]
        %s1710 = scalar_lea.vmem %s6, 2
        %v1711 = vld [vmem:[%s1710] sm:$0x1]
        %v1713 = vlaneseq
        %v1714 = vshrl.u32 %v1713, 7
        %v1715 = vsub.s32 0, %v1714
        %v1716 = vrot.slane %v1711, %v1715
        %1718 = vmatprep.subr.mxu0 0.0
        %1719 = vmatpush1.msra.mxu0 %v1706
        %1720 = vmatprep.subr.mxu0 0.0
        %1721 = vmatpush1.msra.mxu0 %v1707
        %1722 = vmatprep.subr.mxu0 0.0
        %1723 = vmatpush1.msra.mxu0 %v1708
        %1724 = vmatprep.subr.mxu0 0.0
        %1725 = vmatpush1.msra.mxu0 %v1709
        %1726 = vmatprep.subr.mxu0 0.0
        %1727 = vmatpush1.msra.mxu0 0.0
        %1728 = vmatprep.subr.mxu0 0.0
        %1729 = vmatpush1.msra.mxu0 0.0
        %1730 = vmatprep.subr.mxu0 0.0
        %1731 = vmatpush1.msra.mxu0 0.0
        %1732 = vmatprep.subr.mxu0 0.0
        %1733 = vmatpush1.msra.mxu0 0.0
        %1734 = vmatprep.subr.mxu0 0.0
        %1735 = vmatpush1.msra.mxu0 0.0
        %1736 = vmatprep.subr.mxu0 0.0
        %1737 = vmatpush1.msra.mxu0 0.0
        %1738 = vmatprep.subr.mxu0 0.0
        %1739 = vmatpush1.msra.mxu0 0.0
        %1740 = vmatprep.subr.mxu0 0.0
        %1741 = vmatpush1.msra.mxu0 0.0
        %1742 = vmatprep.subr.mxu0 0.0
        %1743 = vmatpush1.msra.mxu0 0.0
        %1744 = vmatprep.subr.mxu0 0.0
        %1745 = vmatpush1.msra.mxu0 0.0
        %1746 = vmatprep.subr.mxu0 0.0
        %1747 = vmatpush1.msra.mxu0 0.0
        %1748 = vmatprep.subr.mxu0 0.0
        %1749 = vmatpush1.msra.mxu0 0.0
        %1750 = vmatprep.subr.mxu0 0.0
        %1751 = vmatpush1.msra.mxu0 0.0
        %1752 = vmatprep.subr.mxu0 0.0
        %1753 = vmatpush1.msra.mxu0 0.0
        %1754 = vmatprep.subr.mxu0 0.0
        %1755 = vmatpush1.msra.mxu0 0.0
        %1756 = vmatprep.subr.mxu0 0.0
        %1757 = vmatpush1.msra.mxu0 0.0
        %1758 = vmatprep.subr.mxu0 0.0
        %1759 = vmatpush1.msra.mxu0 0.0
        %1760 = vmatprep.subr.mxu0 0.0
        %1761 = vmatpush1.msra.mxu0 0.0
        %1762 = vmatprep.subr.mxu0 0.0
        %1763 = vmatpush1.msra.mxu0 0.0
        %1764 = vmatprep.subr.mxu0 0.0
        %1765 = vmatpush1.msra.mxu0 0.0
        %1766 = vmatprep.subr.mxu0 0.0
        %1767 = vmatpush1.msra.mxu0 0.0
        %1768 = vmatprep.subr.mxu0 0.0
        %1769 = vmatpush1.msra.mxu0 0.0
        %1770 = vmatprep.subr.mxu0 0.0
        %1771 = vmatpush1.msra.mxu0 0.0
        %1772 = vmatprep.subr.mxu0 0.0
        %1773 = vmatpush1.msra.mxu0 0.0
        %1774 = vmatprep.subr.mxu0 0.0
        %1775 = vmatpush1.msra.mxu0 0.0
        %1776 = vmatprep.subr.mxu0 0.0
        %1777 = vmatpush1.msra.mxu0 0.0
        %1778 = vmatprep.subr.mxu0 0.0
        %1779 = vmatpush1.msra.mxu0 0.0
        %1780 = vmatprep.subr.mxu0 0.0
        %1781 = vmatpush1.msra.mxu0 0.0
        %1782 = vmatprep.mubr.f32.mxu0 0.0
        %1783 = vmatmul.mubr.f32.gmra.mrb[0].mxu0 %v742
        %v1784 = vpop.f32.mrb[0].mxu0
        %v1785 = vadd.f32 %v1716, %v1784
        %v1786 = vpop.f32.mrb[0].mxu0
        %1787 = vdwg.mxu0
        %s1788 = scalar_lea.vmem %s7, 64
        %v1789 = vld [vmem:[%s1788] sm:$0xff]
        %v1790 = vld [vmem:[%s1788 + $0x8] sm:$0xff]
        %v1791 = vld [vmem:[%s1788 + $0x10] sm:$0xff]
        %v1792 = vld [vmem:[%s1788 + $0x18] sm:$0xff]
        %s1793 = scalar_lea.vmem %s8, 2
        %v1794 = vld [vmem:[%s1793] sm:$0x1]
        %v1796 = vlaneseq
        %v1797 = vshrl.u32 %v1796, 7
        %v1798 = vsub.s32 0, %v1797
        %v1799 = vrot.slane %v1794, %v1798
        %1801 = vmatprep.subr.mxu0 0.0
        %1802 = vmatpush1.msra.mxu0 %v1789
        %1803 = vmatprep.subr.mxu0 0.0
        %1804 = vmatpush1.msra.mxu0 %v1790
        %1805 = vmatprep.subr.mxu0 0.0
        %1806 = vmatpush1.msra.mxu0 %v1791
        %1807 = vmatprep.subr.mxu0 0.0
        %1808 = vmatpush1.msra.mxu0 %v1792
        %1809 = vmatprep.subr.mxu0 0.0
        %1810 = vmatpush1.msra.mxu0 0.0
        %1811 = vmatprep.subr.mxu0 0.0
        %1812 = vmatpush1.msra.mxu0 0.0
        %1813 = vmatprep.subr.mxu0 0.0
        %1814 = vmatpush1.msra.mxu0 0.0
        %1815 = vmatprep.subr.mxu0 0.0
        %1816 = vmatpush1.msra.mxu0 0.0
        %1817 = vmatprep.subr.mxu0 0.0
        %1818 = vmatpush1.msra.mxu0 0.0
        %1819 = vmatprep.subr.mxu0 0.0
        %1820 = vmatpush1.msra.mxu0 0.0
        %1821 = vmatprep.subr.mxu0 0.0
        %1822 = vmatpush1.msra.mxu0 0.0
        %1823 = vmatprep.subr.mxu0 0.0
        %1824 = vmatpush1.msra.mxu0 0.0
        %1825 = vmatprep.subr.mxu0 0.0
        %1826 = vmatpush1.msra.mxu0 0.0
        %1827 = vmatprep.subr.mxu0 0.0
        %1828 = vmatpush1.msra.mxu0 0.0
        %1829 = vmatprep.subr.mxu0 0.0
        %1830 = vmatpush1.msra.mxu0 0.0
        %1831 = vmatprep.subr.mxu0 0.0
        %1832 = vmatpush1.msra.mxu0 0.0
        %1833 = vmatprep.subr.mxu0 0.0
        %1834 = vmatpush1.msra.mxu0 0.0
        %1835 = vmatprep.subr.mxu0 0.0
        %1836 = vmatpush1.msra.mxu0 0.0
        %1837 = vmatprep.subr.mxu0 0.0
        %1838 = vmatpush1.msra.mxu0 0.0
        %1839 = vmatprep.subr.mxu0 0.0
        %1840 = vmatpush1.msra.mxu0 0.0
        %1841 = vmatprep.subr.mxu0 0.0
        %1842 = vmatpush1.msra.mxu0 0.0
        %1843 = vmatprep.subr.mxu0 0.0
        %1844 = vmatpush1.msra.mxu0 0.0
        %1845 = vmatprep.subr.mxu0 0.0
        %1846 = vmatpush1.msra.mxu0 0.0
        %1847 = vmatprep.subr.mxu0 0.0
        %1848 = vmatpush1.msra.mxu0 0.0
        %1849 = vmatprep.subr.mxu0 0.0
        %1850 = vmatpush1.msra.mxu0 0.0
        %1851 = vmatprep.subr.mxu0 0.0
        %1852 = vmatpush1.msra.mxu0 0.0
        %1853 = vmatprep.subr.mxu0 0.0
        %1854 = vmatpush1.msra.mxu0 0.0
        %1855 = vmatprep.subr.mxu0 0.0
        %1856 = vmatpush1.msra.mxu0 0.0
        %1857 = vmatprep.subr.mxu0 0.0
        %1858 = vmatpush1.msra.mxu0 0.0
        %1859 = vmatprep.subr.mxu0 0.0
        %1860 = vmatpush1.msra.mxu0 0.0
        %1861 = vmatprep.subr.mxu0 0.0
        %1862 = vmatpush1.msra.mxu0 0.0
        %1863 = vmatprep.subr.mxu0 0.0
        %1864 = vmatpush1.msra.mxu0 0.0
        %1865 = vmatprep.mubr.f32.mxu0 0.0
        %1866 = vmatmul.mubr.f32.gmra.mrb[0].mxu0 %v742
        %v1867 = vpop.f32.mrb[0].mxu0
        %v1868 = vadd.f32 %v1799, %v1867
        %v1869 = vpop.f32.mrb[0].mxu0
        %1870 = vdwg.mxu0
        %s1871 = scalar_lea.vmem %s9, 64
        %v1872 = vld [vmem:[%s1871] sm:$0xff]
        %v1873 = vld [vmem:[%s1871 + $0x8] sm:$0xff]
        %v1874 = vld [vmem:[%s1871 + $0x10] sm:$0xff]
        %v1875 = vld [vmem:[%s1871 + $0x18] sm:$0xff]
        %s1876 = scalar_lea.vmem %s10, 2
        %v1877 = vld [vmem:[%s1876] sm:$0x1]
        %v1879 = vlaneseq
        %v1880 = vshrl.u32 %v1879, 7
        %v1881 = vsub.s32 0, %v1880
        %v1882 = vrot.slane %v1877, %v1881
        %1884 = vmatprep.subr.mxu0 0.0
        %1885 = vmatpush1.msra.mxu0 %v1872
        %1886 = vmatprep.subr.mxu0 0.0
        %1887 = vmatpush1.msra.mxu0 %v1873
        %1888 = vmatprep.subr.mxu0 0.0
        %1889 = vmatpush1.msra.mxu0 %v1874
        %1890 = vmatprep.subr.mxu0 0.0
        %1891 = vmatpush1.msra.mxu0 %v1875
        %1892 = vmatprep.subr.mxu0 0.0
        %1893 = vmatpush1.msra.mxu0 0.0
        %1894 = vmatprep.subr.mxu0 0.0
        %1895 = vmatpush1.msra.mxu0 0.0
        %1896 = vmatprep.subr.mxu0 0.0
        %1897 = vmatpush1.msra.mxu0 0.0
        %1898 = vmatprep.subr.mxu0 0.0
        %1899 = vmatpush1.msra.mxu0 0.0
        %1900 = vmatprep.subr.mxu0 0.0
        %1901 = vmatpush1.msra.mxu0 0.0
        %1902 = vmatprep.subr.mxu0 0.0
        %1903 = vmatpush1.msra.mxu0 0.0
        %1904 = vmatprep.subr.mxu0 0.0
        %1905 = vmatpush1.msra.mxu0 0.0
        %1906 = vmatprep.subr.mxu0 0.0
        %1907 = vmatpush1.msra.mxu0 0.0
        %1908 = vmatprep.subr.mxu0 0.0
        %1909 = vmatpush1.msra.mxu0 0.0
        %1910 = vmatprep.subr.mxu0 0.0
        %1911 = vmatpush1.msra.mxu0 0.0
        %1912 = vmatprep.subr.mxu0 0.0
        %1913 = vmatpush1.msra.mxu0 0.0
        %1914 = vmatprep.subr.mxu0 0.0
        %1915 = vmatpush1.msra.mxu0 0.0
        %1916 = vmatprep.subr.mxu0 0.0
        %1917 = vmatpush1.msra.mxu0 0.0
        %1918 = vmatprep.subr.mxu0 0.0
        %1919 = vmatpush1.msra.mxu0 0.0
        %1920 = vmatprep.subr.mxu0 0.0
        %1921 = vmatpush1.msra.mxu0 0.0
        %1922 = vmatprep.subr.mxu0 0.0
        %1923 = vmatpush1.msra.mxu0 0.0
        %1924 = vmatprep.subr.mxu0 0.0
        %1925 = vmatpush1.msra.mxu0 0.0
        %1926 = vmatprep.subr.mxu0 0.0
        %1927 = vmatpush1.msra.mxu0 0.0
        %1928 = vmatprep.subr.mxu0 0.0
        %1929 = vmatpush1.msra.mxu0 0.0
        %1930 = vmatprep.subr.mxu0 0.0
        %1931 = vmatpush1.msra.mxu0 0.0
        %1932 = vmatprep.subr.mxu0 0.0
        %1933 = vmatpush1.msra.mxu0 0.0
        %1934 = vmatprep.subr.mxu0 0.0
        %1935 = vmatpush1.msra.mxu0 0.0
        %1936 = vmatprep.subr.mxu0 0.0
        %1937 = vmatpush1.msra.mxu0 0.0
        %1938 = vmatprep.subr.mxu0 0.0
        %1939 = vmatpush1.msra.mxu0 0.0
        %1940 = vmatprep.subr.mxu0 0.0
        %1941 = vmatpush1.msra.mxu0 0.0
        %1942 = vmatprep.subr.mxu0 0.0
        %1943 = vmatpush1.msra.mxu0 0.0
        %1944 = vmatprep.subr.mxu0 0.0
        %1945 = vmatpush1.msra.mxu0 0.0
        %1946 = vmatprep.subr.mxu0 0.0
        %1947 = vmatpush1.msra.mxu0 0.0
        %1948 = vmatprep.mubr.f32.mxu0 0.0
        %1949 = vmatmul.mubr.f32.gmra.mrb[0].mxu0 %v742
        %v1950 = vpop.f32.mrb[0].mxu0
        %v1951 = vadd.f32 %v1882, %v1950
        %v1952 = vpop.f32.mrb[0].mxu0
        %1953 = vdwg.mxu0
        %v1955 = vsel %vm976, %v1785, 0
        %v1958 = vsel %vm976, %v1868, 0
        %1960 = vmatprep.subr.mxu0 0.0
        %1961 = vmatpush1.xpose.msra.mxu0 %v1958
        %1962 = vmatprep.subr.mxu0 0.0
        %1963 = vmatpush1.xpose.msra.mxu0 0.0
        %1964 = vmatprep.subr.mxu0 0.0
        %1965 = vmatpush1.xpose.msra.mxu0 0.0
        %1966 = vmatprep.subr.mxu0 0.0
        %1967 = vmatpush1.xpose.msra.mxu0 0.0
        %1968 = vmatprep.subr.mxu0 0.0
        %1969 = vmatpush1.xpose.msra.mxu0 0.0
        %1970 = vmatprep.subr.mxu0 0.0
        %1971 = vmatpush1.xpose.msra.mxu0 0.0
        %1972 = vmatprep.subr.mxu0 0.0
        %1973 = vmatpush1.xpose.msra.mxu0 0.0
        %1974 = vmatprep.subr.mxu0 0.0
        %1975 = vmatpush1.xpose.msra.mxu0 0.0
        %1976 = vmatprep.subr.mxu0 0.0
        %1977 = vmatpush1.xpose.msra.mxu0 0.0
        %1978 = vmatprep.subr.mxu0 0.0
        %1979 = vmatpush1.xpose.msra.mxu0 0.0
        %1980 = vmatprep.subr.mxu0 0.0
        %1981 = vmatpush1.xpose.msra.mxu0 0.0
        %1982 = vmatprep.subr.mxu0 0.0
        %1983 = vmatpush1.xpose.msra.mxu0 0.0
        %1984 = vmatprep.subr.mxu0 0.0
        %1985 = vmatpush1.xpose.msra.mxu0 0.0
        %1986 = vmatprep.subr.mxu0 0.0
        %1987 = vmatpush1.xpose.msra.mxu0 0.0
        %1988 = vmatprep.subr.mxu0 0.0
        %1989 = vmatpush1.xpose.msra.mxu0 0.0
        %1990 = vmatprep.subr.mxu0 0.0
        %1991 = vmatpush1.xpose.msra.mxu0 0.0
        %1992 = vmatprep.subr.mxu0 0.0
        %1993 = vmatpush1.xpose.msra.mxu0 0.0
        %1994 = vmatprep.subr.mxu0 0.0
        %1995 = vmatpush1.xpose.msra.mxu0 0.0
        %1996 = vmatprep.subr.mxu0 0.0
        %1997 = vmatpush1.xpose.msra.mxu0 0.0
        %1998 = vmatprep.subr.mxu0 0.0
        %1999 = vmatpush1.xpose.msra.mxu0 0.0
        %2000 = vmatprep.subr.mxu0 0.0
        %2001 = vmatpush1.xpose.msra.mxu0 0.0
        %2002 = vmatprep.subr.mxu0 0.0
        %2003 = vmatpush1.xpose.msra.mxu0 0.0
        %2004 = vmatprep.subr.mxu0 0.0
        %2005 = vmatpush1.xpose.msra.mxu0 0.0
        %2006 = vmatprep.subr.mxu0 0.0
        %2007 = vmatpush1.xpose.msra.mxu0 0.0
        %2008 = vmatprep.subr.mxu0 0.0
        %2009 = vmatpush1.xpose.msra.mxu0 0.0
        %2010 = vmatprep.subr.mxu0 0.0
        %2011 = vmatpush1.xpose.msra.mxu0 0.0
        %2012 = vmatprep.subr.mxu0 0.0
        %2013 = vmatpush1.xpose.msra.mxu0 0.0
        %2014 = vmatprep.subr.mxu0 0.0
        %2015 = vmatpush1.xpose.msra.mxu0 0.0
        %2016 = vmatprep.subr.mxu0 0.0
        %2017 = vmatpush1.xpose.msra.mxu0 0.0
        %2018 = vmatprep.subr.mxu0 0.0
        %2019 = vmatpush1.xpose.msra.mxu0 0.0
        %2020 = vmatprep.subr.mxu0 0.0
        %2021 = vmatpush1.xpose.msra.mxu0 0.0
        %2022 = vmatprep.subr.mxu0 0.0
        %2023 = vmatpush1.xpose.msra.mxu0 0.0
        %2024 = vmatprep.mubr.f32.mxu0 0.0
        %2025 = vmatmul.mubr.f32.gmra.mrb[0].mxu0 %v1955
        %v2026 = vpop.f32.mrb[0].mxu0
        %v2027 = vadd.f32 0.0, %v2026
        %v2028 = vpop.f32.mrb[0].mxu0
        %2029 = vdwg.mxu0
        %v2030 = vmul.f32 %v2027, 0.35355338
        %v2031 = vadd.f32 %v2030, %v1058
        %v2032 = vsel %vm976, %v2031, -inf
        %2033 = vmax.xlane.f32.xlu0 %v2032
        %v2034 = vpop.xlane.xlu0 %2033
        %v2035 = vsub.f32 %v2031, %v2034
        %v2036 = vmul.f32 %v2035, 1.442695
        %v2037 = vpow.pop %v2036
        %v2038 = vsel %vm976, %v2037, 0.0
        %2039 = vadd.xlane.f32.xlu0 %v2038
        %v2040 = vpop.xlane.xlu0 %2039
        %v2041 = vrcp.pop %v2040
        %v2042 = vmul.f32 %v2037, %v2041
        %v2044 = vsel %vm976, %v2042, 0
        %2046 = vmatprep.subr.mxu0 0.0
        %2047 = vmatpush1.msra.mxu0 %v1951
        %2048 = vmatprep.subr.mxu0 0.0
        %2049 = vmatpush1.msra.mxu0 0.0
        %2050 = vmatprep.subr.mxu0 0.0
        %2051 = vmatpush1.msra.mxu0 0.0
        %2052 = vmatprep.subr.mxu0 0.0
        %2053 = vmatpush1.msra.mxu0 0.0
        %2054 = vmatprep.subr.mxu0 0.0
        %2055 = vmatpush1.msra.mxu0 0.0
        %2056 = vmatprep.subr.mxu0 0.0
        %2057 = vmatpush1.msra.mxu0 0.0
        %2058 = vmatprep.subr.mxu0 0.0
        %2059 = vmatpush1.msra.mxu0 0.0
        %2060 = vmatprep.subr.mxu0 0.0
        %2061 = vmatpush1.msra.mxu0 0.0
        %2062 = vmatprep.subr.mxu0 0.0
        %2063 = vmatpush1.msra.mxu0 0.0
        %2064 = vmatprep.subr.mxu0 0.0
        %2065 = vmatpush1.msra.mxu0 0.0
        %2066 = vmatprep.subr.mxu0 0.0
        %2067 = vmatpush1.msra.mxu0 0.0
        %2068 = vmatprep.subr.mxu0 0.0
        %2069 = vmatpush1.msra.mxu0 0.0
        %2070 = vmatprep.subr.mxu0 0.0
        %2071 = vmatpush1.msra.mxu0 0.0
        %2072 = vmatprep.subr.mxu0 0.0
        %2073 = vmatpush1.msra.mxu0 0.0
        %2074 = vmatprep.subr.mxu0 0.0
        %2075 = vmatpush1.msra.mxu0 0.0
        %2076 = vmatprep.subr.mxu0 0.0
        %2077 = vmatpush1.msra.mxu0 0.0
        %2078 = vmatprep.subr.mxu0 0.0
        %2079 = vmatpush1.msra.mxu0 0.0
        %2080 = vmatprep.subr.mxu0 0.0
        %2081 = vmatpush1.msra.mxu0 0.0
        %2082 = vmatprep.subr.mxu0 0.0
        %2083 = vmatpush1.msra.mxu0 0.0
        %2084 = vmatprep.subr.mxu0 0.0
        %2085 = vmatpush1.msra.mxu0 0.0
        %2086 = vmatprep.subr.mxu0 0.0
        %2087 = vmatpush1.msra.mxu0 0.0
        %2088 = vmatprep.subr.mxu0 0.0
        %2089 = vmatpush1.msra.mxu0 0.0
        %2090 = vmatprep.subr.mxu0 0.0
        %2091 = vmatpush1.msra.mxu0 0.0
        %2092 = vmatprep.subr.mxu0 0.0
        %2093 = vmatpush1.msra.mxu0 0.0
        %2094 = vmatprep.subr.mxu0 0.0
        %2095 = vmatpush1.msra.mxu0 0.0
        %2096 = vmatprep.subr.mxu0 0.0
        %2097 = vmatpush1.msra.mxu0 0.0
        %2098 = vmatprep.subr.mxu0 0.0
        %2099 = vmatpush1.msra.mxu0 0.0
        %2100 = vmatprep.subr.mxu0 0.0
        %2101 = vmatpush1.msra.mxu0 0.0
        %2102 = vmatprep.subr.mxu0 0.0
        %2103 = vmatpush1.msra.mxu0 0.0
        %2104 = vmatprep.subr.mxu0 0.0
        %2105 = vmatpush1.msra.mxu0 0.0
        %2106 = vmatprep.subr.mxu0 0.0
        %2107 = vmatpush1.msra.mxu0 0.0
        %2108 = vmatprep.subr.mxu0 0.0
        %2109 = vmatpush1.msra.mxu0 0.0
        %2110 = vmatprep.mubr.f32.mxu0 0.0
        %2111 = vmatmul.mubr.f32.gmra.mrb[0].mxu0 %v2044
        %v2112 = vpop.f32.mrb[0].mxu0
        %v2113 = vadd.f32 0.0, %v2112
        %v2114 = vpop.f32.mrb[0].mxu0
        %2115 = vdwg.mxu0
        %s2116 = scalar_lea.vmem %s11, 16
        %v2117 = vld [vmem:[%s2116] sm:$0xff]
        %v2119 = vsel %vm976, %v2113, 0
        %2121 = vmatprep.subr.mxu0 0.0
        %2122 = vmatpush1.msra.mxu0 %v2117
        %2123 = vmatprep.subr.mxu0 0.0
        %2124 = vmatpush1.msra.mxu0 0.0
        %2125 = vmatprep.subr.mxu0 0.0
        %2126 = vmatpush1.msra.mxu0 0.0
        %2127 = vmatprep.subr.mxu0 0.0
        %2128 = vmatpush1.msra.mxu0 0.0
        %2129 = vmatprep.subr.mxu0 0.0
        %2130 = vmatpush1.msra.mxu0 0.0
        %2131 = vmatprep.subr.mxu0 0.0
        %2132 = vmatpush1.msra.mxu0 0.0
        %2133 = vmatprep.subr.mxu0 0.0
        %2134 = vmatpush1.msra.mxu0 0.0
        %2135 = vmatprep.subr.mxu0 0.0
        %2136 = vmatpush1.msra.mxu0 0.0
        %2137 = vmatprep.subr.mxu0 0.0
        %2138 = vmatpush1.msra.mxu0 0.0
        %2139 = vmatprep.subr.mxu0 0.0
        %2140 = vmatpush1.msra.mxu0 0.0
        %2141 = vmatprep.subr.mxu0 0.0
        %2142 = vmatpush1.msra.mxu0 0.0
        %2143 = vmatprep.subr.mxu0 0.0
        %2144 = vmatpush1.msra.mxu0 0.0
        %2145 = vmatprep.subr.mxu0 0.0
        %2146 = vmatpush1.msra.mxu0 0.0
        %2147 = vmatprep.subr.mxu0 0.0
        %2148 = vmatpush1.msra.mxu0 0.0
        %2149 = vmatprep.subr.mxu0 0.0
        %2150 = vmatpush1.msra.mxu0 0.0
        %2151 = vmatprep.subr.mxu0 0.0
        %2152 = vmatpush1.msra.mxu0 0.0
        %2153 = vmatprep.subr.mxu0 0.0
        %2154 = vmatpush1.msra.mxu0 0.0
        %2155 = vmatprep.subr.mxu0 0.0
        %2156 = vmatpush1.msra.mxu0 0.0
        %2157 = vmatprep.subr.mxu0 0.0
        %2158 = vmatpush1.msra.mxu0 0.0
        %2159 = vmatprep.subr.mxu0 0.0
        %2160 = vmatpush1.msra.mxu0 0.0
        %2161 = vmatprep.subr.mxu0 0.0
        %2162 = vmatpush1.msra.mxu0 0.0
        %2163 = vmatprep.subr.mxu0 0.0
        %2164 = vmatpush1.msra.mxu0 0.0
        %2165 = vmatprep.subr.mxu0 0.0
        %2166 = vmatpush1.msra.mxu0 0.0
        %2167 = vmatprep.subr.mxu0 0.0
        %2168 = vmatpush1.msra.mxu0 0.0
        %2169 = vmatprep.subr.mxu0 0.0
        %2170 = vmatpush1.msra.mxu0 0.0
        %2171 = vmatprep.subr.mxu0 0.0
        %2172 = vmatpush1.msra.mxu0 0.0
        %2173 = vmatprep.subr.mxu0 0.0
        %2174 = vmatpush1.msra.mxu0 0.0
        %2175 = vmatprep.subr.mxu0 0.0
        %2176 = vmatpush1.msra.mxu0 0.0
        %2177 = vmatprep.subr.mxu0 0.0
        %2178 = vmatpush1.msra.mxu0 0.0
        %2179 = vmatprep.subr.mxu0 0.0
        %2180 = vmatpush1.msra.mxu0 0.0
        %2181 = vmatprep.subr.mxu0 0.0
        %2182 = vmatpush1.msra.mxu0 0.0
        %2183 = vmatprep.subr.mxu0 0.0
        %2184 = vmatpush1.msra.mxu0 0.0
        %2185 = vmatprep.mubr.f32.mxu0 0.0
        %2186 = vmatmul.mubr.f32.gmra.mrb[0].mxu0 %v2119
        %v2187 = vpop.f32.mrb[0].mxu0
        %v2188 = vadd.f32 0.0, %v2187
        %v2189 = vpop.f32.mrb[0].mxu0
        %2190 = vdwg.mxu0
        %v2191 = vadd.f32 %v1702, %v2188
        %s2192 = scalar_lea.vmem %s5, 96
        %v2193 = vld [vmem:[%s2192] sm:$0xff]
        %v2194 = vld [vmem:[%s2192 + $0x8] sm:$0xff]
        %v2195 = vld [vmem:[%s2192 + $0x10] sm:$0xff]
        %v2196 = vld [vmem:[%s2192 + $0x18] sm:$0xff]
        %s2197 = scalar_lea.vmem %s6, 3
        %v2198 = vld [vmem:[%s2197] sm:$0x1]
        %v2200 = vlaneseq
        %v2201 = vshrl.u32 %v2200, 7
        %v2202 = vsub.s32 0, %v2201
        %v2203 = vrot.slane %v2198, %v2202
        %2205 = vmatprep.subr.mxu0 0.0
        %2206 = vmatpush1.msra.mxu0 %v2193
        %2207 = vmatprep.subr.mxu0 0.0
        %2208 = vmatpush1.msra.mxu0 %v2194
        %2209 = vmatprep.subr.mxu0 0.0
        %2210 = vmatpush1.msra.mxu0 %v2195
        %2211 = vmatprep.subr.mxu0 0.0
        %2212 = vmatpush1.msra.mxu0 %v2196
        %2213 = vmatprep.subr.mxu0 0.0
        %2214 = vmatpush1.msra.mxu0 0.0
        %2215 = vmatprep.subr.mxu0 0.0
        %2216 = vmatpush1.msra.mxu0 0.0
        %2217 = vmatprep.subr.mxu0 0.0
        %2218 = vmatpush1.msra.mxu0 0.0
        %2219 = vmatprep.subr.mxu0 0.0
        %2220 = vmatpush1.msra.mxu0 0.0
        %2221 = vmatprep.subr.mxu0 0.0
        %2222 = vmatpush1.msra.mxu0 0.0
        %2223 = vmatprep.subr.mxu0 0.0
        %2224 = vmatpush1.msra.mxu0 0.0
        %2225 = vmatprep.subr.mxu0 0.0
        %2226 = vmatpush1.msra.mxu0 0.0
        %2227 = vmatprep.subr.mxu0 0.0
        %2228 = vmatpush1.msra.mxu0 0.0
        %2229 = vmatprep.subr.mxu0 0.0
        %2230 = vmatpush1.msra.mxu0 0.0
        %2231 = vmatprep.subr.mxu0 0.0
        %2232 = vmatpush1.msra.mxu0 0.0
        %2233 = vmatprep.subr.mxu0 0.0
        %2234 = vmatpush1.msra.mxu0 0.0
        %2235 = vmatprep.subr.mxu0 0.0
        %2236 = vmatpush1.msra.mxu0 0.0
        %2237 = vmatprep.subr.mxu0 0.0
        %2238 = vmatpush1.msra.mxu0 0.0
        %2239 = vmatprep.subr.mxu0 0.0
        %2240 = vmatpush1.msra.mxu0 0.0
        %2241 = vmatprep.subr.mxu0 0.0
        %2242 = vmatpush1.msra.mxu0 0.0
        %2243 = vmatprep.subr.mxu0 0.0
        %2244 = vmatpush1.msra.mxu0 0.0
        %2245 = vmatprep.subr.mxu0 0.0
        %2246 = vmatpush1.msra.mxu0 0.0
        %2247 = vmatprep.subr.mxu0 0.0
        %2248 = vmatpush1.msra.mxu0 0.0
        %2249 = vmatprep.subr.mxu0 0.0
        %2250 = vmatpush1.msra.mxu0 0.0
        %2251 = vmatprep.subr.mxu0 0.0
        %2252 = vmatpush1.msra.mxu0 0.0
        %2253 = vmatprep.subr.mxu0 0.0
        %2254 = vmatpush1.msra.mxu0 0.0
        %2255 = vmatprep.subr.mxu0 0.0
        %2256 = vmatpush1.msra.mxu0 0.0
        %2257 = vmatprep.subr.mxu0 0.0
        %2258 = vmatpush1.msra.mxu0 0.0
        %2259 = vmatprep.subr.mxu0 0.0
        %2260 = vmatpush1.msra.mxu0 0.0
        %2261 = vmatprep.subr.mxu0 0.0
        %2262 = vmatpush1.msra.mxu0 0.0
        %2263 = vmatprep.subr.mxu0 0.0
        %2264 = vmatpush1.msra.mxu0 0.0
        %2265 = vmatprep.subr.mxu0 0.0
        %2266 = vmatpush1.msra.mxu0 0.0
        %2267 = vmatprep.subr.mxu0 0.0
        %2268 = vmatpush1.msra.mxu0 0.0
        %2269 = vmatprep.mubr.f32.mxu0 0.0
        %2270 = vmatmul.mubr.f32.gmra.mrb[0].mxu0 %v742
        %v2271 = vpop.f32.mrb[0].mxu0
        %v2272 = vadd.f32 %v2203, %v2271
        %v2273 = vpop.f32.mrb[0].mxu0
        %2274 = vdwg.mxu0
        %s2275 = scalar_lea.vmem %s7, 96
        %v2276 = vld [vmem:[%s2275] sm:$0xff]
        %v2277 = vld [vmem:[%s2275 + $0x8] sm:$0xff]
        %v2278 = vld [vmem:[%s2275 + $0x10] sm:$0xff]
        %v2279 = vld [vmem:[%s2275 + $0x18] sm:$0xff]
        %s2280 = scalar_lea.vmem %s8, 3
        %v2281 = vld [vmem:[%s2280] sm:$0x1]
        %v2283 = vlaneseq
        %v2284 = vshrl.u32 %v2283, 7
        %v2285 = vsub.s32 0, %v2284
        %v2286 = vrot.slane %v2281, %v2285
        %2288 = vmatprep.subr.mxu0 0.0
        %2289 = vmatpush1.msra.mxu0 %v2276
        %2290 = vmatprep.subr.mxu0 0.0
        %2291 = vmatpush1.msra.mxu0 %v2277
        %2292 = vmatprep.subr.mxu0 0.0
        %2293 = vmatpush1.msra.mxu0 %v2278
        %2294 = vmatprep.subr.mxu0 0.0
        %2295 = vmatpush1.msra.mxu0 %v2279
        %2296 = vmatprep.subr.mxu0 0.0
        %2297 = vmatpush1.msra.mxu0 0.0
        %2298 = vmatprep.subr.mxu0 0.0
        %2299 = vmatpush1.msra.mxu0 0.0
        %2300 = vmatprep.subr.mxu0 0.0
        %2301 = vmatpush1.msra.mxu0 0.0
        %2302 = vmatprep.subr.mxu0 0.0
        %2303 = vmatpush1.msra.mxu0 0.0
        %2304 = vmatprep.subr.mxu0 0.0
        %2305 = vmatpush1.msra.mxu0 0.0
        %2306 = vmatprep.subr.mxu0 0.0
        %2307 = vmatpush1.msra.mxu0 0.0
        %2308 = vmatprep.subr.mxu0 0.0
        %2309 = vmatpush1.msra.mxu0 0.0
        %2310 = vmatprep.subr.mxu0 0.0
        %2311 = vmatpush1.msra.mxu0 0.0
        %2312 = vmatprep.subr.mxu0 0.0
        %2313 = vmatpush1.msra.mxu0 0.0
        %2314 = vmatprep.subr.mxu0 0.0
        %2315 = vmatpush1.msra.mxu0 0.0
        %2316 = vmatprep.subr.mxu0 0.0
        %2317 = vmatpush1.msra.mxu0 0.0
        %2318 = vmatprep.subr.mxu0 0.0
        %2319 = vmatpush1.msra.mxu0 0.0
        %2320 = vmatprep.subr.mxu0 0.0
        %2321 = vmatpush1.msra.mxu0 0.0
        %2322 = vmatprep.subr.mxu0 0.0
        %2323 = vmatpush1.msra.mxu0 0.0
        %2324 = vmatprep.subr.mxu0 0.0
        %2325 = vmatpush1.msra.mxu0 0.0
        %2326 = vmatprep.subr.mxu0 0.0
        %2327 = vmatpush1.msra.mxu0 0.0
        %2328 = vmatprep.subr.mxu0 0.0
        %2329 = vmatpush1.msra.mxu0 0.0
        %2330 = vmatprep.subr.mxu0 0.0
        %2331 = vmatpush1.msra.mxu0 0.0
        %2332 = vmatprep.subr.mxu0 0.0
        %2333 = vmatpush1.msra.mxu0 0.0
        %2334 = vmatprep.subr.mxu0 0.0
        %2335 = vmatpush1.msra.mxu0 0.0
        %2336 = vmatprep.subr.mxu0 0.0
        %2337 = vmatpush1.msra.mxu0 0.0
        %2338 = vmatprep.subr.mxu0 0.0
        %2339 = vmatpush1.msra.mxu0 0.0
        %2340 = vmatprep.subr.mxu0 0.0
        %2341 = vmatpush1.msra.mxu0 0.0
        %2342 = vmatprep.subr.mxu0 0.0
        %2343 = vmatpush1.msra.mxu0 0.0
        %2344 = vmatprep.subr.mxu0 0.0
        %2345 = vmatpush1.msra.mxu0 0.0
        %2346 = vmatprep.subr.mxu0 0.0
        %2347 = vmatpush1.msra.mxu0 0.0
        %2348 = vmatprep.subr.mxu0 0.0
        %2349 = vmatpush1.msra.mxu0 0.0
        %2350 = vmatprep.subr.mxu0 0.0
        %2351 = vmatpush1.msra.mxu0 0.0
        %2352 = vmatprep.mubr.f32.mxu0 0.0
        %2353 = vmatmul.mubr.f32.gmra.mrb[0].mxu0 %v742
        %v2354 = vpop.f32.mrb[0].mxu0
        %v2355 = vadd.f32 %v2286, %v2354
        %v2356 = vpop.f32.mrb[0].mxu0
        %2357 = vdwg.mxu0
        %s2358 = scalar_lea.vmem %s9, 96
        %v2359 = vld [vmem:[%s2358] sm:$0xff]
        %v2360 = vld [vmem:[%s2358 + $0x8] sm:$0xff]
        %v2361 = vld [vmem:[%s2358 + $0x10] sm:$0xff]
        %v2362 = vld [vmem:[%s2358 + $0x18] sm:$0xff]
        %s2363 = scalar_lea.vmem %s10, 3
        %v2364 = vld [vmem:[%s2363] sm:$0x1]
        %v2366 = vlaneseq
        %v2367 = vshrl.u32 %v2366, 7
        %v2368 = vsub.s32 0, %v2367
        %v2369 = vrot.slane %v2364, %v2368
        %2371 = vmatprep.subr.mxu0 0.0
        %2372 = vmatpush1.msra.mxu0 %v2359
        %2373 = vmatprep.subr.mxu0 0.0
        %2374 = vmatpush1.msra.mxu0 %v2360
        %2375 = vmatprep.subr.mxu0 0.0
        %2376 = vmatpush1.msra.mxu0 %v2361
        %2377 = vmatprep.subr.mxu0 0.0
        %2378 = vmatpush1.msra.mxu0 %v2362
        %2379 = vmatprep.subr.mxu0 0.0
        %2380 = vmatpush1.msra.mxu0 0.0
        %2381 = vmatprep.subr.mxu0 0.0
        %2382 = vmatpush1.msra.mxu0 0.0
        %2383 = vmatprep.subr.mxu0 0.0
        %2384 = vmatpush1.msra.mxu0 0.0
        %2385 = vmatprep.subr.mxu0 0.0
        %2386 = vmatpush1.msra.mxu0 0.0
        %2387 = vmatprep.subr.mxu0 0.0
        %2388 = vmatpush1.msra.mxu0 0.0
        %2389 = vmatprep.subr.mxu0 0.0
        %2390 = vmatpush1.msra.mxu0 0.0
        %2391 = vmatprep.subr.mxu0 0.0
        %2392 = vmatpush1.msra.mxu0 0.0
        %2393 = vmatprep.subr.mxu0 0.0
        %2394 = vmatpush1.msra.mxu0 0.0
        %2395 = vmatprep.subr.mxu0 0.0
        %2396 = vmatpush1.msra.mxu0 0.0
        %2397 = vmatprep.subr.mxu0 0.0
        %2398 = vmatpush1.msra.mxu0 0.0
        %2399 = vmatprep.subr.mxu0 0.0
        %2400 = vmatpush1.msra.mxu0 0.0
        %2401 = vmatprep.subr.mxu0 0.0
        %2402 = vmatpush1.msra.mxu0 0.0
        %2403 = vmatprep.subr.mxu0 0.0
        %2404 = vmatpush1.msra.mxu0 0.0
        %2405 = vmatprep.subr.mxu0 0.0
        %2406 = vmatpush1.msra.mxu0 0.0
        %2407 = vmatprep.subr.mxu0 0.0
        %2408 = vmatpush1.msra.mxu0 0.0
        %2409 = vmatprep.subr.mxu0 0.0
        %2410 = vmatpush1.msra.mxu0 0.0
        %2411 = vmatprep.subr.mxu0 0.0
        %2412 = vmatpush1.msra.mxu0 0.0
        %2413 = vmatprep.subr.mxu0 0.0
        %2414 = vmatpush1.msra.mxu0 0.0
        %2415 = vmatprep.subr.mxu0 0.0
        %2416 = vmatpush1.msra.mxu0 0.0
        %2417 = vmatprep.subr.mxu0 0.0
        %2418 = vmatpush1.msra.mxu0 0.0
        %2419 = vmatprep.subr.mxu0 0.0
        %2420 = vmatpush1.msra.mxu0 0.0
        %2421 = vmatprep.subr.mxu0 0.0
        %2422 = vmatpush1.msra.mxu0 0.0
        %2423 = vmatprep.subr.mxu0 0.0
        %2424 = vmatpush1.msra.mxu0 0.0
        %2425 = vmatprep.subr.mxu0 0.0
        %2426 = vmatpush1.msra.mxu0 0.0
        %2427 = vmatprep.subr.mxu0 0.0
        %2428 = vmatpush1.msra.mxu0 0.0
        %2429 = vmatprep.subr.mxu0 0.0
        %2430 = vmatpush1.msra.mxu0 0.0
        %2431 = vmatprep.subr.mxu0 0.0
        %2432 = vmatpush1.msra.mxu0 0.0
        %2433 = vmatprep.subr.mxu0 0.0
        %2434 = vmatpush1.msra.mxu0 0.0
        %2435 = vmatprep.mubr.f32.mxu0 0.0
        %2436 = vmatmul.mubr.f32.gmra.mrb[0].mxu0 %v742
        %v2437 = vpop.f32.mrb[0].mxu0
        %v2438 = vadd.f32 %v2369, %v2437
        %v2439 = vpop.f32.mrb[0].mxu0
        %2440 = vdwg.mxu0
        %v2442 = vsel %vm976, %v2272, 0
        %v2445 = vsel %vm976, %v2355, 0
        %2447 = vmatprep.subr.mxu0 0.0
        %2448 = vmatpush1.xpose.msra.mxu0 %v2445
        %2449 = vmatprep.subr.mxu0 0.0
        %2450 = vmatpush1.xpose.msra.mxu0 0.0
        %2451 = vmatprep.subr.mxu0 0.0
        %2452 = vmatpush1.xpose.msra.mxu0 0.0
        %2453 = vmatprep.subr.mxu0 0.0
        %2454 = vmatpush1.xpose.msra.mxu0 0.0
        %2455 = vmatprep.subr.mxu0 0.0
        %2456 = vmatpush1.xpose.msra.mxu0 0.0
        %2457 = vmatprep.subr.mxu0 0.0
        %2458 = vmatpush1.xpose.msra.mxu0 0.0
        %2459 = vmatprep.subr.mxu0 0.0
        %2460 = vmatpush1.xpose.msra.mxu0 0.0
        %2461 = vmatprep.subr.mxu0 0.0
        %2462 = vmatpush1.xpose.msra.mxu0 0.0
        %2463 = vmatprep.subr.mxu0 0.0
        %2464 = vmatpush1.xpose.msra.mxu0 0.0
        %2465 = vmatprep.subr.mxu0 0.0
        %2466 = vmatpush1.xpose.msra.mxu0 0.0
        %2467 = vmatprep.subr.mxu0 0.0
        %2468 = vmatpush1.xpose.msra.mxu0 0.0
        %2469 = vmatprep.subr.mxu0 0.0
        %2470 = vmatpush1.xpose.msra.mxu0 0.0
        %2471 = vmatprep.subr.mxu0 0.0
        %2472 = vmatpush1.xpose.msra.mxu0 0.0
        %2473 = vmatprep.subr.mxu0 0.0
        %2474 = vmatpush1.xpose.msra.mxu0 0.0
        %2475 = vmatprep.subr.mxu0 0.0
        %2476 = vmatpush1.xpose.msra.mxu0 0.0
        %2477 = vmatprep.subr.mxu0 0.0
        %2478 = vmatpush1.xpose.msra.mxu0 0.0
        %2479 = vmatprep.subr.mxu0 0.0
        %2480 = vmatpush1.xpose.msra.mxu0 0.0
        %2481 = vmatprep.subr.mxu0 0.0
        %2482 = vmatpush1.xpose.msra.mxu0 0.0
        %2483 = vmatprep.subr.mxu0 0.0
        %2484 = vmatpush1.xpose.msra.mxu0 0.0
        %2485 = vmatprep.subr.mxu0 0.0
        %2486 = vmatpush1.xpose.msra.mxu0 0.0
        %2487 = vmatprep.subr.mxu0 0.0
        %2488 = vmatpush1.xpose.msra.mxu0 0.0
        %2489 = vmatprep.subr.mxu0 0.0
        %2490 = vmatpush1.xpose.msra.mxu0 0.0
        %2491 = vmatprep.subr.mxu0 0.0
        %2492 = vmatpush1.xpose.msra.mxu0 0.0
        %2493 = vmatprep.subr.mxu0 0.0
        %2494 = vmatpush1.xpose.msra.mxu0 0.0
        %2495 = vmatprep.subr.mxu0 0.0
        %2496 = vmatpush1.xpose.msra.mxu0 0.0
        %2497 = vmatprep.subr.mxu0 0.0
        %2498 = vmatpush1.xpose.msra.mxu0 0.0
        %2499 = vmatprep.subr.mxu0 0.0
        %2500 = vmatpush1.xpose.msra.mxu0 0.0
        %2501 = vmatprep.subr.mxu0 0.0
        %2502 = vmatpush1.xpose.msra.mxu0 0.0
        %2503 = vmatprep.subr.mxu0 0.0
        %2504 = vmatpush1.xpose.msra.mxu0 0.0
        %2505 = vmatprep.subr.mxu0 0.0
        %2506 = vmatpush1.xpose.msra.mxu0 0.0
        %2507 = vmatprep.subr.mxu0 0.0
        %2508 = vmatpush1.xpose.msra.mxu0 0.0
        %2509 = vmatprep.subr.mxu0 0.0
        %2510 = vmatpush1.xpose.msra.mxu0 0.0
        %2511 = vmatprep.mubr.f32.mxu0 0.0
        %2512 = vmatmul.mubr.f32.gmra.mrb[0].mxu0 %v2442
        %v2513 = vpop.f32.mrb[0].mxu0
        %v2514 = vadd.f32 0.0, %v2513
        %v2515 = vpop.f32.mrb[0].mxu0
        %2516 = vdwg.mxu0
        %v2517 = vmul.f32 %v2514, 0.35355338
        %v2518 = vadd.f32 %v2517, %v1058
        %v2519 = vsel %vm976, %v2518, -inf
        %2520 = vmax.xlane.f32.xlu0 %v2519
        %v2521 = vpop.xlane.xlu0 %2520
        %v2522 = vsub.f32 %v2518, %v2521
        %v2523 = vmul.f32 %v2522, 1.442695
        %v2524 = vpow.pop %v2523
        %v2525 = vsel %vm976, %v2524, 0.0
        %2526 = vadd.xlane.f32.xlu0 %v2525
        %v2527 = vpop.xlane.xlu0 %2526
        %v2528 = vrcp.pop %v2527
        %v2529 = vmul.f32 %v2524, %v2528
        %v2531 = vsel %vm976, %v2529, 0
        %2533 = vmatprep.subr.mxu0 0.0
        %2534 = vmatpush1.msra.mxu0 %v2438
        %2535 = vmatprep.subr.mxu0 0.0
        %2536 = vmatpush1.msra.mxu0 0.0
        %2537 = vmatprep.subr.mxu0 0.0
        %2538 = vmatpush1.msra.mxu0 0.0
        %2539 = vmatprep.subr.mxu0 0.0
        %2540 = vmatpush1.msra.mxu0 0.0
        %2541 = vmatprep.subr.mxu0 0.0
        %2542 = vmatpush1.msra.mxu0 0.0
        %2543 = vmatprep.subr.mxu0 0.0
        %2544 = vmatpush1.msra.mxu0 0.0
        %2545 = vmatprep.subr.mxu0 0.0
        %2546 = vmatpush1.msra.mxu0 0.0
        %2547 = vmatprep.subr.mxu0 0.0
        %2548 = vmatpush1.msra.mxu0 0.0
        %2549 = vmatprep.subr.mxu0 0.0
        %2550 = vmatpush1.msra.mxu0 0.0
        %2551 = vmatprep.subr.mxu0 0.0
        %2552 = vmatpush1.msra.mxu0 0.0
        %2553 = vmatprep.subr.mxu0 0.0
        %2554 = vmatpush1.msra.mxu0 0.0
        %2555 = vmatprep.subr.mxu0 0.0
        %2556 = vmatpush1.msra.mxu0 0.0
        %2557 = vmatprep.subr.mxu0 0.0
        %2558 = vmatpush1.msra.mxu0 0.0
        %2559 = vmatprep.subr.mxu0 0.0
        %2560 = vmatpush1.msra.mxu0 0.0
        %2561 = vmatprep.subr.mxu0 0.0
        %2562 = vmatpush1.msra.mxu0 0.0
        %2563 = vmatprep.subr.mxu0 0.0
        %2564 = vmatpush1.msra.mxu0 0.0
        %2565 = vmatprep.subr.mxu0 0.0
        %2566 = vmatpush1.msra.mxu0 0.0
        %2567 = vmatprep.subr.mxu0 0.0
        %2568 = vmatpush1.msra.mxu0 0.0
        %2569 = vmatprep.subr.mxu0 0.0
        %2570 = vmatpush1.msra.mxu0 0.0
        %2571 = vmatprep.subr.mxu0 0.0
        %2572 = vmatpush1.msra.mxu0 0.0
        %2573 = vmatprep.subr.mxu0 0.0
        %2574 = vmatpush1.msra.mxu0 0.0
        %2575 = vmatprep.subr.mxu0 0.0
        %2576 = vmatpush1.msra.mxu0 0.0
        %2577 = vmatprep.subr.mxu0 0.0
        %2578 = vmatpush1.msra.mxu0 0.0
        %2579 = vmatprep.subr.mxu0 0.0
        %2580 = vmatpush1.msra.mxu0 0.0
        %2581 = vmatprep.subr.mxu0 0.0
        %2582 = vmatpush1.msra.mxu0 0.0
        %2583 = vmatprep.subr.mxu0 0.0
        %2584 = vmatpush1.msra.mxu0 0.0
        %2585 = vmatprep.subr.mxu0 0.0
        %2586 = vmatpush1.msra.mxu0 0.0
        %2587 = vmatprep.subr.mxu0 0.0
        %2588 = vmatpush1.msra.mxu0 0.0
        %2589 = vmatprep.subr.mxu0 0.0
        %2590 = vmatpush1.msra.mxu0 0.0
        %2591 = vmatprep.subr.mxu0 0.0
        %2592 = vmatpush1.msra.mxu0 0.0
        %2593 = vmatprep.subr.mxu0 0.0
        %2594 = vmatpush1.msra.mxu0 0.0
        %2595 = vmatprep.subr.mxu0 0.0
        %2596 = vmatpush1.msra.mxu0 0.0
        %2597 = vmatprep.mubr.f32.mxu0 0.0
        %2598 = vmatmul.mubr.f32.gmra.mrb[0].mxu0 %v2531
        %v2599 = vpop.f32.mrb[0].mxu0
        %v2600 = vadd.f32 0.0, %v2599
        %v2601 = vpop.f32.mrb[0].mxu0
        %2602 = vdwg.mxu0
        %s2603 = scalar_lea.vmem %s11, 24
        %v2604 = vld [vmem:[%s2603] sm:$0xff]
        %v2606 = vsel %vm976, %v2600, 0
        %2608 = vmatprep.subr.mxu0 0.0
        %2609 = vmatpush1.msra.mxu0 %v2604
        %2610 = vmatprep.subr.mxu0 0.0
        %2611 = vmatpush1.msra.mxu0 0.0
        %2612 = vmatprep.subr.mxu0 0.0
        %2613 = vmatpush1.msra.mxu0 0.0
        %2614 = vmatprep.subr.mxu0 0.0
        %2615 = vmatpush1.msra.mxu0 0.0
        %2616 = vmatprep.subr.mxu0 0.0
        %2617 = vmatpush1.msra.mxu0 0.0
        %2618 = vmatprep.subr.mxu0 0.0
        %2619 = vmatpush1.msra.mxu0 0.0
        %2620 = vmatprep.subr.mxu0 0.0
        %2621 = vmatpush1.msra.mxu0 0.0
        %2622 = vmatprep.subr.mxu0 0.0
        %2623 = vmatpush1.msra.mxu0 0.0
        %2624 = vmatprep.subr.mxu0 0.0
        %2625 = vmatpush1.msra.mxu0 0.0
        %2626 = vmatprep.subr.mxu0 0.0
        %2627 = vmatpush1.msra.mxu0 0.0
        %2628 = vmatprep.subr.mxu0 0.0
        %2629 = vmatpush1.msra.mxu0 0.0
        %2630 = vmatprep.subr.mxu0 0.0
        %2631 = vmatpush1.msra.mxu0 0.0
        %2632 = vmatprep.subr.mxu0 0.0
        %2633 = vmatpush1.msra.mxu0 0.0
        %2634 = vmatprep.subr.mxu0 0.0
        %2635 = vmatpush1.msra.mxu0 0.0
        %2636 = vmatprep.subr.mxu0 0.0
        %2637 = vmatpush1.msra.mxu0 0.0
        %2638 = vmatprep.subr.mxu0 0.0
        %2639 = vmatpush1.msra.mxu0 0.0
        %2640 = vmatprep.subr.mxu0 0.0
        %2641 = vmatpush1.msra.mxu0 0.0
        %2642 = vmatprep.subr.mxu0 0.0
        %2643 = vmatpush1.msra.mxu0 0.0
        %2644 = vmatprep.subr.mxu0 0.0
        %2645 = vmatpush1.msra.mxu0 0.0
        %2646 = vmatprep.subr.mxu0 0.0
        %2647 = vmatpush1.msra.mxu0 0.0
        %2648 = vmatprep.subr.mxu0 0.0
        %2649 = vmatpush1.msra.mxu0 0.0
        %2650 = vmatprep.subr.mxu0 0.0
        %2651 = vmatpush1.msra.mxu0 0.0
        %2652 = vmatprep.subr.mxu0 0.0
        %2653 = vmatpush1.msra.mxu0 0.0
        %2654 = vmatprep.subr.mxu0 0.0
        %2655 = vmatpush1.msra.mxu0 0.0
        %2656 = vmatprep.subr.mxu0 0.0
        %2657 = vmatpush1.msra.mxu0 0.0
        %2658 = vmatprep.subr.mxu0 0.0
        %2659 = vmatpush1.msra.mxu0 0.0
        %2660 = vmatprep.subr.mxu0 0.0
        %2661 = vmatpush1.msra.mxu0 0.0
        %2662 = vmatprep.subr.mxu0 0.0
        %2663 = vmatpush1.msra.mxu0 0.0
        %2664 = vmatprep.subr.mxu0 0.0
        %2665 = vmatpush1.msra.mxu0 0.0
        %2666 = vmatprep.subr.mxu0 0.0
        %2667 = vmatpush1.msra.mxu0 0.0
        %2668 = vmatprep.subr.mxu0 0.0
        %2669 = vmatpush1.msra.mxu0 0.0
        %2670 = vmatprep.subr.mxu0 0.0
        %2671 = vmatpush1.msra.mxu0 0.0
        %2672 = vmatprep.mubr.f32.mxu0 0.0
        %2673 = vmatmul.mubr.f32.gmra.mrb[0].mxu0 %v2606
        %v2674 = vpop.f32.mrb[0].mxu0
        %v2675 = vadd.f32 0.0, %v2674
        %v2676 = vpop.f32.mrb[0].mxu0
        %2677 = vdwg.mxu0
        %v2678 = vadd.f32 %v2191, %v2675
        %v2679 = vld [vmem:[%s12] sm:$0x1]
        %v2681 = vlaneseq
        %v2682 = vshrl.u32 %v2681, 7
        %v2683 = vsub.s32 0, %v2682
        %v2684 = vrot.slane %v2679, %v2683
        %v2686 = vadd.f32 %v2678, %v2684
        %v2687 = vadd.f32 %v720, %v2686
        %v2688 = vld [vmem:[%s17] sm:$0x1]
        %v2689 = vld [vmem:[%s18] sm:$0x1]
        %v2690 = vsel %vm740, %v2687, 0.0
        %2691 = vadd.xlane.f32.xlu0 %v2690
        %v2692 = vpop.xlane.xlu0 %2691
        %v2693 = vrcp.pop 32.0
        %v2694 = vmul.f32 %v2692, %v2693
        %v2695 = vsub.f32 %v2687, %v2694
        %v2696 = vmul.f32 %v2695, %v2695
        %v2697 = vsel %vm740, %v2696, 0.0
        %2698 = vadd.xlane.f32.xlu0 %v2697
        %v2699 = vpop.xlane.xlu0 %2698
        %v2700 = vmul.f32 %v2699, %v2693
        %v2701 = vadd.f32 %v2700, 1e-05
        %v2702 = vrsqrt.pop %v2701
        %v2703 = vmul.f32 %v2695, %v2702
        %v2705 = vlaneseq
        %v2706 = vshrl.u32 %v2705, 7
        %v2707 = vsub.s32 0, %v2706
        %v2708 = vrot.slane %v2688, %v2707
        %v2710 = vmul.f32 %v2703, %v2708
        %v2712 = vlaneseq
        %v2713 = vshrl.u32 %v2712, 7
        %v2714 = vsub.s32 0, %v2713
        %v2715 = vrot.slane %v2689, %v2714
        %v2717 = vadd.f32 %v2710, %v2715
        %v2718 = vld [vmem:[%s13] sm:$0xff]
        %v2719 = vld [vmem:[%s13 + $0x8] sm:$0xff]
        %v2720 = vld [vmem:[%s13 + $0x10] sm:$0xff]
        %v2721 = vld [vmem:[%s13 + $0x18] sm:$0xff]
        %v2722 = vld [vmem:[%s14] sm:$0x1]
        %v2724 = vlaneseq
        %v2725 = vshrl.u32 %v2724, 7
        %v2726 = vsub.s32 0, %v2725
        %v2727 = vrot.slane %v2722, %v2726
        %v2730 = vsel %vm740, %v2717, 0
        %2732 = vmatprep.subr.mxu0 0.0
        %2733 = vmatpush1.msra.mxu0 %v2718
        %2734 = vmatprep.subr.mxu0 0.0
        %2735 = vmatpush1.msra.mxu0 %v2719
        %2736 = vmatprep.subr.mxu0 0.0
        %2737 = vmatpush1.msra.mxu0 %v2720
        %2738 = vmatprep.subr.mxu0 0.0
        %2739 = vmatpush1.msra.mxu0 %v2721
        %2740 = vmatprep.subr.mxu0 0.0
        %2741 = vmatpush1.msra.mxu0 0.0
        %2742 = vmatprep.subr.mxu0 0.0
        %2743 = vmatpush1.msra.mxu0 0.0
        %2744 = vmatprep.subr.mxu0 0.0
        %2745 = vmatpush1.msra.mxu0 0.0
        %2746 = vmatprep.subr.mxu0 0.0
        %2747 = vmatpush1.msra.mxu0 0.0
        %2748 = vmatprep.subr.mxu0 0.0
        %2749 = vmatpush1.msra.mxu0 0.0
        %2750 = vmatprep.subr.mxu0 0.0
        %2751 = vmatpush1.msra.mxu0 0.0
        %2752 = vmatprep.subr.mxu0 0.0
        %2753 = vmatpush1.msra.mxu0 0.0
        %2754 = vmatprep.subr.mxu0 0.0
        %2755 = vmatpush1.msra.mxu0 0.0
        %2756 = vmatprep.subr.mxu0 0.0
        %2757 = vmatpush1.msra.mxu0 0.0
        %2758 = vmatprep.subr.mxu0 0.0
        %2759 = vmatpush1.msra.mxu0 0.0
        %2760 = vmatprep.subr.mxu0 0.0
        %2761 = vmatpush1.msra.mxu0 0.0
        %2762 = vmatprep.subr.mxu0 0.0
        %2763 = vmatpush1.msra.mxu0 0.0
        %2764 = vmatprep.subr.mxu0 0.0
        %2765 = vmatpush1.msra.mxu0 0.0
        %2766 = vmatprep.subr.mxu0 0.0
        %2767 = vmatpush1.msra.mxu0 0.0
        %2768 = vmatprep.subr.mxu0 0.0
        %2769 = vmatpush1.msra.mxu0 0.0
        %2770 = vmatprep.subr.mxu0 0.0
        %2771 = vmatpush1.msra.mxu0 0.0
        %2772 = vmatprep.subr.mxu0 0.0
        %2773 = vmatpush1.msra.mxu0 0.0
        %2774 = vmatprep.subr.mxu0 0.0
        %2775 = vmatpush1.msra.mxu0 0.0
        %2776 = vmatprep.subr.mxu0 0.0
        %2777 = vmatpush1.msra.mxu0 0.0
        %2778 = vmatprep.subr.mxu0 0.0
        %2779 = vmatpush1.msra.mxu0 0.0
        %2780 = vmatprep.subr.mxu0 0.0
        %2781 = vmatpush1.msra.mxu0 0.0
        %2782 = vmatprep.subr.mxu0 0.0
        %2783 = vmatpush1.msra.mxu0 0.0
        %2784 = vmatprep.subr.mxu0 0.0
        %2785 = vmatpush1.msra.mxu0 0.0
        %2786 = vmatprep.subr.mxu0 0.0
        %2787 = vmatpush1.msra.mxu0 0.0
        %2788 = vmatprep.subr.mxu0 0.0
        %2789 = vmatpush1.msra.mxu0 0.0
        %2790 = vmatprep.subr.mxu0 0.0
        %2791 = vmatpush1.msra.mxu0 0.0
        %2792 = vmatprep.subr.mxu0 0.0
        %2793 = vmatpush1.msra.mxu0 0.0
        %2794 = vmatprep.subr.mxu0 0.0
        %2795 = vmatpush1.msra.mxu0 0.0
        %2796 = vmatprep.mubr.f32.mxu0 0.0
        %2797 = vmatmul.mubr.f32.gmra.mrb[0].mxu0 %v2730
        %v2798 = vpop.f32.mrb[0].mxu0
        %v2799 = vadd.f32 %v2727, %v2798
        %v2800 = vpop.f32.mrb[0].mxu0
        %2801 = vdwg.mxu0
        %v2802 = vmax.f32 %v2799, 0.0
        %v2803 = vld [vmem:[%s15] sm:$0xff]
        %v2804 = vld [vmem:[%s15 + $0x8] sm:$0xff]
        %v2805 = vld [vmem:[%s15 + $0x10] sm:$0xff]
        %v2806 = vld [vmem:[%s15 + $0x18] sm:$0xff]
        %v2807 = vld [vmem:[%s15 + $0x20] sm:$0xff]
        %v2808 = vld [vmem:[%s15 + $0x28] sm:$0xff]
        %v2809 = vld [vmem:[%s15 + $0x30] sm:$0xff]
        %v2810 = vld [vmem:[%s15 + $0x38] sm:$0xff]
        %v2811 = vld [vmem:[%s16] sm:$0x1]
        %v2813 = vlaneseq
        %v2814 = vshrl.u32 %v2813, 7
        %v2815 = vsub.s32 0, %v2814
        %v2816 = vrot.slane %v2811, %v2815
        %vm2818 = vcmask 523264
        %v2820 = vsel %vm2818, %v2802, 0
        %2822 = vmatprep.subr.mxu0 0.0
        %2823 = vmatpush1.msra.mxu0 %v2803
        %2824 = vmatprep.subr.mxu0 0.0
        %2825 = vmatpush1.msra.mxu0 %v2804
        %2826 = vmatprep.subr.mxu0 0.0
        %2827 = vmatpush1.msra.mxu0 %v2805
        %2828 = vmatprep.subr.mxu0 0.0
        %2829 = vmatpush1.msra.mxu0 %v2806
        %2830 = vmatprep.subr.mxu0 0.0
        %2831 = vmatpush1.msra.mxu0 %v2807
        %2832 = vmatprep.subr.mxu0 0.0
        %2833 = vmatpush1.msra.mxu0 %v2808
        %2834 = vmatprep.subr.mxu0 0.0
        %2835 = vmatpush1.msra.mxu0 %v2809
        %2836 = vmatprep.subr.mxu0 0.0
        %2837 = vmatpush1.msra.mxu0 %v2810
        %2838 = vmatprep.subr.mxu0 0.0
        %2839 = vmatpush1.msra.mxu0 0.0
        %2840 = vmatprep.subr.mxu0 0.0
        %2841 = vmatpush1.msra.mxu0 0.0
        %2842 = vmatprep.subr.mxu0 0.0
        %2843 = vmatpush1.msra.mxu0 0.0
        %2844 = vmatprep.subr.mxu0 0.0
        %2845 = vmatpush1.msra.mxu0 0.0
        %2846 = vmatprep.subr.mxu0 0.0
        %2847 = vmatpush1.msra.mxu0 0.0
        %2848 = vmatprep.subr.mxu0 0.0
        %2849 = vmatpush1.msra.mxu0 0.0
        %2850 = vmatprep.subr.mxu0 0.0
        %2851 = vmatpush1.msra.mxu0 0.0
        %2852 = vmatprep.subr.mxu0 0.0
        %2853 = vmatpush1.msra.mxu0 0.0
        %2854 = vmatprep.subr.mxu0 0.0
        %2855 = vmatpush1.msra.mxu0 0.0
        %2856 = vmatprep.subr.mxu0 0.0
        %2857 = vmatpush1.msra.mxu0 0.0
        %2858 = vmatprep.subr.mxu0 0.0
        %2859 = vmatpush1.msra.mxu0 0.0
        %2860 = vmatprep.subr.mxu0 0.0
        %2861 = vmatpush1.msra.mxu0 0.0
        %2862 = vmatprep.subr.mxu0 0.0
        %2863 = vmatpush1.msra.mxu0 0.0
        %2864 = vmatprep.subr.mxu0 0.0
        %2865 = vmatpush1.msra.mxu0 0.0
        %2866 = vmatprep.subr.mxu0 0.0
        %2867 = vmatpush1.msra.mxu0 0.0
        %2868 = vmatprep.subr.mxu0 0.0
        %2869 = vmatpush1.msra.mxu0 0.0
        %2870 = vmatprep.subr.mxu0 0.0
        %2871 = vmatpush1.msra.mxu0 0.0
        %2872 = vmatprep.subr.mxu0 0.0
        %2873 = vmatpush1.msra.mxu0 0.0
        %2874 = vmatprep.subr.mxu0 0.0
        %2875 = vmatpush1.msra.mxu0 0.0
        %2876 = vmatprep.subr.mxu0 0.0
        %2877 = vmatpush1.msra.mxu0 0.0
        %2878 = vmatprep.subr.mxu0 0.0
        %2879 = vmatpush1.msra.mxu0 0.0
        %2880 = vmatprep.subr.mxu0 0.0
        %2881 = vmatpush1.msra.mxu0 0.0
        %2882 = vmatprep.subr.mxu0 0.0
        %2883 = vmatpush1.msra.mxu0 0.0
        %2884 = vmatprep.subr.mxu0 0.0
        %2885 = vmatpush1.msra.mxu0 0.0
        %2886 = vmatprep.mubr.f32.mxu0 0.0
        %2887 = vmatmul.mubr.f32.gmra.mrb[0].mxu0 %v2820
        %v2888 = vpop.f32.mrb[0].mxu0
        %v2889 = vadd.f32 %v2816, %v2888
        %v2890 = vpop.f32.mrb[0].mxu0
        %2891 = vdwg.mxu0
        %v2892 = vadd.f32 %v2717, %v2889
        %v2893 = vld [vmem:[%s19] sm:$0x1]
        %v2894 = vld [vmem:[%s20] sm:$0x1]
        %v2895 = vsel %vm740, %v2892, 0.0
        %2896 = vadd.xlane.f32.xlu0 %v2895
        %v2897 = vpop.xlane.xlu0 %2896
        %v2898 = vmul.f32 %v2897, %v2693
        %v2899 = vsub.f32 %v2892, %v2898
        %v2900 = vmul.f32 %v2899, %v2899
        %v2901 = vsel %vm740, %v2900, 0.0
        %2902 = vadd.xlane.f32.xlu0 %v2901
        %v2903 = vpop.xlane.xlu0 %2902
        %v2904 = vmul.f32 %v2903, %v2693
        %v2905 = vadd.f32 %v2904, 1e-05
        %v2906 = vrsqrt.pop %v2905
        %v2907 = vmul.f32 %v2899, %v2906
        %v2909 = vlaneseq
        %v2910 = vshrl.u32 %v2909, 7
        %v2911 = vsub.s32 0, %v2910
        %v2912 = vrot.slane %v2893, %v2911
        %v2914 = vmul.f32 %v2907, %v2912
        %v2916 = vlaneseq
        %v2917 = vshrl.u32 %v2916, 7
        %v2918 = vsub.s32 0, %v2917
        %v2919 = vrot.slane %v2894, %v2918
        %v2921 = vadd.f32 %v2914, %v2919
        %s2922 = scalar_lea.vmem %s5, 128
        %v2923 = vld [vmem:[%s2922] sm:$0xff]
        %v2924 = vld [vmem:[%s2922 + $0x8] sm:$0xff]
        %v2925 = vld [vmem:[%s2922 + $0x10] sm:$0xff]
        %v2926 = vld [vmem:[%s2922 + $0x18] sm:$0xff]
        %s2927 = scalar_lea.vmem %s6, 4
        %v2928 = vld [vmem:[%s2927] sm:$0x1]
        %v2930 = vlaneseq
        %v2931 = vshrl.u32 %v2930, 7
        %v2932 = vsub.s32 0, %v2931
        %v2933 = vrot.slane %v2928, %v2932
        %v2936 = vsel %vm740, %v2921, 0
        %2938 = vmatprep.subr.mxu0 0.0
        %2939 = vmatpush1.msra.mxu0 %v2923
        %2940 = vmatprep.subr.mxu0 0.0
        %2941 = vmatpush1.msra.mxu0 %v2924
        %2942 = vmatprep.subr.mxu0 0.0
        %2943 = vmatpush1.msra.mxu0 %v2925
        %2944 = vmatprep.subr.mxu0 0.0
        %2945 = vmatpush1.msra.mxu0 %v2926
        %2946 = vmatprep.subr.mxu0 0.0
        %2947 = vmatpush1.msra.mxu0 0.0
        %2948 = vmatprep.subr.mxu0 0.0
        %2949 = vmatpush1.msra.mxu0 0.0
        %2950 = vmatprep.subr.mxu0 0.0
        %2951 = vmatpush1.msra.mxu0 0.0
        %2952 = vmatprep.subr.mxu0 0.0
        %2953 = vmatpush1.msra.mxu0 0.0
        %2954 = vmatprep.subr.mxu0 0.0
        %2955 = vmatpush1.msra.mxu0 0.0
        %2956 = vmatprep.subr.mxu0 0.0
        %2957 = vmatpush1.msra.mxu0 0.0
        %2958 = vmatprep.subr.mxu0 0.0
        %2959 = vmatpush1.msra.mxu0 0.0
        %2960 = vmatprep.subr.mxu0 0.0
        %2961 = vmatpush1.msra.mxu0 0.0
        %2962 = vmatprep.subr.mxu0 0.0
        %2963 = vmatpush1.msra.mxu0 0.0
        %2964 = vmatprep.subr.mxu0 0.0
        %2965 = vmatpush1.msra.mxu0 0.0
        %2966 = vmatprep.subr.mxu0 0.0
        %2967 = vmatpush1.msra.mxu0 0.0
        %2968 = vmatprep.subr.mxu0 0.0
        %2969 = vmatpush1.msra.mxu0 0.0
        %2970 = vmatprep.subr.mxu0 0.0
        %2971 = vmatpush1.msra.mxu0 0.0
        %2972 = vmatprep.subr.mxu0 0.0
        %2973 = vmatpush1.msra.mxu0 0.0
        %2974 = vmatprep.subr.mxu0 0.0
        %2975 = vmatpush1.msra.mxu0 0.0
        %2976 = vmatprep.subr.mxu0 0.0
        %2977 = vmatpush1.msra.mxu0 0.0
        %2978 = vmatprep.subr.mxu0 0.0
        %2979 = vmatpush1.msra.mxu0 0.0
        %2980 = vmatprep.subr.mxu0 0.0
        %2981 = vmatpush1.msra.mxu0 0.0
        %2982 = vmatprep.subr.mxu0 0.0
        %2983 = vmatpush1.msra.mxu0 0.0
        %2984 = vmatprep.subr.mxu0 0.0
        %2985 = vmatpush1.msra.mxu0 0.0
        %2986 = vmatprep.subr.mxu0 0.0
        %2987 = vmatpush1.msra.mxu0 0.0
        %2988 = vmatprep.subr.mxu0 0.0
        %2989 = vmatpush1.msra.mxu0 0.0
        %2990 = vmatprep.subr.mxu0 0.0
        %2991 = vmatpush1.msra.mxu0 0.0
        %2992 = vmatprep.subr.mxu0 0.0
        %2993 = vmatpush1.msra.mxu0 0.0
        %2994 = vmatprep.subr.mxu0 0.0
        %2995 = vmatpush1.msra.mxu0 0.0
        %2996 = vmatprep.subr.mxu0 0.0
        %2997 = vmatpush1.msra.mxu0 0.0
        %2998 = vmatprep.subr.mxu0 0.0
        %2999 = vmatpush1.msra.mxu0 0.0
        %3000 = vmatprep.subr.mxu0 0.0
        %3001 = vmatpush1.msra.mxu0 0.0
        %3002 = vmatprep.mubr.f32.mxu0 0.0
        %3003 = vmatmul.mubr.f32.gmra.mrb[0].mxu0 %v2936
        %v3004 = vpop.f32.mrb[0].mxu0
        %v3005 = vadd.f32 %v2933, %v3004
        %v3006 = vpop.f32.mrb[0].mxu0
        %3007 = vdwg.mxu0
        %s3008 = scalar_lea.vmem %s7, 128
        %v3009 = vld [vmem:[%s3008] sm:$0xff]
        %v3010 = vld [vmem:[%s3008 + $0x8] sm:$0xff]
        %v3011 = vld [vmem:[%s3008 + $0x10] sm:$0xff]
        %v3012 = vld [vmem:[%s3008 + $0x18] sm:$0xff]
        %s3013 = scalar_lea.vmem %s8, 4
        %v3014 = vld [vmem:[%s3013] sm:$0x1]
        %v3016 = vlaneseq
        %v3017 = vshrl.u32 %v3016, 7
        %v3018 = vsub.s32 0, %v3017
        %v3019 = vrot.slane %v3014, %v3018
        %v3022 = vsel %vm740, %v721, 0
        %v3025 = vsel %vm740, %v722, 0
        %3027 = vmatprep.subr.mxu0 0.0
        %3028 = vmatpush1.msra.mxu0 %v3009
        %3029 = vmatprep.subr.mxu0 0.0
        %3030 = vmatpush1.msra.mxu0 %v3010
        %3031 = vmatprep.subr.mxu0 0.0
        %3032 = vmatpush1.msra.mxu0 %v3011
        %3033 = vmatprep.subr.mxu0 0.0
        %3034 = vmatpush1.msra.mxu0 %v3012
        %3035 = vmatprep.subr.mxu0 0.0
        %3036 = vmatpush1.msra.mxu0 0.0
        %3037 = vmatprep.subr.mxu0 0.0
        %3038 = vmatpush1.msra.mxu0 0.0
        %3039 = vmatprep.subr.mxu0 0.0
        %3040 = vmatpush1.msra.mxu0 0.0
        %3041 = vmatprep.subr.mxu0 0.0
        %3042 = vmatpush1.msra.mxu0 0.0
        %3043 = vmatprep.subr.mxu0 0.0
        %3044 = vmatpush1.msra.mxu0 0.0
        %3045 = vmatprep.subr.mxu0 0.0
        %3046 = vmatpush1.msra.mxu0 0.0
        %3047 = vmatprep.subr.mxu0 0.0
        %3048 = vmatpush1.msra.mxu0 0.0
        %3049 = vmatprep.subr.mxu0 0.0
        %3050 = vmatpush1.msra.mxu0 0.0
        %3051 = vmatprep.subr.mxu0 0.0
        %3052 = vmatpush1.msra.mxu0 0.0
        %3053 = vmatprep.subr.mxu0 0.0
        %3054 = vmatpush1.msra.mxu0 0.0
        %3055 = vmatprep.subr.mxu0 0.0
        %3056 = vmatpush1.msra.mxu0 0.0
        %3057 = vmatprep.subr.mxu0 0.0
        %3058 = vmatpush1.msra.mxu0 0.0
        %3059 = vmatprep.subr.mxu0 0.0
        %3060 = vmatpush1.msra.mxu0 0.0
        %3061 = vmatprep.subr.mxu0 0.0
        %3062 = vmatpush1.msra.mxu0 0.0
        %3063 = vmatprep.subr.mxu0 0.0
        %3064 = vmatpush1.msra.mxu0 0.0
        %3065 = vmatprep.subr.mxu0 0.0
        %3066 = vmatpush1.msra.mxu0 0.0
        %3067 = vmatprep.subr.mxu0 0.0
        %3068 = vmatpush1.msra.mxu0 0.0
        %3069 = vmatprep.subr.mxu0 0.0
        %3070 = vmatpush1.msra.mxu0 0.0
        %3071 = vmatprep.subr.mxu0 0.0
        %3072 = vmatpush1.msra.mxu0 0.0
        %3073 = vmatprep.subr.mxu0 0.0
        %3074 = vmatpush1.msra.mxu0 0.0
        %3075 = vmatprep.subr.mxu0 0.0
        %3076 = vmatpush1.msra.mxu0 0.0
        %3077 = vmatprep.subr.mxu0 0.0
        %3078 = vmatpush1.msra.mxu0 0.0
        %3079 = vmatprep.subr.mxu0 0.0
        %3080 = vmatpush1.msra.mxu0 0.0
        %3081 = vmatprep.subr.mxu0 0.0
        %3082 = vmatpush1.msra.mxu0 0.0
        %3083 = vmatprep.subr.mxu0 0.0
        %3084 = vmatpush1.msra.mxu0 0.0
        %3085 = vmatprep.subr.mxu0 0.0
        %3086 = vmatpush1.msra.mxu0 0.0
        %3087 = vmatprep.subr.mxu0 0.0
        %3088 = vmatpush1.msra.mxu0 0.0
        %3089 = vmatprep.subr.mxu0 0.0
        %3090 = vmatpush1.msra.mxu0 0.0
        %3091 = vmatprep.mubr.f32.mxu0 0.0
        %3092 = vmatmul.mubr.f32.gmra.mrb[0].mxu0 %v3022
        %v3093 = vpop.f32.mrb[0].mxu0
        %v3094 = vadd.f32 %v3019, %v3093
        %v3095 = vpop.f32.mrb[0].mxu0
        %3096 = vmatprep.mubr.f32.mxu0 0.0
        %3097 = vmatmul.mubr.f32.gmra.mrb[0].mxu0 %v3025
        %v3098 = vpop.f32.mrb[0].mxu0
        %v3099 = vadd.f32 %v3019, %v3098
        %v3100 = vpop.f32.mrb[0].mxu0
        %3101 = vdwg.mxu0
        %s3102 = scalar_lea.vmem %s9, 128
        %v3103 = vld [vmem:[%s3102] sm:$0xff]
        %v3104 = vld [vmem:[%s3102 + $0x8] sm:$0xff]
        %v3105 = vld [vmem:[%s3102 + $0x10] sm:$0xff]
        %v3106 = vld [vmem:[%s3102 + $0x18] sm:$0xff]
        %s3107 = scalar_lea.vmem %s10, 4
        %v3108 = vld [vmem:[%s3107] sm:$0x1]
        %v3110 = vlaneseq
        %v3111 = vshrl.u32 %v3110, 7
        %v3112 = vsub.s32 0, %v3111
        %v3113 = vrot.slane %v3108, %v3112
        %3115 = vmatprep.subr.mxu0 0.0
        %3116 = vmatpush1.msra.mxu0 %v3103
        %3117 = vmatprep.subr.mxu0 0.0
        %3118 = vmatpush1.msra.mxu0 %v3104
        %3119 = vmatprep.subr.mxu0 0.0
        %3120 = vmatpush1.msra.mxu0 %v3105
        %3121 = vmatprep.subr.mxu0 0.0
        %3122 = vmatpush1.msra.mxu0 %v3106
        %3123 = vmatprep.subr.mxu0 0.0
        %3124 = vmatpush1.msra.mxu0 0.0
        %3125 = vmatprep.subr.mxu0 0.0
        %3126 = vmatpush1.msra.mxu0 0.0
        %3127 = vmatprep.subr.mxu0 0.0
        %3128 = vmatpush1.msra.mxu0 0.0
        %3129 = vmatprep.subr.mxu0 0.0
        %3130 = vmatpush1.msra.mxu0 0.0
        %3131 = vmatprep.subr.mxu0 0.0
        %3132 = vmatpush1.msra.mxu0 0.0
        %3133 = vmatprep.subr.mxu0 0.0
        %3134 = vmatpush1.msra.mxu0 0.0
        %3135 = vmatprep.subr.mxu0 0.0
        %3136 = vmatpush1.msra.mxu0 0.0
        %3137 = vmatprep.subr.mxu0 0.0
        %3138 = vmatpush1.msra.mxu0 0.0
        %3139 = vmatprep.subr.mxu0 0.0
        %3140 = vmatpush1.msra.mxu0 0.0
        %3141 = vmatprep.subr.mxu0 0.0
        %3142 = vmatpush1.msra.mxu0 0.0
        %3143 = vmatprep.subr.mxu0 0.0
        %3144 = vmatpush1.msra.mxu0 0.0
        %3145 = vmatprep.subr.mxu0 0.0
        %3146 = vmatpush1.msra.mxu0 0.0
        %3147 = vmatprep.subr.mxu0 0.0
        %3148 = vmatpush1.msra.mxu0 0.0
        %3149 = vmatprep.subr.mxu0 0.0
        %3150 = vmatpush1.msra.mxu0 0.0
        %3151 = vmatprep.subr.mxu0 0.0
        %3152 = vmatpush1.msra.mxu0 0.0
        %3153 = vmatprep.subr.mxu0 0.0
        %3154 = vmatpush1.msra.mxu0 0.0
        %3155 = vmatprep.subr.mxu0 0.0
        %3156 = vmatpush1.msra.mxu0 0.0
        %3157 = vmatprep.subr.mxu0 0.0
        %3158 = vmatpush1.msra.mxu0 0.0
        %3159 = vmatprep.subr.mxu0 0.0
        %3160 = vmatpush1.msra.mxu0 0.0
        %3161 = vmatprep.subr.mxu0 0.0
        %3162 = vmatpush1.msra.mxu0 0.0
        %3163 = vmatprep.subr.mxu0 0.0
        %3164 = vmatpush1.msra.mxu0 0.0
        %3165 = vmatprep.subr.mxu0 0.0
        %3166 = vmatpush1.msra.mxu0 0.0
        %3167 = vmatprep.subr.mxu0 0.0
        %3168 = vmatpush1.msra.mxu0 0.0
        %3169 = vmatprep.subr.mxu0 0.0
        %3170 = vmatpush1.msra.mxu0 0.0
        %3171 = vmatprep.subr.mxu0 0.0
        %3172 = vmatpush1.msra.mxu0 0.0
        %3173 = vmatprep.subr.mxu0 0.0
        %3174 = vmatpush1.msra.mxu0 0.0
        %3175 = vmatprep.subr.mxu0 0.0
        %3176 = vmatpush1.msra.mxu0 0.0
        %3177 = vmatprep.subr.mxu0 0.0
        %3178 = vmatpush1.msra.mxu0 0.0
        %3179 = vmatprep.mubr.f32.mxu0 0.0
        %3180 = vmatmul.mubr.f32.gmra.mrb[0].mxu0 %v3022
        %v3181 = vpop.f32.mrb[0].mxu0
        %v3182 = vadd.f32 %v3113, %v3181
        %v3183 = vpop.f32.mrb[0].mxu0
        %3184 = vmatprep.mubr.f32.mxu0 0.0
        %3185 = vmatmul.mubr.f32.gmra.mrb[0].mxu0 %v3025
        %v3186 = vpop.f32.mrb[0].mxu0
        %v3187 = vadd.f32 %v3113, %v3186
        %v3188 = vpop.f32.mrb[0].mxu0
        %3189 = vdwg.mxu0
        %v3191 = vsel %vm976, %v3005, 0
        %v3194 = vsel %vm976, %v3094, 0
        %v3197 = vsel %vm976, %v3099, 0
        %3199 = vmatprep.subr.mxu0 0.0
        %3200 = vmatpush1.xpose.msra.mxu0 %v3194
        %3201 = vmatprep.subr.mxu0 0.0
        %3202 = vmatpush1.xpose.msra.mxu0 %v3197
        %3203 = vmatprep.subr.mxu0 0.0
        %3204 = vmatpush1.xpose.msra.mxu0 0.0
        %3205 = vmatprep.subr.mxu0 0.0
        %3206 = vmatpush1.xpose.msra.mxu0 0.0
        %3207 = vmatprep.subr.mxu0 0.0
        %3208 = vmatpush1.xpose.msra.mxu0 0.0
        %3209 = vmatprep.subr.mxu0 0.0
        %3210 = vmatpush1.xpose.msra.mxu0 0.0
        %3211 = vmatprep.subr.mxu0 0.0
        %3212 = vmatpush1.xpose.msra.mxu0 0.0
        %3213 = vmatprep.subr.mxu0 0.0
        %3214 = vmatpush1.xpose.msra.mxu0 0.0
        %3215 = vmatprep.subr.mxu0 0.0
        %3216 = vmatpush1.xpose.msra.mxu0 0.0
        %3217 = vmatprep.subr.mxu0 0.0
        %3218 = vmatpush1.xpose.msra.mxu0 0.0
        %3219 = vmatprep.subr.mxu0 0.0
        %3220 = vmatpush1.xpose.msra.mxu0 0.0
        %3221 = vmatprep.subr.mxu0 0.0
        %3222 = vmatpush1.xpose.msra.mxu0 0.0
        %3223 = vmatprep.subr.mxu0 0.0
        %3224 = vmatpush1.xpose.msra.mxu0 0.0
        %3225 = vmatprep.subr.mxu0 0.0
        %3226 = vmatpush1.xpose.msra.mxu0 0.0
        %3227 = vmatprep.subr.mxu0 0.0
        %3228 = vmatpush1.xpose.msra.mxu0 0.0
        %3229 = vmatprep.subr.mxu0 0.0
        %3230 = vmatpush1.xpose.msra.mxu0 0.0
        %3231 = vmatprep.subr.mxu0 0.0
        %3232 = vmatpush1.xpose.msra.mxu0 0.0
        %3233 = vmatprep.subr.mxu0 0.0
        %3234 = vmatpush1.xpose.msra.mxu0 0.0
        %3235 = vmatprep.subr.mxu0 0.0
        %3236 = vmatpush1.xpose.msra.mxu0 0.0
        %3237 = vmatprep.subr.mxu0 0.0
        %3238 = vmatpush1.xpose.msra.mxu0 0.0
        %3239 = vmatprep.subr.mxu0 0.0
        %3240 = vmatpush1.xpose.msra.mxu0 0.0
        %3241 = vmatprep.subr.mxu0 0.0
        %3242 = vmatpush1.xpose.msra.mxu0 0.0
        %3243 = vmatprep.subr.mxu0 0.0
        %3244 = vmatpush1.xpose.msra.mxu0 0.0
        %3245 = vmatprep.subr.mxu0 0.0
        %3246 = vmatpush1.xpose.msra.mxu0 0.0
        %3247 = vmatprep.subr.mxu0 0.0
        %3248 = vmatpush1.xpose.msra.mxu0 0.0
        %3249 = vmatprep.subr.mxu0 0.0
        %3250 = vmatpush1.xpose.msra.mxu0 0.0
        %3251 = vmatprep.subr.mxu0 0.0
        %3252 = vmatpush1.xpose.msra.mxu0 0.0
        %3253 = vmatprep.subr.mxu0 0.0
        %3254 = vmatpush1.xpose.msra.mxu0 0.0
        %3255 = vmatprep.subr.mxu0 0.0
        %3256 = vmatpush1.xpose.msra.mxu0 0.0
        %3257 = vmatprep.subr.mxu0 0.0
        %3258 = vmatpush1.xpose.msra.mxu0 0.0
        %3259 = vmatprep.subr.mxu0 0.0
        %3260 = vmatpush1.xpose.msra.mxu0 0.0
        %3261 = vmatprep.subr.mxu0 0.0
        %3262 = vmatpush1.xpose.msra.mxu0 0.0
        %3263 = vmatprep.mubr.f32.mxu0 0.0
        %3264 = vmatmul.mubr.f32.gmra.mrb[0].mxu0 %v3191
        %v3265 = vpop.f32.mrb[0].mxu0
        %v3266 = vadd.f32 0.0, %v3265
        %v3267 = vpop.f32.mrb[0].mxu0
        %3268 = vdwg.mxu0
        %v3269 = vmul.f32 %v3266, 0.35355338
        %v3271 = vlaneseq
        %v3272 = vshrl.u32 %v3271, 7
        %v3273 = vsub.s32 0, %v3272
        %v3274 = vrot.slane %v728, %v3273
        %v3276 = vadd.f32 %v3269, %v3274
        %v3277 = vld [vmem:[%s719] sm:$0xff]
        %v3278 = vadd.f32 %v3276, %v3277
        %vm3279 = vcmask 97280
        %v3280 = vsel %vm3279, %v3278, -inf
        %3281 = vmax.xlane.f32.xlu0 %v3280
        %v3282 = vpop.xlane.xlu0 %3281
        %v3283 = vsub.f32 %v3278, %v3282
        %v3284 = vmul.f32 %v3283, 1.442695
        %v3285 = vpow.pop %v3284
        %v3286 = vsel %vm3279, %v3285, 0.0
        %3287 = vadd.xlane.f32.xlu0 %v3286
        %v3288 = vpop.xlane.xlu0 %3287
        %v3289 = vrcp.pop %v3288
        %v3290 = vmul.f32 %v3285, %v3289
        %v3292 = vsel %vm3279, %v3290, 0
        %vm3294 = vcmask 1043456
        %v3296 = vsel %vm3294, %v3187, 0
        %3298 = vmatprep.subr.mxu0 0.0
        %3299 = vmatpush1.msra.mxu0 %v3182
        %3300 = vmatprep.subr.mxu0 0.0
        %3301 = vmatpush1.msra.mxu0 %v3296
        %3302 = vmatprep.subr.mxu0 0.0
        %3303 = vmatpush1.msra.mxu0 0.0
        %3304 = vmatprep.subr.mxu0 0.0
        %3305 = vmatpush1.msra.mxu0 0.0
        %3306 = vmatprep.subr.mxu0 0.0
        %3307 = vmatpush1.msra.mxu0 0.0
        %3308 = vmatprep.subr.mxu0 0.0
        %3309 = vmatpush1.msra.mxu0 0.0
        %3310 = vmatprep.subr.mxu0 0.0
        %3311 = vmatpush1.msra.mxu0 0.0
        %3312 = vmatprep.subr.mxu0 0.0
        %3313 = vmatpush1.msra.mxu0 0.0
        %3314 = vmatprep.subr.mxu0 0.0
        %3315 = vmatpush1.msra.mxu0 0.0
        %3316 = vmatprep.subr.mxu0 0.0
        %3317 = vmatpush1.msra.mxu0 0.0
        %3318 = vmatprep.subr.mxu0 0.0
        %3319 = vmatpush1.msra.mxu0 0.0
        %3320 = vmatprep.subr.mxu0 0.0
        %3321 = vmatpush1.msra.mxu0 0.0
        %3322 = vmatprep.subr.mxu0 0.0
        %3323 = vmatpush1.msra.mxu0 0.0
        %3324 = vmatprep.subr.mxu0 0.0
        %3325 = vmatpush1.msra.mxu0 0.0
        %3326 = vmatprep.subr.mxu0 0.0
        %3327 = vmatpush1.msra.mxu0 0.0
        %3328 = vmatprep.subr.mxu0 0.0
        %3329 = vmatpush1.msra.mxu0 0.0
        %3330 = vmatprep.subr.mxu0 0.0
        %3331 = vmatpush1.msra.mxu0 0.0
        %3332 = vmatprep.subr.mxu0 0.0
        %3333 = vmatpush1.msra.mxu0 0.0
        %3334 = vmatprep.subr.mxu0 0.0
        %3335 = vmatpush1.msra.mxu0 0.0
        %3336 = vmatprep.subr.mxu0 0.0
        %3337 = vmatpush1.msra.mxu0 0.0
        %3338 = vmatprep.subr.mxu0 0.0
        %3339 = vmatpush1.msra.mxu0 0.0
        %3340 = vmatprep.subr.mxu0 0.0
        %3341 = vmatpush1.msra.mxu0 0.0
        %3342 = vmatprep.subr.mxu0 0.0
        %3343 = vmatpush1.msra.mxu0 0.0
        %3344 = vmatprep.subr.mxu0 0.0
        %3345 = vmatpush1.msra.mxu0 0.0
        %3346 = vmatprep.subr.mxu0 0.0
        %3347 = vmatpush1.msra.mxu0 0.0
        %3348 = vmatprep.subr.mxu0 0.0
        %3349 = vmatpush1.msra.mxu0 0.0
        %3350 = vmatprep.subr.mxu0 0.0
        %3351 = vmatpush1.msra.mxu0 0.0
        %3352 = vmatprep.subr.mxu0 0.0
        %3353 = vmatpush1.msra.mxu0 0.0
        %3354 = vmatprep.subr.mxu0 0.0
        %3355 = vmatpush1.msra.mxu0 0.0
        %3356 = vmatprep.subr.mxu0 0.0
        %3357 = vmatpush1.msra.mxu0 0.0
        %3358 = vmatprep.subr.mxu0 0.0
        %3359 = vmatpush1.msra.mxu0 0.0
        %3360 = vmatprep.subr.mxu0 0.0
        %3361 = vmatpush1.msra.mxu0 0.0
        %3362 = vmatprep.mubr.f32.mxu0 0.0
        %3363 = vmatmul.mubr.f32.gmra.mrb[0].mxu0 %v3292
        %v3364 = vpop.f32.mrb[0].mxu0
        %v3365 = vadd.f32 0.0, %v3364
        %v3366 = vpop.f32.mrb[0].mxu0
        %3367 = vdwg.mxu0
        %s3368 = scalar_lea.vmem %s11, 32
        %v3369 = vld [vmem:[%s3368] sm:$0xff]
        %s3370 = scalar_lea.vmem %s5, 160
        %v3371 = vld [vmem:[%s3370] sm:$0xff]
        %v3372 = vld [vmem:[%s3370 + $0x8] sm:$0xff]
        %v3373 = vld [vmem:[%s3370 + $0x10] sm:$0xff]
        %v3374 = vld [vmem:[%s3370 + $0x18] sm:$0xff]
        %s3375 = scalar_lea.vmem %s6, 5
        %v3376 = vld [vmem:[%s3375] sm:$0x1]
        %v3378 = vlaneseq
        %v3379 = vshrl.u32 %v3378, 7
        %v3380 = vsub.s32 0, %v3379
        %v3381 = vrot.slane %v3376, %v3380
        %3383 = vmatprep.subr.mxu0 0.0
        %3384 = vmatpush1.msra.mxu0 %v3371
        %3385 = vmatprep.subr.mxu0 0.0
        %3386 = vmatpush1.msra.mxu0 %v3372
        %3387 = vmatprep.subr.mxu0 0.0
        %3388 = vmatpush1.msra.mxu0 %v3373
        %3389 = vmatprep.subr.mxu0 0.0
        %3390 = vmatpush1.msra.mxu0 %v3374
        %3391 = vmatprep.subr.mxu0 0.0
        %3392 = vmatpush1.msra.mxu0 0.0
        %3393 = vmatprep.subr.mxu0 0.0
        %3394 = vmatpush1.msra.mxu0 0.0
        %3395 = vmatprep.subr.mxu0 0.0
        %3396 = vmatpush1.msra.mxu0 0.0
        %3397 = vmatprep.subr.mxu0 0.0
        %3398 = vmatpush1.msra.mxu0 0.0
        %3399 = vmatprep.subr.mxu0 0.0
        %3400 = vmatpush1.msra.mxu0 0.0
        %3401 = vmatprep.subr.mxu0 0.0
        %3402 = vmatpush1.msra.mxu0 0.0
        %3403 = vmatprep.subr.mxu0 0.0
        %3404 = vmatpush1.msra.mxu0 0.0
        %3405 = vmatprep.subr.mxu0 0.0
        %3406 = vmatpush1.msra.mxu0 0.0
        %3407 = vmatprep.subr.mxu0 0.0
        %3408 = vmatpush1.msra.mxu0 0.0
        %3409 = vmatprep.subr.mxu0 0.0
        %3410 = vmatpush1.msra.mxu0 0.0
        %3411 = vmatprep.subr.mxu0 0.0
        %3412 = vmatpush1.msra.mxu0 0.0
        %3413 = vmatprep.subr.mxu0 0.0
        %3414 = vmatpush1.msra.mxu0 0.0
        %3415 = vmatprep.subr.mxu0 0.0
        %3416 = vmatpush1.msra.mxu0 0.0
        %3417 = vmatprep.subr.mxu0 0.0
        %3418 = vmatpush1.msra.mxu0 0.0
        %3419 = vmatprep.subr.mxu0 0.0
        %3420 = vmatpush1.msra.mxu0 0.0
        %3421 = vmatprep.subr.mxu0 0.0
        %3422 = vmatpush1.msra.mxu0 0.0
        %3423 = vmatprep.subr.mxu0 0.0
        %3424 = vmatpush1.msra.mxu0 0.0
        %3425 = vmatprep.subr.mxu0 0.0
        %3426 = vmatpush1.msra.mxu0 0.0
        %3427 = vmatprep.subr.mxu0 0.0
        %3428 = vmatpush1.msra.mxu0 0.0
        %3429 = vmatprep.subr.mxu0 0.0
        %3430 = vmatpush1.msra.mxu0 0.0
        %3431 = vmatprep.subr.mxu0 0.0
        %3432 = vmatpush1.msra.mxu0 0.0
        %3433 = vmatprep.subr.mxu0 0.0
        %3434 = vmatpush1.msra.mxu0 0.0
        %3435 = vmatprep.subr.mxu0 0.0
        %3436 = vmatpush1.msra.mxu0 0.0
        %3437 = vmatprep.subr.mxu0 0.0
        %3438 = vmatpush1.msra.mxu0 0.0
        %3439 = vmatprep.subr.mxu0 0.0
        %3440 = vmatpush1.msra.mxu0 0.0
        %3441 = vmatprep.subr.mxu0 0.0
        %3442 = vmatpush1.msra.mxu0 0.0
        %3443 = vmatprep.subr.mxu0 0.0
        %3444 = vmatpush1.msra.mxu0 0.0
        %3445 = vmatprep.subr.mxu0 0.0
        %3446 = vmatpush1.msra.mxu0 0.0
        %3447 = vmatprep.mubr.f32.mxu0 0.0
        %3448 = vmatmul.mubr.f32.gmra.mrb[0].mxu0 %v2936
        %v3449 = vpop.f32.mrb[0].mxu0
        %v3450 = vadd.f32 %v3381, %v3449
        %v3451 = vpop.f32.mrb[0].mxu0
        %3452 = vdwg.mxu0
        %s3453 = scalar_lea.vmem %s7, 160
        %v3454 = vld [vmem:[%s3453] sm:$0xff]
        %v3455 = vld [vmem:[%s3453 + $0x8] sm:$0xff]
        %v3456 = vld [vmem:[%s3453 + $0x10] sm:$0xff]
        %v3457 = vld [vmem:[%s3453 + $0x18] sm:$0xff]
        %s3458 = scalar_lea.vmem %s8, 5
        %v3459 = vld [vmem:[%s3458] sm:$0x1]
        %v3461 = vlaneseq
        %v3462 = vshrl.u32 %v3461, 7
        %v3463 = vsub.s32 0, %v3462
        %v3464 = vrot.slane %v3459, %v3463
        %3466 = vmatprep.subr.mxu0 0.0
        %3467 = vmatpush1.msra.mxu0 %v3454
        %3468 = vmatprep.subr.mxu0 0.0
        %3469 = vmatpush1.msra.mxu0 %v3455
        %3470 = vmatprep.subr.mxu0 0.0
        %3471 = vmatpush1.msra.mxu0 %v3456
        %3472 = vmatprep.subr.mxu0 0.0
        %3473 = vmatpush1.msra.mxu0 %v3457
        %3474 = vmatprep.subr.mxu0 0.0
        %3475 = vmatpush1.msra.mxu0 0.0
        %3476 = vmatprep.subr.mxu0 0.0
        %3477 = vmatpush1.msra.mxu0 0.0
        %3478 = vmatprep.subr.mxu0 0.0
        %3479 = vmatpush1.msra.mxu0 0.0
        %3480 = vmatprep.subr.mxu0 0.0
        %3481 = vmatpush1.msra.mxu0 0.0
        %3482 = vmatprep.subr.mxu0 0.0
        %3483 = vmatpush1.msra.mxu0 0.0
        %3484 = vmatprep.subr.mxu0 0.0
        %3485 = vmatpush1.msra.mxu0 0.0
        %3486 = vmatprep.subr.mxu0 0.0
        %3487 = vmatpush1.msra.mxu0 0.0
        %3488 = vmatprep.subr.mxu0 0.0
        %3489 = vmatpush1.msra.mxu0 0.0
        %3490 = vmatprep.subr.mxu0 0.0
        %3491 = vmatpush1.msra.mxu0 0.0
        %3492 = vmatprep.subr.mxu0 0.0
        %3493 = vmatpush1.msra.mxu0 0.0
        %3494 = vmatprep.subr.mxu0 0.0
        %3495 = vmatpush1.msra.mxu0 0.0
        %3496 = vmatprep.subr.mxu0 0.0
        %3497 = vmatpush1.msra.mxu0 0.0
        %3498 = vmatprep.subr.mxu0 0.0
        %3499 = vmatpush1.msra.mxu0 0.0
        %3500 = vmatprep.subr.mxu0 0.0
        %3501 = vmatpush1.msra.mxu0 0.0
        %3502 = vmatprep.subr.mxu0 0.0
        %3503 = vmatpush1.msra.mxu0 0.0
        %3504 = vmatprep.subr.mxu0 0.0
        %3505 = vmatpush1.msra.mxu0 0.0
        %3506 = vmatprep.subr.mxu0 0.0
        %3507 = vmatpush1.msra.mxu0 0.0
        %3508 = vmatprep.subr.mxu0 0.0
        %3509 = vmatpush1.msra.mxu0 0.0
        %3510 = vmatprep.subr.mxu0 0.0
        %3511 = vmatpush1.msra.mxu0 0.0
        %3512 = vmatprep.subr.mxu0 0.0
        %3513 = vmatpush1.msra.mxu0 0.0
        %3514 = vmatprep.subr.mxu0 0.0
        %3515 = vmatpush1.msra.mxu0 0.0
        %3516 = vmatprep.subr.mxu0 0.0
        %3517 = vmatpush1.msra.mxu0 0.0
        %3518 = vmatprep.subr.mxu0 0.0
        %3519 = vmatpush1.msra.mxu0 0.0
        %3520 = vmatprep.subr.mxu0 0.0
        %3521 = vmatpush1.msra.mxu0 0.0
        %3522 = vmatprep.subr.mxu0 0.0
        %3523 = vmatpush1.msra.mxu0 0.0
        %3524 = vmatprep.subr.mxu0 0.0
        %3525 = vmatpush1.msra.mxu0 0.0
        %3526 = vmatprep.subr.mxu0 0.0
        %3527 = vmatpush1.msra.mxu0 0.0
        %3528 = vmatprep.subr.mxu0 0.0
        %3529 = vmatpush1.msra.mxu0 0.0
        %3530 = vmatprep.mubr.f32.mxu0 0.0
        %3531 = vmatmul.mubr.f32.gmra.mrb[0].mxu0 %v3022
        %v3532 = vpop.f32.mrb[0].mxu0
        %v3533 = vadd.f32 %v3464, %v3532
        %v3534 = vpop.f32.mrb[0].mxu0
        %3535 = vmatprep.mubr.f32.mxu0 0.0
        %3536 = vmatmul.mubr.f32.gmra.mrb[0].mxu0 %v3025
        %v3537 = vpop.f32.mrb[0].mxu0
        %v3538 = vadd.f32 %v3464, %v3537
        %v3539 = vpop.f32.mrb[0].mxu0
        %3540 = vdwg.mxu0
        %s3541 = scalar_lea.vmem %s9, 160
        %v3542 = vld [vmem:[%s3541] sm:$0xff]
        %v3543 = vld [vmem:[%s3541 + $0x8] sm:$0xff]
        %v3544 = vld [vmem:[%s3541 + $0x10] sm:$0xff]
        %v3545 = vld [vmem:[%s3541 + $0x18] sm:$0xff]
        %s3546 = scalar_lea.vmem %s10, 5
        %v3547 = vld [vmem:[%s3546] sm:$0x1]
        %v3549 = vlaneseq
        %v3550 = vshrl.u32 %v3549, 7
        %v3551 = vsub.s32 0, %v3550
        %v3552 = vrot.slane %v3547, %v3551
        %3554 = vmatprep.subr.mxu0 0.0
        %3555 = vmatpush1.msra.mxu0 %v3542
        %3556 = vmatprep.subr.mxu0 0.0
        %3557 = vmatpush1.msra.mxu0 %v3543
        %3558 = vmatprep.subr.mxu0 0.0
        %3559 = vmatpush1.msra.mxu0 %v3544
        %3560 = vmatprep.subr.mxu0 0.0
        %3561 = vmatpush1.msra.mxu0 %v3545
        %3562 = vmatprep.subr.mxu0 0.0
        %3563 = vmatpush1.msra.mxu0 0.0
        %3564 = vmatprep.subr.mxu0 0.0
        %3565 = vmatpush1.msra.mxu0 0.0
        %3566 = vmatprep.subr.mxu0 0.0
        %3567 = vmatpush1.msra.mxu0 0.0
        %3568 = vmatprep.subr.mxu0 0.0
        %3569 = vmatpush1.msra.mxu0 0.0
        %3570 = vmatprep.subr.mxu0 0.0
        %3571 = vmatpush1.msra.mxu0 0.0
        %3572 = vmatprep.subr.mxu0 0.0
        %3573 = vmatpush1.msra.mxu0 0.0
        %3574 = vmatprep.subr.mxu0 0.0
        %3575 = vmatpush1.msra.mxu0 0.0
        %3576 = vmatprep.subr.mxu0 0.0
        %3577 = vmatpush1.msra.mxu0 0.0
        %3578 = vmatprep.subr.mxu0 0.0
        %3579 = vmatpush1.msra.mxu0 0.0
        %3580 = vmatprep.subr.mxu0 0.0
        %3581 = vmatpush1.msra.mxu0 0.0
        %3582 = vmatprep.subr.mxu0 0.0
        %3583 = vmatpush1.msra.mxu0 0.0
        %3584 = vmatprep.subr.mxu0 0.0
        %3585 = vmatpush1.msra.mxu0 0.0
        %3586 = vmatprep.subr.mxu0 0.0
        %3587 = vmatpush1.msra.mxu0 0.0
        %3588 = vmatprep.subr.mxu0 0.0
        %3589 = vmatpush1.msra.mxu0 0.0
        %3590 = vmatprep.subr.mxu0 0.0
        %3591 = vmatpush1.msra.mxu0 0.0
        %3592 = vmatprep.subr.mxu0 0.0
        %3593 = vmatpush1.msra.mxu0 0.0
        %3594 = vmatprep.subr.mxu0 0.0
        %3595 = vmatpush1.msra.mxu0 0.0
        %3596 = vmatprep.subr.mxu0 0.0
        %3597 = vmatpush1.msra.mxu0 0.0
        %3598 = vmatprep.subr.mxu0 0.0
        %3599 = vmatpush1.msra.mxu0 0.0
        %3600 = vmatprep.subr.mxu0 0.0
        %3601 = vmatpush1.msra.mxu0 0.0
        %3602 = vmatprep.subr.mxu0 0.0
        %3603 = vmatpush1.msra.mxu0 0.0
        %3604 = vmatprep.subr.mxu0 0.0
        %3605 = vmatpush1.msra.mxu0 0.0
        %3606 = vmatprep.subr.mxu0 0.0
        %3607 = vmatpush1.msra.mxu0 0.0
        %3608 = vmatprep.subr.mxu0 0.0
        %3609 = vmatpush1.msra.mxu0 0.0
        %3610 = vmatprep.subr.mxu0 0.0
        %3611 = vmatpush1.msra.mxu0 0.0
        %3612 = vmatprep.subr.mxu0 0.0
        %3613 = vmatpush1.msra.mxu0 0.0
        %3614 = vmatprep.subr.mxu0 0.0
        %3615 = vmatpush1.msra.mxu0 0.0
        %3616 = vmatprep.subr.mxu0 0.0
        %3617 = vmatpush1.msra.mxu0 0.0
        %3618 = vmatprep.mubr.f32.mxu0 0.0
        %3619 = vmatmul.mubr.f32.gmra.mrb[0].mxu0 %v3022
        %v3620 = vpop.f32.mrb[0].mxu0
        %v3621 = vadd.f32 %v3552, %v3620
        %v3622 = vpop.f32.mrb[0].mxu0
        %3623 = vmatprep.mubr.f32.mxu0 0.0
        %3624 = vmatmul.mubr.f32.gmra.mrb[0].mxu0 %v3025
        %v3625 = vpop.f32.mrb[0].mxu0
        %v3626 = vadd.f32 %v3552, %v3625
        %v3627 = vpop.f32.mrb[0].mxu0
        %3628 = vdwg.mxu0
        %v3630 = vsel %vm976, %v3450, 0
        %v3633 = vsel %vm976, %v3533, 0
        %v3636 = vsel %vm976, %v3538, 0
        %3638 = vmatprep.subr.mxu0 0.0
        %3639 = vmatpush1.xpose.msra.mxu0 %v3633
        %3640 = vmatprep.subr.mxu0 0.0
        %3641 = vmatpush1.xpose.msra.mxu0 %v3636
        %3642 = vmatprep.subr.mxu0 0.0
        %3643 = vmatpush1.xpose.msra.mxu0 0.0
        %3644 = vmatprep.subr.mxu0 0.0
        %3645 = vmatpush1.xpose.msra.mxu0 0.0
        %3646 = vmatprep.subr.mxu0 0.0
        %3647 = vmatpush1.xpose.msra.mxu0 0.0
        %3648 = vmatprep.subr.mxu0 0.0
        %3649 = vmatpush1.xpose.msra.mxu0 0.0
        %3650 = vmatprep.subr.mxu0 0.0
        %3651 = vmatpush1.xpose.msra.mxu0 0.0
        %3652 = vmatprep.subr.mxu0 0.0
        %3653 = vmatpush1.xpose.msra.mxu0 0.0
        %3654 = vmatprep.subr.mxu0 0.0
        %3655 = vmatpush1.xpose.msra.mxu0 0.0
        %3656 = vmatprep.subr.mxu0 0.0
        %3657 = vmatpush1.xpose.msra.mxu0 0.0
        %3658 = vmatprep.subr.mxu0 0.0
        %3659 = vmatpush1.xpose.msra.mxu0 0.0
        %3660 = vmatprep.subr.mxu0 0.0
        %3661 = vmatpush1.xpose.msra.mxu0 0.0
        %3662 = vmatprep.subr.mxu0 0.0
        %3663 = vmatpush1.xpose.msra.mxu0 0.0
        %3664 = vmatprep.subr.mxu0 0.0
        %3665 = vmatpush1.xpose.msra.mxu0 0.0
        %3666 = vmatprep.subr.mxu0 0.0
        %3667 = vmatpush1.xpose.msra.mxu0 0.0
        %3668 = vmatprep.subr.mxu0 0.0
        %3669 = vmatpush1.xpose.msra.mxu0 0.0
        %3670 = vmatprep.subr.mxu0 0.0
        %3671 = vmatpush1.xpose.msra.mxu0 0.0
        %3672 = vmatprep.subr.mxu0 0.0
        %3673 = vmatpush1.xpose.msra.mxu0 0.0
        %3674 = vmatprep.subr.mxu0 0.0
        %3675 = vmatpush1.xpose.msra.mxu0 0.0
        %3676 = vmatprep.subr.mxu0 0.0
        %3677 = vmatpush1.xpose.msra.mxu0 0.0
        %3678 = vmatprep.subr.mxu0 0.0
        %3679 = vmatpush1.xpose.msra.mxu0 0.0
        %3680 = vmatprep.subr.mxu0 0.0
        %3681 = vmatpush1.xpose.msra.mxu0 0.0
        %3682 = vmatprep.subr.mxu0 0.0
        %3683 = vmatpush1.xpose.msra.mxu0 0.0
        %3684 = vmatprep.subr.mxu0 0.0
        %3685 = vmatpush1.xpose.msra.mxu0 0.0
        %3686 = vmatprep.subr.mxu0 0.0
        %3687 = vmatpush1.xpose.msra.mxu0 0.0
        %3688 = vmatprep.subr.mxu0 0.0
        %3689 = vmatpush1.xpose.msra.mxu0 0.0
        %3690 = vmatprep.subr.mxu0 0.0
        %3691 = vmatpush1.xpose.msra.mxu0 0.0
        %3692 = vmatprep.subr.mxu0 0.0
        %3693 = vmatpush1.xpose.msra.mxu0 0.0
        %3694 = vmatprep.subr.mxu0 0.0
        %3695 = vmatpush1.xpose.msra.mxu0 0.0
        %3696 = vmatprep.subr.mxu0 0.0
        %3697 = vmatpush1.xpose.msra.mxu0 0.0
        %3698 = vmatprep.subr.mxu0 0.0
        %3699 = vmatpush1.xpose.msra.mxu0 0.0
        %3700 = vmatprep.subr.mxu0 0.0
        %3701 = vmatpush1.xpose.msra.mxu0 0.0
        %3702 = vmatprep.mubr.f32.mxu0 0.0
        %3703 = vmatmul.mubr.f32.gmra.mrb[0].mxu0 %v3630
        %v3704 = vpop.f32.mrb[0].mxu0
        %v3705 = vadd.f32 0.0, %v3704
        %v3706 = vpop.f32.mrb[0].mxu0
        %3707 = vdwg.mxu0
        %v3708 = vmul.f32 %v3705, 0.35355338
        %v3709 = vadd.f32 %v3708, %v3274
        %s3710 = scalar_lea.vmem %s719, 8
        %v3711 = vld [vmem:[%s3710] sm:$0xff]
        %v3712 = vadd.f32 %v3709, %v3711
        %v3713 = vsel %vm3279, %v3712, -inf
        %3714 = vmax.xlane.f32.xlu0 %v3713
        %v3715 = vpop.xlane.xlu0 %3714
        %v3716 = vsub.f32 %v3712, %v3715
        %v3717 = vmul.f32 %v3716, 1.442695
        %v3718 = vpow.pop %v3717
        %v3719 = vsel %vm3279, %v3718, 0.0
        %3720 = vadd.xlane.f32.xlu0 %v3719
        %v3721 = vpop.xlane.xlu0 %3720
        %v3722 = vrcp.pop %v3721
        %v3723 = vmul.f32 %v3718, %v3722
        %v3725 = vsel %vm3279, %v3723, 0
        %v3728 = vsel %vm3294, %v3626, 0
        %3730 = vmatprep.subr.mxu0 0.0
        %3731 = vmatpush1.msra.mxu0 %v3621
        %3732 = vmatprep.subr.mxu0 0.0
        %3733 = vmatpush1.msra.mxu0 %v3728
        %3734 = vmatprep.subr.mxu0 0.0
        %3735 = vmatpush1.msra.mxu0 0.0
        %3736 = vmatprep.subr.mxu0 0.0
        %3737 = vmatpush1.msra.mxu0 0.0
        %3738 = vmatprep.subr.mxu0 0.0
        %3739 = vmatpush1.msra.mxu0 0.0
        %3740 = vmatprep.subr.mxu0 0.0
        %3741 = vmatpush1.msra.mxu0 0.0
        %3742 = vmatprep.subr.mxu0 0.0
        %3743 = vmatpush1.msra.mxu0 0.0
        %3744 = vmatprep.subr.mxu0 0.0
        %3745 = vmatpush1.msra.mxu0 0.0
        %3746 = vmatprep.subr.mxu0 0.0
        %3747 = vmatpush1.msra.mxu0 0.0
        %3748 = vmatprep.subr.mxu0 0.0
        %3749 = vmatpush1.msra.mxu0 0.0
        %3750 = vmatprep.subr.mxu0 0.0
        %3751 = vmatpush1.msra.mxu0 0.0
        %3752 = vmatprep.subr.mxu0 0.0
        %3753 = vmatpush1.msra.mxu0 0.0
        %3754 = vmatprep.subr.mxu0 0.0
        %3755 = vmatpush1.msra.mxu0 0.0
        %3756 = vmatprep.subr.mxu0 0.0
        %3757 = vmatpush1.msra.mxu0 0.0
        %3758 = vmatprep.subr.mxu0 0.0
        %3759 = vmatpush1.msra.mxu0 0.0
        %3760 = vmatprep.subr.mxu0 0.0
        %3761 = vmatpush1.msra.mxu0 0.0
        %3762 = vmatprep.subr.mxu0 0.0
        %3763 = vmatpush1.msra.mxu0 0.0
        %3764 = vmatprep.subr.mxu0 0.0
        %3765 = vmatpush1.msra.mxu0 0.0
        %3766 = vmatprep.subr.mxu0 0.0
        %3767 = vmatpush1.msra.mxu0 0.0
        %3768 = vmatprep.subr.mxu0 0.0
        %3769 = vmatpush1.msra.mxu0 0.0
        %3770 = vmatprep.subr.mxu0 0.0
        %3771 = vmatpush1.msra.mxu0 0.0
        %3772 = vmatprep.subr.mxu0 0.0
        %3773 = vmatpush1.msra.mxu0 0.0
        %3774 = vmatprep.subr.mxu0 0.0
        %3775 = vmatpush1.msra.mxu0 0.0
        %3776 = vmatprep.subr.mxu0 0.0
        %3777 = vmatpush1.msra.mxu0 0.0
        %3778 = vmatprep.subr.mxu0 0.0
        %3779 = vmatpush1.msra.mxu0 0.0
        %3780 = vmatprep.subr.mxu0 0.0
        %3781 = vmatpush1.msra.mxu0 0.0
        %3782 = vmatprep.subr.mxu0 0.0
        %3783 = vmatpush1.msra.mxu0 0.0
        %3784 = vmatprep.subr.mxu0 0.0
        %3785 = vmatpush1.msra.mxu0 0.0
        %3786 = vmatprep.subr.mxu0 0.0
        %3787 = vmatpush1.msra.mxu0 0.0
        %3788 = vmatprep.subr.mxu0 0.0
        %3789 = vmatpush1.msra.mxu0 0.0
        %3790 = vmatprep.subr.mxu0 0.0
        %3791 = vmatpush1.msra.mxu0 0.0
        %3792 = vmatprep.subr.mxu0 0.0
        %3793 = vmatpush1.msra.mxu0 0.0
        %3794 = vmatprep.mubr.f32.mxu0 0.0
        %3795 = vmatmul.mubr.f32.gmra.mrb[0].mxu0 %v3725
        %v3796 = vpop.f32.mrb[0].mxu0
        %v3797 = vadd.f32 0.0, %v3796
        %v3798 = vpop.f32.mrb[0].mxu0
        %3799 = vdwg.mxu0
        %s3800 = scalar_lea.vmem %s11, 40
        %v3801 = vld [vmem:[%s3800] sm:$0xff]
        %v3803 = vsel %vm976, %v3797, 0
        %3805 = vmatprep.subr.mxu0 0.0
        %3806 = vmatpush1.msra.mxu0 %v3801
        %3807 = vmatprep.subr.mxu0 0.0
        %3808 = vmatpush1.msra.mxu0 0.0
        %3809 = vmatprep.subr.mxu0 0.0
        %3810 = vmatpush1.msra.mxu0 0.0
        %3811 = vmatprep.subr.mxu0 0.0
        %3812 = vmatpush1.msra.mxu0 0.0
        %3813 = vmatprep.subr.mxu0 0.0
        %3814 = vmatpush1.msra.mxu0 0.0
        %3815 = vmatprep.subr.mxu0 0.0
        %3816 = vmatpush1.msra.mxu0 0.0
        %3817 = vmatprep.subr.mxu0 0.0
        %3818 = vmatpush1.msra.mxu0 0.0
        %3819 = vmatprep.subr.mxu0 0.0
        %3820 = vmatpush1.msra.mxu0 0.0
        %3821 = vmatprep.subr.mxu0 0.0
        %3822 = vmatpush1.msra.mxu0 0.0
        %3823 = vmatprep.subr.mxu0 0.0
        %3824 = vmatpush1.msra.mxu0 0.0
        %3825 = vmatprep.subr.mxu0 0.0
        %3826 = vmatpush1.msra.mxu0 0.0
        %3827 = vmatprep.subr.mxu0 0.0
        %3828 = vmatpush1.msra.mxu0 0.0
        %3829 = vmatprep.subr.mxu0 0.0
        %3830 = vmatpush1.msra.mxu0 0.0
        %3831 = vmatprep.subr.mxu0 0.0
        %3832 = vmatpush1.msra.mxu0 0.0
        %3833 = vmatprep.subr.mxu0 0.0
        %3834 = vmatpush1.msra.mxu0 0.0
        %3835 = vmatprep.subr.mxu0 0.0
        %3836 = vmatpush1.msra.mxu0 0.0
        %3837 = vmatprep.subr.mxu0 0.0
        %3838 = vmatpush1.msra.mxu0 0.0
        %3839 = vmatprep.subr.mxu0 0.0
        %3840 = vmatpush1.msra.mxu0 0.0
        %3841 = vmatprep.subr.mxu0 0.0
        %3842 = vmatpush1.msra.mxu0 0.0
        %3843 = vmatprep.subr.mxu0 0.0
        %3844 = vmatpush1.msra.mxu0 0.0
        %3845 = vmatprep.subr.mxu0 0.0
        %3846 = vmatpush1.msra.mxu0 0.0
        %3847 = vmatprep.subr.mxu0 0.0
        %3848 = vmatpush1.msra.mxu0 0.0
        %3849 = vmatprep.subr.mxu0 0.0
        %3850 = vmatpush1.msra.mxu0 0.0
        %3851 = vmatprep.subr.mxu0 0.0
        %3852 = vmatpush1.msra.mxu0 0.0
        %3853 = vmatprep.subr.mxu0 0.0
        %3854 = vmatpush1.msra.mxu0 0.0
        %3855 = vmatprep.subr.mxu0 0.0
        %3856 = vmatpush1.msra.mxu0 0.0
        %3857 = vmatprep.subr.mxu0 0.0
        %3858 = vmatpush1.msra.mxu0 0.0
        %3859 = vmatprep.subr.mxu0 0.0
        %3860 = vmatpush1.msra.mxu0 0.0
        %3861 = vmatprep.subr.mxu0 0.0
        %3862 = vmatpush1.msra.mxu0 0.0
        %3863 = vmatprep.subr.mxu0 0.0
        %3864 = vmatpush1.msra.mxu0 0.0
        %3865 = vmatprep.subr.mxu0 0.0
        %3866 = vmatpush1.msra.mxu0 0.0
        %3867 = vmatprep.subr.mxu0 0.0
        %3868 = vmatpush1.msra.mxu0 0.0
        %3869 = vmatprep.mubr.f32.mxu0 0.0
        %3870 = vmatmul.mubr.f32.gmra.mrb[0].mxu0 %v3803
        %v3871 = vpop.f32.mrb[0].mxu0
        %v3872 = vadd.f32 0.0, %v3871
        %v3873 = vpop.f32.mrb[0].mxu0
        %3874 = vdwg.mxu0
        %v3876 = vsel %vm976, %v3365, 0
        %3878 = vmatprep.subr.mxu0 0.0
        %3879 = vmatpush1.msra.mxu0 %v3369
        %3880 = vmatprep.subr.mxu0 0.0
        %3881 = vmatpush1.msra.mxu0 0.0
        %3882 = vmatprep.subr.mxu0 0.0
        %3883 = vmatpush1.msra.mxu0 0.0
        %3884 = vmatprep.subr.mxu0 0.0
        %3885 = vmatpush1.msra.mxu0 0.0
        %3886 = vmatprep.subr.mxu0 0.0
        %3887 = vmatpush1.msra.mxu0 0.0
        %3888 = vmatprep.subr.mxu0 0.0
        %3889 = vmatpush1.msra.mxu0 0.0
        %3890 = vmatprep.subr.mxu0 0.0
        %3891 = vmatpush1.msra.mxu0 0.0
        %3892 = vmatprep.subr.mxu0 0.0
        %3893 = vmatpush1.msra.mxu0 0.0
        %3894 = vmatprep.subr.mxu0 0.0
        %3895 = vmatpush1.msra.mxu0 0.0
        %3896 = vmatprep.subr.mxu0 0.0
        %3897 = vmatpush1.msra.mxu0 0.0
        %3898 = vmatprep.subr.mxu0 0.0
        %3899 = vmatpush1.msra.mxu0 0.0
        %3900 = vmatprep.subr.mxu0 0.0
        %3901 = vmatpush1.msra.mxu0 0.0
        %3902 = vmatprep.subr.mxu0 0.0
        %3903 = vmatpush1.msra.mxu0 0.0
        %3904 = vmatprep.subr.mxu0 0.0
        %3905 = vmatpush1.msra.mxu0 0.0
        %3906 = vmatprep.subr.mxu0 0.0
        %3907 = vmatpush1.msra.mxu0 0.0
        %3908 = vmatprep.subr.mxu0 0.0
        %3909 = vmatpush1.msra.mxu0 0.0
        %3910 = vmatprep.subr.mxu0 0.0
        %3911 = vmatpush1.msra.mxu0 0.0
        %3912 = vmatprep.subr.mxu0 0.0
        %3913 = vmatpush1.msra.mxu0 0.0
        %3914 = vmatprep.subr.mxu0 0.0
        %3915 = vmatpush1.msra.mxu0 0.0
        %3916 = vmatprep.subr.mxu0 0.0
        %3917 = vmatpush1.msra.mxu0 0.0
        %3918 = vmatprep.subr.mxu0 0.0
        %3919 = vmatpush1.msra.mxu0 0.0
        %3920 = vmatprep.subr.mxu0 0.0
        %3921 = vmatpush1.msra.mxu0 0.0
        %3922 = vmatprep.subr.mxu0 0.0
        %3923 = vmatpush1.msra.mxu0 0.0
        %3924 = vmatprep.subr.mxu0 0.0
        %3925 = vmatpush1.msra.mxu0 0.0
        %3926 = vmatprep.subr.mxu0 0.0
        %3927 = vmatpush1.msra.mxu0 0.0
        %3928 = vmatprep.subr.mxu0 0.0
        %3929 = vmatpush1.msra.mxu0 0.0
        %3930 = vmatprep.subr.mxu0 0.0
        %3931 = vmatpush1.msra.mxu0 0.0
        %3932 = vmatprep.subr.mxu0 0.0
        %3933 = vmatpush1.msra.mxu0 0.0
        %3934 = vmatprep.subr.mxu0 0.0
        %3935 = vmatpush1.msra.mxu0 0.0
        %3936 = vmatprep.subr.mxu0 0.0
        %3937 = vmatpush1.msra.mxu0 0.0
        %3938 = vmatprep.subr.mxu0 0.0
        %3939 = vmatpush1.msra.mxu0 0.0
        %3940 = vmatprep.subr.mxu0 0.0
        %3941 = vmatpush1.msra.mxu0 0.0
        %3942 = vmatprep.mubr.f32.mxu0 0.0
        %3943 = vmatmul.mubr.f32.gmra.mrb[0].mxu0 %v3876
        %v3944 = vpop.f32.mrb[0].mxu0
        %v3945 = vadd.f32 %v3872, %v3944
        %v3946 = vpop.f32.mrb[0].mxu0
        %3947 = vdwg.mxu0
        %s3948 = scalar_lea.vmem %s5, 192
        %v3949 = vld [vmem:[%s3948] sm:$0xff]
        %v3950 = vld [vmem:[%s3948 + $0x8] sm:$0xff]
        %v3951 = vld [vmem:[%s3948 + $0x10] sm:$0xff]
        %v3952 = vld [vmem:[%s3948 + $0x18] sm:$0xff]
        %s3953 = scalar_lea.vmem %s6, 6
        %v3954 = vld [vmem:[%s3953] sm:$0x1]
        %v3956 = vlaneseq
        %v3957 = vshrl.u32 %v3956, 7
        %v3958 = vsub.s32 0, %v3957
        %v3959 = vrot.slane %v3954, %v3958
        %3961 = vmatprep.subr.mxu0 0.0
        %3962 = vmatpush1.msra.mxu0 %v3949
        %3963 = vmatprep.subr.mxu0 0.0
        %3964 = vmatpush1.msra.mxu0 %v3950
        %3965 = vmatprep.subr.mxu0 0.0
        %3966 = vmatpush1.msra.mxu0 %v3951
        %3967 = vmatprep.subr.mxu0 0.0
        %3968 = vmatpush1.msra.mxu0 %v3952
        %3969 = vmatprep.subr.mxu0 0.0
        %3970 = vmatpush1.msra.mxu0 0.0
        %3971 = vmatprep.subr.mxu0 0.0
        %3972 = vmatpush1.msra.mxu0 0.0
        %3973 = vmatprep.subr.mxu0 0.0
        %3974 = vmatpush1.msra.mxu0 0.0
        %3975 = vmatprep.subr.mxu0 0.0
        %3976 = vmatpush1.msra.mxu0 0.0
        %3977 = vmatprep.subr.mxu0 0.0
        %3978 = vmatpush1.msra.mxu0 0.0
        %3979 = vmatprep.subr.mxu0 0.0
        %3980 = vmatpush1.msra.mxu0 0.0
        %3981 = vmatprep.subr.mxu0 0.0
        %3982 = vmatpush1.msra.mxu0 0.0
        %3983 = vmatprep.subr.mxu0 0.0
        %3984 = vmatpush1.msra.mxu0 0.0
        %3985 = vmatprep.subr.mxu0 0.0
        %3986 = vmatpush1.msra.mxu0 0.0
        %3987 = vmatprep.subr.mxu0 0.0
        %3988 = vmatpush1.msra.mxu0 0.0
        %3989 = vmatprep.subr.mxu0 0.0
        %3990 = vmatpush1.msra.mxu0 0.0
        %3991 = vmatprep.subr.mxu0 0.0
        %3992 = vmatpush1.msra.mxu0 0.0
        %3993 = vmatprep.subr.mxu0 0.0
        %3994 = vmatpush1.msra.mxu0 0.0
        %3995 = vmatprep.subr.mxu0 0.0
        %3996 = vmatpush1.msra.mxu0 0.0
        %3997 = vmatprep.subr.mxu0 0.0
        %3998 = vmatpush1.msra.mxu0 0.0
        %3999 = vmatprep.subr.mxu0 0.0
        %4000 = vmatpush1.msra.mxu0 0.0
        %4001 = vmatprep.subr.mxu0 0.0
        %4002 = vmatpush1.msra.mxu0 0.0
        %4003 = vmatprep.subr.mxu0 0.0
        %4004 = vmatpush1.msra.mxu0 0.0
        %4005 = vmatprep.subr.mxu0 0.0
        %4006 = vmatpush1.msra.mxu0 0.0
        %4007 = vmatprep.subr.mxu0 0.0
        %4008 = vmatpush1.msra.mxu0 0.0
        %4009 = vmatprep.subr.mxu0 0.0
        %4010 = vmatpush1.msra.mxu0 0.0
        %4011 = vmatprep.subr.mxu0 0.0
        %4012 = vmatpush1.msra.mxu0 0.0
        %4013 = vmatprep.subr.mxu0 0.0
        %4014 = vmatpush1.msra.mxu0 0.0
        %4015 = vmatprep.subr.mxu0 0.0
        %4016 = vmatpush1.msra.mxu0 0.0
        %4017 = vmatprep.subr.mxu0 0.0
        %4018 = vmatpush1.msra.mxu0 0.0
        %4019 = vmatprep.subr.mxu0 0.0
        %4020 = vmatpush1.msra.mxu0 0.0
        %4021 = vmatprep.subr.mxu0 0.0
        %4022 = vmatpush1.msra.mxu0 0.0
        %4023 = vmatprep.subr.mxu0 0.0
        %4024 = vmatpush1.msra.mxu0 0.0
        %4025 = vmatprep.mubr.f32.mxu0 0.0
        %4026 = vmatmul.mubr.f32.gmra.mrb[0].mxu0 %v2936
        %v4027 = vpop.f32.mrb[0].mxu0
        %v4028 = vadd.f32 %v3959, %v4027
        %v4029 = vpop.f32.mrb[0].mxu0
        %4030 = vdwg.mxu0
        %s4031 = scalar_lea.vmem %s7, 192
        %v4032 = vld [vmem:[%s4031] sm:$0xff]
        %v4033 = vld [vmem:[%s4031 + $0x8] sm:$0xff]
        %v4034 = vld [vmem:[%s4031 + $0x10] sm:$0xff]
        %v4035 = vld [vmem:[%s4031 + $0x18] sm:$0xff]
        %s4036 = scalar_lea.vmem %s8, 6
        %v4037 = vld [vmem:[%s4036] sm:$0x1]
        %v4039 = vlaneseq
        %v4040 = vshrl.u32 %v4039, 7
        %v4041 = vsub.s32 0, %v4040
        %v4042 = vrot.slane %v4037, %v4041
        %4044 = vmatprep.subr.mxu0 0.0
        %4045 = vmatpush1.msra.mxu0 %v4032
        %4046 = vmatprep.subr.mxu0 0.0
        %4047 = vmatpush1.msra.mxu0 %v4033
        %4048 = vmatprep.subr.mxu0 0.0
        %4049 = vmatpush1.msra.mxu0 %v4034
        %4050 = vmatprep.subr.mxu0 0.0
        %4051 = vmatpush1.msra.mxu0 %v4035
        %4052 = vmatprep.subr.mxu0 0.0
        %4053 = vmatpush1.msra.mxu0 0.0
        %4054 = vmatprep.subr.mxu0 0.0
        %4055 = vmatpush1.msra.mxu0 0.0
        %4056 = vmatprep.subr.mxu0 0.0
        %4057 = vmatpush1.msra.mxu0 0.0
        %4058 = vmatprep.subr.mxu0 0.0
        %4059 = vmatpush1.msra.mxu0 0.0
        %4060 = vmatprep.subr.mxu0 0.0
        %4061 = vmatpush1.msra.mxu0 0.0
        %4062 = vmatprep.subr.mxu0 0.0
        %4063 = vmatpush1.msra.mxu0 0.0
        %4064 = vmatprep.subr.mxu0 0.0
        %4065 = vmatpush1.msra.mxu0 0.0
        %4066 = vmatprep.subr.mxu0 0.0
        %4067 = vmatpush1.msra.mxu0 0.0
        %4068 = vmatprep.subr.mxu0 0.0
        %4069 = vmatpush1.msra.mxu0 0.0
        %4070 = vmatprep.subr.mxu0 0.0
        %4071 = vmatpush1.msra.mxu0 0.0
        %4072 = vmatprep.subr.mxu0 0.0
        %4073 = vmatpush1.msra.mxu0 0.0
        %4074 = vmatprep.subr.mxu0 0.0
        %4075 = vmatpush1.msra.mxu0 0.0
        %4076 = vmatprep.subr.mxu0 0.0
        %4077 = vmatpush1.msra.mxu0 0.0
        %4078 = vmatprep.subr.mxu0 0.0
        %4079 = vmatpush1.msra.mxu0 0.0
        %4080 = vmatprep.subr.mxu0 0.0
        %4081 = vmatpush1.msra.mxu0 0.0
        %4082 = vmatprep.subr.mxu0 0.0
        %4083 = vmatpush1.msra.mxu0 0.0
        %4084 = vmatprep.subr.mxu0 0.0
        %4085 = vmatpush1.msra.mxu0 0.0
        %4086 = vmatprep.subr.mxu0 0.0
        %4087 = vmatpush1.msra.mxu0 0.0
        %4088 = vmatprep.subr.mxu0 0.0
        %4089 = vmatpush1.msra.mxu0 0.0
        %4090 = vmatprep.subr.mxu0 0.0
        %4091 = vmatpush1.msra.mxu0 0.0
        %4092 = vmatprep.subr.mxu0 0.0
        %4093 = vmatpush1.msra.mxu0 0.0
        %4094 = vmatprep.subr.mxu0 0.0
        %4095 = vmatpush1.msra.mxu0 0.0
        %4096 = vmatprep.subr.mxu0 0.0
        %4097 = vmatpush1.msra.mxu0 0.0
        %4098 = vmatprep.subr.mxu0 0.0
        %4099 = vmatpush1.msra.mxu0 0.0
        %4100 = vmatprep.subr.mxu0 0.0
        %4101 = vmatpush1.msra.mxu0 0.0
        %4102 = vmatprep.subr.mxu0 0.0
        %4103 = vmatpush1.msra.mxu0 0.0
        %4104 = vmatprep.subr.mxu0 0.0
        %4105 = vmatpush1.msra.mxu0 0.0
        %4106 = vmatprep.subr.mxu0 0.0
        %4107 = vmatpush1.msra.mxu0 0.0
        %4108 = vmatprep.mubr.f32.mxu0 0.0
        %4109 = vmatmul.mubr.f32.gmra.mrb[0].mxu0 %v3022
        %v4110 = vpop.f32.mrb[0].mxu0
        %v4111 = vadd.f32 %v4042, %v4110
        %v4112 = vpop.f32.mrb[0].mxu0
        %4113 = vmatprep.mubr.f32.mxu0 0.0
        %4114 = vmatmul.mubr.f32.gmra.mrb[0].mxu0 %v3025
        %v4115 = vpop.f32.mrb[0].mxu0
        %v4116 = vadd.f32 %v4042, %v4115
        %v4117 = vpop.f32.mrb[0].mxu0
        %4118 = vdwg.mxu0
        %s4119 = scalar_lea.vmem %s9, 192
        %v4120 = vld [vmem:[%s4119] sm:$0xff]
        %v4121 = vld [vmem:[%s4119 + $0x8] sm:$0xff]
        %v4122 = vld [vmem:[%s4119 + $0x10] sm:$0xff]
        %v4123 = vld [vmem:[%s4119 + $0x18] sm:$0xff]
        %s4124 = scalar_lea.vmem %s10, 6
        %v4125 = vld [vmem:[%s4124] sm:$0x1]
        %v4127 = vlaneseq
        %v4128 = vshrl.u32 %v4127, 7
        %v4129 = vsub.s32 0, %v4128
        %v4130 = vrot.slane %v4125, %v4129
        %4132 = vmatprep.subr.mxu0 0.0
        %4133 = vmatpush1.msra.mxu0 %v4120
        %4134 = vmatprep.subr.mxu0 0.0
        %4135 = vmatpush1.msra.mxu0 %v4121
        %4136 = vmatprep.subr.mxu0 0.0
        %4137 = vmatpush1.msra.mxu0 %v4122
        %4138 = vmatprep.subr.mxu0 0.0
        %4139 = vmatpush1.msra.mxu0 %v4123
        %4140 = vmatprep.subr.mxu0 0.0
        %4141 = vmatpush1.msra.mxu0 0.0
        %4142 = vmatprep.subr.mxu0 0.0
        %4143 = vmatpush1.msra.mxu0 0.0
        %4144 = vmatprep.subr.mxu0 0.0
        %4145 = vmatpush1.msra.mxu0 0.0
        %4146 = vmatprep.subr.mxu0 0.0
        %4147 = vmatpush1.msra.mxu0 0.0
        %4148 = vmatprep.subr.mxu0 0.0
        %4149 = vmatpush1.msra.mxu0 0.0
        %4150 = vmatprep.subr.mxu0 0.0
        %4151 = vmatpush1.msra.mxu0 0.0
        %4152 = vmatprep.subr.mxu0 0.0
        %4153 = vmatpush1.msra.mxu0 0.0
        %4154 = vmatprep.subr.mxu0 0.0
        %4155 = vmatpush1.msra.mxu0 0.0
        %4156 = vmatprep.subr.mxu0 0.0
        %4157 = vmatpush1.msra.mxu0 0.0
        %4158 = vmatprep.subr.mxu0 0.0
        %4159 = vmatpush1.msra.mxu0 0.0
        %4160 = vmatprep.subr.mxu0 0.0
        %4161 = vmatpush1.msra.mxu0 0.0
        %4162 = vmatprep.subr.mxu0 0.0
        %4163 = vmatpush1.msra.mxu0 0.0
        %4164 = vmatprep.subr.mxu0 0.0
        %4165 = vmatpush1.msra.mxu0 0.0
        %4166 = vmatprep.subr.mxu0 0.0
        %4167 = vmatpush1.msra.mxu0 0.0
        %4168 = vmatprep.subr.mxu0 0.0
        %4169 = vmatpush1.msra.mxu0 0.0
        %4170 = vmatprep.subr.mxu0 0.0
        %4171 = vmatpush1.msra.mxu0 0.0
        %4172 = vmatprep.subr.mxu0 0.0
        %4173 = vmatpush1.msra.mxu0 0.0
        %4174 = vmatprep.subr.mxu0 0.0
        %4175 = vmatpush1.msra.mxu0 0.0
        %4176 = vmatprep.subr.mxu0 0.0
        %4177 = vmatpush1.msra.mxu0 0.0
        %4178 = vmatprep.subr.mxu0 0.0
        %4179 = vmatpush1.msra.mxu0 0.0
        %4180 = vmatprep.subr.mxu0 0.0
        %4181 = vmatpush1.msra.mxu0 0.0
        %4182 = vmatprep.subr.mxu0 0.0
        %4183 = vmatpush1.msra.mxu0 0.0
        %4184 = vmatprep.subr.mxu0 0.0
        %4185 = vmatpush1.msra.mxu0 0.0
        %4186 = vmatprep.subr.mxu0 0.0
        %4187 = vmatpush1.msra.mxu0 0.0
        %4188 = vmatprep.subr.mxu0 0.0
        %4189 = vmatpush1.msra.mxu0 0.0
        %4190 = vmatprep.subr.mxu0 0.0
        %4191 = vmatpush1.msra.mxu0 0.0
        %4192 = vmatprep.subr.mxu0 0.0
        %4193 = vmatpush1.msra.mxu0 0.0
        %4194 = vmatprep.subr.mxu0 0.0
        %4195 = vmatpush1.msra.mxu0 0.0
        %4196 = vmatprep.mubr.f32.mxu0 0.0
        %4197 = vmatmul.mubr.f32.gmra.mrb[0].mxu0 %v3022
        %v4198 = vpop.f32.mrb[0].mxu0
        %v4199 = vadd.f32 %v4130, %v4198
        %v4200 = vpop.f32.mrb[0].mxu0
        %4201 = vmatprep.mubr.f32.mxu0 0.0
        %4202 = vmatmul.mubr.f32.gmra.mrb[0].mxu0 %v3025
        %v4203 = vpop.f32.mrb[0].mxu0
        %v4204 = vadd.f32 %v4130, %v4203
        %v4205 = vpop.f32.mrb[0].mxu0
        %4206 = vdwg.mxu0
        %v4208 = vsel %vm976, %v4028, 0
        %v4211 = vsel %vm976, %v4111, 0
        %v4214 = vsel %vm976, %v4116, 0
        %4216 = vmatprep.subr.mxu0 0.0
        %4217 = vmatpush1.xpose.msra.mxu0 %v4211
        %4218 = vmatprep.subr.mxu0 0.0
        %4219 = vmatpush1.xpose.msra.mxu0 %v4214
        %4220 = vmatprep.subr.mxu0 0.0
        %4221 = vmatpush1.xpose.msra.mxu0 0.0
        %4222 = vmatprep.subr.mxu0 0.0
        %4223 = vmatpush1.xpose.msra.mxu0 0.0
        %4224 = vmatprep.subr.mxu0 0.0
        %4225 = vmatpush1.xpose.msra.mxu0 0.0
        %4226 = vmatprep.subr.mxu0 0.0
        %4227 = vmatpush1.xpose.msra.mxu0 0.0
        %4228 = vmatprep.subr.mxu0 0.0
        %4229 = vmatpush1.xpose.msra.mxu0 0.0
        %4230 = vmatprep.subr.mxu0 0.0
        %4231 = vmatpush1.xpose.msra.mxu0 0.0
        %4232 = vmatprep.subr.mxu0 0.0
        %4233 = vmatpush1.xpose.msra.mxu0 0.0
        %4234 = vmatprep.subr.mxu0 0.0
        %4235 = vmatpush1.xpose.msra.mxu0 0.0
        %4236 = vmatprep.subr.mxu0 0.0
        %4237 = vmatpush1.xpose.msra.mxu0 0.0
        %4238 = vmatprep.subr.mxu0 0.0
        %4239 = vmatpush1.xpose.msra.mxu0 0.0
        %4240 = vmatprep.subr.mxu0 0.0
        %4241 = vmatpush1.xpose.msra.mxu0 0.0
        %4242 = vmatprep.subr.mxu0 0.0
        %4243 = vmatpush1.xpose.msra.mxu0 0.0
        %4244 = vmatprep.subr.mxu0 0.0
        %4245 = vmatpush1.xpose.msra.mxu0 0.0
        %4246 = vmatprep.subr.mxu0 0.0
        %4247 = vmatpush1.xpose.msra.mxu0 0.0
        %4248 = vmatprep.subr.mxu0 0.0
        %4249 = vmatpush1.xpose.msra.mxu0 0.0
        %4250 = vmatprep.subr.mxu0 0.0
        %4251 = vmatpush1.xpose.msra.mxu0 0.0
        %4252 = vmatprep.subr.mxu0 0.0
        %4253 = vmatpush1.xpose.msra.mxu0 0.0
        %4254 = vmatprep.subr.mxu0 0.0
        %4255 = vmatpush1.xpose.msra.mxu0 0.0
        %4256 = vmatprep.subr.mxu0 0.0
        %4257 = vmatpush1.xpose.msra.mxu0 0.0
        %4258 = vmatprep.subr.mxu0 0.0
        %4259 = vmatpush1.xpose.msra.mxu0 0.0
        %4260 = vmatprep.subr.mxu0 0.0
        %4261 = vmatpush1.xpose.msra.mxu0 0.0
        %4262 = vmatprep.subr.mxu0 0.0
        %4263 = vmatpush1.xpose.msra.mxu0 0.0
        %4264 = vmatprep.subr.mxu0 0.0
        %4265 = vmatpush1.xpose.msra.mxu0 0.0
        %4266 = vmatprep.subr.mxu0 0.0
        %4267 = vmatpush1.xpose.msra.mxu0 0.0
        %4268 = vmatprep.subr.mxu0 0.0
        %4269 = vmatpush1.xpose.msra.mxu0 0.0
        %4270 = vmatprep.subr.mxu0 0.0
        %4271 = vmatpush1.xpose.msra.mxu0 0.0
        %4272 = vmatprep.subr.mxu0 0.0
        %4273 = vmatpush1.xpose.msra.mxu0 0.0
        %4274 = vmatprep.subr.mxu0 0.0
        %4275 = vmatpush1.xpose.msra.mxu0 0.0
        %4276 = vmatprep.subr.mxu0 0.0
        %4277 = vmatpush1.xpose.msra.mxu0 0.0
        %4278 = vmatprep.subr.mxu0 0.0
        %4279 = vmatpush1.xpose.msra.mxu0 0.0
        %4280 = vmatprep.mubr.f32.mxu0 0.0
        %4281 = vmatmul.mubr.f32.gmra.mrb[0].mxu0 %v4208
        %v4282 = vpop.f32.mrb[0].mxu0
        %v4283 = vadd.f32 0.0, %v4282
        %v4284 = vpop.f32.mrb[0].mxu0
        %4285 = vdwg.mxu0
        %v4286 = vmul.f32 %v4283, 0.35355338
        %v4287 = vadd.f32 %v4286, %v3274
        %s4288 = scalar_lea.vmem %s719, 16
        %v4289 = vld [vmem:[%s4288] sm:$0xff]
        %v4290 = vadd.f32 %v4287, %v4289
        %v4291 = vsel %vm3279, %v4290, -inf
        %4292 = vmax.xlane.f32.xlu0 %v4291
        %v4293 = vpop.xlane.xlu0 %4292
        %v4294 = vsub.f32 %v4290, %v4293
        %v4295 = vmul.f32 %v4294, 1.442695
        %v4296 = vpow.pop %v4295
        %v4297 = vsel %vm3279, %v4296, 0.0
        %4298 = vadd.xlane.f32.xlu0 %v4297
        %v4299 = vpop.xlane.xlu0 %4298
        %v4300 = vrcp.pop %v4299
        %v4301 = vmul.f32 %v4296, %v4300
        %v4303 = vsel %vm3279, %v4301, 0
        %v4306 = vsel %vm3294, %v4204, 0
        %4308 = vmatprep.subr.mxu0 0.0
        %4309 = vmatpush1.msra.mxu0 %v4199
        %4310 = vmatprep.subr.mxu0 0.0
        %4311 = vmatpush1.msra.mxu0 %v4306
        %4312 = vmatprep.subr.mxu0 0.0
        %4313 = vmatpush1.msra.mxu0 0.0
        %4314 = vmatprep.subr.mxu0 0.0
        %4315 = vmatpush1.msra.mxu0 0.0
        %4316 = vmatprep.subr.mxu0 0.0
        %4317 = vmatpush1.msra.mxu0 0.0
        %4318 = vmatprep.subr.mxu0 0.0
        %4319 = vmatpush1.msra.mxu0 0.0
        %4320 = vmatprep.subr.mxu0 0.0
        %4321 = vmatpush1.msra.mxu0 0.0
        %4322 = vmatprep.subr.mxu0 0.0
        %4323 = vmatpush1.msra.mxu0 0.0
        %4324 = vmatprep.subr.mxu0 0.0
        %4325 = vmatpush1.msra.mxu0 0.0
        %4326 = vmatprep.subr.mxu0 0.0
        %4327 = vmatpush1.msra.mxu0 0.0
        %4328 = vmatprep.subr.mxu0 0.0
        %4329 = vmatpush1.msra.mxu0 0.0
        %4330 = vmatprep.subr.mxu0 0.0
        %4331 = vmatpush1.msra.mxu0 0.0
        %4332 = vmatprep.subr.mxu0 0.0
        %4333 = vmatpush1.msra.mxu0 0.0
        %4334 = vmatprep.subr.mxu0 0.0
        %4335 = vmatpush1.msra.mxu0 0.0
        %4336 = vmatprep.subr.mxu0 0.0
        %4337 = vmatpush1.msra.mxu0 0.0
        %4338 = vmatprep.subr.mxu0 0.0
        %4339 = vmatpush1.msra.mxu0 0.0
        %4340 = vmatprep.subr.mxu0 0.0
        %4341 = vmatpush1.msra.mxu0 0.0
        %4342 = vmatprep.subr.mxu0 0.0
        %4343 = vmatpush1.msra.mxu0 0.0
        %4344 = vmatprep.subr.mxu0 0.0
        %4345 = vmatpush1.msra.mxu0 0.0
        %4346 = vmatprep.subr.mxu0 0.0
        %4347 = vmatpush1.msra.mxu0 0.0
        %4348 = vmatprep.subr.mxu0 0.0
        %4349 = vmatpush1.msra.mxu0 0.0
        %4350 = vmatprep.subr.mxu0 0.0
        %4351 = vmatpush1.msra.mxu0 0.0
        %4352 = vmatprep.subr.mxu0 0.0
        %4353 = vmatpush1.msra.mxu0 0.0
        %4354 = vmatprep.subr.mxu0 0.0
        %4355 = vmatpush1.msra.mxu0 0.0
        %4356 = vmatprep.subr.mxu0 0.0
        %4357 = vmatpush1.msra.mxu0 0.0
        %4358 = vmatprep.subr.mxu0 0.0
        %4359 = vmatpush1.msra.mxu0 0.0
        %4360 = vmatprep.subr.mxu0 0.0
        %4361 = vmatpush1.msra.mxu0 0.0
        %4362 = vmatprep.subr.mxu0 0.0
        %4363 = vmatpush1.msra.mxu0 0.0
        %4364 = vmatprep.subr.mxu0 0.0
        %4365 = vmatpush1.msra.mxu0 0.0
        %4366 = vmatprep.subr.mxu0 0.0
        %4367 = vmatpush1.msra.mxu0 0.0
        %4368 = vmatprep.subr.mxu0 0.0
        %4369 = vmatpush1.msra.mxu0 0.0
        %4370 = vmatprep.subr.mxu0 0.0
        %4371 = vmatpush1.msra.mxu0 0.0
        %4372 = vmatprep.mubr.f32.mxu0 0.0
        %4373 = vmatmul.mubr.f32.gmra.mrb[0].mxu0 %v4303
        %v4374 = vpop.f32.mrb[0].mxu0
        %v4375 = vadd.f32 0.0, %v4374
        %v4376 = vpop.f32.mrb[0].mxu0
        %4377 = vdwg.mxu0
        %s4378 = scalar_lea.vmem %s11, 48
        %v4379 = vld [vmem:[%s4378] sm:$0xff]
        %v4381 = vsel %vm976, %v4375, 0
        %4383 = vmatprep.subr.mxu0 0.0
        %4384 = vmatpush1.msra.mxu0 %v4379
        %4385 = vmatprep.subr.mxu0 0.0
        %4386 = vmatpush1.msra.mxu0 0.0
        %4387 = vmatprep.subr.mxu0 0.0
        %4388 = vmatpush1.msra.mxu0 0.0
        %4389 = vmatprep.subr.mxu0 0.0
        %4390 = vmatpush1.msra.mxu0 0.0
        %4391 = vmatprep.subr.mxu0 0.0
        %4392 = vmatpush1.msra.mxu0 0.0
        %4393 = vmatprep.subr.mxu0 0.0
        %4394 = vmatpush1.msra.mxu0 0.0
        %4395 = vmatprep.subr.mxu0 0.0
        %4396 = vmatpush1.msra.mxu0 0.0
        %4397 = vmatprep.subr.mxu0 0.0
        %4398 = vmatpush1.msra.mxu0 0.0
        %4399 = vmatprep.subr.mxu0 0.0
        %4400 = vmatpush1.msra.mxu0 0.0
        %4401 = vmatprep.subr.mxu0 0.0
        %4402 = vmatpush1.msra.mxu0 0.0
        %4403 = vmatprep.subr.mxu0 0.0
        %4404 = vmatpush1.msra.mxu0 0.0
        %4405 = vmatprep.subr.mxu0 0.0
        %4406 = vmatpush1.msra.mxu0 0.0
        %4407 = vmatprep.subr.mxu0 0.0
        %4408 = vmatpush1.msra.mxu0 0.0
        %4409 = vmatprep.subr.mxu0 0.0
        %4410 = vmatpush1.msra.mxu0 0.0
        %4411 = vmatprep.subr.mxu0 0.0
        %4412 = vmatpush1.msra.mxu0 0.0
        %4413 = vmatprep.subr.mxu0 0.0
        %4414 = vmatpush1.msra.mxu0 0.0
        %4415 = vmatprep.subr.mxu0 0.0
        %4416 = vmatpush1.msra.mxu0 0.0
        %4417 = vmatprep.subr.mxu0 0.0
        %4418 = vmatpush1.msra.mxu0 0.0
        %4419 = vmatprep.subr.mxu0 0.0
        %4420 = vmatpush1.msra.mxu0 0.0
        %4421 = vmatprep.subr.mxu0 0.0
        %4422 = vmatpush1.msra.mxu0 0.0
        %4423 = vmatprep.subr.mxu0 0.0
        %4424 = vmatpush1.msra.mxu0 0.0
        %4425 = vmatprep.subr.mxu0 0.0
        %4426 = vmatpush1.msra.mxu0 0.0
        %4427 = vmatprep.subr.mxu0 0.0
        %4428 = vmatpush1.msra.mxu0 0.0
        %4429 = vmatprep.subr.mxu0 0.0
        %4430 = vmatpush1.msra.mxu0 0.0
        %4431 = vmatprep.subr.mxu0 0.0
        %4432 = vmatpush1.msra.mxu0 0.0
        %4433 = vmatprep.subr.mxu0 0.0
        %4434 = vmatpush1.msra.mxu0 0.0
        %4435 = vmatprep.subr.mxu0 0.0
        %4436 = vmatpush1.msra.mxu0 0.0
        %4437 = vmatprep.subr.mxu0 0.0
        %4438 = vmatpush1.msra.mxu0 0.0
        %4439 = vmatprep.subr.mxu0 0.0
        %4440 = vmatpush1.msra.mxu0 0.0
        %4441 = vmatprep.subr.mxu0 0.0
        %4442 = vmatpush1.msra.mxu0 0.0
        %4443 = vmatprep.subr.mxu0 0.0
        %4444 = vmatpush1.msra.mxu0 0.0
        %4445 = vmatprep.subr.mxu0 0.0
        %4446 = vmatpush1.msra.mxu0 0.0
        %4447 = vmatprep.mubr.f32.mxu0 0.0
        %4448 = vmatmul.mubr.f32.gmra.mrb[0].mxu0 %v4381
        %v4449 = vpop.f32.mrb[0].mxu0
        %v4450 = vadd.f32 0.0, %v4449
        %v4451 = vpop.f32.mrb[0].mxu0
        %4452 = vdwg.mxu0
        %v4453 = vadd.f32 %v3945, %v4450
        %s4454 = scalar_lea.vmem %s5, 224
        %v4455 = vld [vmem:[%s4454] sm:$0xff]
        %v4456 = vld [vmem:[%s4454 + $0x8] sm:$0xff]
        %v4457 = vld [vmem:[%s4454 + $0x10] sm:$0xff]
        %v4458 = vld [vmem:[%s4454 + $0x18] sm:$0xff]
        %s4459 = scalar_lea.vmem %s6, 7
        %v4460 = vld [vmem:[%s4459] sm:$0x1]
        %v4462 = vlaneseq
        %v4463 = vshrl.u32 %v4462, 7
        %v4464 = vsub.s32 0, %v4463
        %v4465 = vrot.slane %v4460, %v4464
        %4467 = vmatprep.subr.mxu0 0.0
        %4468 = vmatpush1.msra.mxu0 %v4455
        %4469 = vmatprep.subr.mxu0 0.0
        %4470 = vmatpush1.msra.mxu0 %v4456
        %4471 = vmatprep.subr.mxu0 0.0
        %4472 = vmatpush1.msra.mxu0 %v4457
        %4473 = vmatprep.subr.mxu0 0.0
        %4474 = vmatpush1.msra.mxu0 %v4458
        %4475 = vmatprep.subr.mxu0 0.0
        %4476 = vmatpush1.msra.mxu0 0.0
        %4477 = vmatprep.subr.mxu0 0.0
        %4478 = vmatpush1.msra.mxu0 0.0
        %4479 = vmatprep.subr.mxu0 0.0
        %4480 = vmatpush1.msra.mxu0 0.0
        %4481 = vmatprep.subr.mxu0 0.0
        %4482 = vmatpush1.msra.mxu0 0.0
        %4483 = vmatprep.subr.mxu0 0.0
        %4484 = vmatpush1.msra.mxu0 0.0
        %4485 = vmatprep.subr.mxu0 0.0
        %4486 = vmatpush1.msra.mxu0 0.0
        %4487 = vmatprep.subr.mxu0 0.0
        %4488 = vmatpush1.msra.mxu0 0.0
        %4489 = vmatprep.subr.mxu0 0.0
        %4490 = vmatpush1.msra.mxu0 0.0
        %4491 = vmatprep.subr.mxu0 0.0
        %4492 = vmatpush1.msra.mxu0 0.0
        %4493 = vmatprep.subr.mxu0 0.0
        %4494 = vmatpush1.msra.mxu0 0.0
        %4495 = vmatprep.subr.mxu0 0.0
        %4496 = vmatpush1.msra.mxu0 0.0
        %4497 = vmatprep.subr.mxu0 0.0
        %4498 = vmatpush1.msra.mxu0 0.0
        %4499 = vmatprep.subr.mxu0 0.0
        %4500 = vmatpush1.msra.mxu0 0.0
        %4501 = vmatprep.subr.mxu0 0.0
        %4502 = vmatpush1.msra.mxu0 0.0
        %4503 = vmatprep.subr.mxu0 0.0
        %4504 = vmatpush1.msra.mxu0 0.0
        %4505 = vmatprep.subr.mxu0 0.0
        %4506 = vmatpush1.msra.mxu0 0.0
        %4507 = vmatprep.subr.mxu0 0.0
        %4508 = vmatpush1.msra.mxu0 0.0
        %4509 = vmatprep.subr.mxu0 0.0
        %4510 = vmatpush1.msra.mxu0 0.0
        %4511 = vmatprep.subr.mxu0 0.0
        %4512 = vmatpush1.msra.mxu0 0.0
        %4513 = vmatprep.subr.mxu0 0.0
        %4514 = vmatpush1.msra.mxu0 0.0
        %4515 = vmatprep.subr.mxu0 0.0
        %4516 = vmatpush1.msra.mxu0 0.0
        %4517 = vmatprep.subr.mxu0 0.0
        %4518 = vmatpush1.msra.mxu0 0.0
        %4519 = vmatprep.subr.mxu0 0.0
        %4520 = vmatpush1.msra.mxu0 0.0
        %4521 = vmatprep.subr.mxu0 0.0
        %4522 = vmatpush1.msra.mxu0 0.0
        %4523 = vmatprep.subr.mxu0 0.0
        %4524 = vmatpush1.msra.mxu0 0.0
        %4525 = vmatprep.subr.mxu0 0.0
        %4526 = vmatpush1.msra.mxu0 0.0
        %4527 = vmatprep.subr.mxu0 0.0
        %4528 = vmatpush1.msra.mxu0 0.0
        %4529 = vmatprep.subr.mxu0 0.0
        %4530 = vmatpush1.msra.mxu0 0.0
        %4531 = vmatprep.mubr.f32.mxu0 0.0
        %4532 = vmatmul.mubr.f32.gmra.mrb[0].mxu0 %v2936
        %v4533 = vpop.f32.mrb[0].mxu0
        %v4534 = vadd.f32 %v4465, %v4533
        %v4535 = vpop.f32.mrb[0].mxu0
        %4536 = vdwg.mxu0
        %s4537 = scalar_lea.vmem %s7, 224
        %v4538 = vld [vmem:[%s4537] sm:$0xff]
        %v4539 = vld [vmem:[%s4537 + $0x8] sm:$0xff]
        %v4540 = vld [vmem:[%s4537 + $0x10] sm:$0xff]
        %v4541 = vld [vmem:[%s4537 + $0x18] sm:$0xff]
        %s4542 = scalar_lea.vmem %s8, 7
        %v4543 = vld [vmem:[%s4542] sm:$0x1]
        %v4545 = vlaneseq
        %v4546 = vshrl.u32 %v4545, 7
        %v4547 = vsub.s32 0, %v4546
        %v4548 = vrot.slane %v4543, %v4547
        %4550 = vmatprep.subr.mxu0 0.0
        %4551 = vmatpush1.msra.mxu0 %v4538
        %4552 = vmatprep.subr.mxu0 0.0
        %4553 = vmatpush1.msra.mxu0 %v4539
        %4554 = vmatprep.subr.mxu0 0.0
        %4555 = vmatpush1.msra.mxu0 %v4540
        %4556 = vmatprep.subr.mxu0 0.0
        %4557 = vmatpush1.msra.mxu0 %v4541
        %4558 = vmatprep.subr.mxu0 0.0
        %4559 = vmatpush1.msra.mxu0 0.0
        %4560 = vmatprep.subr.mxu0 0.0
        %4561 = vmatpush1.msra.mxu0 0.0
        %4562 = vmatprep.subr.mxu0 0.0
        %4563 = vmatpush1.msra.mxu0 0.0
        %4564 = vmatprep.subr.mxu0 0.0
        %4565 = vmatpush1.msra.mxu0 0.0
        %4566 = vmatprep.subr.mxu0 0.0
        %4567 = vmatpush1.msra.mxu0 0.0
        %4568 = vmatprep.subr.mxu0 0.0
        %4569 = vmatpush1.msra.mxu0 0.0
        %4570 = vmatprep.subr.mxu0 0.0
        %4571 = vmatpush1.msra.mxu0 0.0
        %4572 = vmatprep.subr.mxu0 0.0
        %4573 = vmatpush1.msra.mxu0 0.0
        %4574 = vmatprep.subr.mxu0 0.0
        %4575 = vmatpush1.msra.mxu0 0.0
        %4576 = vmatprep.subr.mxu0 0.0
        %4577 = vmatpush1.msra.mxu0 0.0
        %4578 = vmatprep.subr.mxu0 0.0
        %4579 = vmatpush1.msra.mxu0 0.0
        %4580 = vmatprep.subr.mxu0 0.0
        %4581 = vmatpush1.msra.mxu0 0.0
        %4582 = vmatprep.subr.mxu0 0.0
        %4583 = vmatpush1.msra.mxu0 0.0
        %4584 = vmatprep.subr.mxu0 0.0
        %4585 = vmatpush1.msra.mxu0 0.0
        %4586 = vmatprep.subr.mxu0 0.0
        %4587 = vmatpush1.msra.mxu0 0.0
        %4588 = vmatprep.subr.mxu0 0.0
        %4589 = vmatpush1.msra.mxu0 0.0
        %4590 = vmatprep.subr.mxu0 0.0
        %4591 = vmatpush1.msra.mxu0 0.0
        %4592 = vmatprep.subr.mxu0 0.0
        %4593 = vmatpush1.msra.mxu0 0.0
        %4594 = vmatprep.subr.mxu0 0.0
        %4595 = vmatpush1.msra.mxu0 0.0
        %4596 = vmatprep.subr.mxu0 0.0
        %4597 = vmatpush1.msra.mxu0 0.0
        %4598 = vmatprep.subr.mxu0 0.0
        %4599 = vmatpush1.msra.mxu0 0.0
        %4600 = vmatprep.subr.mxu0 0.0
        %4601 = vmatpush1.msra.mxu0 0.0
        %4602 = vmatprep.subr.mxu0 0.0
        %4603 = vmatpush1.msra.mxu0 0.0
        %4604 = vmatprep.subr.mxu0 0.0
        %4605 = vmatpush1.msra.mxu0 0.0
        %4606 = vmatprep.subr.mxu0 0.0
        %4607 = vmatpush1.msra.mxu0 0.0
        %4608 = vmatprep.subr.mxu0 0.0
        %4609 = vmatpush1.msra.mxu0 0.0
        %4610 = vmatprep.subr.mxu0 0.0
        %4611 = vmatpush1.msra.mxu0 0.0
        %4612 = vmatprep.subr.mxu0 0.0
        %4613 = vmatpush1.msra.mxu0 0.0
        %4614 = vmatprep.mubr.f32.mxu0 0.0
        %4615 = vmatmul.mubr.f32.gmra.mrb[0].mxu0 %v3022
        %v4616 = vpop.f32.mrb[0].mxu0
        %v4617 = vadd.f32 %v4548, %v4616
        %v4618 = vpop.f32.mrb[0].mxu0
        %4619 = vmatprep.mubr.f32.mxu0 0.0
        %4620 = vmatmul.mubr.f32.gmra.mrb[0].mxu0 %v3025
        %v4621 = vpop.f32.mrb[0].mxu0
        %v4622 = vadd.f32 %v4548, %v4621
        %v4623 = vpop.f32.mrb[0].mxu0
        %4624 = vdwg.mxu0
        %s4625 = scalar_lea.vmem %s9, 224
        %v4626 = vld [vmem:[%s4625] sm:$0xff]
        %v4627 = vld [vmem:[%s4625 + $0x8] sm:$0xff]
        %v4628 = vld [vmem:[%s4625 + $0x10] sm:$0xff]
        %v4629 = vld [vmem:[%s4625 + $0x18] sm:$0xff]
        %s4630 = scalar_lea.vmem %s10, 7
        %v4631 = vld [vmem:[%s4630] sm:$0x1]
        %v4633 = vlaneseq
        %v4634 = vshrl.u32 %v4633, 7
        %v4635 = vsub.s32 0, %v4634
        %v4636 = vrot.slane %v4631, %v4635
        %4638 = vmatprep.subr.mxu0 0.0
        %4639 = vmatpush1.msra.mxu0 %v4626
        %4640 = vmatprep.subr.mxu0 0.0
        %4641 = vmatpush1.msra.mxu0 %v4627
        %4642 = vmatprep.subr.mxu0 0.0
        %4643 = vmatpush1.msra.mxu0 %v4628
        %4644 = vmatprep.subr.mxu0 0.0
        %4645 = vmatpush1.msra.mxu0 %v4629
        %4646 = vmatprep.subr.mxu0 0.0
        %4647 = vmatpush1.msra.mxu0 0.0
        %4648 = vmatprep.subr.mxu0 0.0
        %4649 = vmatpush1.msra.mxu0 0.0
        %4650 = vmatprep.subr.mxu0 0.0
        %4651 = vmatpush1.msra.mxu0 0.0
        %4652 = vmatprep.subr.mxu0 0.0
        %4653 = vmatpush1.msra.mxu0 0.0
        %4654 = vmatprep.subr.mxu0 0.0
        %4655 = vmatpush1.msra.mxu0 0.0
        %4656 = vmatprep.subr.mxu0 0.0
        %4657 = vmatpush1.msra.mxu0 0.0
        %4658 = vmatprep.subr.mxu0 0.0
        %4659 = vmatpush1.msra.mxu0 0.0
        %4660 = vmatprep.subr.mxu0 0.0
        %4661 = vmatpush1.msra.mxu0 0.0
        %4662 = vmatprep.subr.mxu0 0.0
        %4663 = vmatpush1.msra.mxu0 0.0
        %4664 = vmatprep.subr.mxu0 0.0
        %4665 = vmatpush1.msra.mxu0 0.0
        %4666 = vmatprep.subr.mxu0 0.0
        %4667 = vmatpush1.msra.mxu0 0.0
        %4668 = vmatprep.subr.mxu0 0.0
        %4669 = vmatpush1.msra.mxu0 0.0
        %4670 = vmatprep.subr.mxu0 0.0
        %4671 = vmatpush1.msra.mxu0 0.0
        %4672 = vmatprep.subr.mxu0 0.0
        %4673 = vmatpush1.msra.mxu0 0.0
        %4674 = vmatprep.subr.mxu0 0.0
        %4675 = vmatpush1.msra.mxu0 0.0
        %4676 = vmatprep.subr.mxu0 0.0
        %4677 = vmatpush1.msra.mxu0 0.0
        %4678 = vmatprep.subr.mxu0 0.0
        %4679 = vmatpush1.msra.mxu0 0.0
        %4680 = vmatprep.subr.mxu0 0.0
        %4681 = vmatpush1.msra.mxu0 0.0
        %4682 = vmatprep.subr.mxu0 0.0
        %4683 = vmatpush1.msra.mxu0 0.0
        %4684 = vmatprep.subr.mxu0 0.0
        %4685 = vmatpush1.msra.mxu0 0.0
        %4686 = vmatprep.subr.mxu0 0.0
        %4687 = vmatpush1.msra.mxu0 0.0
        %4688 = vmatprep.subr.mxu0 0.0
        %4689 = vmatpush1.msra.mxu0 0.0
        %4690 = vmatprep.subr.mxu0 0.0
        %4691 = vmatpush1.msra.mxu0 0.0
        %4692 = vmatprep.subr.mxu0 0.0
        %4693 = vmatpush1.msra.mxu0 0.0
        %4694 = vmatprep.subr.mxu0 0.0
        %4695 = vmatpush1.msra.mxu0 0.0
        %4696 = vmatprep.subr.mxu0 0.0
        %4697 = vmatpush1.msra.mxu0 0.0
        %4698 = vmatprep.subr.mxu0 0.0
        %4699 = vmatpush1.msra.mxu0 0.0
        %4700 = vmatprep.subr.mxu0 0.0
        %4701 = vmatpush1.msra.mxu0 0.0
        %4702 = vmatprep.mubr.f32.mxu0 0.0
        %4703 = vmatmul.mubr.f32.gmra.mrb[0].mxu0 %v3022
        %v4704 = vpop.f32.mrb[0].mxu0
        %v4705 = vadd.f32 %v4636, %v4704
        %v4706 = vpop.f32.mrb[0].mxu0
        %4707 = vmatprep.mubr.f32.mxu0 0.0
        %4708 = vmatmul.mubr.f32.gmra.mrb[0].mxu0 %v3025
        %v4709 = vpop.f32.mrb[0].mxu0
        %v4710 = vadd.f32 %v4636, %v4709
        %v4711 = vpop.f32.mrb[0].mxu0
        %4712 = vdwg.mxu0
        %v4714 = vsel %vm976, %v4534, 0
        %v4717 = vsel %vm976, %v4617, 0
        %v4720 = vsel %vm976, %v4622, 0
        %4722 = vmatprep.subr.mxu0 0.0
        %4723 = vmatpush1.xpose.msra.mxu0 %v4717
        %4724 = vmatprep.subr.mxu0 0.0
        %4725 = vmatpush1.xpose.msra.mxu0 %v4720
        %4726 = vmatprep.subr.mxu0 0.0
        %4727 = vmatpush1.xpose.msra.mxu0 0.0
        %4728 = vmatprep.subr.mxu0 0.0
        %4729 = vmatpush1.xpose.msra.mxu0 0.0
        %4730 = vmatprep.subr.mxu0 0.0
        %4731 = vmatpush1.xpose.msra.mxu0 0.0
        %4732 = vmatprep.subr.mxu0 0.0
        %4733 = vmatpush1.xpose.msra.mxu0 0.0
        %4734 = vmatprep.subr.mxu0 0.0
        %4735 = vmatpush1.xpose.msra.mxu0 0.0
        %4736 = vmatprep.subr.mxu0 0.0
        %4737 = vmatpush1.xpose.msra.mxu0 0.0
        %4738 = vmatprep.subr.mxu0 0.0
        %4739 = vmatpush1.xpose.msra.mxu0 0.0
        %4740 = vmatprep.subr.mxu0 0.0
        %4741 = vmatpush1.xpose.msra.mxu0 0.0
        %4742 = vmatprep.subr.mxu0 0.0
        %4743 = vmatpush1.xpose.msra.mxu0 0.0
        %4744 = vmatprep.subr.mxu0 0.0
        %4745 = vmatpush1.xpose.msra.mxu0 0.0
        %4746 = vmatprep.subr.mxu0 0.0
        %4747 = vmatpush1.xpose.msra.mxu0 0.0
        %4748 = vmatprep.subr.mxu0 0.0
        %4749 = vmatpush1.xpose.msra.mxu0 0.0
        %4750 = vmatprep.subr.mxu0 0.0
        %4751 = vmatpush1.xpose.msra.mxu0 0.0
        %4752 = vmatprep.subr.mxu0 0.0
        %4753 = vmatpush1.xpose.msra.mxu0 0.0
        %4754 = vmatprep.subr.mxu0 0.0
        %4755 = vmatpush1.xpose.msra.mxu0 0.0
        %4756 = vmatprep.subr.mxu0 0.0
        %4757 = vmatpush1.xpose.msra.mxu0 0.0
        %4758 = vmatprep.subr.mxu0 0.0
        %4759 = vmatpush1.xpose.msra.mxu0 0.0
        %4760 = vmatprep.subr.mxu0 0.0
        %4761 = vmatpush1.xpose.msra.mxu0 0.0
        %4762 = vmatprep.subr.mxu0 0.0
        %4763 = vmatpush1.xpose.msra.mxu0 0.0
        %4764 = vmatprep.subr.mxu0 0.0
        %4765 = vmatpush1.xpose.msra.mxu0 0.0
        %4766 = vmatprep.subr.mxu0 0.0
        %4767 = vmatpush1.xpose.msra.mxu0 0.0
        %4768 = vmatprep.subr.mxu0 0.0
        %4769 = vmatpush1.xpose.msra.mxu0 0.0
        %4770 = vmatprep.subr.mxu0 0.0
        %4771 = vmatpush1.xpose.msra.mxu0 0.0
        %4772 = vmatprep.subr.mxu0 0.0
        %4773 = vmatpush1.xpose.msra.mxu0 0.0
        %4774 = vmatprep.subr.mxu0 0.0
        %4775 = vmatpush1.xpose.msra.mxu0 0.0
        %4776 = vmatprep.subr.mxu0 0.0
        %4777 = vmatpush1.xpose.msra.mxu0 0.0
        %4778 = vmatprep.subr.mxu0 0.0
        %4779 = vmatpush1.xpose.msra.mxu0 0.0
        %4780 = vmatprep.subr.mxu0 0.0
        %4781 = vmatpush1.xpose.msra.mxu0 0.0
        %4782 = vmatprep.subr.mxu0 0.0
        %4783 = vmatpush1.xpose.msra.mxu0 0.0
        %4784 = vmatprep.subr.mxu0 0.0
        %4785 = vmatpush1.xpose.msra.mxu0 0.0
        %4786 = vmatprep.mubr.f32.mxu0 0.0
        %4787 = vmatmul.mubr.f32.gmra.mrb[0].mxu0 %v4714
        %v4788 = vpop.f32.mrb[0].mxu0
        %v4789 = vadd.f32 0.0, %v4788
        %v4790 = vpop.f32.mrb[0].mxu0
        %4791 = vdwg.mxu0
        %v4792 = vmul.f32 %v4789, 0.35355338
        %v4793 = vadd.f32 %v4792, %v3274
        %s4794 = scalar_lea.vmem %s719, 24
        %v4795 = vld [vmem:[%s4794] sm:$0xff]
        %v4796 = vadd.f32 %v4793, %v4795
        %v4797 = vsel %vm3279, %v4796, -inf
        %4798 = vmax.xlane.f32.xlu0 %v4797
        %v4799 = vpop.xlane.xlu0 %4798
        %v4800 = vsub.f32 %v4796, %v4799
        %v4801 = vmul.f32 %v4800, 1.442695
        %v4802 = vpow.pop %v4801
        %v4803 = vsel %vm3279, %v4802, 0.0
        %4804 = vadd.xlane.f32.xlu0 %v4803
        %v4805 = vpop.xlane.xlu0 %4804
        %v4806 = vrcp.pop %v4805
        %v4807 = vmul.f32 %v4802, %v4806
        %v4809 = vsel %vm3279, %v4807, 0
        %v4812 = vsel %vm3294, %v4710, 0
        %4814 = vmatprep.subr.mxu0 0.0
        %4815 = vmatpush1.msra.mxu0 %v4705
        %4816 = vmatprep.subr.mxu0 0.0
        %4817 = vmatpush1.msra.mxu0 %v4812
        %4818 = vmatprep.subr.mxu0 0.0
        %4819 = vmatpush1.msra.mxu0 0.0
        %4820 = vmatprep.subr.mxu0 0.0
        %4821 = vmatpush1.msra.mxu0 0.0
        %4822 = vmatprep.subr.mxu0 0.0
        %4823 = vmatpush1.msra.mxu0 0.0
        %4824 = vmatprep.subr.mxu0 0.0
        %4825 = vmatpush1.msra.mxu0 0.0
        %4826 = vmatprep.subr.mxu0 0.0
        %4827 = vmatpush1.msra.mxu0 0.0
        %4828 = vmatprep.subr.mxu0 0.0
        %4829 = vmatpush1.msra.mxu0 0.0
        %4830 = vmatprep.subr.mxu0 0.0
        %4831 = vmatpush1.msra.mxu0 0.0
        %4832 = vmatprep.subr.mxu0 0.0
        %4833 = vmatpush1.msra.mxu0 0.0
        %4834 = vmatprep.subr.mxu0 0.0
        %4835 = vmatpush1.msra.mxu0 0.0
        %4836 = vmatprep.subr.mxu0 0.0
        %4837 = vmatpush1.msra.mxu0 0.0
        %4838 = vmatprep.subr.mxu0 0.0
        %4839 = vmatpush1.msra.mxu0 0.0
        %4840 = vmatprep.subr.mxu0 0.0
        %4841 = vmatpush1.msra.mxu0 0.0
        %4842 = vmatprep.subr.mxu0 0.0
        %4843 = vmatpush1.msra.mxu0 0.0
        %4844 = vmatprep.subr.mxu0 0.0
        %4845 = vmatpush1.msra.mxu0 0.0
        %4846 = vmatprep.subr.mxu0 0.0
        %4847 = vmatpush1.msra.mxu0 0.0
        %4848 = vmatprep.subr.mxu0 0.0
        %4849 = vmatpush1.msra.mxu0 0.0
        %4850 = vmatprep.subr.mxu0 0.0
        %4851 = vmatpush1.msra.mxu0 0.0
        %4852 = vmatprep.subr.mxu0 0.0
        %4853 = vmatpush1.msra.mxu0 0.0
        %4854 = vmatprep.subr.mxu0 0.0
        %4855 = vmatpush1.msra.mxu0 0.0
        %4856 = vmatprep.subr.mxu0 0.0
        %4857 = vmatpush1.msra.mxu0 0.0
        %4858 = vmatprep.subr.mxu0 0.0
        %4859 = vmatpush1.msra.mxu0 0.0
        %4860 = vmatprep.subr.mxu0 0.0
        %4861 = vmatpush1.msra.mxu0 0.0
        %4862 = vmatprep.subr.mxu0 0.0
        %4863 = vmatpush1.msra.mxu0 0.0
        %4864 = vmatprep.subr.mxu0 0.0
        %4865 = vmatpush1.msra.mxu0 0.0
        %4866 = vmatprep.subr.mxu0 0.0
        %4867 = vmatpush1.msra.mxu0 0.0
        %4868 = vmatprep.subr.mxu0 0.0
        %4869 = vmatpush1.msra.mxu0 0.0
        %4870 = vmatprep.subr.mxu0 0.0
        %4871 = vmatpush1.msra.mxu0 0.0
        %4872 = vmatprep.subr.mxu0 0.0
        %4873 = vmatpush1.msra.mxu0 0.0
        %4874 = vmatprep.subr.mxu0 0.0
        %4875 = vmatpush1.msra.mxu0 0.0
        %4876 = vmatprep.subr.mxu0 0.0
        %4877 = vmatpush1.msra.mxu0 0.0
        %4878 = vmatprep.mubr.f32.mxu0 0.0
        %4879 = vmatmul.mubr.f32.gmra.mrb[0].mxu0 %v4809
        %v4880 = vpop.f32.mrb[0].mxu0
        %v4881 = vadd.f32 0.0, %v4880
        %v4882 = vpop.f32.mrb[0].mxu0
        %4883 = vdwg.mxu0
        %s4884 = scalar_lea.vmem %s11, 56
        %v4885 = vld [vmem:[%s4884] sm:$0xff]
        %v4887 = vsel %vm976, %v4881, 0
        %4889 = vmatprep.subr.mxu0 0.0
        %4890 = vmatpush1.msra.mxu0 %v4885
        %4891 = vmatprep.subr.mxu0 0.0
        %4892 = vmatpush1.msra.mxu0 0.0
        %4893 = vmatprep.subr.mxu0 0.0
        %4894 = vmatpush1.msra.mxu0 0.0
        %4895 = vmatprep.subr.mxu0 0.0
        %4896 = vmatpush1.msra.mxu0 0.0
        %4897 = vmatprep.subr.mxu0 0.0
        %4898 = vmatpush1.msra.mxu0 0.0
        %4899 = vmatprep.subr.mxu0 0.0
        %4900 = vmatpush1.msra.mxu0 0.0
        %4901 = vmatprep.subr.mxu0 0.0
        %4902 = vmatpush1.msra.mxu0 0.0
        %4903 = vmatprep.subr.mxu0 0.0
        %4904 = vmatpush1.msra.mxu0 0.0
        %4905 = vmatprep.subr.mxu0 0.0
        %4906 = vmatpush1.msra.mxu0 0.0
        %4907 = vmatprep.subr.mxu0 0.0
        %4908 = vmatpush1.msra.mxu0 0.0
        %4909 = vmatprep.subr.mxu0 0.0
        %4910 = vmatpush1.msra.mxu0 0.0
        %4911 = vmatprep.subr.mxu0 0.0
        %4912 = vmatpush1.msra.mxu0 0.0
        %4913 = vmatprep.subr.mxu0 0.0
        %4914 = vmatpush1.msra.mxu0 0.0
        %4915 = vmatprep.subr.mxu0 0.0
        %4916 = vmatpush1.msra.mxu0 0.0
        %4917 = vmatprep.subr.mxu0 0.0
        %4918 = vmatpush1.msra.mxu0 0.0
        %4919 = vmatprep.subr.mxu0 0.0
        %4920 = vmatpush1.msra.mxu0 0.0
        %4921 = vmatprep.subr.mxu0 0.0
        %4922 = vmatpush1.msra.mxu0 0.0
        %4923 = vmatprep.subr.mxu0 0.0
        %4924 = vmatpush1.msra.mxu0 0.0
        %4925 = vmatprep.subr.mxu0 0.0
        %4926 = vmatpush1.msra.mxu0 0.0
        %4927 = vmatprep.subr.mxu0 0.0
        %4928 = vmatpush1.msra.mxu0 0.0
        %4929 = vmatprep.subr.mxu0 0.0
        %4930 = vmatpush1.msra.mxu0 0.0
        %4931 = vmatprep.subr.mxu0 0.0
        %4932 = vmatpush1.msra.mxu0 0.0
        %4933 = vmatprep.subr.mxu0 0.0
        %4934 = vmatpush1.msra.mxu0 0.0
        %4935 = vmatprep.subr.mxu0 0.0
        %4936 = vmatpush1.msra.mxu0 0.0
        %4937 = vmatprep.subr.mxu0 0.0
        %4938 = vmatpush1.msra.mxu0 0.0
        %4939 = vmatprep.subr.mxu0 0.0
        %4940 = vmatpush1.msra.mxu0 0.0
        %4941 = vmatprep.subr.mxu0 0.0
        %4942 = vmatpush1.msra.mxu0 0.0
        %4943 = vmatprep.subr.mxu0 0.0
        %4944 = vmatpush1.msra.mxu0 0.0
        %4945 = vmatprep.subr.mxu0 0.0
        %4946 = vmatpush1.msra.mxu0 0.0
        %4947 = vmatprep.subr.mxu0 0.0
        %4948 = vmatpush1.msra.mxu0 0.0
        %4949 = vmatprep.subr.mxu0 0.0
        %4950 = vmatpush1.msra.mxu0 0.0
        %4951 = vmatprep.subr.mxu0 0.0
        %4952 = vmatpush1.msra.mxu0 0.0
        %4953 = vmatprep.mubr.f32.mxu0 0.0
        %4954 = vmatmul.mubr.f32.gmra.mrb[0].mxu0 %v4887
        %v4955 = vpop.f32.mrb[0].mxu0
        %v4956 = vadd.f32 0.0, %v4955
        %v4957 = vpop.f32.mrb[0].mxu0
        %4958 = vdwg.mxu0
        %v4959 = vadd.f32 %v4453, %v4956
        %s4960 = scalar_lea.vmem %s12, 1
        %v4961 = vld [vmem:[%s4960] sm:$0x1]
        %v4963 = vlaneseq
        %v4964 = vshrl.u32 %v4963, 7
        %v4965 = vsub.s32 0, %v4964
        %v4966 = vrot.slane %v4961, %v4965
        %v4968 = vadd.f32 %v4959, %v4966
        %v4969 = vadd.f32 %v2921, %v4968
        %s4970 = scalar_lea.vmem %s17, 1
        %v4971 = vld [vmem:[%s4970] sm:$0x1]
        %s4972 = scalar_lea.vmem %s18, 1
        %v4973 = vld [vmem:[%s4972] sm:$0x1]
        %v4974 = vsel %vm740, %v4969, 0.0
        %4975 = vadd.xlane.f32.xlu0 %v4974
        %v4976 = vpop.xlane.xlu0 %4975
        %v4977 = vmul.f32 %v4976, %v2693
        %v4978 = vsub.f32 %v4969, %v4977
        %v4979 = vmul.f32 %v4978, %v4978
        %v4980 = vsel %vm740, %v4979, 0.0
        %4981 = vadd.xlane.f32.xlu0 %v4980
        %v4982 = vpop.xlane.xlu0 %4981
        %v4983 = vmul.f32 %v4982, %v2693
        %v4984 = vadd.f32 %v4983, 1e-05
        %v4985 = vrsqrt.pop %v4984
        %v4986 = vmul.f32 %v4978, %v4985
        %v4988 = vlaneseq
        %v4989 = vshrl.u32 %v4988, 7
        %v4990 = vsub.s32 0, %v4989
        %v4991 = vrot.slane %v4971, %v4990
        %v4993 = vmul.f32 %v4986, %v4991
        %v4995 = vlaneseq
        %v4996 = vshrl.u32 %v4995, 7
        %v4997 = vsub.s32 0, %v4996
        %v4998 = vrot.slane %v4973, %v4997
        %v5000 = vadd.f32 %v4993, %v4998
        %s5001 = scalar_lea.vmem %s13, 32
        %v5002 = vld [vmem:[%s5001] sm:$0xff]
        %v5003 = vld [vmem:[%s5001 + $0x8] sm:$0xff]
        %v5004 = vld [vmem:[%s5001 + $0x10] sm:$0xff]
        %v5005 = vld [vmem:[%s5001 + $0x18] sm:$0xff]
        %s5006 = scalar_lea.vmem %s14, 1
        %v5007 = vld [vmem:[%s5006] sm:$0x1]
        %v5009 = vlaneseq
        %v5010 = vshrl.u32 %v5009, 7
        %v5011 = vsub.s32 0, %v5010
        %v5012 = vrot.slane %v5007, %v5011
        %v5015 = vsel %vm740, %v5000, 0
        %5017 = vmatprep.subr.mxu0 0.0
        %5018 = vmatpush1.msra.mxu0 %v5002
        %5019 = vmatprep.subr.mxu0 0.0
        %5020 = vmatpush1.msra.mxu0 %v5003
        %5021 = vmatprep.subr.mxu0 0.0
        %5022 = vmatpush1.msra.mxu0 %v5004
        %5023 = vmatprep.subr.mxu0 0.0
        %5024 = vmatpush1.msra.mxu0 %v5005
        %5025 = vmatprep.subr.mxu0 0.0
        %5026 = vmatpush1.msra.mxu0 0.0
        %5027 = vmatprep.subr.mxu0 0.0
        %5028 = vmatpush1.msra.mxu0 0.0
        %5029 = vmatprep.subr.mxu0 0.0
        %5030 = vmatpush1.msra.mxu0 0.0
        %5031 = vmatprep.subr.mxu0 0.0
        %5032 = vmatpush1.msra.mxu0 0.0
        %5033 = vmatprep.subr.mxu0 0.0
        %5034 = vmatpush1.msra.mxu0 0.0
        %5035 = vmatprep.subr.mxu0 0.0
        %5036 = vmatpush1.msra.mxu0 0.0
        %5037 = vmatprep.subr.mxu0 0.0
        %5038 = vmatpush1.msra.mxu0 0.0
        %5039 = vmatprep.subr.mxu0 0.0
        %5040 = vmatpush1.msra.mxu0 0.0
        %5041 = vmatprep.subr.mxu0 0.0
        %5042 = vmatpush1.msra.mxu0 0.0
        %5043 = vmatprep.subr.mxu0 0.0
        %5044 = vmatpush1.msra.mxu0 0.0
        %5045 = vmatprep.subr.mxu0 0.0
        %5046 = vmatpush1.msra.mxu0 0.0
        %5047 = vmatprep.subr.mxu0 0.0
        %5048 = vmatpush1.msra.mxu0 0.0
        %5049 = vmatprep.subr.mxu0 0.0
        %5050 = vmatpush1.msra.mxu0 0.0
        %5051 = vmatprep.subr.mxu0 0.0
        %5052 = vmatpush1.msra.mxu0 0.0
        %5053 = vmatprep.subr.mxu0 0.0
        %5054 = vmatpush1.msra.mxu0 0.0
        %5055 = vmatprep.subr.mxu0 0.0
        %5056 = vmatpush1.msra.mxu0 0.0
        %5057 = vmatprep.subr.mxu0 0.0
        %5058 = vmatpush1.msra.mxu0 0.0
        %5059 = vmatprep.subr.mxu0 0.0
        %5060 = vmatpush1.msra.mxu0 0.0
        %5061 = vmatprep.subr.mxu0 0.0
        %5062 = vmatpush1.msra.mxu0 0.0
        %5063 = vmatprep.subr.mxu0 0.0
        %5064 = vmatpush1.msra.mxu0 0.0
        %5065 = vmatprep.subr.mxu0 0.0
        %5066 = vmatpush1.msra.mxu0 0.0
        %5067 = vmatprep.subr.mxu0 0.0
        %5068 = vmatpush1.msra.mxu0 0.0
        %5069 = vmatprep.subr.mxu0 0.0
        %5070 = vmatpush1.msra.mxu0 0.0
        %5071 = vmatprep.subr.mxu0 0.0
        %5072 = vmatpush1.msra.mxu0 0.0
        %5073 = vmatprep.subr.mxu0 0.0
        %5074 = vmatpush1.msra.mxu0 0.0
        %5075 = vmatprep.subr.mxu0 0.0
        %5076 = vmatpush1.msra.mxu0 0.0
        %5077 = vmatprep.subr.mxu0 0.0
        %5078 = vmatpush1.msra.mxu0 0.0
        %5079 = vmatprep.subr.mxu0 0.0
        %5080 = vmatpush1.msra.mxu0 0.0
        %5081 = vmatprep.mubr.f32.mxu0 0.0
        %5082 = vmatmul.mubr.f32.gmra.mrb[0].mxu0 %v5015
        %v5083 = vpop.f32.mrb[0].mxu0
        %v5084 = vadd.f32 %v5012, %v5083
        %v5085 = vpop.f32.mrb[0].mxu0
        %5086 = vdwg.mxu0
        %v5087 = vmax.f32 %v5084, 0.0
        %s5088 = scalar_lea.vmem %s15, 64
        %v5089 = vld [vmem:[%s5088] sm:$0xff]
        %v5090 = vld [vmem:[%s5088 + $0x8] sm:$0xff]
        %v5091 = vld [vmem:[%s5088 + $0x10] sm:$0xff]
        %v5092 = vld [vmem:[%s5088 + $0x18] sm:$0xff]
        %v5093 = vld [vmem:[%s5088 + $0x20] sm:$0xff]
        %v5094 = vld [vmem:[%s5088 + $0x28] sm:$0xff]
        %v5095 = vld [vmem:[%s5088 + $0x30] sm:$0xff]
        %v5096 = vld [vmem:[%s5088 + $0x38] sm:$0xff]
        %s5097 = scalar_lea.vmem %s16, 1
        %v5098 = vld [vmem:[%s5097] sm:$0x1]
        %v5100 = vlaneseq
        %v5101 = vshrl.u32 %v5100, 7
        %v5102 = vsub.s32 0, %v5101
        %v5103 = vrot.slane %v5098, %v5102
        %v5106 = vsel %vm2818, %v5087, 0
        %5108 = vmatprep.subr.mxu0 0.0
        %5109 = vmatpush1.msra.mxu0 %v5089
        %5110 = vmatprep.subr.mxu0 0.0
        %5111 = vmatpush1.msra.mxu0 %v5090
        %5112 = vmatprep.subr.mxu0 0.0
        %5113 = vmatpush1.msra.mxu0 %v5091
        %5114 = vmatprep.subr.mxu0 0.0
        %5115 = vmatpush1.msra.mxu0 %v5092
        %5116 = vmatprep.subr.mxu0 0.0
        %5117 = vmatpush1.msra.mxu0 %v5093
        %5118 = vmatprep.subr.mxu0 0.0
        %5119 = vmatpush1.msra.mxu0 %v5094
        %5120 = vmatprep.subr.mxu0 0.0
        %5121 = vmatpush1.msra.mxu0 %v5095
        %5122 = vmatprep.subr.mxu0 0.0
        %5123 = vmatpush1.msra.mxu0 %v5096
        %5124 = vmatprep.subr.mxu0 0.0
        %5125 = vmatpush1.msra.mxu0 0.0
        %5126 = vmatprep.subr.mxu0 0.0
        %5127 = vmatpush1.msra.mxu0 0.0
        %5128 = vmatprep.subr.mxu0 0.0
        %5129 = vmatpush1.msra.mxu0 0.0
        %5130 = vmatprep.subr.mxu0 0.0
        %5131 = vmatpush1.msra.mxu0 0.0
        %5132 = vmatprep.subr.mxu0 0.0
        %5133 = vmatpush1.msra.mxu0 0.0
        %5134 = vmatprep.subr.mxu0 0.0
        %5135 = vmatpush1.msra.mxu0 0.0
        %5136 = vmatprep.subr.mxu0 0.0
        %5137 = vmatpush1.msra.mxu0 0.0
        %5138 = vmatprep.subr.mxu0 0.0
        %5139 = vmatpush1.msra.mxu0 0.0
        %5140 = vmatprep.subr.mxu0 0.0
        %5141 = vmatpush1.msra.mxu0 0.0
        %5142 = vmatprep.subr.mxu0 0.0
        %5143 = vmatpush1.msra.mxu0 0.0
        %5144 = vmatprep.subr.mxu0 0.0
        %5145 = vmatpush1.msra.mxu0 0.0
        %5146 = vmatprep.subr.mxu0 0.0
        %5147 = vmatpush1.msra.mxu0 0.0
        %5148 = vmatprep.subr.mxu0 0.0
        %5149 = vmatpush1.msra.mxu0 0.0
        %5150 = vmatprep.subr.mxu0 0.0
        %5151 = vmatpush1.msra.mxu0 0.0
        %5152 = vmatprep.subr.mxu0 0.0
        %5153 = vmatpush1.msra.mxu0 0.0
        %5154 = vmatprep.subr.mxu0 0.0
        %5155 = vmatpush1.msra.mxu0 0.0
        %5156 = vmatprep.subr.mxu0 0.0
        %5157 = vmatpush1.msra.mxu0 0.0
        %5158 = vmatprep.subr.mxu0 0.0
        %5159 = vmatpush1.msra.mxu0 0.0
        %5160 = vmatprep.subr.mxu0 0.0
        %5161 = vmatpush1.msra.mxu0 0.0
        %5162 = vmatprep.subr.mxu0 0.0
        %5163 = vmatpush1.msra.mxu0 0.0
        %5164 = vmatprep.subr.mxu0 0.0
        %5165 = vmatpush1.msra.mxu0 0.0
        %5166 = vmatprep.subr.mxu0 0.0
        %5167 = vmatpush1.msra.mxu0 0.0
        %5168 = vmatprep.subr.mxu0 0.0
        %5169 = vmatpush1.msra.mxu0 0.0
        %5170 = vmatprep.subr.mxu0 0.0
        %5171 = vmatpush1.msra.mxu0 0.0
        %5172 = vmatprep.mubr.f32.mxu0 0.0
        %5173 = vmatmul.mubr.f32.gmra.mrb[0].mxu0 %v5106
        %v5174 = vpop.f32.mrb[0].mxu0
        %v5175 = vadd.f32 %v5103, %v5174
        %v5176 = vpop.f32.mrb[0].mxu0
        %5177 = vdwg.mxu0
        %v5178 = vadd.f32 %v5000, %v5175
        %s5179 = scalar_lea.vmem %s19, 1
        %v5180 = vld [vmem:[%s5179] sm:$0x1]
        %s5181 = scalar_lea.vmem %s20, 1
        %v5182 = vld [vmem:[%s5181] sm:$0x1]
        %v5183 = vsel %vm740, %v5178, 0.0
        %5184 = vadd.xlane.f32.xlu0 %v5183
        %v5185 = vpop.xlane.xlu0 %5184
        %v5186 = vmul.f32 %v5185, %v2693
        %v5187 = vsub.f32 %v5178, %v5186
        %v5188 = vmul.f32 %v5187, %v5187
        %v5189 = vsel %vm740, %v5188, 0.0
        %5190 = vadd.xlane.f32.xlu0 %v5189
        %v5191 = vpop.xlane.xlu0 %5190
        %v5192 = vmul.f32 %v5191, %v2693
        %v5193 = vadd.f32 %v5192, 1e-05
        %v5194 = vrsqrt.pop %v5193
        %v5195 = vmul.f32 %v5187, %v5194
        %v5197 = vlaneseq
        %v5198 = vshrl.u32 %v5197, 7
        %v5199 = vsub.s32 0, %v5198
        %v5200 = vrot.slane %v5180, %v5199
        %v5202 = vmul.f32 %v5195, %v5200
        %v5204 = vlaneseq
        %v5205 = vshrl.u32 %v5204, 7
        %v5206 = vsub.s32 0, %v5205
        %v5207 = vrot.slane %v5182, %v5206
        %v5209 = vadd.f32 %v5202, %v5207
        %s5210 = scalar_lea.vmem %s5, 256
        %v5211 = vld [vmem:[%s5210] sm:$0xff]
        %v5212 = vld [vmem:[%s5210 + $0x8] sm:$0xff]
        %v5213 = vld [vmem:[%s5210 + $0x10] sm:$0xff]
        %v5214 = vld [vmem:[%s5210 + $0x18] sm:$0xff]
        %s5215 = scalar_lea.vmem %s6, 8
        %v5216 = vld [vmem:[%s5215] sm:$0x1]
        %v5218 = vlaneseq
        %v5219 = vshrl.u32 %v5218, 7
        %v5220 = vsub.s32 0, %v5219
        %v5221 = vrot.slane %v5216, %v5220
        %v5224 = vsel %vm740, %v5209, 0
        %5226 = vmatprep.subr.mxu0 0.0
        %5227 = vmatpush1.msra.mxu0 %v5211
        %5228 = vmatprep.subr.mxu0 0.0
        %5229 = vmatpush1.msra.mxu0 %v5212
        %5230 = vmatprep.subr.mxu0 0.0
        %5231 = vmatpush1.msra.mxu0 %v5213
        %5232 = vmatprep.subr.mxu0 0.0
        %5233 = vmatpush1.msra.mxu0 %v5214
        %5234 = vmatprep.subr.mxu0 0.0
        %5235 = vmatpush1.msra.mxu0 0.0
        %5236 = vmatprep.subr.mxu0 0.0
        %5237 = vmatpush1.msra.mxu0 0.0
        %5238 = vmatprep.subr.mxu0 0.0
        %5239 = vmatpush1.msra.mxu0 0.0
        %5240 = vmatprep.subr.mxu0 0.0
        %5241 = vmatpush1.msra.mxu0 0.0
        %5242 = vmatprep.subr.mxu0 0.0
        %5243 = vmatpush1.msra.mxu0 0.0
        %5244 = vmatprep.subr.mxu0 0.0
        %5245 = vmatpush1.msra.mxu0 0.0
        %5246 = vmatprep.subr.mxu0 0.0
        %5247 = vmatpush1.msra.mxu0 0.0
        %5248 = vmatprep.subr.mxu0 0.0
        %5249 = vmatpush1.msra.mxu0 0.0
        %5250 = vmatprep.subr.mxu0 0.0
        %5251 = vmatpush1.msra.mxu0 0.0
        %5252 = vmatprep.subr.mxu0 0.0
        %5253 = vmatpush1.msra.mxu0 0.0
        %5254 = vmatprep.subr.mxu0 0.0
        %5255 = vmatpush1.msra.mxu0 0.0
        %5256 = vmatprep.subr.mxu0 0.0
        %5257 = vmatpush1.msra.mxu0 0.0
        %5258 = vmatprep.subr.mxu0 0.0
        %5259 = vmatpush1.msra.mxu0 0.0
        %5260 = vmatprep.subr.mxu0 0.0
        %5261 = vmatpush1.msra.mxu0 0.0
        %5262 = vmatprep.subr.mxu0 0.0
        %5263 = vmatpush1.msra.mxu0 0.0
        %5264 = vmatprep.subr.mxu0 0.0
        %5265 = vmatpush1.msra.mxu0 0.0
        %5266 = vmatprep.subr.mxu0 0.0
        %5267 = vmatpush1.msra.mxu0 0.0
        %5268 = vmatprep.subr.mxu0 0.0
        %5269 = vmatpush1.msra.mxu0 0.0
        %5270 = vmatprep.subr.mxu0 0.0
        %5271 = vmatpush1.msra.mxu0 0.0
        %5272 = vmatprep.subr.mxu0 0.0
        %5273 = vmatpush1.msra.mxu0 0.0
        %5274 = vmatprep.subr.mxu0 0.0
        %5275 = vmatpush1.msra.mxu0 0.0
        %5276 = vmatprep.subr.mxu0 0.0
        %5277 = vmatpush1.msra.mxu0 0.0
        %5278 = vmatprep.subr.mxu0 0.0
        %5279 = vmatpush1.msra.mxu0 0.0
        %5280 = vmatprep.subr.mxu0 0.0
        %5281 = vmatpush1.msra.mxu0 0.0
        %5282 = vmatprep.subr.mxu0 0.0
        %5283 = vmatpush1.msra.mxu0 0.0
        %5284 = vmatprep.subr.mxu0 0.0
        %5285 = vmatpush1.msra.mxu0 0.0
        %5286 = vmatprep.subr.mxu0 0.0
        %5287 = vmatpush1.msra.mxu0 0.0
        %5288 = vmatprep.subr.mxu0 0.0
        %5289 = vmatpush1.msra.mxu0 0.0
        %5290 = vmatprep.mubr.f32.mxu0 0.0
        %5291 = vmatmul.mubr.f32.gmra.mrb[0].mxu0 %v5224
        %v5292 = vpop.f32.mrb[0].mxu0
        %v5293 = vadd.f32 %v5221, %v5292
        %v5294 = vpop.f32.mrb[0].mxu0
        %5295 = vdwg.mxu0
        %s5296 = scalar_lea.vmem %s7, 256
        %v5297 = vld [vmem:[%s5296] sm:$0xff]
        %v5298 = vld [vmem:[%s5296 + $0x8] sm:$0xff]
        %v5299 = vld [vmem:[%s5296 + $0x10] sm:$0xff]
        %v5300 = vld [vmem:[%s5296 + $0x18] sm:$0xff]
        %s5301 = scalar_lea.vmem %s8, 8
        %v5302 = vld [vmem:[%s5301] sm:$0x1]
        %v5304 = vlaneseq
        %v5305 = vshrl.u32 %v5304, 7
        %v5306 = vsub.s32 0, %v5305
        %v5307 = vrot.slane %v5302, %v5306
        %5309 = vmatprep.subr.mxu0 0.0
        %5310 = vmatpush1.msra.mxu0 %v5297
        %5311 = vmatprep.subr.mxu0 0.0
        %5312 = vmatpush1.msra.mxu0 %v5298
        %5313 = vmatprep.subr.mxu0 0.0
        %5314 = vmatpush1.msra.mxu0 %v5299
        %5315 = vmatprep.subr.mxu0 0.0
        %5316 = vmatpush1.msra.mxu0 %v5300
        %5317 = vmatprep.subr.mxu0 0.0
        %5318 = vmatpush1.msra.mxu0 0.0
        %5319 = vmatprep.subr.mxu0 0.0
        %5320 = vmatpush1.msra.mxu0 0.0
        %5321 = vmatprep.subr.mxu0 0.0
        %5322 = vmatpush1.msra.mxu0 0.0
        %5323 = vmatprep.subr.mxu0 0.0
        %5324 = vmatpush1.msra.mxu0 0.0
        %5325 = vmatprep.subr.mxu0 0.0
        %5326 = vmatpush1.msra.mxu0 0.0
        %5327 = vmatprep.subr.mxu0 0.0
        %5328 = vmatpush1.msra.mxu0 0.0
        %5329 = vmatprep.subr.mxu0 0.0
        %5330 = vmatpush1.msra.mxu0 0.0
        %5331 = vmatprep.subr.mxu0 0.0
        %5332 = vmatpush1.msra.mxu0 0.0
        %5333 = vmatprep.subr.mxu0 0.0
        %5334 = vmatpush1.msra.mxu0 0.0
        %5335 = vmatprep.subr.mxu0 0.0
        %5336 = vmatpush1.msra.mxu0 0.0
        %5337 = vmatprep.subr.mxu0 0.0
        %5338 = vmatpush1.msra.mxu0 0.0
        %5339 = vmatprep.subr.mxu0 0.0
        %5340 = vmatpush1.msra.mxu0 0.0
        %5341 = vmatprep.subr.mxu0 0.0
        %5342 = vmatpush1.msra.mxu0 0.0
        %5343 = vmatprep.subr.mxu0 0.0
        %5344 = vmatpush1.msra.mxu0 0.0
        %5345 = vmatprep.subr.mxu0 0.0
        %5346 = vmatpush1.msra.mxu0 0.0
        %5347 = vmatprep.subr.mxu0 0.0
        %5348 = vmatpush1.msra.mxu0 0.0
        %5349 = vmatprep.subr.mxu0 0.0
        %5350 = vmatpush1.msra.mxu0 0.0
        %5351 = vmatprep.subr.mxu0 0.0
        %5352 = vmatpush1.msra.mxu0 0.0
        %5353 = vmatprep.subr.mxu0 0.0
        %5354 = vmatpush1.msra.mxu0 0.0
        %5355 = vmatprep.subr.mxu0 0.0
        %5356 = vmatpush1.msra.mxu0 0.0
        %5357 = vmatprep.subr.mxu0 0.0
        %5358 = vmatpush1.msra.mxu0 0.0
        %5359 = vmatprep.subr.mxu0 0.0
        %5360 = vmatpush1.msra.mxu0 0.0
        %5361 = vmatprep.subr.mxu0 0.0
        %5362 = vmatpush1.msra.mxu0 0.0
        %5363 = vmatprep.subr.mxu0 0.0
        %5364 = vmatpush1.msra.mxu0 0.0
        %5365 = vmatprep.subr.mxu0 0.0
        %5366 = vmatpush1.msra.mxu0 0.0
        %5367 = vmatprep.subr.mxu0 0.0
        %5368 = vmatpush1.msra.mxu0 0.0
        %5369 = vmatprep.subr.mxu0 0.0
        %5370 = vmatpush1.msra.mxu0 0.0
        %5371 = vmatprep.subr.mxu0 0.0
        %5372 = vmatpush1.msra.mxu0 0.0
        %5373 = vmatprep.mubr.f32.mxu0 0.0
        %5374 = vmatmul.mubr.f32.gmra.mrb[0].mxu0 %v5224
        %v5375 = vpop.f32.mrb[0].mxu0
        %v5376 = vadd.f32 %v5307, %v5375
        %v5377 = vpop.f32.mrb[0].mxu0
        %5378 = vdwg.mxu0
        %s5379 = scalar_lea.vmem %s9, 256
        %v5380 = vld [vmem:[%s5379] sm:$0xff]
        %v5381 = vld [vmem:[%s5379 + $0x8] sm:$0xff]
        %v5382 = vld [vmem:[%s5379 + $0x10] sm:$0xff]
        %v5383 = vld [vmem:[%s5379 + $0x18] sm:$0xff]
        %s5384 = scalar_lea.vmem %s10, 8
        %v5385 = vld [vmem:[%s5384] sm:$0x1]
        %v5387 = vlaneseq
        %v5388 = vshrl.u32 %v5387, 7
        %v5389 = vsub.s32 0, %v5388
        %v5390 = vrot.slane %v5385, %v5389
        %5392 = vmatprep.subr.mxu0 0.0
        %5393 = vmatpush1.msra.mxu0 %v5380
        %5394 = vmatprep.subr.mxu0 0.0
        %5395 = vmatpush1.msra.mxu0 %v5381
        %5396 = vmatprep.subr.mxu0 0.0
        %5397 = vmatpush1.msra.mxu0 %v5382
        %5398 = vmatprep.subr.mxu0 0.0
        %5399 = vmatpush1.msra.mxu0 %v5383
        %5400 = vmatprep.subr.mxu0 0.0
        %5401 = vmatpush1.msra.mxu0 0.0
        %5402 = vmatprep.subr.mxu0 0.0
        %5403 = vmatpush1.msra.mxu0 0.0
        %5404 = vmatprep.subr.mxu0 0.0
        %5405 = vmatpush1.msra.mxu0 0.0
        %5406 = vmatprep.subr.mxu0 0.0
        %5407 = vmatpush1.msra.mxu0 0.0
        %5408 = vmatprep.subr.mxu0 0.0
        %5409 = vmatpush1.msra.mxu0 0.0
        %5410 = vmatprep.subr.mxu0 0.0
        %5411 = vmatpush1.msra.mxu0 0.0
        %5412 = vmatprep.subr.mxu0 0.0
        %5413 = vmatpush1.msra.mxu0 0.0
        %5414 = vmatprep.subr.mxu0 0.0
        %5415 = vmatpush1.msra.mxu0 0.0
        %5416 = vmatprep.subr.mxu0 0.0
        %5417 = vmatpush1.msra.mxu0 0.0
        %5418 = vmatprep.subr.mxu0 0.0
        %5419 = vmatpush1.msra.mxu0 0.0
        %5420 = vmatprep.subr.mxu0 0.0
        %5421 = vmatpush1.msra.mxu0 0.0
        %5422 = vmatprep.subr.mxu0 0.0
        %5423 = vmatpush1.msra.mxu0 0.0
        %5424 = vmatprep.subr.mxu0 0.0
        %5425 = vmatpush1.msra.mxu0 0.0
        %5426 = vmatprep.subr.mxu0 0.0
        %5427 = vmatpush1.msra.mxu0 0.0
        %5428 = vmatprep.subr.mxu0 0.0
        %5429 = vmatpush1.msra.mxu0 0.0
        %5430 = vmatprep.subr.mxu0 0.0
        %5431 = vmatpush1.msra.mxu0 0.0
        %5432 = vmatprep.subr.mxu0 0.0
        %5433 = vmatpush1.msra.mxu0 0.0
        %5434 = vmatprep.subr.mxu0 0.0
        %5435 = vmatpush1.msra.mxu0 0.0
        %5436 = vmatprep.subr.mxu0 0.0
        %5437 = vmatpush1.msra.mxu0 0.0
        %5438 = vmatprep.subr.mxu0 0.0
        %5439 = vmatpush1.msra.mxu0 0.0
        %5440 = vmatprep.subr.mxu0 0.0
        %5441 = vmatpush1.msra.mxu0 0.0
        %5442 = vmatprep.subr.mxu0 0.0
        %5443 = vmatpush1.msra.mxu0 0.0
        %5444 = vmatprep.subr.mxu0 0.0
        %5445 = vmatpush1.msra.mxu0 0.0
        %5446 = vmatprep.subr.mxu0 0.0
        %5447 = vmatpush1.msra.mxu0 0.0
        %5448 = vmatprep.subr.mxu0 0.0
        %5449 = vmatpush1.msra.mxu0 0.0
        %5450 = vmatprep.subr.mxu0 0.0
        %5451 = vmatpush1.msra.mxu0 0.0
        %5452 = vmatprep.subr.mxu0 0.0
        %5453 = vmatpush1.msra.mxu0 0.0
        %5454 = vmatprep.subr.mxu0 0.0
        %5455 = vmatpush1.msra.mxu0 0.0
        %5456 = vmatprep.mubr.f32.mxu0 0.0
        %5457 = vmatmul.mubr.f32.gmra.mrb[0].mxu0 %v5224
        %v5458 = vpop.f32.mrb[0].mxu0
        %v5459 = vadd.f32 %v5390, %v5458
        %v5460 = vpop.f32.mrb[0].mxu0
        %5461 = vdwg.mxu0
        %v5463 = vsel %vm976, %v5293, 0
        %v5466 = vsel %vm976, %v5376, 0
        %5468 = vmatprep.subr.mxu0 0.0
        %5469 = vmatpush1.xpose.msra.mxu0 %v5466
        %5470 = vmatprep.subr.mxu0 0.0
        %5471 = vmatpush1.xpose.msra.mxu0 0.0
        %5472 = vmatprep.subr.mxu0 0.0
        %5473 = vmatpush1.xpose.msra.mxu0 0.0
        %5474 = vmatprep.subr.mxu0 0.0
        %5475 = vmatpush1.xpose.msra.mxu0 0.0
        %5476 = vmatprep.subr.mxu0 0.0
        %5477 = vmatpush1.xpose.msra.mxu0 0.0
        %5478 = vmatprep.subr.mxu0 0.0
        %5479 = vmatpush1.xpose.msra.mxu0 0.0
        %5480 = vmatprep.subr.mxu0 0.0
        %5481 = vmatpush1.xpose.msra.mxu0 0.0
        %5482 = vmatprep.subr.mxu0 0.0
        %5483 = vmatpush1.xpose.msra.mxu0 0.0
        %5484 = vmatprep.subr.mxu0 0.0
        %5485 = vmatpush1.xpose.msra.mxu0 0.0
        %5486 = vmatprep.subr.mxu0 0.0
        %5487 = vmatpush1.xpose.msra.mxu0 0.0
        %5488 = vmatprep.subr.mxu0 0.0
        %5489 = vmatpush1.xpose.msra.mxu0 0.0
        %5490 = vmatprep.subr.mxu0 0.0
        %5491 = vmatpush1.xpose.msra.mxu0 0.0
        %5492 = vmatprep.subr.mxu0 0.0
        %5493 = vmatpush1.xpose.msra.mxu0 0.0
        %5494 = vmatprep.subr.mxu0 0.0
        %5495 = vmatpush1.xpose.msra.mxu0 0.0
        %5496 = vmatprep.subr.mxu0 0.0
        %5497 = vmatpush1.xpose.msra.mxu0 0.0
        %5498 = vmatprep.subr.mxu0 0.0
        %5499 = vmatpush1.xpose.msra.mxu0 0.0
        %5500 = vmatprep.subr.mxu0 0.0
        %5501 = vmatpush1.xpose.msra.mxu0 0.0
        %5502 = vmatprep.subr.mxu0 0.0
        %5503 = vmatpush1.xpose.msra.mxu0 0.0
        %5504 = vmatprep.subr.mxu0 0.0
        %5505 = vmatpush1.xpose.msra.mxu0 0.0
        %5506 = vmatprep.subr.mxu0 0.0
        %5507 = vmatpush1.xpose.msra.mxu0 0.0
        %5508 = vmatprep.subr.mxu0 0.0
        %5509 = vmatpush1.xpose.msra.mxu0 0.0
        %5510 = vmatprep.subr.mxu0 0.0
        %5511 = vmatpush1.xpose.msra.mxu0 0.0
        %5512 = vmatprep.subr.mxu0 0.0
        %5513 = vmatpush1.xpose.msra.mxu0 0.0
        %5514 = vmatprep.subr.mxu0 0.0
        %5515 = vmatpush1.xpose.msra.mxu0 0.0
        %5516 = vmatprep.subr.mxu0 0.0
        %5517 = vmatpush1.xpose.msra.mxu0 0.0
        %5518 = vmatprep.subr.mxu0 0.0
        %5519 = vmatpush1.xpose.msra.mxu0 0.0
        %5520 = vmatprep.subr.mxu0 0.0
        %5521 = vmatpush1.xpose.msra.mxu0 0.0
        %5522 = vmatprep.subr.mxu0 0.0
        %5523 = vmatpush1.xpose.msra.mxu0 0.0
        %5524 = vmatprep.subr.mxu0 0.0
        %5525 = vmatpush1.xpose.msra.mxu0 0.0
        %5526 = vmatprep.subr.mxu0 0.0
        %5527 = vmatpush1.xpose.msra.mxu0 0.0
        %5528 = vmatprep.subr.mxu0 0.0
        %5529 = vmatpush1.xpose.msra.mxu0 0.0
        %5530 = vmatprep.subr.mxu0 0.0
        %5531 = vmatpush1.xpose.msra.mxu0 0.0
        %5532 = vmatprep.mubr.f32.mxu0 0.0
        %5533 = vmatmul.mubr.f32.gmra.mrb[0].mxu0 %v5463
        %v5534 = vpop.f32.mrb[0].mxu0
        %v5535 = vadd.f32 0.0, %v5534
        %v5536 = vpop.f32.mrb[0].mxu0
        %5537 = vdwg.mxu0
        %v5538 = vmul.f32 %v5535, 0.35355338
        %v5539 = vadd.f32 %v5538, %v1058
        %v5540 = vsel %vm976, %v5539, -inf
        %5541 = vmax.xlane.f32.xlu0 %v5540
        %v5542 = vpop.xlane.xlu0 %5541
        %v5543 = vsub.f32 %v5539, %v5542
        %v5544 = vmul.f32 %v5543, 1.442695
        %v5545 = vpow.pop %v5544
        %v5546 = vsel %vm976, %v5545, 0.0
        %5547 = vadd.xlane.f32.xlu0 %v5546
        %v5548 = vpop.xlane.xlu0 %5547
        %v5549 = vrcp.pop %v5548
        %v5550 = vmul.f32 %v5545, %v5549
        %v5552 = vsel %vm976, %v5550, 0
        %5554 = vmatprep.subr.mxu0 0.0
        %5555 = vmatpush1.msra.mxu0 %v5459
        %5556 = vmatprep.subr.mxu0 0.0
        %5557 = vmatpush1.msra.mxu0 0.0
        %5558 = vmatprep.subr.mxu0 0.0
        %5559 = vmatpush1.msra.mxu0 0.0
        %5560 = vmatprep.subr.mxu0 0.0
        %5561 = vmatpush1.msra.mxu0 0.0
        %5562 = vmatprep.subr.mxu0 0.0
        %5563 = vmatpush1.msra.mxu0 0.0
        %5564 = vmatprep.subr.mxu0 0.0
        %5565 = vmatpush1.msra.mxu0 0.0
        %5566 = vmatprep.subr.mxu0 0.0
        %5567 = vmatpush1.msra.mxu0 0.0
        %5568 = vmatprep.subr.mxu0 0.0
        %5569 = vmatpush1.msra.mxu0 0.0
        %5570 = vmatprep.subr.mxu0 0.0
        %5571 = vmatpush1.msra.mxu0 0.0
        %5572 = vmatprep.subr.mxu0 0.0
        %5573 = vmatpush1.msra.mxu0 0.0
        %5574 = vmatprep.subr.mxu0 0.0
        %5575 = vmatpush1.msra.mxu0 0.0
        %5576 = vmatprep.subr.mxu0 0.0
        %5577 = vmatpush1.msra.mxu0 0.0
        %5578 = vmatprep.subr.mxu0 0.0
        %5579 = vmatpush1.msra.mxu0 0.0
        %5580 = vmatprep.subr.mxu0 0.0
        %5581 = vmatpush1.msra.mxu0 0.0
        %5582 = vmatprep.subr.mxu0 0.0
        %5583 = vmatpush1.msra.mxu0 0.0
        %5584 = vmatprep.subr.mxu0 0.0
        %5585 = vmatpush1.msra.mxu0 0.0
        %5586 = vmatprep.subr.mxu0 0.0
        %5587 = vmatpush1.msra.mxu0 0.0
        %5588 = vmatprep.subr.mxu0 0.0
        %5589 = vmatpush1.msra.mxu0 0.0
        %5590 = vmatprep.subr.mxu0 0.0
        %5591 = vmatpush1.msra.mxu0 0.0
        %5592 = vmatprep.subr.mxu0 0.0
        %5593 = vmatpush1.msra.mxu0 0.0
        %5594 = vmatprep.subr.mxu0 0.0
        %5595 = vmatpush1.msra.mxu0 0.0
        %5596 = vmatprep.subr.mxu0 0.0
        %5597 = vmatpush1.msra.mxu0 0.0
        %5598 = vmatprep.subr.mxu0 0.0
        %5599 = vmatpush1.msra.mxu0 0.0
        %5600 = vmatprep.subr.mxu0 0.0
        %5601 = vmatpush1.msra.mxu0 0.0
        %5602 = vmatprep.subr.mxu0 0.0
        %5603 = vmatpush1.msra.mxu0 0.0
        %5604 = vmatprep.subr.mxu0 0.0
        %5605 = vmatpush1.msra.mxu0 0.0
        %5606 = vmatprep.subr.mxu0 0.0
        %5607 = vmatpush1.msra.mxu0 0.0
        %5608 = vmatprep.subr.mxu0 0.0
        %5609 = vmatpush1.msra.mxu0 0.0
        %5610 = vmatprep.subr.mxu0 0.0
        %5611 = vmatpush1.msra.mxu0 0.0
        %5612 = vmatprep.subr.mxu0 0.0
        %5613 = vmatpush1.msra.mxu0 0.0
        %5614 = vmatprep.subr.mxu0 0.0
        %5615 = vmatpush1.msra.mxu0 0.0
        %5616 = vmatprep.subr.mxu0 0.0
        %5617 = vmatpush1.msra.mxu0 0.0
        %5618 = vmatprep.mubr.f32.mxu0 0.0
        %5619 = vmatmul.mubr.f32.gmra.mrb[0].mxu0 %v5552
        %v5620 = vpop.f32.mrb[0].mxu0
        %v5621 = vadd.f32 0.0, %v5620
        %v5622 = vpop.f32.mrb[0].mxu0
        %5623 = vdwg.mxu0
        %s5624 = scalar_lea.vmem %s11, 64
        %v5625 = vld [vmem:[%s5624] sm:$0xff]
        %s5626 = scalar_lea.vmem %s5, 288
        %v5627 = vld [vmem:[%s5626] sm:$0xff]
        %v5628 = vld [vmem:[%s5626 + $0x8] sm:$0xff]
        %v5629 = vld [vmem:[%s5626 + $0x10] sm:$0xff]
        %v5630 = vld [vmem:[%s5626 + $0x18] sm:$0xff]
        %s5631 = scalar_lea.vmem %s6, 9
        %v5632 = vld [vmem:[%s5631] sm:$0x1]
        %v5634 = vlaneseq
        %v5635 = vshrl.u32 %v5634, 7
        %v5636 = vsub.s32 0, %v5635
        %v5637 = vrot.slane %v5632, %v5636
        %5639 = vmatprep.subr.mxu0 0.0
        %5640 = vmatpush1.msra.mxu0 %v5627
        %5641 = vmatprep.subr.mxu0 0.0
        %5642 = vmatpush1.msra.mxu0 %v5628
        %5643 = vmatprep.subr.mxu0 0.0
        %5644 = vmatpush1.msra.mxu0 %v5629
        %5645 = vmatprep.subr.mxu0 0.0
        %5646 = vmatpush1.msra.mxu0 %v5630
        %5647 = vmatprep.subr.mxu0 0.0
        %5648 = vmatpush1.msra.mxu0 0.0
        %5649 = vmatprep.subr.mxu0 0.0
        %5650 = vmatpush1.msra.mxu0 0.0
        %5651 = vmatprep.subr.mxu0 0.0
        %5652 = vmatpush1.msra.mxu0 0.0
        %5653 = vmatprep.subr.mxu0 0.0
        %5654 = vmatpush1.msra.mxu0 0.0
        %5655 = vmatprep.subr.mxu0 0.0
        %5656 = vmatpush1.msra.mxu0 0.0
        %5657 = vmatprep.subr.mxu0 0.0
        %5658 = vmatpush1.msra.mxu0 0.0
        %5659 = vmatprep.subr.mxu0 0.0
        %5660 = vmatpush1.msra.mxu0 0.0
        %5661 = vmatprep.subr.mxu0 0.0
        %5662 = vmatpush1.msra.mxu0 0.0
        %5663 = vmatprep.subr.mxu0 0.0
        %5664 = vmatpush1.msra.mxu0 0.0
        %5665 = vmatprep.subr.mxu0 0.0
        %5666 = vmatpush1.msra.mxu0 0.0
        %5667 = vmatprep.subr.mxu0 0.0
        %5668 = vmatpush1.msra.mxu0 0.0
        %5669 = vmatprep.subr.mxu0 0.0
        %5670 = vmatpush1.msra.mxu0 0.0
        %5671 = vmatprep.subr.mxu0 0.0
        %5672 = vmatpush1.msra.mxu0 0.0
        %5673 = vmatprep.subr.mxu0 0.0
        %5674 = vmatpush1.msra.mxu0 0.0
        %5675 = vmatprep.subr.mxu0 0.0
        %5676 = vmatpush1.msra.mxu0 0.0
        %5677 = vmatprep.subr.mxu0 0.0
        %5678 = vmatpush1.msra.mxu0 0.0
        %5679 = vmatprep.subr.mxu0 0.0
        %5680 = vmatpush1.msra.mxu0 0.0
        %5681 = vmatprep.subr.mxu0 0.0
        %5682 = vmatpush1.msra.mxu0 0.0
        %5683 = vmatprep.subr.mxu0 0.0
        %5684 = vmatpush1.msra.mxu0 0.0
        %5685 = vmatprep.subr.mxu0 0.0
        %5686 = vmatpush1.msra.mxu0 0.0
        %5687 = vmatprep.subr.mxu0 0.0
        %5688 = vmatpush1.msra.mxu0 0.0
        %5689 = vmatprep.subr.mxu0 0.0
        %5690 = vmatpush1.msra.mxu0 0.0
        %5691 = vmatprep.subr.mxu0 0.0
        %5692 = vmatpush1.msra.mxu0 0.0
        %5693 = vmatprep.subr.mxu0 0.0
        %5694 = vmatpush1.msra.mxu0 0.0
        %5695 = vmatprep.subr.mxu0 0.0
        %5696 = vmatpush1.msra.mxu0 0.0
        %5697 = vmatprep.subr.mxu0 0.0
        %5698 = vmatpush1.msra.mxu0 0.0
        %5699 = vmatprep.subr.mxu0 0.0
        %5700 = vmatpush1.msra.mxu0 0.0
        %5701 = vmatprep.subr.mxu0 0.0
        %5702 = vmatpush1.msra.mxu0 0.0
        %5703 = vmatprep.mubr.f32.mxu0 0.0
        %5704 = vmatmul.mubr.f32.gmra.mrb[0].mxu0 %v5224
        %v5705 = vpop.f32.mrb[0].mxu0
        %v5706 = vadd.f32 %v5637, %v5705
        %v5707 = vpop.f32.mrb[0].mxu0
        %5708 = vdwg.mxu0
        %s5709 = scalar_lea.vmem %s7, 288
        %v5710 = vld [vmem:[%s5709] sm:$0xff]
        %v5711 = vld [vmem:[%s5709 + $0x8] sm:$0xff]
        %v5712 = vld [vmem:[%s5709 + $0x10] sm:$0xff]
        %v5713 = vld [vmem:[%s5709 + $0x18] sm:$0xff]
        %s5714 = scalar_lea.vmem %s8, 9
        %v5715 = vld [vmem:[%s5714] sm:$0x1]
        %v5717 = vlaneseq
        %v5718 = vshrl.u32 %v5717, 7
        %v5719 = vsub.s32 0, %v5718
        %v5720 = vrot.slane %v5715, %v5719
        %5722 = vmatprep.subr.mxu0 0.0
        %5723 = vmatpush1.msra.mxu0 %v5710
        %5724 = vmatprep.subr.mxu0 0.0
        %5725 = vmatpush1.msra.mxu0 %v5711
        %5726 = vmatprep.subr.mxu0 0.0
        %5727 = vmatpush1.msra.mxu0 %v5712
        %5728 = vmatprep.subr.mxu0 0.0
        %5729 = vmatpush1.msra.mxu0 %v5713
        %5730 = vmatprep.subr.mxu0 0.0
        %5731 = vmatpush1.msra.mxu0 0.0
        %5732 = vmatprep.subr.mxu0 0.0
        %5733 = vmatpush1.msra.mxu0 0.0
        %5734 = vmatprep.subr.mxu0 0.0
        %5735 = vmatpush1.msra.mxu0 0.0
        %5736 = vmatprep.subr.mxu0 0.0
        %5737 = vmatpush1.msra.mxu0 0.0
        %5738 = vmatprep.subr.mxu0 0.0
        %5739 = vmatpush1.msra.mxu0 0.0
        %5740 = vmatprep.subr.mxu0 0.0
        %5741 = vmatpush1.msra.mxu0 0.0
        %5742 = vmatprep.subr.mxu0 0.0
        %5743 = vmatpush1.msra.mxu0 0.0
        %5744 = vmatprep.subr.mxu0 0.0
        %5745 = vmatpush1.msra.mxu0 0.0
        %5746 = vmatprep.subr.mxu0 0.0
        %5747 = vmatpush1.msra.mxu0 0.0
        %5748 = vmatprep.subr.mxu0 0.0
        %5749 = vmatpush1.msra.mxu0 0.0
        %5750 = vmatprep.subr.mxu0 0.0
        %5751 = vmatpush1.msra.mxu0 0.0
        %5752 = vmatprep.subr.mxu0 0.0
        %5753 = vmatpush1.msra.mxu0 0.0
        %5754 = vmatprep.subr.mxu0 0.0
        %5755 = vmatpush1.msra.mxu0 0.0
        %5756 = vmatprep.subr.mxu0 0.0
        %5757 = vmatpush1.msra.mxu0 0.0
        %5758 = vmatprep.subr.mxu0 0.0
        %5759 = vmatpush1.msra.mxu0 0.0
        %5760 = vmatprep.subr.mxu0 0.0
        %5761 = vmatpush1.msra.mxu0 0.0
        %5762 = vmatprep.subr.mxu0 0.0
        %5763 = vmatpush1.msra.mxu0 0.0
        %5764 = vmatprep.subr.mxu0 0.0
        %5765 = vmatpush1.msra.mxu0 0.0
        %5766 = vmatprep.subr.mxu0 0.0
        %5767 = vmatpush1.msra.mxu0 0.0
        %5768 = vmatprep.subr.mxu0 0.0
        %5769 = vmatpush1.msra.mxu0 0.0
        %5770 = vmatprep.subr.mxu0 0.0
        %5771 = vmatpush1.msra.mxu0 0.0
        %5772 = vmatprep.subr.mxu0 0.0
        %5773 = vmatpush1.msra.mxu0 0.0
        %5774 = vmatprep.subr.mxu0 0.0
        %5775 = vmatpush1.msra.mxu0 0.0
        %5776 = vmatprep.subr.mxu0 0.0
        %5777 = vmatpush1.msra.mxu0 0.0
        %5778 = vmatprep.subr.mxu0 0.0
        %5779 = vmatpush1.msra.mxu0 0.0
        %5780 = vmatprep.subr.mxu0 0.0
        %5781 = vmatpush1.msra.mxu0 0.0
        %5782 = vmatprep.subr.mxu0 0.0
        %5783 = vmatpush1.msra.mxu0 0.0
        %5784 = vmatprep.subr.mxu0 0.0
        %5785 = vmatpush1.msra.mxu0 0.0
        %5786 = vmatprep.mubr.f32.mxu0 0.0
        %5787 = vmatmul.mubr.f32.gmra.mrb[0].mxu0 %v5224
        %v5788 = vpop.f32.mrb[0].mxu0
        %v5789 = vadd.f32 %v5720, %v5788
        %v5790 = vpop.f32.mrb[0].mxu0
        %5791 = vdwg.mxu0
        %s5792 = scalar_lea.vmem %s9, 288
        %v5793 = vld [vmem:[%s5792] sm:$0xff]
        %v5794 = vld [vmem:[%s5792 + $0x8] sm:$0xff]
        %v5795 = vld [vmem:[%s5792 + $0x10] sm:$0xff]
        %v5796 = vld [vmem:[%s5792 + $0x18] sm:$0xff]
        %s5797 = scalar_lea.vmem %s10, 9
        %v5798 = vld [vmem:[%s5797] sm:$0x1]
        %v5800 = vlaneseq
        %v5801 = vshrl.u32 %v5800, 7
        %v5802 = vsub.s32 0, %v5801
        %v5803 = vrot.slane %v5798, %v5802
        %5805 = vmatprep.subr.mxu0 0.0
        %5806 = vmatpush1.msra.mxu0 %v5793
        %5807 = vmatprep.subr.mxu0 0.0
        %5808 = vmatpush1.msra.mxu0 %v5794
        %5809 = vmatprep.subr.mxu0 0.0
        %5810 = vmatpush1.msra.mxu0 %v5795
        %5811 = vmatprep.subr.mxu0 0.0
        %5812 = vmatpush1.msra.mxu0 %v5796
        %5813 = vmatprep.subr.mxu0 0.0
        %5814 = vmatpush1.msra.mxu0 0.0
        %5815 = vmatprep.subr.mxu0 0.0
        %5816 = vmatpush1.msra.mxu0 0.0
        %5817 = vmatprep.subr.mxu0 0.0
        %5818 = vmatpush1.msra.mxu0 0.0
        %5819 = vmatprep.subr.mxu0 0.0
        %5820 = vmatpush1.msra.mxu0 0.0
        %5821 = vmatprep.subr.mxu0 0.0
        %5822 = vmatpush1.msra.mxu0 0.0
        %5823 = vmatprep.subr.mxu0 0.0
        %5824 = vmatpush1.msra.mxu0 0.0
        %5825 = vmatprep.subr.mxu0 0.0
        %5826 = vmatpush1.msra.mxu0 0.0
        %5827 = vmatprep.subr.mxu0 0.0
        %5828 = vmatpush1.msra.mxu0 0.0
        %5829 = vmatprep.subr.mxu0 0.0
        %5830 = vmatpush1.msra.mxu0 0.0
        %5831 = vmatprep.subr.mxu0 0.0
        %5832 = vmatpush1.msra.mxu0 0.0
        %5833 = vmatprep.subr.mxu0 0.0
        %5834 = vmatpush1.msra.mxu0 0.0
        %5835 = vmatprep.subr.mxu0 0.0
        %5836 = vmatpush1.msra.mxu0 0.0
        %5837 = vmatprep.subr.mxu0 0.0
        %5838 = vmatpush1.msra.mxu0 0.0
        %5839 = vmatprep.subr.mxu0 0.0
        %5840 = vmatpush1.msra.mxu0 0.0
        %5841 = vmatprep.subr.mxu0 0.0
        %5842 = vmatpush1.msra.mxu0 0.0
        %5843 = vmatprep.subr.mxu0 0.0
        %5844 = vmatpush1.msra.mxu0 0.0
        %5845 = vmatprep.subr.mxu0 0.0
        %5846 = vmatpush1.msra.mxu0 0.0
        %5847 = vmatprep.subr.mxu0 0.0
        %5848 = vmatpush1.msra.mxu0 0.0
        %5849 = vmatprep.subr.mxu0 0.0
        %5850 = vmatpush1.msra.mxu0 0.0
        %5851 = vmatprep.subr.mxu0 0.0
        %5852 = vmatpush1.msra.mxu0 0.0
        %5853 = vmatprep.subr.mxu0 0.0
        %5854 = vmatpush1.msra.mxu0 0.0
        %5855 = vmatprep.subr.mxu0 0.0
        %5856 = vmatpush1.msra.mxu0 0.0
        %5857 = vmatprep.subr.mxu0 0.0
        %5858 = vmatpush1.msra.mxu0 0.0
        %5859 = vmatprep.subr.mxu0 0.0
        %5860 = vmatpush1.msra.mxu0 0.0
        %5861 = vmatprep.subr.mxu0 0.0
        %5862 = vmatpush1.msra.mxu0 0.0
        %5863 = vmatprep.subr.mxu0 0.0
        %5864 = vmatpush1.msra.mxu0 0.0
        %5865 = vmatprep.subr.mxu0 0.0
        %5866 = vmatpush1.msra.mxu0 0.0
        %5867 = vmatprep.subr.mxu0 0.0
        %5868 = vmatpush1.msra.mxu0 0.0
        %5869 = vmatprep.mubr.f32.mxu0 0.0
        %5870 = vmatmul.mubr.f32.gmra.mrb[0].mxu0 %v5224
        %v5871 = vpop.f32.mrb[0].mxu0
        %v5872 = vadd.f32 %v5803, %v5871
        %v5873 = vpop.f32.mrb[0].mxu0
        %5874 = vdwg.mxu0
        %v5876 = vsel %vm976, %v5706, 0
        %v5879 = vsel %vm976, %v5789, 0
        %5881 = vmatprep.subr.mxu0 0.0
        %5882 = vmatpush1.xpose.msra.mxu0 %v5879
        %5883 = vmatprep.subr.mxu0 0.0
        %5884 = vmatpush1.xpose.msra.mxu0 0.0
        %5885 = vmatprep.subr.mxu0 0.0
        %5886 = vmatpush1.xpose.msra.mxu0 0.0
        %5887 = vmatprep.subr.mxu0 0.0
        %5888 = vmatpush1.xpose.msra.mxu0 0.0
        %5889 = vmatprep.subr.mxu0 0.0
        %5890 = vmatpush1.xpose.msra.mxu0 0.0
        %5891 = vmatprep.subr.mxu0 0.0
        %5892 = vmatpush1.xpose.msra.mxu0 0.0
        %5893 = vmatprep.subr.mxu0 0.0
        %5894 = vmatpush1.xpose.msra.mxu0 0.0
        %5895 = vmatprep.subr.mxu0 0.0
        %5896 = vmatpush1.xpose.msra.mxu0 0.0
        %5897 = vmatprep.subr.mxu0 0.0
        %5898 = vmatpush1.xpose.msra.mxu0 0.0
        %5899 = vmatprep.subr.mxu0 0.0
        %5900 = vmatpush1.xpose.msra.mxu0 0.0
        %5901 = vmatprep.subr.mxu0 0.0
        %5902 = vmatpush1.xpose.msra.mxu0 0.0
        %5903 = vmatprep.subr.mxu0 0.0
        %5904 = vmatpush1.xpose.msra.mxu0 0.0
        %5905 = vmatprep.subr.mxu0 0.0
        %5906 = vmatpush1.xpose.msra.mxu0 0.0
        %5907 = vmatprep.subr.mxu0 0.0
        %5908 = vmatpush1.xpose.msra.mxu0 0.0
        %5909 = vmatprep.subr.mxu0 0.0
        %5910 = vmatpush1.xpose.msra.mxu0 0.0
        %5911 = vmatprep.subr.mxu0 0.0
        %5912 = vmatpush1.xpose.msra.mxu0 0.0
        %5913 = vmatprep.subr.mxu0 0.0
        %5914 = vmatpush1.xpose.msra.mxu0 0.0
        %5915 = vmatprep.subr.mxu0 0.0
        %5916 = vmatpush1.xpose.msra.mxu0 0.0
        %5917 = vmatprep.subr.mxu0 0.0
        %5918 = vmatpush1.xpose.msra.mxu0 0.0
        %5919 = vmatprep.subr.mxu0 0.0
        %5920 = vmatpush1.xpose.msra.mxu0 0.0
        %5921 = vmatprep.subr.mxu0 0.0
        %5922 = vmatpush1.xpose.msra.mxu0 0.0
        %5923 = vmatprep.subr.mxu0 0.0
        %5924 = vmatpush1.xpose.msra.mxu0 0.0
        %5925 = vmatprep.subr.mxu0 0.0
        %5926 = vmatpush1.xpose.msra.mxu0 0.0
        %5927 = vmatprep.subr.mxu0 0.0
        %5928 = vmatpush1.xpose.msra.mxu0 0.0
        %5929 = vmatprep.subr.mxu0 0.0
        %5930 = vmatpush1.xpose.msra.mxu0 0.0
        %5931 = vmatprep.subr.mxu0 0.0
        %5932 = vmatpush1.xpose.msra.mxu0 0.0
        %5933 = vmatprep.subr.mxu0 0.0
        %5934 = vmatpush1.xpose.msra.mxu0 0.0
        %5935 = vmatprep.subr.mxu0 0.0
        %5936 = vmatpush1.xpose.msra.mxu0 0.0
        %5937 = vmatprep.subr.mxu0 0.0
        %5938 = vmatpush1.xpose.msra.mxu0 0.0
        %5939 = vmatprep.subr.mxu0 0.0
        %5940 = vmatpush1.xpose.msra.mxu0 0.0
        %5941 = vmatprep.subr.mxu0 0.0
        %5942 = vmatpush1.xpose.msra.mxu0 0.0
        %5943 = vmatprep.subr.mxu0 0.0
        %5944 = vmatpush1.xpose.msra.mxu0 0.0
        %5945 = vmatprep.mubr.f32.mxu0 0.0
        %5946 = vmatmul.mubr.f32.gmra.mrb[0].mxu0 %v5876
        %v5947 = vpop.f32.mrb[0].mxu0
        %v5948 = vadd.f32 0.0, %v5947
        %v5949 = vpop.f32.mrb[0].mxu0
        %5950 = vdwg.mxu0
        %v5951 = vmul.f32 %v5948, 0.35355338
        %v5952 = vadd.f32 %v5951, %v1058
        %v5953 = vsel %vm976, %v5952, -inf
        %5954 = vmax.xlane.f32.xlu0 %v5953
        %v5955 = vpop.xlane.xlu0 %5954
        %v5956 = vsub.f32 %v5952, %v5955
        %v5957 = vmul.f32 %v5956, 1.442695
        %v5958 = vpow.pop %v5957
        %v5959 = vsel %vm976, %v5958, 0.0
        %5960 = vadd.xlane.f32.xlu0 %v5959
        %v5961 = vpop.xlane.xlu0 %5960
        %v5962 = vrcp.pop %v5961
        %v5963 = vmul.f32 %v5958, %v5962
        %v5965 = vsel %vm976, %v5963, 0
        %5967 = vmatprep.subr.mxu0 0.0
        %5968 = vmatpush1.msra.mxu0 %v5872
        %5969 = vmatprep.subr.mxu0 0.0
        %5970 = vmatpush1.msra.mxu0 0.0
        %5971 = vmatprep.subr.mxu0 0.0
        %5972 = vmatpush1.msra.mxu0 0.0
        %5973 = vmatprep.subr.mxu0 0.0
        %5974 = vmatpush1.msra.mxu0 0.0
        %5975 = vmatprep.subr.mxu0 0.0
        %5976 = vmatpush1.msra.mxu0 0.0
        %5977 = vmatprep.subr.mxu0 0.0
        %5978 = vmatpush1.msra.mxu0 0.0
        %5979 = vmatprep.subr.mxu0 0.0
        %5980 = vmatpush1.msra.mxu0 0.0
        %5981 = vmatprep.subr.mxu0 0.0
        %5982 = vmatpush1.msra.mxu0 0.0
        %5983 = vmatprep.subr.mxu0 0.0
        %5984 = vmatpush1.msra.mxu0 0.0
        %5985 = vmatprep.subr.mxu0 0.0
        %5986 = vmatpush1.msra.mxu0 0.0
        %5987 = vmatprep.subr.mxu0 0.0
        %5988 = vmatpush1.msra.mxu0 0.0
        %5989 = vmatprep.subr.mxu0 0.0
        %5990 = vmatpush1.msra.mxu0 0.0
        %5991 = vmatprep.subr.mxu0 0.0
        %5992 = vmatpush1.msra.mxu0 0.0
        %5993 = vmatprep.subr.mxu0 0.0
        %5994 = vmatpush1.msra.mxu0 0.0
        %5995 = vmatprep.subr.mxu0 0.0
        %5996 = vmatpush1.msra.mxu0 0.0
        %5997 = vmatprep.subr.mxu0 0.0
        %5998 = vmatpush1.msra.mxu0 0.0
        %5999 = vmatprep.subr.mxu0 0.0
        %6000 = vmatpush1.msra.mxu0 0.0
        %6001 = vmatprep.subr.mxu0 0.0
        %6002 = vmatpush1.msra.mxu0 0.0
        %6003 = vmatprep.subr.mxu0 0.0
        %6004 = vmatpush1.msra.mxu0 0.0
        %6005 = vmatprep.subr.mxu0 0.0
        %6006 = vmatpush1.msra.mxu0 0.0
        %6007 = vmatprep.subr.mxu0 0.0
        %6008 = vmatpush1.msra.mxu0 0.0
        %6009 = vmatprep.subr.mxu0 0.0
        %6010 = vmatpush1.msra.mxu0 0.0
        %6011 = vmatprep.subr.mxu0 0.0
        %6012 = vmatpush1.msra.mxu0 0.0
        %6013 = vmatprep.subr.mxu0 0.0
        %6014 = vmatpush1.msra.mxu0 0.0
        %6015 = vmatprep.subr.mxu0 0.0
        %6016 = vmatpush1.msra.mxu0 0.0
        %6017 = vmatprep.subr.mxu0 0.0
        %6018 = vmatpush1.msra.mxu0 0.0
        %6019 = vmatprep.subr.mxu0 0.0
        %6020 = vmatpush1.msra.mxu0 0.0
        %6021 = vmatprep.subr.mxu0 0.0
        %6022 = vmatpush1.msra.mxu0 0.0
        %6023 = vmatprep.subr.mxu0 0.0
        %6024 = vmatpush1.msra.mxu0 0.0
        %6025 = vmatprep.subr.mxu0 0.0
        %6026 = vmatpush1.msra.mxu0 0.0
        %6027 = vmatprep.subr.mxu0 0.0
        %6028 = vmatpush1.msra.mxu0 0.0
        %6029 = vmatprep.subr.mxu0 0.0
        %6030 = vmatpush1.msra.mxu0 0.0
        %6031 = vmatprep.mubr.f32.mxu0 0.0
        %6032 = vmatmul.mubr.f32.gmra.mrb[0].mxu0 %v5965
        %v6033 = vpop.f32.mrb[0].mxu0
        %v6034 = vadd.f32 0.0, %v6033
        %v6035 = vpop.f32.mrb[0].mxu0
        %6036 = vdwg.mxu0
        %s6037 = scalar_lea.vmem %s11, 72
        %v6038 = vld [vmem:[%s6037] sm:$0xff]
        %v6040 = vsel %vm976, %v6034, 0
        %6042 = vmatprep.subr.mxu0 0.0
        %6043 = vmatpush1.msra.mxu0 %v6038
        %6044 = vmatprep.subr.mxu0 0.0
        %6045 = vmatpush1.msra.mxu0 0.0
        %6046 = vmatprep.subr.mxu0 0.0
        %6047 = vmatpush1.msra.mxu0 0.0
        %6048 = vmatprep.subr.mxu0 0.0
        %6049 = vmatpush1.msra.mxu0 0.0
        %6050 = vmatprep.subr.mxu0 0.0
        %6051 = vmatpush1.msra.mxu0 0.0
        %6052 = vmatprep.subr.mxu0 0.0
        %6053 = vmatpush1.msra.mxu0 0.0
        %6054 = vmatprep.subr.mxu0 0.0
        %6055 = vmatpush1.msra.mxu0 0.0
        %6056 = vmatprep.subr.mxu0 0.0
        %6057 = vmatpush1.msra.mxu0 0.0
        %6058 = vmatprep.subr.mxu0 0.0
        %6059 = vmatpush1.msra.mxu0 0.0
        %6060 = vmatprep.subr.mxu0 0.0
        %6061 = vmatpush1.msra.mxu0 0.0
        %6062 = vmatprep.subr.mxu0 0.0
        %6063 = vmatpush1.msra.mxu0 0.0
        %6064 = vmatprep.subr.mxu0 0.0
        %6065 = vmatpush1.msra.mxu0 0.0
        %6066 = vmatprep.subr.mxu0 0.0
        %6067 = vmatpush1.msra.mxu0 0.0
        %6068 = vmatprep.subr.mxu0 0.0
        %6069 = vmatpush1.msra.mxu0 0.0
        %6070 = vmatprep.subr.mxu0 0.0
        %6071 = vmatpush1.msra.mxu0 0.0
        %6072 = vmatprep.subr.mxu0 0.0
        %6073 = vmatpush1.msra.mxu0 0.0
        %6074 = vmatprep.subr.mxu0 0.0
        %6075 = vmatpush1.msra.mxu0 0.0
        %6076 = vmatprep.subr.mxu0 0.0
        %6077 = vmatpush1.msra.mxu0 0.0
        %6078 = vmatprep.subr.mxu0 0.0
        %6079 = vmatpush1.msra.mxu0 0.0
        %6080 = vmatprep.subr.mxu0 0.0
        %6081 = vmatpush1.msra.mxu0 0.0
        %6082 = vmatprep.subr.mxu0 0.0
        %6083 = vmatpush1.msra.mxu0 0.0
        %6084 = vmatprep.subr.mxu0 0.0
        %6085 = vmatpush1.msra.mxu0 0.0
        %6086 = vmatprep.subr.mxu0 0.0
        %6087 = vmatpush1.msra.mxu0 0.0
        %6088 = vmatprep.subr.mxu0 0.0
        %6089 = vmatpush1.msra.mxu0 0.0
        %6090 = vmatprep.subr.mxu0 0.0
        %6091 = vmatpush1.msra.mxu0 0.0
        %6092 = vmatprep.subr.mxu0 0.0
        %6093 = vmatpush1.msra.mxu0 0.0
        %6094 = vmatprep.subr.mxu0 0.0
        %6095 = vmatpush1.msra.mxu0 0.0
        %6096 = vmatprep.subr.mxu0 0.0
        %6097 = vmatpush1.msra.mxu0 0.0
        %6098 = vmatprep.subr.mxu0 0.0
        %6099 = vmatpush1.msra.mxu0 0.0
        %6100 = vmatprep.subr.mxu0 0.0
        %6101 = vmatpush1.msra.mxu0 0.0
        %6102 = vmatprep.subr.mxu0 0.0
        %6103 = vmatpush1.msra.mxu0 0.0
        %6104 = vmatprep.subr.mxu0 0.0
        %6105 = vmatpush1.msra.mxu0 0.0
        %6106 = vmatprep.mubr.f32.mxu0 0.0
        %6107 = vmatmul.mubr.f32.gmra.mrb[0].mxu0 %v6040
        %v6108 = vpop.f32.mrb[0].mxu0
        %v6109 = vadd.f32 0.0, %v6108
        %v6110 = vpop.f32.mrb[0].mxu0
        %6111 = vdwg.mxu0
        %v6113 = vsel %vm976, %v5621, 0
        %6115 = vmatprep.subr.mxu0 0.0
        %6116 = vmatpush1.msra.mxu0 %v5625
        %6117 = vmatprep.subr.mxu0 0.0
        %6118 = vmatpush1.msra.mxu0 0.0
        %6119 = vmatprep.subr.mxu0 0.0
        %6120 = vmatpush1.msra.mxu0 0.0
        %6121 = vmatprep.subr.mxu0 0.0
        %6122 = vmatpush1.msra.mxu0 0.0
        %6123 = vmatprep.subr.mxu0 0.0
        %6124 = vmatpush1.msra.mxu0 0.0
        %6125 = vmatprep.subr.mxu0 0.0
        %6126 = vmatpush1.msra.mxu0 0.0
        %6127 = vmatprep.subr.mxu0 0.0
        %6128 = vmatpush1.msra.mxu0 0.0
        %6129 = vmatprep.subr.mxu0 0.0
        %6130 = vmatpush1.msra.mxu0 0.0
        %6131 = vmatprep.subr.mxu0 0.0
        %6132 = vmatpush1.msra.mxu0 0.0
        %6133 = vmatprep.subr.mxu0 0.0
        %6134 = vmatpush1.msra.mxu0 0.0
        %6135 = vmatprep.subr.mxu0 0.0
        %6136 = vmatpush1.msra.mxu0 0.0
        %6137 = vmatprep.subr.mxu0 0.0
        %6138 = vmatpush1.msra.mxu0 0.0
        %6139 = vmatprep.subr.mxu0 0.0
        %6140 = vmatpush1.msra.mxu0 0.0
        %6141 = vmatprep.subr.mxu0 0.0
        %6142 = vmatpush1.msra.mxu0 0.0
        %6143 = vmatprep.subr.mxu0 0.0
        %6144 = vmatpush1.msra.mxu0 0.0
        %6145 = vmatprep.subr.mxu0 0.0
        %6146 = vmatpush1.msra.mxu0 0.0
        %6147 = vmatprep.subr.mxu0 0.0
        %6148 = vmatpush1.msra.mxu0 0.0
        %6149 = vmatprep.subr.mxu0 0.0
        %6150 = vmatpush1.msra.mxu0 0.0
        %6151 = vmatprep.subr.mxu0 0.0
        %6152 = vmatpush1.msra.mxu0 0.0
        %6153 = vmatprep.subr.mxu0 0.0
        %6154 = vmatpush1.msra.mxu0 0.0
        %6155 = vmatprep.subr.mxu0 0.0
        %6156 = vmatpush1.msra.mxu0 0.0
        %6157 = vmatprep.subr.mxu0 0.0
        %6158 = vmatpush1.msra.mxu0 0.0
        %6159 = vmatprep.subr.mxu0 0.0
        %6160 = vmatpush1.msra.mxu0 0.0
        %6161 = vmatprep.subr.mxu0 0.0
        %6162 = vmatpush1.msra.mxu0 0.0
        %6163 = vmatprep.subr.mxu0 0.0
        %6164 = vmatpush1.msra.mxu0 0.0
        %6165 = vmatprep.subr.mxu0 0.0
        %6166 = vmatpush1.msra.mxu0 0.0
        %6167 = vmatprep.subr.mxu0 0.0
        %6168 = vmatpush1.msra.mxu0 0.0
        %6169 = vmatprep.subr.mxu0 0.0
        %6170 = vmatpush1.msra.mxu0 0.0
        %6171 = vmatprep.subr.mxu0 0.0
        %6172 = vmatpush1.msra.mxu0 0.0
        %6173 = vmatprep.subr.mxu0 0.0
        %6174 = vmatpush1.msra.mxu0 0.0
        %6175 = vmatprep.subr.mxu0 0.0
        %6176 = vmatpush1.msra.mxu0 0.0
        %6177 = vmatprep.subr.mxu0 0.0
        %6178 = vmatpush1.msra.mxu0 0.0
        %6179 = vmatprep.mubr.f32.mxu0 0.0
        %6180 = vmatmul.mubr.f32.gmra.mrb[0].mxu0 %v6113
        %v6181 = vpop.f32.mrb[0].mxu0
        %v6182 = vadd.f32 %v6109, %v6181
        %v6183 = vpop.f32.mrb[0].mxu0
        %6184 = vdwg.mxu0
        %s6185 = scalar_lea.vmem %s5, 320
        %v6186 = vld [vmem:[%s6185] sm:$0xff]
        %v6187 = vld [vmem:[%s6185 + $0x8] sm:$0xff]
        %v6188 = vld [vmem:[%s6185 + $0x10] sm:$0xff]
        %v6189 = vld [vmem:[%s6185 + $0x18] sm:$0xff]
        %s6190 = scalar_lea.vmem %s6, 10
        %v6191 = vld [vmem:[%s6190] sm:$0x1]
        %v6193 = vlaneseq
        %v6194 = vshrl.u32 %v6193, 7
        %v6195 = vsub.s32 0, %v6194
        %v6196 = vrot.slane %v6191, %v6195
        %6198 = vmatprep.subr.mxu0 0.0
        %6199 = vmatpush1.msra.mxu0 %v6186
        %6200 = vmatprep.subr.mxu0 0.0
        %6201 = vmatpush1.msra.mxu0 %v6187
        %6202 = vmatprep.subr.mxu0 0.0
        %6203 = vmatpush1.msra.mxu0 %v6188
        %6204 = vmatprep.subr.mxu0 0.0
        %6205 = vmatpush1.msra.mxu0 %v6189
        %6206 = vmatprep.subr.mxu0 0.0
        %6207 = vmatpush1.msra.mxu0 0.0
        %6208 = vmatprep.subr.mxu0 0.0
        %6209 = vmatpush1.msra.mxu0 0.0
        %6210 = vmatprep.subr.mxu0 0.0
        %6211 = vmatpush1.msra.mxu0 0.0
        %6212 = vmatprep.subr.mxu0 0.0
        %6213 = vmatpush1.msra.mxu0 0.0
        %6214 = vmatprep.subr.mxu0 0.0
        %6215 = vmatpush1.msra.mxu0 0.0
        %6216 = vmatprep.subr.mxu0 0.0
        %6217 = vmatpush1.msra.mxu0 0.0
        %6218 = vmatprep.subr.mxu0 0.0
        %6219 = vmatpush1.msra.mxu0 0.0
        %6220 = vmatprep.subr.mxu0 0.0
        %6221 = vmatpush1.msra.mxu0 0.0
        %6222 = vmatprep.subr.mxu0 0.0
        %6223 = vmatpush1.msra.mxu0 0.0
        %6224 = vmatprep.subr.mxu0 0.0
        %6225 = vmatpush1.msra.mxu0 0.0
        %6226 = vmatprep.subr.mxu0 0.0
        %6227 = vmatpush1.msra.mxu0 0.0
        %6228 = vmatprep.subr.mxu0 0.0
        %6229 = vmatpush1.msra.mxu0 0.0
        %6230 = vmatprep.subr.mxu0 0.0
        %6231 = vmatpush1.msra.mxu0 0.0
        %6232 = vmatprep.subr.mxu0 0.0
        %6233 = vmatpush1.msra.mxu0 0.0
        %6234 = vmatprep.subr.mxu0 0.0
        %6235 = vmatpush1.msra.mxu0 0.0
        %6236 = vmatprep.subr.mxu0 0.0
        %6237 = vmatpush1.msra.mxu0 0.0
        %6238 = vmatprep.subr.mxu0 0.0
        %6239 = vmatpush1.msra.mxu0 0.0
        %6240 = vmatprep.subr.mxu0 0.0
        %6241 = vmatpush1.msra.mxu0 0.0
        %6242 = vmatprep.subr.mxu0 0.0
        %6243 = vmatpush1.msra.mxu0 0.0
        %6244 = vmatprep.subr.mxu0 0.0
        %6245 = vmatpush1.msra.mxu0 0.0
        %6246 = vmatprep.subr.mxu0 0.0
        %6247 = vmatpush1.msra.mxu0 0.0
        %6248 = vmatprep.subr.mxu0 0.0
        %6249 = vmatpush1.msra.mxu0 0.0
        %6250 = vmatprep.subr.mxu0 0.0
        %6251 = vmatpush1.msra.mxu0 0.0
        %6252 = vmatprep.subr.mxu0 0.0
        %6253 = vmatpush1.msra.mxu0 0.0
        %6254 = vmatprep.subr.mxu0 0.0
        %6255 = vmatpush1.msra.mxu0 0.0
        %6256 = vmatprep.subr.mxu0 0.0
        %6257 = vmatpush1.msra.mxu0 0.0
        %6258 = vmatprep.subr.mxu0 0.0
        %6259 = vmatpush1.msra.mxu0 0.0
        %6260 = vmatprep.subr.mxu0 0.0
        %6261 = vmatpush1.msra.mxu0 0.0
        %6262 = vmatprep.mubr.f32.mxu0 0.0
        %6263 = vmatmul.mubr.f32.gmra.mrb[0].mxu0 %v5224
        %v6264 = vpop.f32.mrb[0].mxu0
        %v6265 = vadd.f32 %v6196, %v6264
        %v6266 = vpop.f32.mrb[0].mxu0
        %6267 = vdwg.mxu0
        %s6268 = scalar_lea.vmem %s7, 320
        %v6269 = vld [vmem:[%s6268] sm:$0xff]
        %v6270 = vld [vmem:[%s6268 + $0x8] sm:$0xff]
        %v6271 = vld [vmem:[%s6268 + $0x10] sm:$0xff]
        %v6272 = vld [vmem:[%s6268 + $0x18] sm:$0xff]
        %s6273 = scalar_lea.vmem %s8, 10
        %v6274 = vld [vmem:[%s6273] sm:$0x1]
        %v6276 = vlaneseq
        %v6277 = vshrl.u32 %v6276, 7
        %v6278 = vsub.s32 0, %v6277
        %v6279 = vrot.slane %v6274, %v6278
        %6281 = vmatprep.subr.mxu0 0.0
        %6282 = vmatpush1.msra.mxu0 %v6269
        %6283 = vmatprep.subr.mxu0 0.0
        %6284 = vmatpush1.msra.mxu0 %v6270
        %6285 = vmatprep.subr.mxu0 0.0
        %6286 = vmatpush1.msra.mxu0 %v6271
        %6287 = vmatprep.subr.mxu0 0.0
        %6288 = vmatpush1.msra.mxu0 %v6272
        %6289 = vmatprep.subr.mxu0 0.0
        %6290 = vmatpush1.msra.mxu0 0.0
        %6291 = vmatprep.subr.mxu0 0.0
        %6292 = vmatpush1.msra.mxu0 0.0
        %6293 = vmatprep.subr.mxu0 0.0
        %6294 = vmatpush1.msra.mxu0 0.0
        %6295 = vmatprep.subr.mxu0 0.0
        %6296 = vmatpush1.msra.mxu0 0.0
        %6297 = vmatprep.subr.mxu0 0.0
        %6298 = vmatpush1.msra.mxu0 0.0
        %6299 = vmatprep.subr.mxu0 0.0
        %6300 = vmatpush1.msra.mxu0 0.0
        %6301 = vmatprep.subr.mxu0 0.0
        %6302 = vmatpush1.msra.mxu0 0.0
        %6303 = vmatprep.subr.mxu0 0.0
        %6304 = vmatpush1.msra.mxu0 0.0
        %6305 = vmatprep.subr.mxu0 0.0
        %6306 = vmatpush1.msra.mxu0 0.0
        %6307 = vmatprep.subr.mxu0 0.0
        %6308 = vmatpush1.msra.mxu0 0.0
        %6309 = vmatprep.subr.mxu0 0.0
        %6310 = vmatpush1.msra.mxu0 0.0
        %6311 = vmatprep.subr.mxu0 0.0
        %6312 = vmatpush1.msra.mxu0 0.0
        %6313 = vmatprep.subr.mxu0 0.0
        %6314 = vmatpush1.msra.mxu0 0.0
        %6315 = vmatprep.subr.mxu0 0.0
        %6316 = vmatpush1.msra.mxu0 0.0
        %6317 = vmatprep.subr.mxu0 0.0
        %6318 = vmatpush1.msra.mxu0 0.0
        %6319 = vmatprep.subr.mxu0 0.0
        %6320 = vmatpush1.msra.mxu0 0.0
        %6321 = vmatprep.subr.mxu0 0.0
        %6322 = vmatpush1.msra.mxu0 0.0
        %6323 = vmatprep.subr.mxu0 0.0
        %6324 = vmatpush1.msra.mxu0 0.0
        %6325 = vmatprep.subr.mxu0 0.0
        %6326 = vmatpush1.msra.mxu0 0.0
        %6327 = vmatprep.subr.mxu0 0.0
        %6328 = vmatpush1.msra.mxu0 0.0
        %6329 = vmatprep.subr.mxu0 0.0
        %6330 = vmatpush1.msra.mxu0 0.0
        %6331 = vmatprep.subr.mxu0 0.0
        %6332 = vmatpush1.msra.mxu0 0.0
        %6333 = vmatprep.subr.mxu0 0.0
        %6334 = vmatpush1.msra.mxu0 0.0
        %6335 = vmatprep.subr.mxu0 0.0
        %6336 = vmatpush1.msra.mxu0 0.0
        %6337 = vmatprep.subr.mxu0 0.0
        %6338 = vmatpush1.msra.mxu0 0.0
        %6339 = vmatprep.subr.mxu0 0.0
        %6340 = vmatpush1.msra.mxu0 0.0
        %6341 = vmatprep.subr.mxu0 0.0
        %6342 = vmatpush1.msra.mxu0 0.0
        %6343 = vmatprep.subr.mxu0 0.0
        %6344 = vmatpush1.msra.mxu0 0.0
        %6345 = vmatprep.mubr.f32.mxu0 0.0
        %6346 = vmatmul.mubr.f32.gmra.mrb[0].mxu0 %v5224
        %v6347 = vpop.f32.mrb[0].mxu0
        %v6348 = vadd.f32 %v6279, %v6347
        %v6349 = vpop.f32.mrb[0].mxu0
        %6350 = vdwg.mxu0
        %s6351 = scalar_lea.vmem %s9, 320
        %v6352 = vld [vmem:[%s6351] sm:$0xff]
        %v6353 = vld [vmem:[%s6351 + $0x8] sm:$0xff]
        %v6354 = vld [vmem:[%s6351 + $0x10] sm:$0xff]
        %v6355 = vld [vmem:[%s6351 + $0x18] sm:$0xff]
        %s6356 = scalar_lea.vmem %s10, 10
        %v6357 = vld [vmem:[%s6356] sm:$0x1]
        %v6359 = vlaneseq
        %v6360 = vshrl.u32 %v6359, 7
        %v6361 = vsub.s32 0, %v6360
        %v6362 = vrot.slane %v6357, %v6361
        %6364 = vmatprep.subr.mxu0 0.0
        %6365 = vmatpush1.msra.mxu0 %v6352
        %6366 = vmatprep.subr.mxu0 0.0
        %6367 = vmatpush1.msra.mxu0 %v6353
        %6368 = vmatprep.subr.mxu0 0.0
        %6369 = vmatpush1.msra.mxu0 %v6354
        %6370 = vmatprep.subr.mxu0 0.0
        %6371 = vmatpush1.msra.mxu0 %v6355
        %6372 = vmatprep.subr.mxu0 0.0
        %6373 = vmatpush1.msra.mxu0 0.0
        %6374 = vmatprep.subr.mxu0 0.0
        %6375 = vmatpush1.msra.mxu0 0.0
        %6376 = vmatprep.subr.mxu0 0.0
        %6377 = vmatpush1.msra.mxu0 0.0
        %6378 = vmatprep.subr.mxu0 0.0
        %6379 = vmatpush1.msra.mxu0 0.0
        %6380 = vmatprep.subr.mxu0 0.0
        %6381 = vmatpush1.msra.mxu0 0.0
        %6382 = vmatprep.subr.mxu0 0.0
        %6383 = vmatpush1.msra.mxu0 0.0
        %6384 = vmatprep.subr.mxu0 0.0
        %6385 = vmatpush1.msra.mxu0 0.0
        %6386 = vmatprep.subr.mxu0 0.0
        %6387 = vmatpush1.msra.mxu0 0.0
        %6388 = vmatprep.subr.mxu0 0.0
        %6389 = vmatpush1.msra.mxu0 0.0
        %6390 = vmatprep.subr.mxu0 0.0
        %6391 = vmatpush1.msra.mxu0 0.0
        %6392 = vmatprep.subr.mxu0 0.0
        %6393 = vmatpush1.msra.mxu0 0.0
        %6394 = vmatprep.subr.mxu0 0.0
        %6395 = vmatpush1.msra.mxu0 0.0
        %6396 = vmatprep.subr.mxu0 0.0
        %6397 = vmatpush1.msra.mxu0 0.0
        %6398 = vmatprep.subr.mxu0 0.0
        %6399 = vmatpush1.msra.mxu0 0.0
        %6400 = vmatprep.subr.mxu0 0.0
        %6401 = vmatpush1.msra.mxu0 0.0
        %6402 = vmatprep.subr.mxu0 0.0
        %6403 = vmatpush1.msra.mxu0 0.0
        %6404 = vmatprep.subr.mxu0 0.0
        %6405 = vmatpush1.msra.mxu0 0.0
        %6406 = vmatprep.subr.mxu0 0.0
        %6407 = vmatpush1.msra.mxu0 0.0
        %6408 = vmatprep.subr.mxu0 0.0
        %6409 = vmatpush1.msra.mxu0 0.0
        %6410 = vmatprep.subr.mxu0 0.0
        %6411 = vmatpush1.msra.mxu0 0.0
        %6412 = vmatprep.subr.mxu0 0.0
        %6413 = vmatpush1.msra.mxu0 0.0
        %6414 = vmatprep.subr.mxu0 0.0
        %6415 = vmatpush1.msra.mxu0 0.0
        %6416 = vmatprep.subr.mxu0 0.0
        %6417 = vmatpush1.msra.mxu0 0.0
        %6418 = vmatprep.subr.mxu0 0.0
        %6419 = vmatpush1.msra.mxu0 0.0
        %6420 = vmatprep.subr.mxu0 0.0
        %6421 = vmatpush1.msra.mxu0 0.0
        %6422 = vmatprep.subr.mxu0 0.0
        %6423 = vmatpush1.msra.mxu0 0.0
        %6424 = vmatprep.subr.mxu0 0.0
        %6425 = vmatpush1.msra.mxu0 0.0
        %6426 = vmatprep.subr.mxu0 0.0
        %6427 = vmatpush1.msra.mxu0 0.0
        %6428 = vmatprep.mubr.f32.mxu0 0.0
        %6429 = vmatmul.mubr.f32.gmra.mrb[0].mxu0 %v5224
        %v6430 = vpop.f32.mrb[0].mxu0
        %v6431 = vadd.f32 %v6362, %v6430
        %v6432 = vpop.f32.mrb[0].mxu0
        %6433 = vdwg.mxu0
        %v6435 = vsel %vm976, %v6265, 0
        %v6438 = vsel %vm976, %v6348, 0
        %6440 = vmatprep.subr.mxu0 0.0
        %6441 = vmatpush1.xpose.msra.mxu0 %v6438
        %6442 = vmatprep.subr.mxu0 0.0
        %6443 = vmatpush1.xpose.msra.mxu0 0.0
        %6444 = vmatprep.subr.mxu0 0.0
        %6445 = vmatpush1.xpose.msra.mxu0 0.0
        %6446 = vmatprep.subr.mxu0 0.0
        %6447 = vmatpush1.xpose.msra.mxu0 0.0
        %6448 = vmatprep.subr.mxu0 0.0
        %6449 = vmatpush1.xpose.msra.mxu0 0.0
        %6450 = vmatprep.subr.mxu0 0.0
        %6451 = vmatpush1.xpose.msra.mxu0 0.0
        %6452 = vmatprep.subr.mxu0 0.0
        %6453 = vmatpush1.xpose.msra.mxu0 0.0
        %6454 = vmatprep.subr.mxu0 0.0
        %6455 = vmatpush1.xpose.msra.mxu0 0.0
        %6456 = vmatprep.subr.mxu0 0.0
        %6457 = vmatpush1.xpose.msra.mxu0 0.0
        %6458 = vmatprep.subr.mxu0 0.0
        %6459 = vmatpush1.xpose.msra.mxu0 0.0
        %6460 = vmatprep.subr.mxu0 0.0
        %6461 = vmatpush1.xpose.msra.mxu0 0.0
        %6462 = vmatprep.subr.mxu0 0.0
        %6463 = vmatpush1.xpose.msra.mxu0 0.0
        %6464 = vmatprep.subr.mxu0 0.0
        %6465 = vmatpush1.xpose.msra.mxu0 0.0
        %6466 = vmatprep.subr.mxu0 0.0
        %6467 = vmatpush1.xpose.msra.mxu0 0.0
        %6468 = vmatprep.subr.mxu0 0.0
        %6469 = vmatpush1.xpose.msra.mxu0 0.0
        %6470 = vmatprep.subr.mxu0 0.0
        %6471 = vmatpush1.xpose.msra.mxu0 0.0
        %6472 = vmatprep.subr.mxu0 0.0
        %6473 = vmatpush1.xpose.msra.mxu0 0.0
        %6474 = vmatprep.subr.mxu0 0.0
        %6475 = vmatpush1.xpose.msra.mxu0 0.0
        %6476 = vmatprep.subr.mxu0 0.0
        %6477 = vmatpush1.xpose.msra.mxu0 0.0
        %6478 = vmatprep.subr.mxu0 0.0
        %6479 = vmatpush1.xpose.msra.mxu0 0.0
        %6480 = vmatprep.subr.mxu0 0.0
        %6481 = vmatpush1.xpose.msra.mxu0 0.0
        %6482 = vmatprep.subr.mxu0 0.0
        %6483 = vmatpush1.xpose.msra.mxu0 0.0
        %6484 = vmatprep.subr.mxu0 0.0
        %6485 = vmatpush1.xpose.msra.mxu0 0.0
        %6486 = vmatprep.subr.mxu0 0.0
        %6487 = vmatpush1.xpose.msra.mxu0 0.0
        %6488 = vmatprep.subr.mxu0 0.0
        %6489 = vmatpush1.xpose.msra.mxu0 0.0
        %6490 = vmatprep.subr.mxu0 0.0
        %6491 = vmatpush1.xpose.msra.mxu0 0.0
        %6492 = vmatprep.subr.mxu0 0.0
        %6493 = vmatpush1.xpose.msra.mxu0 0.0
        %6494 = vmatprep.subr.mxu0 0.0
        %6495 = vmatpush1.xpose.msra.mxu0 0.0
        %6496 = vmatprep.subr.mxu0 0.0
        %6497 = vmatpush1.xpose.msra.mxu0 0.0
        %6498 = vmatprep.subr.mxu0 0.0
        %6499 = vmatpush1.xpose.msra.mxu0 0.0
        %6500 = vmatprep.subr.mxu0 0.0
        %6501 = vmatpush1.xpose.msra.mxu0 0.0
        %6502 = vmatprep.subr.mxu0 0.0
        %6503 = vmatpush1.xpose.msra.mxu0 0.0
        %6504 = vmatprep.mubr.f32.mxu0 0.0
        %6505 = vmatmul.mubr.f32.gmra.mrb[0].mxu0 %v6435
        %v6506 = vpop.f32.mrb[0].mxu0
        %v6507 = vadd.f32 0.0, %v6506
        %v6508 = vpop.f32.mrb[0].mxu0
        %6509 = vdwg.mxu0
        %v6510 = vmul.f32 %v6507, 0.35355338
        %v6511 = vadd.f32 %v6510, %v1058
        %v6512 = vsel %vm976, %v6511, -inf
        %6513 = vmax.xlane.f32.xlu0 %v6512
        %v6514 = vpop.xlane.xlu0 %6513
        %v6515 = vsub.f32 %v6511, %v6514
        %v6516 = vmul.f32 %v6515, 1.442695
        %v6517 = vpow.pop %v6516
        %v6518 = vsel %vm976, %v6517, 0.0
        %6519 = vadd.xlane.f32.xlu0 %v6518
        %v6520 = vpop.xlane.xlu0 %6519
        %v6521 = vrcp.pop %v6520
        %v6522 = vmul.f32 %v6517, %v6521
        %v6524 = vsel %vm976, %v6522, 0
        %6526 = vmatprep.subr.mxu0 0.0
        %6527 = vmatpush1.msra.mxu0 %v6431
        %6528 = vmatprep.subr.mxu0 0.0
        %6529 = vmatpush1.msra.mxu0 0.0
        %6530 = vmatprep.subr.mxu0 0.0
        %6531 = vmatpush1.msra.mxu0 0.0
        %6532 = vmatprep.subr.mxu0 0.0
        %6533 = vmatpush1.msra.mxu0 0.0
        %6534 = vmatprep.subr.mxu0 0.0
        %6535 = vmatpush1.msra.mxu0 0.0
        %6536 = vmatprep.subr.mxu0 0.0
        %6537 = vmatpush1.msra.mxu0 0.0
        %6538 = vmatprep.subr.mxu0 0.0
        %6539 = vmatpush1.msra.mxu0 0.0
        %6540 = vmatprep.subr.mxu0 0.0
        %6541 = vmatpush1.msra.mxu0 0.0
        %6542 = vmatprep.subr.mxu0 0.0
        %6543 = vmatpush1.msra.mxu0 0.0
        %6544 = vmatprep.subr.mxu0 0.0
        %6545 = vmatpush1.msra.mxu0 0.0
        %6546 = vmatprep.subr.mxu0 0.0
        %6547 = vmatpush1.msra.mxu0 0.0
        %6548 = vmatprep.subr.mxu0 0.0
        %6549 = vmatpush1.msra.mxu0 0.0
        %6550 = vmatprep.subr.mxu0 0.0
        %6551 = vmatpush1.msra.mxu0 0.0
        %6552 = vmatprep.subr.mxu0 0.0
        %6553 = vmatpush1.msra.mxu0 0.0
        %6554 = vmatprep.subr.mxu0 0.0
        %6555 = vmatpush1.msra.mxu0 0.0
        %6556 = vmatprep.subr.mxu0 0.0
        %6557 = vmatpush1.msra.mxu0 0.0
        %6558 = vmatprep.subr.mxu0 0.0
        %6559 = vmatpush1.msra.mxu0 0.0
        %6560 = vmatprep.subr.mxu0 0.0
        %6561 = vmatpush1.msra.mxu0 0.0
        %6562 = vmatprep.subr.mxu0 0.0
        %6563 = vmatpush1.msra.mxu0 0.0
        %6564 = vmatprep.subr.mxu0 0.0
        %6565 = vmatpush1.msra.mxu0 0.0
        %6566 = vmatprep.subr.mxu0 0.0
        %6567 = vmatpush1.msra.mxu0 0.0
        %6568 = vmatprep.subr.mxu0 0.0
        %6569 = vmatpush1.msra.mxu0 0.0
        %6570 = vmatprep.subr.mxu0 0.0
        %6571 = vmatpush1.msra.mxu0 0.0
        %6572 = vmatprep.subr.mxu0 0.0
        %6573 = vmatpush1.msra.mxu0 0.0
        %6574 = vmatprep.subr.mxu0 0.0
        %6575 = vmatpush1.msra.mxu0 0.0
        %6576 = vmatprep.subr.mxu0 0.0
        %6577 = vmatpush1.msra.mxu0 0.0
        %6578 = vmatprep.subr.mxu0 0.0
        %6579 = vmatpush1.msra.mxu0 0.0
        %6580 = vmatprep.subr.mxu0 0.0
        %6581 = vmatpush1.msra.mxu0 0.0
        %6582 = vmatprep.subr.mxu0 0.0
        %6583 = vmatpush1.msra.mxu0 0.0
        %6584 = vmatprep.subr.mxu0 0.0
        %6585 = vmatpush1.msra.mxu0 0.0
        %6586 = vmatprep.subr.mxu0 0.0
        %6587 = vmatpush1.msra.mxu0 0.0
        %6588 = vmatprep.subr.mxu0 0.0
        %6589 = vmatpush1.msra.mxu0 0.0
        %6590 = vmatprep.mubr.f32.mxu0 0.0
        %6591 = vmatmul.mubr.f32.gmra.mrb[0].mxu0 %v6524
        %v6592 = vpop.f32.mrb[0].mxu0
        %v6593 = vadd.f32 0.0, %v6592
        %v6594 = vpop.f32.mrb[0].mxu0
        %6595 = vdwg.mxu0
        %s6596 = scalar_lea.vmem %s11, 80
        %v6597 = vld [vmem:[%s6596] sm:$0xff]
        %v6599 = vsel %vm976, %v6593, 0
        %6601 = vmatprep.subr.mxu0 0.0
        %6602 = vmatpush1.msra.mxu0 %v6597
        %6603 = vmatprep.subr.mxu0 0.0
        %6604 = vmatpush1.msra.mxu0 0.0
        %6605 = vmatprep.subr.mxu0 0.0
        %6606 = vmatpush1.msra.mxu0 0.0
        %6607 = vmatprep.subr.mxu0 0.0
        %6608 = vmatpush1.msra.mxu0 0.0
        %6609 = vmatprep.subr.mxu0 0.0
        %6610 = vmatpush1.msra.mxu0 0.0
        %6611 = vmatprep.subr.mxu0 0.0
        %6612 = vmatpush1.msra.mxu0 0.0
        %6613 = vmatprep.subr.mxu0 0.0
        %6614 = vmatpush1.msra.mxu0 0.0
        %6615 = vmatprep.subr.mxu0 0.0
        %6616 = vmatpush1.msra.mxu0 0.0
        %6617 = vmatprep.subr.mxu0 0.0
        %6618 = vmatpush1.msra.mxu0 0.0
        %6619 = vmatprep.subr.mxu0 0.0
        %6620 = vmatpush1.msra.mxu0 0.0
        %6621 = vmatprep.subr.mxu0 0.0
        %6622 = vmatpush1.msra.mxu0 0.0
        %6623 = vmatprep.subr.mxu0 0.0
        %6624 = vmatpush1.msra.mxu0 0.0
        %6625 = vmatprep.subr.mxu0 0.0
        %6626 = vmatpush1.msra.mxu0 0.0
        %6627 = vmatprep.subr.mxu0 0.0
        %6628 = vmatpush1.msra.mxu0 0.0
        %6629 = vmatprep.subr.mxu0 0.0
        %6630 = vmatpush1.msra.mxu0 0.0
        %6631 = vmatprep.subr.mxu0 0.0
        %6632 = vmatpush1.msra.mxu0 0.0
        %6633 = vmatprep.subr.mxu0 0.0
        %6634 = vmatpush1.msra.mxu0 0.0
        %6635 = vmatprep.subr.mxu0 0.0
        %6636 = vmatpush1.msra.mxu0 0.0
        %6637 = vmatprep.subr.mxu0 0.0
        %6638 = vmatpush1.msra.mxu0 0.0
        %6639 = vmatprep.subr.mxu0 0.0
        %6640 = vmatpush1.msra.mxu0 0.0
        %6641 = vmatprep.subr.mxu0 0.0
        %6642 = vmatpush1.msra.mxu0 0.0
        %6643 = vmatprep.subr.mxu0 0.0
        %6644 = vmatpush1.msra.mxu0 0.0
        %6645 = vmatprep.subr.mxu0 0.0
        %6646 = vmatpush1.msra.mxu0 0.0
        %6647 = vmatprep.subr.mxu0 0.0
        %6648 = vmatpush1.msra.mxu0 0.0
        %6649 = vmatprep.subr.mxu0 0.0
        %6650 = vmatpush1.msra.mxu0 0.0
        %6651 = vmatprep.subr.mxu0 0.0
        %6652 = vmatpush1.msra.mxu0 0.0
        %6653 = vmatprep.subr.mxu0 0.0
        %6654 = vmatpush1.msra.mxu0 0.0
        %6655 = vmatprep.subr.mxu0 0.0
        %6656 = vmatpush1.msra.mxu0 0.0
        %6657 = vmatprep.subr.mxu0 0.0
        %6658 = vmatpush1.msra.mxu0 0.0
        %6659 = vmatprep.subr.mxu0 0.0
        %6660 = vmatpush1.msra.mxu0 0.0
        %6661 = vmatprep.subr.mxu0 0.0
        %6662 = vmatpush1.msra.mxu0 0.0
        %6663 = vmatprep.subr.mxu0 0.0
        %6664 = vmatpush1.msra.mxu0 0.0
        %6665 = vmatprep.mubr.f32.mxu0 0.0
        %6666 = vmatmul.mubr.f32.gmra.mrb[0].mxu0 %v6599
        %v6667 = vpop.f32.mrb[0].mxu0
        %v6668 = vadd.f32 0.0, %v6667
        %v6669 = vpop.f32.mrb[0].mxu0
        %6670 = vdwg.mxu0
        %v6671 = vadd.f32 %v6182, %v6668
        %s6672 = scalar_lea.vmem %s5, 352
        %v6673 = vld [vmem:[%s6672] sm:$0xff]
        %v6674 = vld [vmem:[%s6672 + $0x8] sm:$0xff]
        %v6675 = vld [vmem:[%s6672 + $0x10] sm:$0xff]
        %v6676 = vld [vmem:[%s6672 + $0x18] sm:$0xff]
        %s6677 = scalar_lea.vmem %s6, 11
        %v6678 = vld [vmem:[%s6677] sm:$0x1]
        %v6680 = vlaneseq
        %v6681 = vshrl.u32 %v6680, 7
        %v6682 = vsub.s32 0, %v6681
        %v6683 = vrot.slane %v6678, %v6682
        %6685 = vmatprep.subr.mxu0 0.0
        %6686 = vmatpush1.msra.mxu0 %v6673
        %6687 = vmatprep.subr.mxu0 0.0
        %6688 = vmatpush1.msra.mxu0 %v6674
        %6689 = vmatprep.subr.mxu0 0.0
        %6690 = vmatpush1.msra.mxu0 %v6675
        %6691 = vmatprep.subr.mxu0 0.0
        %6692 = vmatpush1.msra.mxu0 %v6676
        %6693 = vmatprep.subr.mxu0 0.0
        %6694 = vmatpush1.msra.mxu0 0.0
        %6695 = vmatprep.subr.mxu0 0.0
        %6696 = vmatpush1.msra.mxu0 0.0
        %6697 = vmatprep.subr.mxu0 0.0
        %6698 = vmatpush1.msra.mxu0 0.0
        %6699 = vmatprep.subr.mxu0 0.0
        %6700 = vmatpush1.msra.mxu0 0.0
        %6701 = vmatprep.subr.mxu0 0.0
        %6702 = vmatpush1.msra.mxu0 0.0
        %6703 = vmatprep.subr.mxu0 0.0
        %6704 = vmatpush1.msra.mxu0 0.0
        %6705 = vmatprep.subr.mxu0 0.0
        %6706 = vmatpush1.msra.mxu0 0.0
        %6707 = vmatprep.subr.mxu0 0.0
        %6708 = vmatpush1.msra.mxu0 0.0
        %6709 = vmatprep.subr.mxu0 0.0
        %6710 = vmatpush1.msra.mxu0 0.0
        %6711 = vmatprep.subr.mxu0 0.0
        %6712 = vmatpush1.msra.mxu0 0.0
        %6713 = vmatprep.subr.mxu0 0.0
        %6714 = vmatpush1.msra.mxu0 0.0
        %6715 = vmatprep.subr.mxu0 0.0
        %6716 = vmatpush1.msra.mxu0 0.0
        %6717 = vmatprep.subr.mxu0 0.0
        %6718 = vmatpush1.msra.mxu0 0.0
        %6719 = vmatprep.subr.mxu0 0.0
        %6720 = vmatpush1.msra.mxu0 0.0
        %6721 = vmatprep.subr.mxu0 0.0
        %6722 = vmatpush1.msra.mxu0 0.0
        %6723 = vmatprep.subr.mxu0 0.0
        %6724 = vmatpush1.msra.mxu0 0.0
        %6725 = vmatprep.subr.mxu0 0.0
        %6726 = vmatpush1.msra.mxu0 0.0
        %6727 = vmatprep.subr.mxu0 0.0
        %6728 = vmatpush1.msra.mxu0 0.0
        %6729 = vmatprep.subr.mxu0 0.0
        %6730 = vmatpush1.msra.mxu0 0.0
        %6731 = vmatprep.subr.mxu0 0.0
        %6732 = vmatpush1.msra.mxu0 0.0
        %6733 = vmatprep.subr.mxu0 0.0
        %6734 = vmatpush1.msra.mxu0 0.0
        %6735 = vmatprep.subr.mxu0 0.0
        %6736 = vmatpush1.msra.mxu0 0.0
        %6737 = vmatprep.subr.mxu0 0.0
        %6738 = vmatpush1.msra.mxu0 0.0
        %6739 = vmatprep.subr.mxu0 0.0
        %6740 = vmatpush1.msra.mxu0 0.0
        %6741 = vmatprep.subr.mxu0 0.0
        %6742 = vmatpush1.msra.mxu0 0.0
        %6743 = vmatprep.subr.mxu0 0.0
        %6744 = vmatpush1.msra.mxu0 0.0
        %6745 = vmatprep.subr.mxu0 0.0
        %6746 = vmatpush1.msra.mxu0 0.0
        %6747 = vmatprep.subr.mxu0 0.0
        %6748 = vmatpush1.msra.mxu0 0.0
        %6749 = vmatprep.mubr.f32.mxu0 0.0
        %6750 = vmatmul.mubr.f32.gmra.mrb[0].mxu0 %v5224
        %v6751 = vpop.f32.mrb[0].mxu0
        %v6752 = vadd.f32 %v6683, %v6751
        %v6753 = vpop.f32.mrb[0].mxu0
        %6754 = vdwg.mxu0
        %s6755 = scalar_lea.vmem %s7, 352
        %v6756 = vld [vmem:[%s6755] sm:$0xff]
        %v6757 = vld [vmem:[%s6755 + $0x8] sm:$0xff]
        %v6758 = vld [vmem:[%s6755 + $0x10] sm:$0xff]
        %v6759 = vld [vmem:[%s6755 + $0x18] sm:$0xff]
        %s6760 = scalar_lea.vmem %s8, 11
        %v6761 = vld [vmem:[%s6760] sm:$0x1]
        %v6763 = vlaneseq
        %v6764 = vshrl.u32 %v6763, 7
        %v6765 = vsub.s32 0, %v6764
        %v6766 = vrot.slane %v6761, %v6765
        %6768 = vmatprep.subr.mxu0 0.0
        %6769 = vmatpush1.msra.mxu0 %v6756
        %6770 = vmatprep.subr.mxu0 0.0
        %6771 = vmatpush1.msra.mxu0 %v6757
        %6772 = vmatprep.subr.mxu0 0.0
        %6773 = vmatpush1.msra.mxu0 %v6758
        %6774 = vmatprep.subr.mxu0 0.0
        %6775 = vmatpush1.msra.mxu0 %v6759
        %6776 = vmatprep.subr.mxu0 0.0
        %6777 = vmatpush1.msra.mxu0 0.0
        %6778 = vmatprep.subr.mxu0 0.0
        %6779 = vmatpush1.msra.mxu0 0.0
        %6780 = vmatprep.subr.mxu0 0.0
        %6781 = vmatpush1.msra.mxu0 0.0
        %6782 = vmatprep.subr.mxu0 0.0
        %6783 = vmatpush1.msra.mxu0 0.0
        %6784 = vmatprep.subr.mxu0 0.0
        %6785 = vmatpush1.msra.mxu0 0.0
        %6786 = vmatprep.subr.mxu0 0.0
        %6787 = vmatpush1.msra.mxu0 0.0
        %6788 = vmatprep.subr.mxu0 0.0
        %6789 = vmatpush1.msra.mxu0 0.0
        %6790 = vmatprep.subr.mxu0 0.0
        %6791 = vmatpush1.msra.mxu0 0.0
        %6792 = vmatprep.subr.mxu0 0.0
        %6793 = vmatpush1.msra.mxu0 0.0
        %6794 = vmatprep.subr.mxu0 0.0
        %6795 = vmatpush1.msra.mxu0 0.0
        %6796 = vmatprep.subr.mxu0 0.0
        %6797 = vmatpush1.msra.mxu0 0.0
        %6798 = vmatprep.subr.mxu0 0.0
        %6799 = vmatpush1.msra.mxu0 0.0
        %6800 = vmatprep.subr.mxu0 0.0
        %6801 = vmatpush1.msra.mxu0 0.0
        %6802 = vmatprep.subr.mxu0 0.0
        %6803 = vmatpush1.msra.mxu0 0.0
        %6804 = vmatprep.subr.mxu0 0.0
        %6805 = vmatpush1.msra.mxu0 0.0
        %6806 = vmatprep.subr.mxu0 0.0
        %6807 = vmatpush1.msra.mxu0 0.0
        %6808 = vmatprep.subr.mxu0 0.0
        %6809 = vmatpush1.msra.mxu0 0.0
        %6810 = vmatprep.subr.mxu0 0.0
        %6811 = vmatpush1.msra.mxu0 0.0
        %6812 = vmatprep.subr.mxu0 0.0
        %6813 = vmatpush1.msra.mxu0 0.0
        %6814 = vmatprep.subr.mxu0 0.0
        %6815 = vmatpush1.msra.mxu0 0.0
        %6816 = vmatprep.subr.mxu0 0.0
        %6817 = vmatpush1.msra.mxu0 0.0
        %6818 = vmatprep.subr.mxu0 0.0
        %6819 = vmatpush1.msra.mxu0 0.0
        %6820 = vmatprep.subr.mxu0 0.0
        %6821 = vmatpush1.msra.mxu0 0.0
        %6822 = vmatprep.subr.mxu0 0.0
        %6823 = vmatpush1.msra.mxu0 0.0
        %6824 = vmatprep.subr.mxu0 0.0
        %6825 = vmatpush1.msra.mxu0 0.0
        %6826 = vmatprep.subr.mxu0 0.0
        %6827 = vmatpush1.msra.mxu0 0.0
        %6828 = vmatprep.subr.mxu0 0.0
        %6829 = vmatpush1.msra.mxu0 0.0
        %6830 = vmatprep.subr.mxu0 0.0
        %6831 = vmatpush1.msra.mxu0 0.0
        %6832 = vmatprep.mubr.f32.mxu0 0.0
        %6833 = vmatmul.mubr.f32.gmra.mrb[0].mxu0 %v5224
        %v6834 = vpop.f32.mrb[0].mxu0
        %v6835 = vadd.f32 %v6766, %v6834
        %v6836 = vpop.f32.mrb[0].mxu0
        %6837 = vdwg.mxu0
        %s6838 = scalar_lea.vmem %s9, 352
        %v6839 = vld [vmem:[%s6838] sm:$0xff]
        %v6840 = vld [vmem:[%s6838 + $0x8] sm:$0xff]
        %v6841 = vld [vmem:[%s6838 + $0x10] sm:$0xff]
        %v6842 = vld [vmem:[%s6838 + $0x18] sm:$0xff]
        %s6843 = scalar_lea.vmem %s10, 11
        %v6844 = vld [vmem:[%s6843] sm:$0x1]
        %v6846 = vlaneseq
        %v6847 = vshrl.u32 %v6846, 7
        %v6848 = vsub.s32 0, %v6847
        %v6849 = vrot.slane %v6844, %v6848
        %6851 = vmatprep.subr.mxu0 0.0
        %6852 = vmatpush1.msra.mxu0 %v6839
        %6853 = vmatprep.subr.mxu0 0.0
        %6854 = vmatpush1.msra.mxu0 %v6840
        %6855 = vmatprep.subr.mxu0 0.0
        %6856 = vmatpush1.msra.mxu0 %v6841
        %6857 = vmatprep.subr.mxu0 0.0
        %6858 = vmatpush1.msra.mxu0 %v6842
        %6859 = vmatprep.subr.mxu0 0.0
        %6860 = vmatpush1.msra.mxu0 0.0
        %6861 = vmatprep.subr.mxu0 0.0
        %6862 = vmatpush1.msra.mxu0 0.0
        %6863 = vmatprep.subr.mxu0 0.0
        %6864 = vmatpush1.msra.mxu0 0.0
        %6865 = vmatprep.subr.mxu0 0.0
        %6866 = vmatpush1.msra.mxu0 0.0
        %6867 = vmatprep.subr.mxu0 0.0
        %6868 = vmatpush1.msra.mxu0 0.0
        %6869 = vmatprep.subr.mxu0 0.0
        %6870 = vmatpush1.msra.mxu0 0.0
        %6871 = vmatprep.subr.mxu0 0.0
        %6872 = vmatpush1.msra.mxu0 0.0
        %6873 = vmatprep.subr.mxu0 0.0
        %6874 = vmatpush1.msra.mxu0 0.0
        %6875 = vmatprep.subr.mxu0 0.0
        %6876 = vmatpush1.msra.mxu0 0.0
        %6877 = vmatprep.subr.mxu0 0.0
        %6878 = vmatpush1.msra.mxu0 0.0
        %6879 = vmatprep.subr.mxu0 0.0
        %6880 = vmatpush1.msra.mxu0 0.0
        %6881 = vmatprep.subr.mxu0 0.0
        %6882 = vmatpush1.msra.mxu0 0.0
        %6883 = vmatprep.subr.mxu0 0.0
        %6884 = vmatpush1.msra.mxu0 0.0
        %6885 = vmatprep.subr.mxu0 0.0
        %6886 = vmatpush1.msra.mxu0 0.0
        %6887 = vmatprep.subr.mxu0 0.0
        %6888 = vmatpush1.msra.mxu0 0.0
        %6889 = vmatprep.subr.mxu0 0.0
        %6890 = vmatpush1.msra.mxu0 0.0
        %6891 = vmatprep.subr.mxu0 0.0
        %6892 = vmatpush1.msra.mxu0 0.0
        %6893 = vmatprep.subr.mxu0 0.0
        %6894 = vmatpush1.msra.mxu0 0.0
        %6895 = vmatprep.subr.mxu0 0.0
        %6896 = vmatpush1.msra.mxu0 0.0
        %6897 = vmatprep.subr.mxu0 0.0
        %6898 = vmatpush1.msra.mxu0 0.0
        %6899 = vmatprep.subr.mxu0 0.0
        %6900 = vmatpush1.msra.mxu0 0.0
        %6901 = vmatprep.subr.mxu0 0.0
        %6902 = vmatpush1.msra.mxu0 0.0
        %6903 = vmatprep.subr.mxu0 0.0
        %6904 = vmatpush1.msra.mxu0 0.0
        %6905 = vmatprep.subr.mxu0 0.0
        %6906 = vmatpush1.msra.mxu0 0.0
        %6907 = vmatprep.subr.mxu0 0.0
        %6908 = vmatpush1.msra.mxu0 0.0
        %6909 = vmatprep.subr.mxu0 0.0
        %6910 = vmatpush1.msra.mxu0 0.0
        %6911 = vmatprep.subr.mxu0 0.0
        %6912 = vmatpush1.msra.mxu0 0.0
        %6913 = vmatprep.subr.mxu0 0.0
        %6914 = vmatpush1.msra.mxu0 0.0
        %6915 = vmatprep.mubr.f32.mxu0 0.0
        %6916 = vmatmul.mubr.f32.gmra.mrb[0].mxu0 %v5224
        %v6917 = vpop.f32.mrb[0].mxu0
        %v6918 = vadd.f32 %v6849, %v6917
        %v6919 = vpop.f32.mrb[0].mxu0
        %6920 = vdwg.mxu0
        %v6922 = vsel %vm976, %v6752, 0
        %v6925 = vsel %vm976, %v6835, 0
        %6927 = vmatprep.subr.mxu0 0.0
        %6928 = vmatpush1.xpose.msra.mxu0 %v6925
        %6929 = vmatprep.subr.mxu0 0.0
        %6930 = vmatpush1.xpose.msra.mxu0 0.0
        %6931 = vmatprep.subr.mxu0 0.0
        %6932 = vmatpush1.xpose.msra.mxu0 0.0
        %6933 = vmatprep.subr.mxu0 0.0
        %6934 = vmatpush1.xpose.msra.mxu0 0.0
        %6935 = vmatprep.subr.mxu0 0.0
        %6936 = vmatpush1.xpose.msra.mxu0 0.0
        %6937 = vmatprep.subr.mxu0 0.0
        %6938 = vmatpush1.xpose.msra.mxu0 0.0
        %6939 = vmatprep.subr.mxu0 0.0
        %6940 = vmatpush1.xpose.msra.mxu0 0.0
        %6941 = vmatprep.subr.mxu0 0.0
        %6942 = vmatpush1.xpose.msra.mxu0 0.0
        %6943 = vmatprep.subr.mxu0 0.0
        %6944 = vmatpush1.xpose.msra.mxu0 0.0
        %6945 = vmatprep.subr.mxu0 0.0
        %6946 = vmatpush1.xpose.msra.mxu0 0.0
        %6947 = vmatprep.subr.mxu0 0.0
        %6948 = vmatpush1.xpose.msra.mxu0 0.0
        %6949 = vmatprep.subr.mxu0 0.0
        %6950 = vmatpush1.xpose.msra.mxu0 0.0
        %6951 = vmatprep.subr.mxu0 0.0
        %6952 = vmatpush1.xpose.msra.mxu0 0.0
        %6953 = vmatprep.subr.mxu0 0.0
        %6954 = vmatpush1.xpose.msra.mxu0 0.0
        %6955 = vmatprep.subr.mxu0 0.0
        %6956 = vmatpush1.xpose.msra.mxu0 0.0
        %6957 = vmatprep.subr.mxu0 0.0
        %6958 = vmatpush1.xpose.msra.mxu0 0.0
        %6959 = vmatprep.subr.mxu0 0.0
        %6960 = vmatpush1.xpose.msra.mxu0 0.0
        %6961 = vmatprep.subr.mxu0 0.0
        %6962 = vmatpush1.xpose.msra.mxu0 0.0
        %6963 = vmatprep.subr.mxu0 0.0
        %6964 = vmatpush1.xpose.msra.mxu0 0.0
        %6965 = vmatprep.subr.mxu0 0.0
        %6966 = vmatpush1.xpose.msra.mxu0 0.0
        %6967 = vmatprep.subr.mxu0 0.0
        %6968 = vmatpush1.xpose.msra.mxu0 0.0
        %6969 = vmatprep.subr.mxu0 0.0
        %6970 = vmatpush1.xpose.msra.mxu0 0.0
        %6971 = vmatprep.subr.mxu0 0.0
        %6972 = vmatpush1.xpose.msra.mxu0 0.0
        %6973 = vmatprep.subr.mxu0 0.0
        %6974 = vmatpush1.xpose.msra.mxu0 0.0
        %6975 = vmatprep.subr.mxu0 0.0
        %6976 = vmatpush1.xpose.msra.mxu0 0.0
        %6977 = vmatprep.subr.mxu0 0.0
        %6978 = vmatpush1.xpose.msra.mxu0 0.0
        %6979 = vmatprep.subr.mxu0 0.0
        %6980 = vmatpush1.xpose.msra.mxu0 0.0
        %6981 = vmatprep.subr.mxu0 0.0
        %6982 = vmatpush1.xpose.msra.mxu0 0.0
        %6983 = vmatprep.subr.mxu0 0.0
        %6984 = vmatpush1.xpose.msra.mxu0 0.0
        %6985 = vmatprep.subr.mxu0 0.0
        %6986 = vmatpush1.xpose.msra.mxu0 0.0
        %6987 = vmatprep.subr.mxu0 0.0
        %6988 = vmatpush1.xpose.msra.mxu0 0.0
        %6989 = vmatprep.subr.mxu0 0.0
        %6990 = vmatpush1.xpose.msra.mxu0 0.0
        %6991 = vmatprep.mubr.f32.mxu0 0.0
        %6992 = vmatmul.mubr.f32.gmra.mrb[0].mxu0 %v6922
        %v6993 = vpop.f32.mrb[0].mxu0
        %v6994 = vadd.f32 0.0, %v6993
        %v6995 = vpop.f32.mrb[0].mxu0
        %6996 = vdwg.mxu0
        %v6997 = vmul.f32 %v6994, 0.35355338
        %v6998 = vadd.f32 %v6997, %v1058
        %v6999 = vsel %vm976, %v6998, -inf
        %7000 = vmax.xlane.f32.xlu0 %v6999
        %v7001 = vpop.xlane.xlu0 %7000
        %v7002 = vsub.f32 %v6998, %v7001
        %v7003 = vmul.f32 %v7002, 1.442695
        %v7004 = vpow.pop %v7003
        %v7005 = vsel %vm976, %v7004, 0.0
        %7006 = vadd.xlane.f32.xlu0 %v7005
        %v7007 = vpop.xlane.xlu0 %7006
        %v7008 = vrcp.pop %v7007
        %v7009 = vmul.f32 %v7004, %v7008
        %v7011 = vsel %vm976, %v7009, 0
        %7013 = vmatprep.subr.mxu0 0.0
        %7014 = vmatpush1.msra.mxu0 %v6918
        %7015 = vmatprep.subr.mxu0 0.0
        %7016 = vmatpush1.msra.mxu0 0.0
        %7017 = vmatprep.subr.mxu0 0.0
        %7018 = vmatpush1.msra.mxu0 0.0
        %7019 = vmatprep.subr.mxu0 0.0
        %7020 = vmatpush1.msra.mxu0 0.0
        %7021 = vmatprep.subr.mxu0 0.0
        %7022 = vmatpush1.msra.mxu0 0.0
        %7023 = vmatprep.subr.mxu0 0.0
        %7024 = vmatpush1.msra.mxu0 0.0
        %7025 = vmatprep.subr.mxu0 0.0
        %7026 = vmatpush1.msra.mxu0 0.0
        %7027 = vmatprep.subr.mxu0 0.0
        %7028 = vmatpush1.msra.mxu0 0.0
        %7029 = vmatprep.subr.mxu0 0.0
        %7030 = vmatpush1.msra.mxu0 0.0
        %7031 = vmatprep.subr.mxu0 0.0
        %7032 = vmatpush1.msra.mxu0 0.0
        %7033 = vmatprep.subr.mxu0 0.0
        %7034 = vmatpush1.msra.mxu0 0.0
        %7035 = vmatprep.subr.mxu0 0.0
        %7036 = vmatpush1.msra.mxu0 0.0
        %7037 = vmatprep.subr.mxu0 0.0
        %7038 = vmatpush1.msra.mxu0 0.0
        %7039 = vmatprep.subr.mxu0 0.0
        %7040 = vmatpush1.msra.mxu0 0.0
        %7041 = vmatprep.subr.mxu0 0.0
        %7042 = vmatpush1.msra.mxu0 0.0
        %7043 = vmatprep.subr.mxu0 0.0
        %7044 = vmatpush1.msra.mxu0 0.0
        %7045 = vmatprep.subr.mxu0 0.0
        %7046 = vmatpush1.msra.mxu0 0.0
        %7047 = vmatprep.subr.mxu0 0.0
        %7048 = vmatpush1.msra.mxu0 0.0
        %7049 = vmatprep.subr.mxu0 0.0
        %7050 = vmatpush1.msra.mxu0 0.0
        %7051 = vmatprep.subr.mxu0 0.0
        %7052 = vmatpush1.msra.mxu0 0.0
        %7053 = vmatprep.subr.mxu0 0.0
        %7054 = vmatpush1.msra.mxu0 0.0
        %7055 = vmatprep.subr.mxu0 0.0
        %7056 = vmatpush1.msra.mxu0 0.0
        %7057 = vmatprep.subr.mxu0 0.0
        %7058 = vmatpush1.msra.mxu0 0.0
        %7059 = vmatprep.subr.mxu0 0.0
        %7060 = vmatpush1.msra.mxu0 0.0
        %7061 = vmatprep.subr.mxu0 0.0
        %7062 = vmatpush1.msra.mxu0 0.0
        %7063 = vmatprep.subr.mxu0 0.0
        %7064 = vmatpush1.msra.mxu0 0.0
        %7065 = vmatprep.subr.mxu0 0.0
        %7066 = vmatpush1.msra.mxu0 0.0
        %7067 = vmatprep.subr.mxu0 0.0
        %7068 = vmatpush1.msra.mxu0 0.0
        %7069 = vmatprep.subr.mxu0 0.0
        %7070 = vmatpush1.msra.mxu0 0.0
        %7071 = vmatprep.subr.mxu0 0.0
        %7072 = vmatpush1.msra.mxu0 0.0
        %7073 = vmatprep.subr.mxu0 0.0
        %7074 = vmatpush1.msra.mxu0 0.0
        %7075 = vmatprep.subr.mxu0 0.0
        %7076 = vmatpush1.msra.mxu0 0.0
        %7077 = vmatprep.mubr.f32.mxu0 0.0
        %7078 = vmatmul.mubr.f32.gmra.mrb[0].mxu0 %v7011
        %v7079 = vpop.f32.mrb[0].mxu0
        %v7080 = vadd.f32 0.0, %v7079
        %v7081 = vpop.f32.mrb[0].mxu0
        %7082 = vdwg.mxu0
        %s7083 = scalar_lea.vmem %s11, 88
        %v7084 = vld [vmem:[%s7083] sm:$0xff]
        %v7086 = vsel %vm976, %v7080, 0
        %7088 = vmatprep.subr.mxu0 0.0
        %7089 = vmatpush1.msra.mxu0 %v7084
        %7090 = vmatprep.subr.mxu0 0.0
        %7091 = vmatpush1.msra.mxu0 0.0
        %7092 = vmatprep.subr.mxu0 0.0
        %7093 = vmatpush1.msra.mxu0 0.0
        %7094 = vmatprep.subr.mxu0 0.0
        %7095 = vmatpush1.msra.mxu0 0.0
        %7096 = vmatprep.subr.mxu0 0.0
        %7097 = vmatpush1.msra.mxu0 0.0
        %7098 = vmatprep.subr.mxu0 0.0
        %7099 = vmatpush1.msra.mxu0 0.0
        %7100 = vmatprep.subr.mxu0 0.0
        %7101 = vmatpush1.msra.mxu0 0.0
        %7102 = vmatprep.subr.mxu0 0.0
        %7103 = vmatpush1.msra.mxu0 0.0
        %7104 = vmatprep.subr.mxu0 0.0
        %7105 = vmatpush1.msra.mxu0 0.0
        %7106 = vmatprep.subr.mxu0 0.0
        %7107 = vmatpush1.msra.mxu0 0.0
        %7108 = vmatprep.subr.mxu0 0.0
        %7109 = vmatpush1.msra.mxu0 0.0
        %7110 = vmatprep.subr.mxu0 0.0
        %7111 = vmatpush1.msra.mxu0 0.0
        %7112 = vmatprep.subr.mxu0 0.0
        %7113 = vmatpush1.msra.mxu0 0.0
        %7114 = vmatprep.subr.mxu0 0.0
        %7115 = vmatpush1.msra.mxu0 0.0
        %7116 = vmatprep.subr.mxu0 0.0
        %7117 = vmatpush1.msra.mxu0 0.0
        %7118 = vmatprep.subr.mxu0 0.0
        %7119 = vmatpush1.msra.mxu0 0.0
        %7120 = vmatprep.subr.mxu0 0.0
        %7121 = vmatpush1.msra.mxu0 0.0
        %7122 = vmatprep.subr.mxu0 0.0
        %7123 = vmatpush1.msra.mxu0 0.0
        %7124 = vmatprep.subr.mxu0 0.0
        %7125 = vmatpush1.msra.mxu0 0.0
        %7126 = vmatprep.subr.mxu0 0.0
        %7127 = vmatpush1.msra.mxu0 0.0
        %7128 = vmatprep.subr.mxu0 0.0
        %7129 = vmatpush1.msra.mxu0 0.0
        %7130 = vmatprep.subr.mxu0 0.0
        %7131 = vmatpush1.msra.mxu0 0.0
        %7132 = vmatprep.subr.mxu0 0.0
        %7133 = vmatpush1.msra.mxu0 0.0
        %7134 = vmatprep.subr.mxu0 0.0
        %7135 = vmatpush1.msra.mxu0 0.0
        %7136 = vmatprep.subr.mxu0 0.0
        %7137 = vmatpush1.msra.mxu0 0.0
        %7138 = vmatprep.subr.mxu0 0.0
        %7139 = vmatpush1.msra.mxu0 0.0
        %7140 = vmatprep.subr.mxu0 0.0
        %7141 = vmatpush1.msra.mxu0 0.0
        %7142 = vmatprep.subr.mxu0 0.0
        %7143 = vmatpush1.msra.mxu0 0.0
        %7144 = vmatprep.subr.mxu0 0.0
        %7145 = vmatpush1.msra.mxu0 0.0
        %7146 = vmatprep.subr.mxu0 0.0
        %7147 = vmatpush1.msra.mxu0 0.0
        %7148 = vmatprep.subr.mxu0 0.0
        %7149 = vmatpush1.msra.mxu0 0.0
        %7150 = vmatprep.subr.mxu0 0.0
        %7151 = vmatpush1.msra.mxu0 0.0
        %7152 = vmatprep.mubr.f32.mxu0 0.0
        %7153 = vmatmul.mubr.f32.gmra.mrb[0].mxu0 %v7086
        %v7154 = vpop.f32.mrb[0].mxu0
        %v7155 = vadd.f32 0.0, %v7154
        %v7156 = vpop.f32.mrb[0].mxu0
        %7157 = vdwg.mxu0
        %v7158 = vadd.f32 %v6671, %v7155
        %s7159 = scalar_lea.vmem %s12, 2
        %v7160 = vld [vmem:[%s7159] sm:$0x1]
        %v7162 = vlaneseq
        %v7163 = vshrl.u32 %v7162, 7
        %v7164 = vsub.s32 0, %v7163
        %v7165 = vrot.slane %v7160, %v7164
        %v7167 = vadd.f32 %v7158, %v7165
        %v7168 = vadd.f32 %v5209, %v7167
        %s7169 = scalar_lea.vmem %s17, 2
        %v7170 = vld [vmem:[%s7169] sm:$0x1]
        %s7171 = scalar_lea.vmem %s18, 2
        %v7172 = vld [vmem:[%s7171] sm:$0x1]
        %v7173 = vsel %vm740, %v7168, 0.0
        %7174 = vadd.xlane.f32.xlu0 %v7173
        %v7175 = vpop.xlane.xlu0 %7174
        %v7176 = vmul.f32 %v7175, %v2693
        %v7177 = vsub.f32 %v7168, %v7176
        %v7178 = vmul.f32 %v7177, %v7177
        %v7179 = vsel %vm740, %v7178, 0.0
        %7180 = vadd.xlane.f32.xlu0 %v7179
        %v7181 = vpop.xlane.xlu0 %7180
        %v7182 = vmul.f32 %v7181, %v2693
        %v7183 = vadd.f32 %v7182, 1e-05
        %v7184 = vrsqrt.pop %v7183
        %v7185 = vmul.f32 %v7177, %v7184
        %v7187 = vlaneseq
        %v7188 = vshrl.u32 %v7187, 7
        %v7189 = vsub.s32 0, %v7188
        %v7190 = vrot.slane %v7170, %v7189
        %v7192 = vmul.f32 %v7185, %v7190
        %v7194 = vlaneseq
        %v7195 = vshrl.u32 %v7194, 7
        %v7196 = vsub.s32 0, %v7195
        %v7197 = vrot.slane %v7172, %v7196
        %v7199 = vadd.f32 %v7192, %v7197
        %s7200 = scalar_lea.vmem %s13, 64
        %v7201 = vld [vmem:[%s7200] sm:$0xff]
        %v7202 = vld [vmem:[%s7200 + $0x8] sm:$0xff]
        %v7203 = vld [vmem:[%s7200 + $0x10] sm:$0xff]
        %v7204 = vld [vmem:[%s7200 + $0x18] sm:$0xff]
        %s7205 = scalar_lea.vmem %s14, 2
        %v7206 = vld [vmem:[%s7205] sm:$0x1]
        %v7208 = vlaneseq
        %v7209 = vshrl.u32 %v7208, 7
        %v7210 = vsub.s32 0, %v7209
        %v7211 = vrot.slane %v7206, %v7210
        %v7214 = vsel %vm740, %v7199, 0
        %7216 = vmatprep.subr.mxu0 0.0
        %7217 = vmatpush1.msra.mxu0 %v7201
        %7218 = vmatprep.subr.mxu0 0.0
        %7219 = vmatpush1.msra.mxu0 %v7202
        %7220 = vmatprep.subr.mxu0 0.0
        %7221 = vmatpush1.msra.mxu0 %v7203
        %7222 = vmatprep.subr.mxu0 0.0
        %7223 = vmatpush1.msra.mxu0 %v7204
        %7224 = vmatprep.subr.mxu0 0.0
        %7225 = vmatpush1.msra.mxu0 0.0
        %7226 = vmatprep.subr.mxu0 0.0
        %7227 = vmatpush1.msra.mxu0 0.0
        %7228 = vmatprep.subr.mxu0 0.0
        %7229 = vmatpush1.msra.mxu0 0.0
        %7230 = vmatprep.subr.mxu0 0.0
        %7231 = vmatpush1.msra.mxu0 0.0
        %7232 = vmatprep.subr.mxu0 0.0
        %7233 = vmatpush1.msra.mxu0 0.0
        %7234 = vmatprep.subr.mxu0 0.0
        %7235 = vmatpush1.msra.mxu0 0.0
        %7236 = vmatprep.subr.mxu0 0.0
        %7237 = vmatpush1.msra.mxu0 0.0
        %7238 = vmatprep.subr.mxu0 0.0
        %7239 = vmatpush1.msra.mxu0 0.0
        %7240 = vmatprep.subr.mxu0 0.0
        %7241 = vmatpush1.msra.mxu0 0.0
        %7242 = vmatprep.subr.mxu0 0.0
        %7243 = vmatpush1.msra.mxu0 0.0
        %7244 = vmatprep.subr.mxu0 0.0
        %7245 = vmatpush1.msra.mxu0 0.0
        %7246 = vmatprep.subr.mxu0 0.0
        %7247 = vmatpush1.msra.mxu0 0.0
        %7248 = vmatprep.subr.mxu0 0.0
        %7249 = vmatpush1.msra.mxu0 0.0
        %7250 = vmatprep.subr.mxu0 0.0
        %7251 = vmatpush1.msra.mxu0 0.0
        %7252 = vmatprep.subr.mxu0 0.0
        %7253 = vmatpush1.msra.mxu0 0.0
        %7254 = vmatprep.subr.mxu0 0.0
        %7255 = vmatpush1.msra.mxu0 0.0
        %7256 = vmatprep.subr.mxu0 0.0
        %7257 = vmatpush1.msra.mxu0 0.0
        %7258 = vmatprep.subr.mxu0 0.0
        %7259 = vmatpush1.msra.mxu0 0.0
        %7260 = vmatprep.subr.mxu0 0.0
        %7261 = vmatpush1.msra.mxu0 0.0
        %7262 = vmatprep.subr.mxu0 0.0
        %7263 = vmatpush1.msra.mxu0 0.0
        %7264 = vmatprep.subr.mxu0 0.0
        %7265 = vmatpush1.msra.mxu0 0.0
        %7266 = vmatprep.subr.mxu0 0.0
        %7267 = vmatpush1.msra.mxu0 0.0
        %7268 = vmatprep.subr.mxu0 0.0
        %7269 = vmatpush1.msra.mxu0 0.0
        %7270 = vmatprep.subr.mxu0 0.0
        %7271 = vmatpush1.msra.mxu0 0.0
        %7272 = vmatprep.subr.mxu0 0.0
        %7273 = vmatpush1.msra.mxu0 0.0
        %7274 = vmatprep.subr.mxu0 0.0
        %7275 = vmatpush1.msra.mxu0 0.0
        %7276 = vmatprep.subr.mxu0 0.0
        %7277 = vmatpush1.msra.mxu0 0.0
        %7278 = vmatprep.subr.mxu0 0.0
        %7279 = vmatpush1.msra.mxu0 0.0
        %7280 = vmatprep.mubr.f32.mxu0 0.0
        %7281 = vmatmul.mubr.f32.gmra.mrb[0].mxu0 %v7214
        %v7282 = vpop.f32.mrb[0].mxu0
        %v7283 = vadd.f32 %v7211, %v7282
        %v7284 = vpop.f32.mrb[0].mxu0
        %7285 = vdwg.mxu0
        %v7286 = vmax.f32 %v7283, 0.0
        %s7287 = scalar_lea.vmem %s15, 128
        %v7288 = vld [vmem:[%s7287] sm:$0xff]
        %v7289 = vld [vmem:[%s7287 + $0x8] sm:$0xff]
        %v7290 = vld [vmem:[%s7287 + $0x10] sm:$0xff]
        %v7291 = vld [vmem:[%s7287 + $0x18] sm:$0xff]
        %v7292 = vld [vmem:[%s7287 + $0x20] sm:$0xff]
        %v7293 = vld [vmem:[%s7287 + $0x28] sm:$0xff]
        %v7294 = vld [vmem:[%s7287 + $0x30] sm:$0xff]
        %v7295 = vld [vmem:[%s7287 + $0x38] sm:$0xff]
        %s7296 = scalar_lea.vmem %s16, 2
        %v7297 = vld [vmem:[%s7296] sm:$0x1]
        %v7299 = vlaneseq
        %v7300 = vshrl.u32 %v7299, 7
        %v7301 = vsub.s32 0, %v7300
        %v7302 = vrot.slane %v7297, %v7301
        %v7305 = vsel %vm2818, %v7286, 0
        %7307 = vmatprep.subr.mxu0 0.0
        %7308 = vmatpush1.msra.mxu0 %v7288
        %7309 = vmatprep.subr.mxu0 0.0
        %7310 = vmatpush1.msra.mxu0 %v7289
        %7311 = vmatprep.subr.mxu0 0.0
        %7312 = vmatpush1.msra.mxu0 %v7290
        %7313 = vmatprep.subr.mxu0 0.0
        %7314 = vmatpush1.msra.mxu0 %v7291
        %7315 = vmatprep.subr.mxu0 0.0
        %7316 = vmatpush1.msra.mxu0 %v7292
        %7317 = vmatprep.subr.mxu0 0.0
        %7318 = vmatpush1.msra.mxu0 %v7293
        %7319 = vmatprep.subr.mxu0 0.0
        %7320 = vmatpush1.msra.mxu0 %v7294
        %7321 = vmatprep.subr.mxu0 0.0
        %7322 = vmatpush1.msra.mxu0 %v7295
        %7323 = vmatprep.subr.mxu0 0.0
        %7324 = vmatpush1.msra.mxu0 0.0
        %7325 = vmatprep.subr.mxu0 0.0
        %7326 = vmatpush1.msra.mxu0 0.0
        %7327 = vmatprep.subr.mxu0 0.0
        %7328 = vmatpush1.msra.mxu0 0.0
        %7329 = vmatprep.subr.mxu0 0.0
        %7330 = vmatpush1.msra.mxu0 0.0
        %7331 = vmatprep.subr.mxu0 0.0
        %7332 = vmatpush1.msra.mxu0 0.0
        %7333 = vmatprep.subr.mxu0 0.0
        %7334 = vmatpush1.msra.mxu0 0.0
        %7335 = vmatprep.subr.mxu0 0.0
        %7336 = vmatpush1.msra.mxu0 0.0
        %7337 = vmatprep.subr.mxu0 0.0
        %7338 = vmatpush1.msra.mxu0 0.0
        %7339 = vmatprep.subr.mxu0 0.0
        %7340 = vmatpush1.msra.mxu0 0.0
        %7341 = vmatprep.subr.mxu0 0.0
        %7342 = vmatpush1.msra.mxu0 0.0
        %7343 = vmatprep.subr.mxu0 0.0
        %7344 = vmatpush1.msra.mxu0 0.0
        %7345 = vmatprep.subr.mxu0 0.0
        %7346 = vmatpush1.msra.mxu0 0.0
        %7347 = vmatprep.subr.mxu0 0.0
        %7348 = vmatpush1.msra.mxu0 0.0
        %7349 = vmatprep.subr.mxu0 0.0
        %7350 = vmatpush1.msra.mxu0 0.0
        %7351 = vmatprep.subr.mxu0 0.0
        %7352 = vmatpush1.msra.mxu0 0.0
        %7353 = vmatprep.subr.mxu0 0.0
        %7354 = vmatpush1.msra.mxu0 0.0
        %7355 = vmatprep.subr.mxu0 0.0
        %7356 = vmatpush1.msra.mxu0 0.0
        %7357 = vmatprep.subr.mxu0 0.0
        %7358 = vmatpush1.msra.mxu0 0.0
        %7359 = vmatprep.subr.mxu0 0.0
        %7360 = vmatpush1.msra.mxu0 0.0
        %7361 = vmatprep.subr.mxu0 0.0
        %7362 = vmatpush1.msra.mxu0 0.0
        %7363 = vmatprep.subr.mxu0 0.0
        %7364 = vmatpush1.msra.mxu0 0.0
        %7365 = vmatprep.subr.mxu0 0.0
        %7366 = vmatpush1.msra.mxu0 0.0
        %7367 = vmatprep.subr.mxu0 0.0
        %7368 = vmatpush1.msra.mxu0 0.0
        %7369 = vmatprep.subr.mxu0 0.0
        %7370 = vmatpush1.msra.mxu0 0.0
        %7371 = vmatprep.mubr.f32.mxu0 0.0
        %7372 = vmatmul.mubr.f32.gmra.mrb[0].mxu0 %v7305
        %v7373 = vpop.f32.mrb[0].mxu0
        %v7374 = vadd.f32 %v7302, %v7373
        %v7375 = vpop.f32.mrb[0].mxu0
        %7376 = vdwg.mxu0
        %v7377 = vadd.f32 %v7199, %v7374
        %s7378 = scalar_lea.vmem %s19, 2
        %v7379 = vld [vmem:[%s7378] sm:$0x1]
        %s7380 = scalar_lea.vmem %s20, 2
        %v7381 = vld [vmem:[%s7380] sm:$0x1]
        %v7382 = vsel %vm740, %v7377, 0.0
        %7383 = vadd.xlane.f32.xlu0 %v7382
        %v7384 = vpop.xlane.xlu0 %7383
        %v7385 = vmul.f32 %v7384, %v2693
        %v7386 = vsub.f32 %v7377, %v7385
        %v7387 = vmul.f32 %v7386, %v7386
        %v7388 = vsel %vm740, %v7387, 0.0
        %7389 = vadd.xlane.f32.xlu0 %v7388
        %v7390 = vpop.xlane.xlu0 %7389
        %v7391 = vmul.f32 %v7390, %v2693
        %v7392 = vadd.f32 %v7391, 1e-05
        %v7393 = vrsqrt.pop %v7392
        %v7394 = vmul.f32 %v7386, %v7393
        %v7396 = vlaneseq
        %v7397 = vshrl.u32 %v7396, 7
        %v7398 = vsub.s32 0, %v7397
        %v7399 = vrot.slane %v7379, %v7398
        %v7401 = vmul.f32 %v7394, %v7399
        %v7403 = vlaneseq
        %v7404 = vshrl.u32 %v7403, 7
        %v7405 = vsub.s32 0, %v7404
        %v7406 = vrot.slane %v7381, %v7405
        %v7408 = vadd.f32 %v7401, %v7406
        %7409 = vst.msk [vmem:[%s699] sm:$0xff] %vm740, %v7408
        %s7410 = sand.u32 %s509, 1
        %s7411 = scalar_lea.sflag [#allocation3], %s7410
        %s7412 = sand.u32 %s509, 1
        %s7413 = smul.addr %s7412, 8
        %s7414 = scalar_lea.vmem [#allocation2], %s7413
        // Predicated region
        $region105: #{block_forward.1} parent=103 // pred_check
          %p7415 = pneg %p519
        $region106: #{block_forward.1} parent=103 // pred_check_branch
          %7417 = sbr.rel (%p7415) target = $region108
        $region107: #{block_forward.1} parent=103 // pred_region
          %s7419 = ssub.s32 128, 128
          %7420 = vsyncadd %s7411, %s7419
          %s7421 = smul.addr %s35, 128
          %s7422 = scalar_lea.hbm %s21, %s7421
          %s7424 = sshll.u32 %s7414, 4
          %s7425 = int_to_ptr.vmem [resolvable:$true] %s7424
          %7427 = dma.vmem_to_hbm [thread:$0]  %s7425, 128, %s7422, %s7411
        $region108: #{block_forward.1} parent=103 // pred_fallthru
          _
      $region104: #{block_forward.1} parent=5 // pred_fallthru
        _
      %p7428 = scmp.le.s32.totalorder 2, %s30
      // Predicated region
      $region109: #{block_forward.1} parent=5 // pred_check
        %p7429 = pneg %p7428
      $region110: #{block_forward.1} parent=5 // pred_check_branch
        %7431 = sbr.rel (%p7429) target = $region112
      $region111: #{block_forward.1} parent=5 // pred_region
        %s7432 = ssub.s32 %s30, 2
        // Predicated region
        $region113: #{block_forward.1} parent=111 // pred_check
          %p7433 = pneg %p525
        $region114: #{block_forward.1} parent=111 // pred_check_branch
          %7435 = sbr.rel (%p7433) target = $region116
        $region115: #{block_forward.1} parent=111 // pred_region
          %s7436 = sand.u32 %s510, 1
          %s7437 = scalar_lea.sflag [#allocation3], %s7436
          %s7438 = sand.u32 %s510, 1
          %s7439 = smul.addr %s7438, 8
          %s7440 = scalar_lea.vmem [#allocation2], %s7439
          %7441 = dma.done %s7437, 128
        $region116: #{block_forward.1} parent=111 // pred_fallthru
          _
      $region112: #{block_forward.1} parent=5 // pred_fallthru
        _
    $region6: #{block_forward.1} parent=1 // loop_footer
      %s34 = sadd.s32 1, %s30
    $region7: #{block_forward.1} parent=1 // loop_footer_branch
      %29 = sbr.rel target = $region3
    $region8: #{block_forward.1} parent=1 // loop_exit
      _
    %7442 = vsyncpa [#allocation3], 1
    %s7443 = scalar_lea.sflag [#allocation3], 1
    %7444 = vsyncpa %s7443, 1

</llo_original>
